<compile_context>
chip_gen: v6e
topology: v6e:2x2x1
jax: 0.10.0
libtpu: 0.0.40
codegen_flags: <defaults>
</compile_context>

<pallas_src>
import functools

import jax
import jax.numpy as jnp
import numpy as np
from jax.experimental import pallas as pl
from jax.experimental.pallas import tpu as pltpu


# ------------------------------ fused GPT forward kernel ------------------------------
def gpt_kernel(x_ref, wq_ref, wk_ref, wv_ref, wout_ref, bout_ref, wprojh_ref,
               bproj_ref, ln1w_ref, ln1b_ref, w1t_ref, b1_ref, w2t_ref, b2_ref,
               ln3w_ref, ln3b_ref, lnfw_ref, lnfb_ref, wft_ref, bf_ref, o_ref,
               *, num_blocks, num_heads, head_size):
    f32 = jnp.float32
    x = x_ref[...]                               # (1, T, E) -- one batch element per step
    T = x.shape[1]
    scale = 1.0 / float(head_size) ** 0.5
    neg = jnp.float32(-1e30)

    # Causal mask for a single attention block.
    # TODO(synk): seq_len > 128 would need the module's block-diagonal flash_attention
    # tiling; T <= 128 here so single-block causal attention is exact.
    rows = jax.lax.broadcasted_iota(jnp.int32, (1, T, T), 1)
    cols = jax.lax.broadcasted_iota(jnp.int32, (1, T, T), 2)
    causal = cols <= rows

    def layer_norm(z, w, b):
        mu = jnp.mean(z, axis=-1, keepdims=True)
        var = jnp.mean(jnp.square(z - mu), axis=-1, keepdims=True)
        return (z - mu) * jax.lax.rsqrt(var + 1e-5) * w + b

    dT = (((2,), (1,)), ((), ()))                # act @ W^T  (contract feature with W dim 1)
    dN = (((2,), (0,)), ((), ()))                # act @ W    (contract feature with W dim 0)

    for l in range(num_blocks):
        # ---- multi-head causal self-attention; all heads stay in registers ----
        acc = jnp.zeros(x.shape, f32)
        for h in range(num_heads):
            i = l * num_heads + h
            q = jax.lax.dot_general(x, wq_ref[i], dT, preferred_element_type=f32)
            k = jax.lax.dot_general(x, wk_ref[i], dT, preferred_element_type=f32)
            v = jax.lax.dot_general(x, wv_ref[i], dT, preferred_element_type=f32)
            s = jnp.einsum('bqd,bkd->bqk', q, k, preferred_element_type=f32) * scale
            s = jnp.where(causal, s, neg)
            s = s - jnp.max(s, axis=-1, keepdims=True)
            p = jnp.exp(s)
            p = p * pl.reciprocal(jnp.sum(p, axis=-1, keepdims=True) + 1e-6, approx=False)
            a = jnp.einsum('bqk,bkd->bqd', p, v, preferred_element_type=f32)
            # per-head out_proj (with bias)
            ho = jax.lax.dot_general(a, wout_ref[i], dT, preferred_element_type=f32) + bout_ref[i]
            # per-head slice of the merge projection (pre-split on host -> no lane slicing);
            # summing per-head contributions == concat(heads) @ W_proj^T
            acc = acc + jax.lax.dot_general(ho, wprojh_ref[i], dT, preferred_element_type=f32)
        mha = acc + bproj_ref[l]                 # dropout(0.2) == identity in eval mode

        h1 = layer_norm(x + mha, ln1w_ref[l], ln1b_ref[l])

        # FFN: Linear -> ReLU -> Linear, residual, LayerNorm
        f = jax.lax.dot_general(h1, w1t_ref[l], dN, preferred_element_type=f32) + b1_ref[l]
        f = jnp.maximum(f, 0.0)
        f = jax.lax.dot_general(f, w2t_ref[l], dN, preferred_element_type=f32) + b2_ref[l]
        x = layer_norm(h1 + f, ln3w_ref[l], ln3b_ref[l])

    # final LayerNorm + vocab head
    x = layer_norm(x, lnfw_ref[...], lnfb_ref[...])
    o_ref[...] = jax.lax.dot_general(x, wft_ref[...], dN,
                                     preferred_element_type=f32) + bf_ref[...]


# ------------------------------------- wrapper --------------------------------------
def gpt_forward(tokens, params, *, num_blocks, num_heads, head_size):
    tok_emb = params['tok_emb']
    pos_emb = params['pos_emb']
    V, E = tok_emb.shape
    B, T = tokens.shape
    L, H, hs = num_blocks, num_heads, head_size
    nh = params['b1'].shape[-1]

    # TODO(synk): the embedding lookup is a gather; it stays in XLA (jnp.take) since a
    # Pallas DMA-gather adds nothing at these sizes.
    x = (jnp.take(tok_emb, tokens, axis=0) + pos_emb[:T][None, :, :]).astype(jnp.float32)

    # Host-side (trace-time, free) weight re-layouts: split qkv and per-head proj slices,
    # transpose FFN/final weights so every in-kernel matmul is a plain last-dim contraction.
    w_qkv = params['w_qkv']                                            # (L, H, 3hs, E)
    wq = w_qkv[:, :, 0 * hs:1 * hs, :].reshape(L * H, hs, E)
    wk = w_qkv[:, :, 1 * hs:2 * hs, :].reshape(L * H, hs, E)
    wv = w_qkv[:, :, 2 * hs:3 * hs, :].reshape(L * H, hs, E)
    wout = params['w_out'].reshape(L * H, hs, hs)
    bout = params['b_out'].reshape(L * H, 1, hs)
    wprojh = params['w_proj'].reshape(L, E, H, hs).transpose(0, 2, 1, 3).reshape(L * H, E, hs)
    bproj = params['b_proj'].reshape(L, 1, E)
    ln1w = params['ln1_w'].reshape(L, 1, E)
    ln1b = params['ln1_b'].reshape(L, 1, E)
    w1t = params['w1'].transpose(0, 2, 1)                              # (L, E, nh)
    b1 = params['b1'].reshape(L, 1, nh)
    w2t = params['w2'].transpose(0, 2, 1)                              # (L, nh, E)
    b2 = params['b2'].reshape(L, 1, E)
    ln3w = params['ln3_w'].reshape(L, 1, E)
    ln3b = params['ln3_b'].reshape(L, 1, E)
    lnfw = params['lnf_w'].reshape(1, E)
    lnfb = params['lnf_b'].reshape(1, E)
    wft = params['wf'].T                                               # (E, V)
    bf = params['bf'].reshape(1, V)

    operands = [x, wq, wk, wv, wout, bout, wprojh, bproj, ln1w, ln1b,
                w1t, b1, w2t, b2, ln3w, ln3b, lnfw, lnfb, wft, bf]

    def const_spec(shape):
        zeros = (0,) * len(shape)
        return pl.BlockSpec(shape, lambda b, _z=zeros: _z)   # constant index -> DMA'd once

    in_specs = [pl.BlockSpec((1, T, E), lambda b: (b, 0, 0))]
    in_specs += [const_spec(tuple(op.shape)) for op in operands[1:]]

    kernel = functools.partial(gpt_kernel, num_blocks=L, num_heads=H, head_size=hs)
    return pl.pallas_call(
        kernel,
        out_shape=jax.ShapeDtypeStruct((B, T, V), jnp.float32),
        grid=(B,),
        in_specs=in_specs,
        out_specs=pl.BlockSpec((1, T, V), lambda b: (b, 0, 0)),
        compiler_params=pltpu.CompilerParams(
            dimension_semantics=("parallel",)),   # v7x: the 2 TensorCores split the batch
    )(*operands)


# ---------------------------------- pure-JAX reference -------------------------------
def reference_forward(tokens, params, *, num_blocks, num_heads, head_size):
    hs = head_size
    B, T = tokens.shape
    x = params['tok_emb'][tokens] + params['pos_emb'][:T][None]
    tril = jnp.tril(jnp.ones((T, T), jnp.float32))

    def ln(z, w, b):
        mu = jnp.mean(z, axis=-1, keepdims=True)
        var = jnp.mean(jnp.square(z - mu), axis=-1, keepdims=True)
        return (z - mu) / jnp.sqrt(var + 1e-5) * w + b

    for l in range(num_blocks):
        heads = []
        for h in range(num_heads):
            qkv = x @ params['w_qkv'][l, h].T                          # (B, T, 3hs)
            q, k, v = qkv[..., :hs], qkv[..., hs:2 * hs], qkv[..., 2 * hs:]
            s = jnp.einsum('bqd,bkd->bqk', q, k) / hs ** 0.5
            s = jnp.where(tril[None] == 0, -jnp.inf, s)
            s = s - jnp.max(s, axis=-1, keepdims=True)
            p = jnp.exp(s)
            p = p / (jnp.sum(p, axis=-1, keepdims=True) + 1e-6)
            a = jnp.einsum('bqk,bkd->bqd', p, v)
            heads.append(a @ params['w_out'][l, h].T + params['b_out'][l, h])
        cat = jnp.concatenate(heads, axis=-1)
        mha = cat @ params['w_proj'][l].T + params['b_proj'][l]        # dropout == identity
        x = ln(x + mha, params['ln1_w'][l], params['ln1_b'][l])
        f = jnp.maximum(x @ params['w1'][l].T + params['b1'][l], 0.0)
        f = f @ params['w2'][l].T + params['b2'][l]
        x = ln(x + f, params['ln3_w'][l], params['ln3_b'][l])

    x = ln(x, params['lnf_w'], params['lnf_b'])
    return x @ params['wf'].T + params['bf']


# --------------------------------------- main ----------------------------------------
if __name__ == "__main__":
    # GPTModel hyper-parameters (small, consistent with the module):
    vocab_size, embedding_size, head_size = 64, 32, 8
    block_size, num_heads, num_blocks = 16, 4, 2
    n_hidden = 4 * num_heads                    # DecoderBlock default n_hidden = 4 * num_heads
    B, T = 2, block_size

    key = jax.random.PRNGKey(0)
    ks = iter(jax.random.split(key, 32))
    f32 = jnp.float32

    def nrm(shape, s=0.02):
        return s * jax.random.normal(next(ks), shape, f32)

    L, H, E, hs, V, nh = num_blocks, num_heads, embedding_size, head_size, vocab_size, n_hidden
    params = {
        'tok_emb': nrm((V, E)),
        'pos_emb': nrm((block_size, E)),
        'w_qkv': nrm((L, H, 3 * hs, E)),
        'w_out': nrm((L, H, hs, hs)),
        'b_out': nrm((L, H, hs)),
        'w_proj': nrm((L, E, H * hs)),
        'b_proj': nrm((L, E)),
        'ln1_w': 1.0 + nrm((L, E)),
        'ln1_b': nrm((L, E)),
        'w1': nrm((L, nh, E)),
        'b1': nrm((L, nh)),
        'w2': nrm((L, E, nh)),
        'b2': nrm((L, E)),
        'ln3_w': 1.0 + nrm((L, E)),
        'ln3_b': nrm((L, E)),
        'lnf_w': 1.0 + nrm((E,)),
        'lnf_b': nrm((E,)),
        'wf': nrm((V, E)),
        'bf': nrm((V,)),
    }
    tokens = jax.random.randint(jax.random.PRNGKey(42), (B, T), 0, V, dtype=jnp.int32)

    fwd = jax.jit(functools.partial(gpt_forward, num_blocks=L, num_heads=H, head_size=hs))
    logits = jax.block_until_ready(fwd(tokens, params))
    ref = jax.block_until_ready(
        reference_forward(tokens, params, num_blocks=L, num_heads=H, head_size=hs))

    np.testing.assert_allclose(np.asarray(logits), np.asarray(ref), rtol=1e-4, atol=1e-4)
    print("KERNEL_OK")
</pallas_src>

<mosaic_0001>
module attributes {stable_mosaic.version = 11 : i64} {
  func.func @gpt_kernel(%arg0: i32, %arg1: memref<1x16x32xf32, #tpu.memory_space<vmem>>, %arg2: memref<8x8x32xf32, #tpu.memory_space<vmem>>, %arg3: memref<8x8x32xf32, #tpu.memory_space<vmem>>, %arg4: memref<8x8x32xf32, #tpu.memory_space<vmem>>, %arg5: memref<8x8x8xf32, #tpu.memory_space<vmem>>, %arg6: memref<8x1x8xf32, #tpu.memory_space<vmem>>, %arg7: memref<8x32x8xf32, #tpu.memory_space<vmem>>, %arg8: memref<2x1x32xf32, #tpu.memory_space<vmem>>, %arg9: memref<2x1x32xf32, #tpu.memory_space<vmem>>, %arg10: memref<2x1x32xf32, #tpu.memory_space<vmem>>, %arg11: memref<2x32x16xf32, #tpu.memory_space<vmem>>, %arg12: memref<2x1x16xf32, #tpu.memory_space<vmem>>, %arg13: memref<2x16x32xf32, #tpu.memory_space<vmem>>, %arg14: memref<2x1x32xf32, #tpu.memory_space<vmem>>, %arg15: memref<2x1x32xf32, #tpu.memory_space<vmem>>, %arg16: memref<2x1x32xf32, #tpu.memory_space<vmem>>, %arg17: memref<1x32xf32, #tpu.memory_space<vmem>>, %arg18: memref<1x32xf32, #tpu.memory_space<vmem>>, %arg19: memref<32x64xf32, #tpu.memory_space<vmem>>, %arg20: memref<1x64xf32, #tpu.memory_space<vmem>>, %arg21: memref<1x16x64xf32, #tpu.memory_space<vmem>>) attributes {dimension_semantics = [#tpu.dimension_semantics<parallel>], iteration_bounds = array<i64: 2>, scalar_prefetch = 0 : i64, scratch_operands = 0 : i64, tpu.core_type = #tpu.core_type<tc>, window_params = [{transform_indices = @transform_0, window_bounds = array<i64: 1, 16, 32>}, {pipeline_mode = #tpu.pipeline_mode<synchronous>, transform_indices = @transform_1, window_bounds = array<i64: 8, 8, 32>}, {pipeline_mode = #tpu.pipeline_mode<synchronous>, transform_indices = @transform_2, window_bounds = array<i64: 8, 8, 32>}, {pipeline_mode = #tpu.pipeline_mode<synchronous>, transform_indices = @transform_3, window_bounds = array<i64: 8, 8, 32>}, {pipeline_mode = #tpu.pipeline_mode<synchronous>, transform_indices = @transform_4, window_bounds = array<i64: 8, 8, 8>}, {pipeline_mode = #tpu.pipeline_mode<synchronous>, transform_indices = @transform_5, window_bounds = array<i64: 8, 1, 8>}, {pipeline_mode = #tpu.pipeline_mode<synchronous>, transform_indices = @transform_6, window_bounds = array<i64: 8, 32, 8>}, {pipeline_mode = #tpu.pipeline_mode<synchronous>, transform_indices = @transform_7, window_bounds = array<i64: 2, 1, 32>}, {pipeline_mode = #tpu.pipeline_mode<synchronous>, transform_indices = @transform_8, window_bounds = array<i64: 2, 1, 32>}, {pipeline_mode = #tpu.pipeline_mode<synchronous>, transform_indices = @transform_9, window_bounds = array<i64: 2, 1, 32>}, {pipeline_mode = #tpu.pipeline_mode<synchronous>, transform_indices = @transform_10, window_bounds = array<i64: 2, 32, 16>}, {pipeline_mode = #tpu.pipeline_mode<synchronous>, transform_indices = @transform_11, window_bounds = array<i64: 2, 1, 16>}, {pipeline_mode = #tpu.pipeline_mode<synchronous>, transform_indices = @transform_12, window_bounds = array<i64: 2, 16, 32>}, {pipeline_mode = #tpu.pipeline_mode<synchronous>, transform_indices = @transform_13, window_bounds = array<i64: 2, 1, 32>}, {pipeline_mode = #tpu.pipeline_mode<synchronous>, transform_indices = @transform_14, window_bounds = array<i64: 2, 1, 32>}, {pipeline_mode = #tpu.pipeline_mode<synchronous>, transform_indices = @transform_15, window_bounds = array<i64: 2, 1, 32>}, {pipeline_mode = #tpu.pipeline_mode<synchronous>, transform_indices = @transform_16, window_bounds = array<i64: 1, 32>}, {pipeline_mode = #tpu.pipeline_mode<synchronous>, transform_indices = @transform_17, window_bounds = array<i64: 1, 32>}, {pipeline_mode = #tpu.pipeline_mode<synchronous>, transform_indices = @transform_18, window_bounds = array<i64: 32, 64>}, {pipeline_mode = #tpu.pipeline_mode<synchronous>, transform_indices = @transform_19, window_bounds = array<i64: 1, 64>}, {transform_indices = @transform_20, window_bounds = array<i64: 1, 16, 64>}]} {
    %c0 = arith.constant 0 : index
    %c0_0 = arith.constant 0 : index
    %c0_1 = arith.constant 0 : index
    %0 = vector.load %arg1[%c0, %c0_0, %c0_1] : memref<1x16x32xf32, #tpu.memory_space<vmem>>, vector<1x16x32xf32>
    %1 = tpu.iota {dimensions = array<i32: 1>} : vector<1x16x16xi32>
    %2 = tpu.iota {dimensions = array<i32: 2>} : vector<1x16x16xi32>
    %3 = arith.cmpi sle, %2, %1 : vector<1x16x16xi32>
    %cst = arith.constant 0.000000e+00 : f32
    %4 = vector.broadcast %cst : f32 to vector<1x16x32xf32>
    %c0_2 = arith.constant 0 : index
    %c0_3 = arith.constant 0 : index
    %c0_4 = arith.constant 0 : index
    %5 = vector.load %arg2[%c0_2, %c0_3, %c0_4] : memref<8x8x32xf32, #tpu.memory_space<vmem>>, vector<1x8x32xf32>
    %6 = vector.shape_cast %5 : vector<1x8x32xf32> to vector<8x32xf32>
    %cst_5 = arith.constant dense<0.000000e+00> : vector<1x16x8xf32>
    %7 = tpu.matmul %0, %6, %cst_5 {dimension_numbers = #tpu.dot_dimension_numbers<[2], [1], [0, 1], [0], [0, 0, 0, 1, 1, 0], [], []>} : vector<1x16x32xf32>, vector<8x32xf32>, vector<1x16x8xf32> -> vector<1x16x8xf32>
    %c0_6 = arith.constant 0 : index
    %c0_7 = arith.constant 0 : index
    %c0_8 = arith.constant 0 : index
    %8 = vector.load %arg3[%c0_6, %c0_7, %c0_8] : memref<8x8x32xf32, #tpu.memory_space<vmem>>, vector<1x8x32xf32>
    %9 = vector.shape_cast %8 : vector<1x8x32xf32> to vector<8x32xf32>
    %cst_9 = arith.constant dense<0.000000e+00> : vector<1x16x8xf32>
    %10 = tpu.matmul %0, %9, %cst_9 {dimension_numbers = #tpu.dot_dimension_numbers<[2], [1], [0, 1], [0], [0, 0, 0, 1, 1, 0], [], []>} : vector<1x16x32xf32>, vector<8x32xf32>, vector<1x16x8xf32> -> vector<1x16x8xf32>
    %c0_10 = arith.constant 0 : index
    %c0_11 = arith.constant 0 : index
    %c0_12 = arith.constant 0 : index
    %11 = vector.load %arg4[%c0_10, %c0_11, %c0_12] : memref<8x8x32xf32, #tpu.memory_space<vmem>>, vector<1x8x32xf32>
    %12 = vector.shape_cast %11 : vector<1x8x32xf32> to vector<8x32xf32>
    %cst_13 = arith.constant dense<0.000000e+00> : vector<1x16x8xf32>
    %13 = tpu.matmul %0, %12, %cst_13 {dimension_numbers = #tpu.dot_dimension_numbers<[2], [1], [0, 1], [0], [0, 0, 0, 1, 1, 0], [], []>} : vector<1x16x32xf32>, vector<8x32xf32>, vector<1x16x8xf32> -> vector<1x16x8xf32>
    "tpu.trace_start"() <{level = 10 : i32, message = "bqd,bkd->bqk"}> : () -> ()
    %cst_14 = arith.constant dense<0.000000e+00> : vector<1x16x16xf32>
    %14 = tpu.matmul %7, %10, %cst_14 {dimension_numbers = #tpu.dot_dimension_numbers<[2], [2], [1], [1], [0, 0, 0, 1, 1, 1], [0], [0]>} : vector<1x16x8xf32>, vector<1x16x8xf32>, vector<1x16x16xf32> -> vector<1x16x16xf32>
    "tpu.trace_stop"() : () -> ()
    %cst_15 = arith.constant 0.353553385 : f32
    %15 = vector.broadcast %cst_15 : f32 to vector<1x16x16xf32>
    %16 = arith.mulf %14, %15 : vector<1x16x16xf32>
    %cst_16 = arith.constant -1.000000e+30 : f32
    %17 = vector.broadcast %cst_16 : f32 to vector<1x16x16xf32>
    %18 = arith.select %3, %16, %17 : vector<1x16x16xi1>, vector<1x16x16xf32>
    %cst_17 = arith.constant dense<0xFF800000> : vector<1x16xf32>
    %19 = vector.multi_reduction <maximumf>, %18, %cst_17 [2] : vector<1x16x16xf32> to vector<1x16xf32>
    %20 = vector.shape_cast %19 : vector<1x16xf32> to vector<1x16x1xf32>
    %21 = vector.broadcast %20 : vector<1x16x1xf32> to vector<1x16x16xf32>
    %22 = arith.subf %18, %21 : vector<1x16x16xf32>
    %23 = math.exp %22 : vector<1x16x16xf32>
    %cst_18 = arith.constant dense<0.000000e+00> : vector<1x16xf32>
    %24 = vector.multi_reduction <add>, %23, %cst_18 [2] : vector<1x16x16xf32> to vector<1x16xf32>
    %25 = vector.shape_cast %24 : vector<1x16xf32> to vector<1x16x1xf32>
    %cst_19 = arith.constant 9.99999997E-7 : f32
    %26 = vector.broadcast %cst_19 : f32 to vector<1x16x1xf32>
    %27 = arith.addf %25, %26 : vector<1x16x1xf32>
    %28 = tpu.reciprocal %27 : vector<1x16x1xf32> -> vector<1x16x1xf32>
    %29 = vector.broadcast %28 : vector<1x16x1xf32> to vector<1x16x16xf32>
    %30 = arith.mulf %23, %29 : vector<1x16x16xf32>
    "tpu.trace_start"() <{level = 10 : i32, message = "bqk,bkd->bqd"}> : () -> ()
    %cst_20 = arith.constant dense<0.000000e+00> : vector<1x16x8xf32>
    %31 = tpu.matmul %30, %13, %cst_20 {dimension_numbers = #tpu.dot_dimension_numbers<[2], [1], [1], [2], [0, 0, 0, 1, 1, 2], [0], [0]>} : vector<1x16x16xf32>, vector<1x16x8xf32>, vector<1x16x8xf32> -> vector<1x16x8xf32>
    "tpu.trace_stop"() : () -> ()
    %c0_21 = arith.constant 0 : index
    %c0_22 = arith.constant 0 : index
    %c0_23 = arith.constant 0 : index
    %32 = vector.load %arg5[%c0_21, %c0_22, %c0_23] : memref<8x8x8xf32, #tpu.memory_space<vmem>>, vector<1x8x8xf32>
    %33 = vector.shape_cast %32 : vector<1x8x8xf32> to vector<8x8xf32>
    %cst_24 = arith.constant dense<0.000000e+00> : vector<1x16x8xf32>
    %34 = tpu.matmul %31, %33, %cst_24 {dimension_numbers = #tpu.dot_dimension_numbers<[2], [1], [0, 1], [0], [0, 0, 0, 1, 1, 0], [], []>} : vector<1x16x8xf32>, vector<8x8xf32>, vector<1x16x8xf32> -> vector<1x16x8xf32>
    %c0_25 = arith.constant 0 : index
    %c0_26 = arith.constant 0 : index
    %c0_27 = arith.constant 0 : index
    %35 = vector.load %arg6[%c0_25, %c0_26, %c0_27] : memref<8x1x8xf32, #tpu.memory_space<vmem>>, vector<1x1x8xf32>
    %36 = vector.shape_cast %35 : vector<1x1x8xf32> to vector<1x8xf32>
    %37 = vector.shape_cast %36 : vector<1x8xf32> to vector<1x1x8xf32>
    %38 = vector.broadcast %37 : vector<1x1x8xf32> to vector<1x16x8xf32>
    %39 = arith.addf %34, %38 : vector<1x16x8xf32>
    %c0_28 = arith.constant 0 : index
    %c0_29 = arith.constant 0 : index
    %c0_30 = arith.constant 0 : index
    %40 = vector.load %arg7[%c0_28, %c0_29, %c0_30] : memref<8x32x8xf32, #tpu.memory_space<vmem>>, vector<1x32x8xf32>
    %41 = vector.shape_cast %40 : vector<1x32x8xf32> to vector<32x8xf32>
    %cst_31 = arith.constant dense<0.000000e+00> : vector<1x16x32xf32>
    %42 = tpu.matmul %39, %41, %cst_31 {dimension_numbers = #tpu.dot_dimension_numbers<[2], [1], [0, 1], [0], [0, 0, 0, 1, 1, 0], [], []>} : vector<1x16x8xf32>, vector<32x8xf32>, vector<1x16x32xf32> -> vector<1x16x32xf32>
    %43 = arith.addf %4, %42 : vector<1x16x32xf32>
    %c1 = arith.constant 1 : index
    %c0_32 = arith.constant 0 : index
    %c0_33 = arith.constant 0 : index
    %44 = vector.load %arg2[%c1, %c0_32, %c0_33] : memref<8x8x32xf32, #tpu.memory_space<vmem>>, vector<1x8x32xf32>
    %45 = vector.shape_cast %44 : vector<1x8x32xf32> to vector<8x32xf32>
    %cst_34 = arith.constant dense<0.000000e+00> : vector<1x16x8xf32>
    %46 = tpu.matmul %0, %45, %cst_34 {dimension_numbers = #tpu.dot_dimension_numbers<[2], [1], [0, 1], [0], [0, 0, 0, 1, 1, 0], [], []>} : vector<1x16x32xf32>, vector<8x32xf32>, vector<1x16x8xf32> -> vector<1x16x8xf32>
    %c1_35 = arith.constant 1 : index
    %c0_36 = arith.constant 0 : index
    %c0_37 = arith.constant 0 : index
    %47 = vector.load %arg3[%c1_35, %c0_36, %c0_37] : memref<8x8x32xf32, #tpu.memory_space<vmem>>, vector<1x8x32xf32>
    %48 = vector.shape_cast %47 : vector<1x8x32xf32> to vector<8x32xf32>
    %cst_38 = arith.constant dense<0.000000e+00> : vector<1x16x8xf32>
    %49 = tpu.matmul %0, %48, %cst_38 {dimension_numbers = #tpu.dot_dimension_numbers<[2], [1], [0, 1], [0], [0, 0, 0, 1, 1, 0], [], []>} : vector<1x16x32xf32>, vector<8x32xf32>, vector<1x16x8xf32> -> vector<1x16x8xf32>
    %c1_39 = arith.constant 1 : index
    %c0_40 = arith.constant 0 : index
    %c0_41 = arith.constant 0 : index
    %50 = vector.load %arg4[%c1_39, %c0_40, %c0_41] : memref<8x8x32xf32, #tpu.memory_space<vmem>>, vector<1x8x32xf32>
    %51 = vector.shape_cast %50 : vector<1x8x32xf32> to vector<8x32xf32>
    %cst_42 = arith.constant dense<0.000000e+00> : vector<1x16x8xf32>
    %52 = tpu.matmul %0, %51, %cst_42 {dimension_numbers = #tpu.dot_dimension_numbers<[2], [1], [0, 1], [0], [0, 0, 0, 1, 1, 0], [], []>} : vector<1x16x32xf32>, vector<8x32xf32>, vector<1x16x8xf32> -> vector<1x16x8xf32>
    "tpu.trace_start"() <{level = 10 : i32, message = "bqd,bkd->bqk"}> : () -> ()
    %cst_43 = arith.constant dense<0.000000e+00> : vector<1x16x16xf32>
    %53 = tpu.matmul %46, %49, %cst_43 {dimension_numbers = #tpu.dot_dimension_numbers<[2], [2], [1], [1], [0, 0, 0, 1, 1, 1], [0], [0]>} : vector<1x16x8xf32>, vector<1x16x8xf32>, vector<1x16x16xf32> -> vector<1x16x16xf32>
    "tpu.trace_stop"() : () -> ()
    %cst_44 = arith.constant 0.353553385 : f32
    %54 = vector.broadcast %cst_44 : f32 to vector<1x16x16xf32>
    %55 = arith.mulf %53, %54 : vector<1x16x16xf32>
    %cst_45 = arith.constant -1.000000e+30 : f32
    %56 = vector.broadcast %cst_45 : f32 to vector<1x16x16xf32>
    %57 = arith.select %3, %55, %56 : vector<1x16x16xi1>, vector<1x16x16xf32>
    %cst_46 = arith.constant dense<0xFF800000> : vector<1x16xf32>
    %58 = vector.multi_reduction <maximumf>, %57, %cst_46 [2] : vector<1x16x16xf32> to vector<1x16xf32>
    %59 = vector.shape_cast %58 : vector<1x16xf32> to vector<1x16x1xf32>
    %60 = vector.broadcast %59 : vector<1x16x1xf32> to vector<1x16x16xf32>
    %61 = arith.subf %57, %60 : vector<1x16x16xf32>
    %62 = math.exp %61 : vector<1x16x16xf32>
    %cst_47 = arith.constant dense<0.000000e+00> : vector<1x16xf32>
    %63 = vector.multi_reduction <add>, %62, %cst_47 [2] : vector<1x16x16xf32> to vector<1x16xf32>
    %64 = vector.shape_cast %63 : vector<1x16xf32> to vector<1x16x1xf32>
    %cst_48 = arith.constant 9.99999997E-7 : f32
    %65 = vector.broadcast %cst_48 : f32 to vector<1x16x1xf32>
    %66 = arith.addf %64, %65 : vector<1x16x1xf32>
    %67 = tpu.reciprocal %66 : vector<1x16x1xf32> -> vector<1x16x1xf32>
    %68 = vector.broadcast %67 : vector<1x16x1xf32> to vector<1x16x16xf32>
    %69 = arith.mulf %62, %68 : vector<1x16x16xf32>
    "tpu.trace_start"() <{level = 10 : i32, message = "bqk,bkd->bqd"}> : () -> ()
    %cst_49 = arith.constant dense<0.000000e+00> : vector<1x16x8xf32>
    %70 = tpu.matmul %69, %52, %cst_49 {dimension_numbers = #tpu.dot_dimension_numbers<[2], [1], [1], [2], [0, 0, 0, 1, 1, 2], [0], [0]>} : vector<1x16x16xf32>, vector<1x16x8xf32>, vector<1x16x8xf32> -> vector<1x16x8xf32>
    "tpu.trace_stop"() : () -> ()
    %c1_50 = arith.constant 1 : index
    %c0_51 = arith.constant 0 : index
    %c0_52 = arith.constant 0 : index
    %71 = vector.load %arg5[%c1_50, %c0_51, %c0_52] : memref<8x8x8xf32, #tpu.memory_space<vmem>>, vector<1x8x8xf32>
    %72 = vector.shape_cast %71 : vector<1x8x8xf32> to vector<8x8xf32>
    %cst_53 = arith.constant dense<0.000000e+00> : vector<1x16x8xf32>
    %73 = tpu.matmul %70, %72, %cst_53 {dimension_numbers = #tpu.dot_dimension_numbers<[2], [1], [0, 1], [0], [0, 0, 0, 1, 1, 0], [], []>} : vector<1x16x8xf32>, vector<8x8xf32>, vector<1x16x8xf32> -> vector<1x16x8xf32>
    %c1_54 = arith.constant 1 : index
    %c0_55 = arith.constant 0 : index
    %c0_56 = arith.constant 0 : index
    %74 = vector.load %arg6[%c1_54, %c0_55, %c0_56] : memref<8x1x8xf32, #tpu.memory_space<vmem>>, vector<1x1x8xf32>
    %75 = vector.shape_cast %74 : vector<1x1x8xf32> to vector<1x8xf32>
    %76 = vector.shape_cast %75 : vector<1x8xf32> to vector<1x1x8xf32>
    %77 = vector.broadcast %76 : vector<1x1x8xf32> to vector<1x16x8xf32>
    %78 = arith.addf %73, %77 : vector<1x16x8xf32>
    %c1_57 = arith.constant 1 : index
    %c0_58 = arith.constant 0 : index
    %c0_59 = arith.constant 0 : index
    %79 = vector.load %arg7[%c1_57, %c0_58, %c0_59] : memref<8x32x8xf32, #tpu.memory_space<vmem>>, vector<1x32x8xf32>
    %80 = vector.shape_cast %79 : vector<1x32x8xf32> to vector<32x8xf32>
    %cst_60 = arith.constant dense<0.000000e+00> : vector<1x16x32xf32>
    %81 = tpu.matmul %78, %80, %cst_60 {dimension_numbers = #tpu.dot_dimension_numbers<[2], [1], [0, 1], [0], [0, 0, 0, 1, 1, 0], [], []>} : vector<1x16x8xf32>, vector<32x8xf32>, vector<1x16x32xf32> -> vector<1x16x32xf32>
    %82 = arith.addf %43, %81 : vector<1x16x32xf32>
    %c2 = arith.constant 2 : index
    %c0_61 = arith.constant 0 : index
    %c0_62 = arith.constant 0 : index
    %83 = vector.load %arg2[%c2, %c0_61, %c0_62] : memref<8x8x32xf32, #tpu.memory_space<vmem>>, vector<1x8x32xf32>
    %84 = vector.shape_cast %83 : vector<1x8x32xf32> to vector<8x32xf32>
    %cst_63 = arith.constant dense<0.000000e+00> : vector<1x16x8xf32>
    %85 = tpu.matmul %0, %84, %cst_63 {dimension_numbers = #tpu.dot_dimension_numbers<[2], [1], [0, 1], [0], [0, 0, 0, 1, 1, 0], [], []>} : vector<1x16x32xf32>, vector<8x32xf32>, vector<1x16x8xf32> -> vector<1x16x8xf32>
    %c2_64 = arith.constant 2 : index
    %c0_65 = arith.constant 0 : index
    %c0_66 = arith.constant 0 : index
    %86 = vector.load %arg3[%c2_64, %c0_65, %c0_66] : memref<8x8x32xf32, #tpu.memory_space<vmem>>, vector<1x8x32xf32>
    %87 = vector.shape_cast %86 : vector<1x8x32xf32> to vector<8x32xf32>
    %cst_67 = arith.constant dense<0.000000e+00> : vector<1x16x8xf32>
    %88 = tpu.matmul %0, %87, %cst_67 {dimension_numbers = #tpu.dot_dimension_numbers<[2], [1], [0, 1], [0], [0, 0, 0, 1, 1, 0], [], []>} : vector<1x16x32xf32>, vector<8x32xf32>, vector<1x16x8xf32> -> vector<1x16x8xf32>
    %c2_68 = arith.constant 2 : index
    %c0_69 = arith.constant 0 : index
    %c0_70 = arith.constant 0 : index
    %89 = vector.load %arg4[%c2_68, %c0_69, %c0_70] : memref<8x8x32xf32, #tpu.memory_space<vmem>>, vector<1x8x32xf32>
    %90 = vector.shape_cast %89 : vector<1x8x32xf32> to vector<8x32xf32>
    %cst_71 = arith.constant dense<0.000000e+00> : vector<1x16x8xf32>
    %91 = tpu.matmul %0, %90, %cst_71 {dimension_numbers = #tpu.dot_dimension_numbers<[2], [1], [0, 1], [0], [0, 0, 0, 1, 1, 0], [], []>} : vector<1x16x32xf32>, vector<8x32xf32>, vector<1x16x8xf32> -> vector<1x16x8xf32>
    "tpu.trace_start"() <{level = 10 : i32, message = "bqd,bkd->bqk"}> : () -> ()
    %cst_72 = arith.constant dense<0.000000e+00> : vector<1x16x16xf32>
    %92 = tpu.matmul %85, %88, %cst_72 {dimension_numbers = #tpu.dot_dimension_numbers<[2], [2], [1], [1], [0, 0, 0, 1, 1, 1], [0], [0]>} : vector<1x16x8xf32>, vector<1x16x8xf32>, vector<1x16x16xf32> -> vector<1x16x16xf32>
    "tpu.trace_stop"() : () -> ()
    %cst_73 = arith.constant 0.353553385 : f32
    %93 = vector.broadcast %cst_73 : f32 to vector<1x16x16xf32>
    %94 = arith.mulf %92, %93 : vector<1x16x16xf32>
    %cst_74 = arith.constant -1.000000e+30 : f32
    %95 = vector.broadcast %cst_74 : f32 to vector<1x16x16xf32>
    %96 = arith.select %3, %94, %95 : vector<1x16x16xi1>, vector<1x16x16xf32>
    %cst_75 = arith.constant dense<0xFF800000> : vector<1x16xf32>
    %97 = vector.multi_reduction <maximumf>, %96, %cst_75 [2] : vector<1x16x16xf32> to vector<1x16xf32>
    %98 = vector.shape_cast %97 : vector<1x16xf32> to vector<1x16x1xf32>
    %99 = vector.broadcast %98 : vector<1x16x1xf32> to vector<1x16x16xf32>
    %100 = arith.subf %96, %99 : vector<1x16x16xf32>
    %101 = math.exp %100 : vector<1x16x16xf32>
    %cst_76 = arith.constant dense<0.000000e+00> : vector<1x16xf32>
    %102 = vector.multi_reduction <add>, %101, %cst_76 [2] : vector<1x16x16xf32> to vector<1x16xf32>
    %103 = vector.shape_cast %102 : vector<1x16xf32> to vector<1x16x1xf32>
    %cst_77 = arith.constant 9.99999997E-7 : f32
    %104 = vector.broadcast %cst_77 : f32 to vector<1x16x1xf32>
    %105 = arith.addf %103, %104 : vector<1x16x1xf32>
    %106 = tpu.reciprocal %105 : vector<1x16x1xf32> -> vector<1x16x1xf32>
    %107 = vector.broadcast %106 : vector<1x16x1xf32> to vector<1x16x16xf32>
    %108 = arith.mulf %101, %107 : vector<1x16x16xf32>
    "tpu.trace_start"() <{level = 10 : i32, message = "bqk,bkd->bqd"}> : () -> ()
    %cst_78 = arith.constant dense<0.000000e+00> : vector<1x16x8xf32>
    %109 = tpu.matmul %108, %91, %cst_78 {dimension_numbers = #tpu.dot_dimension_numbers<[2], [1], [1], [2], [0, 0, 0, 1, 1, 2], [0], [0]>} : vector<1x16x16xf32>, vector<1x16x8xf32>, vector<1x16x8xf32> -> vector<1x16x8xf32>
    "tpu.trace_stop"() : () -> ()
    %c2_79 = arith.constant 2 : index
    %c0_80 = arith.constant 0 : index
    %c0_81 = arith.constant 0 : index
    %110 = vector.load %arg5[%c2_79, %c0_80, %c0_81] : memref<8x8x8xf32, #tpu.memory_space<vmem>>, vector<1x8x8xf32>
    %111 = vector.shape_cast %110 : vector<1x8x8xf32> to vector<8x8xf32>
    %cst_82 = arith.constant dense<0.000000e+00> : vector<1x16x8xf32>
    %112 = tpu.matmul %109, %111, %cst_82 {dimension_numbers = #tpu.dot_dimension_numbers<[2], [1], [0, 1], [0], [0, 0, 0, 1, 1, 0], [], []>} : vector<1x16x8xf32>, vector<8x8xf32>, vector<1x16x8xf32> -> vector<1x16x8xf32>
    %c2_83 = arith.constant 2 : index
    %c0_84 = arith.constant 0 : index
    %c0_85 = arith.constant 0 : index
    %113 = vector.load %arg6[%c2_83, %c0_84, %c0_85] : memref<8x1x8xf32, #tpu.memory_space<vmem>>, vector<1x1x8xf32>
    %114 = vector.shape_cast %113 : vector<1x1x8xf32> to vector<1x8xf32>
    %115 = vector.shape_cast %114 : vector<1x8xf32> to vector<1x1x8xf32>
    %116 = vector.broadcast %115 : vector<1x1x8xf32> to vector<1x16x8xf32>
    %117 = arith.addf %112, %116 : vector<1x16x8xf32>
    %c2_86 = arith.constant 2 : index
    %c0_87 = arith.constant 0 : index
    %c0_88 = arith.constant 0 : index
    %118 = vector.load %arg7[%c2_86, %c0_87, %c0_88] : memref<8x32x8xf32, #tpu.memory_space<vmem>>, vector<1x32x8xf32>
    %119 = vector.shape_cast %118 : vector<1x32x8xf32> to vector<32x8xf32>
    %cst_89 = arith.constant dense<0.000000e+00> : vector<1x16x32xf32>
    %120 = tpu.matmul %117, %119, %cst_89 {dimension_numbers = #tpu.dot_dimension_numbers<[2], [1], [0, 1], [0], [0, 0, 0, 1, 1, 0], [], []>} : vector<1x16x8xf32>, vector<32x8xf32>, vector<1x16x32xf32> -> vector<1x16x32xf32>
    %121 = arith.addf %82, %120 : vector<1x16x32xf32>
    %c3 = arith.constant 3 : index
    %c0_90 = arith.constant 0 : index
    %c0_91 = arith.constant 0 : index
    %122 = vector.load %arg2[%c3, %c0_90, %c0_91] : memref<8x8x32xf32, #tpu.memory_space<vmem>>, vector<1x8x32xf32>
    %123 = vector.shape_cast %122 : vector<1x8x32xf32> to vector<8x32xf32>
    %cst_92 = arith.constant dense<0.000000e+00> : vector<1x16x8xf32>
    %124 = tpu.matmul %0, %123, %cst_92 {dimension_numbers = #tpu.dot_dimension_numbers<[2], [1], [0, 1], [0], [0, 0, 0, 1, 1, 0], [], []>} : vector<1x16x32xf32>, vector<8x32xf32>, vector<1x16x8xf32> -> vector<1x16x8xf32>
    %c3_93 = arith.constant 3 : index
    %c0_94 = arith.constant 0 : index
    %c0_95 = arith.constant 0 : index
    %125 = vector.load %arg3[%c3_93, %c0_94, %c0_95] : memref<8x8x32xf32, #tpu.memory_space<vmem>>, vector<1x8x32xf32>
    %126 = vector.shape_cast %125 : vector<1x8x32xf32> to vector<8x32xf32>
    %cst_96 = arith.constant dense<0.000000e+00> : vector<1x16x8xf32>
    %127 = tpu.matmul %0, %126, %cst_96 {dimension_numbers = #tpu.dot_dimension_numbers<[2], [1], [0, 1], [0], [0, 0, 0, 1, 1, 0], [], []>} : vector<1x16x32xf32>, vector<8x32xf32>, vector<1x16x8xf32> -> vector<1x16x8xf32>
    %c3_97 = arith.constant 3 : index
    %c0_98 = arith.constant 0 : index
    %c0_99 = arith.constant 0 : index
    %128 = vector.load %arg4[%c3_97, %c0_98, %c0_99] : memref<8x8x32xf32, #tpu.memory_space<vmem>>, vector<1x8x32xf32>
    %129 = vector.shape_cast %128 : vector<1x8x32xf32> to vector<8x32xf32>
    %cst_100 = arith.constant dense<0.000000e+00> : vector<1x16x8xf32>
    %130 = tpu.matmul %0, %129, %cst_100 {dimension_numbers = #tpu.dot_dimension_numbers<[2], [1], [0, 1], [0], [0, 0, 0, 1, 1, 0], [], []>} : vector<1x16x32xf32>, vector<8x32xf32>, vector<1x16x8xf32> -> vector<1x16x8xf32>
    "tpu.trace_start"() <{level = 10 : i32, message = "bqd,bkd->bqk"}> : () -> ()
    %cst_101 = arith.constant dense<0.000000e+00> : vector<1x16x16xf32>
    %131 = tpu.matmul %124, %127, %cst_101 {dimension_numbers = #tpu.dot_dimension_numbers<[2], [2], [1], [1], [0, 0, 0, 1, 1, 1], [0], [0]>} : vector<1x16x8xf32>, vector<1x16x8xf32>, vector<1x16x16xf32> -> vector<1x16x16xf32>
    "tpu.trace_stop"() : () -> ()
    %cst_102 = arith.constant 0.353553385 : f32
    %132 = vector.broadcast %cst_102 : f32 to vector<1x16x16xf32>
    %133 = arith.mulf %131, %132 : vector<1x16x16xf32>
    %cst_103 = arith.constant -1.000000e+30 : f32
    %134 = vector.broadcast %cst_103 : f32 to vector<1x16x16xf32>
    %135 = arith.select %3, %133, %134 : vector<1x16x16xi1>, vector<1x16x16xf32>
    %cst_104 = arith.constant dense<0xFF800000> : vector<1x16xf32>
    %136 = vector.multi_reduction <maximumf>, %135, %cst_104 [2] : vector<1x16x16xf32> to vector<1x16xf32>
    %137 = vector.shape_cast %136 : vector<1x16xf32> to vector<1x16x1xf32>
    %138 = vector.broadcast %137 : vector<1x16x1xf32> to vector<1x16x16xf32>
    %139 = arith.subf %135, %138 : vector<1x16x16xf32>
    %140 = math.exp %139 : vector<1x16x16xf32>
    %cst_105 = arith.constant dense<0.000000e+00> : vector<1x16xf32>
    %141 = vector.multi_reduction <add>, %140, %cst_105 [2] : vector<1x16x16xf32> to vector<1x16xf32>
    %142 = vector.shape_cast %141 : vector<1x16xf32> to vector<1x16x1xf32>
    %cst_106 = arith.constant 9.99999997E-7 : f32
    %143 = vector.broadcast %cst_106 : f32 to vector<1x16x1xf32>
    %144 = arith.addf %142, %143 : vector<1x16x1xf32>
    %145 = tpu.reciprocal %144 : vector<1x16x1xf32> -> vector<1x16x1xf32>
    %146 = vector.broadcast %145 : vector<1x16x1xf32> to vector<1x16x16xf32>
    %147 = arith.mulf %140, %146 : vector<1x16x16xf32>
    "tpu.trace_start"() <{level = 10 : i32, message = "bqk,bkd->bqd"}> : () -> ()
    %cst_107 = arith.constant dense<0.000000e+00> : vector<1x16x8xf32>
    %148 = tpu.matmul %147, %130, %cst_107 {dimension_numbers = #tpu.dot_dimension_numbers<[2], [1], [1], [2], [0, 0, 0, 1, 1, 2], [0], [0]>} : vector<1x16x16xf32>, vector<1x16x8xf32>, vector<1x16x8xf32> -> vector<1x16x8xf32>
    "tpu.trace_stop"() : () -> ()
    %c3_108 = arith.constant 3 : index
    %c0_109 = arith.constant 0 : index
    %c0_110 = arith.constant 0 : index
    %149 = vector.load %arg5[%c3_108, %c0_109, %c0_110] : memref<8x8x8xf32, #tpu.memory_space<vmem>>, vector<1x8x8xf32>
    %150 = vector.shape_cast %149 : vector<1x8x8xf32> to vector<8x8xf32>
    %cst_111 = arith.constant dense<0.000000e+00> : vector<1x16x8xf32>
    %151 = tpu.matmul %148, %150, %cst_111 {dimension_numbers = #tpu.dot_dimension_numbers<[2], [1], [0, 1], [0], [0, 0, 0, 1, 1, 0], [], []>} : vector<1x16x8xf32>, vector<8x8xf32>, vector<1x16x8xf32> -> vector<1x16x8xf32>
    %c3_112 = arith.constant 3 : index
    %c0_113 = arith.constant 0 : index
    %c0_114 = arith.constant 0 : index
    %152 = vector.load %arg6[%c3_112, %c0_113, %c0_114] : memref<8x1x8xf32, #tpu.memory_space<vmem>>, vector<1x1x8xf32>
    %153 = vector.shape_cast %152 : vector<1x1x8xf32> to vector<1x8xf32>
    %154 = vector.shape_cast %153 : vector<1x8xf32> to vector<1x1x8xf32>
    %155 = vector.broadcast %154 : vector<1x1x8xf32> to vector<1x16x8xf32>
    %156 = arith.addf %151, %155 : vector<1x16x8xf32>
    %c3_115 = arith.constant 3 : index
    %c0_116 = arith.constant 0 : index
    %c0_117 = arith.constant 0 : index
    %157 = vector.load %arg7[%c3_115, %c0_116, %c0_117] : memref<8x32x8xf32, #tpu.memory_space<vmem>>, vector<1x32x8xf32>
    %158 = vector.shape_cast %157 : vector<1x32x8xf32> to vector<32x8xf32>
    %cst_118 = arith.constant dense<0.000000e+00> : vector<1x16x32xf32>
    %159 = tpu.matmul %156, %158, %cst_118 {dimension_numbers = #tpu.dot_dimension_numbers<[2], [1], [0, 1], [0], [0, 0, 0, 1, 1, 0], [], []>} : vector<1x16x8xf32>, vector<32x8xf32>, vector<1x16x32xf32> -> vector<1x16x32xf32>
    %160 = arith.addf %121, %159 : vector<1x16x32xf32>
    %c0_119 = arith.constant 0 : index
    %c0_120 = arith.constant 0 : index
    %c0_121 = arith.constant 0 : index
    %161 = vector.load %arg8[%c0_119, %c0_120, %c0_121] : memref<2x1x32xf32, #tpu.memory_space<vmem>>, vector<1x1x32xf32>
    %162 = vector.shape_cast %161 : vector<1x1x32xf32> to vector<1x32xf32>
    %163 = vector.shape_cast %162 : vector<1x32xf32> to vector<1x1x32xf32>
    %164 = vector.broadcast %163 : vector<1x1x32xf32> to vector<1x16x32xf32>
    %165 = arith.addf %160, %164 : vector<1x16x32xf32>
    %166 = arith.addf %0, %165 : vector<1x16x32xf32>
    %c0_122 = arith.constant 0 : index
    %c0_123 = arith.constant 0 : index
    %c0_124 = arith.constant 0 : index
    %167 = vector.load %arg9[%c0_122, %c0_123, %c0_124] : memref<2x1x32xf32, #tpu.memory_space<vmem>>, vector<1x1x32xf32>
    %168 = vector.shape_cast %167 : vector<1x1x32xf32> to vector<1x32xf32>
    %c0_125 = arith.constant 0 : index
    %c0_126 = arith.constant 0 : index
    %c0_127 = arith.constant 0 : index
    %169 = vector.load %arg10[%c0_125, %c0_126, %c0_127] : memref<2x1x32xf32, #tpu.memory_space<vmem>>, vector<1x1x32xf32>
    %170 = vector.shape_cast %169 : vector<1x1x32xf32> to vector<1x32xf32>
    %cst_128 = arith.constant dense<0.000000e+00> : vector<1x16xf32>
    %171 = vector.multi_reduction <add>, %166, %cst_128 [2] : vector<1x16x32xf32> to vector<1x16xf32>
    %172 = vector.shape_cast %171 : vector<1x16xf32> to vector<1x16x1xf32>
    %cst_129 = arith.constant 3.200000e+01 : f32
    %173 = vector.broadcast %cst_129 : f32 to vector<1x16x1xf32>
    %174 = arith.divf %172, %173 : vector<1x16x1xf32>
    %175 = vector.broadcast %174 : vector<1x16x1xf32> to vector<1x16x32xf32>
    %176 = arith.subf %166, %175 : vector<1x16x32xf32>
    %177 = arith.mulf %176, %176 : vector<1x16x32xf32>
    %cst_130 = arith.constant dense<0.000000e+00> : vector<1x16xf32>
    %178 = vector.multi_reduction <add>, %177, %cst_130 [2] : vector<1x16x32xf32> to vector<1x16xf32>
    %179 = vector.shape_cast %178 : vector<1x16xf32> to vector<1x16x1xf32>
    %cst_131 = arith.constant 3.200000e+01 : f32
    %180 = vector.broadcast %cst_131 : f32 to vector<1x16x1xf32>
    %181 = arith.divf %179, %180 : vector<1x16x1xf32>
    %182 = vector.broadcast %174 : vector<1x16x1xf32> to vector<1x16x32xf32>
    %183 = arith.subf %166, %182 : vector<1x16x32xf32>
    %cst_132 = arith.constant 9.99999974E-6 : f32
    %184 = vector.broadcast %cst_132 : f32 to vector<1x16x1xf32>
    %185 = arith.addf %181, %184 : vector<1x16x1xf32>
    %186 = math.rsqrt %185 : vector<1x16x1xf32>
    %187 = vector.broadcast %186 : vector<1x16x1xf32> to vector<1x16x32xf32>
    %188 = arith.mulf %183, %187 : vector<1x16x32xf32>
    %189 = vector.shape_cast %168 : vector<1x32xf32> to vector<1x1x32xf32>
    %190 = vector.broadcast %189 : vector<1x1x32xf32> to vector<1x16x32xf32>
    %191 = arith.mulf %188, %190 : vector<1x16x32xf32>
    %192 = vector.shape_cast %170 : vector<1x32xf32> to vector<1x1x32xf32>
    %193 = vector.broadcast %192 : vector<1x1x32xf32> to vector<1x16x32xf32>
    %194 = arith.addf %191, %193 : vector<1x16x32xf32>
    %c0_133 = arith.constant 0 : index
    %c0_134 = arith.constant 0 : index
    %c0_135 = arith.constant 0 : index
    %195 = vector.load %arg11[%c0_133, %c0_134, %c0_135] : memref<2x32x16xf32, #tpu.memory_space<vmem>>, vector<1x32x16xf32>
    %196 = vector.shape_cast %195 : vector<1x32x16xf32> to vector<32x16xf32>
    %cst_136 = arith.constant dense<0.000000e+00> : vector<1x16x16xf32>
    %197 = tpu.matmul %194, %196, %cst_136 {dimension_numbers = #tpu.dot_dimension_numbers<[2], [0], [0, 1], [1], [0, 0, 0, 1, 1, 1], [], []>} : vector<1x16x32xf32>, vector<32x16xf32>, vector<1x16x16xf32> -> vector<1x16x16xf32>
    %c0_137 = arith.constant 0 : index
    %c0_138 = arith.constant 0 : index
    %c0_139 = arith.constant 0 : index
    %198 = vector.load %arg12[%c0_137, %c0_138, %c0_139] : memref<2x1x16xf32, #tpu.memory_space<vmem>>, vector<1x1x16xf32>
    %199 = vector.shape_cast %198 : vector<1x1x16xf32> to vector<1x16xf32>
    %200 = vector.shape_cast %199 : vector<1x16xf32> to vector<1x1x16xf32>
    %201 = vector.broadcast %200 : vector<1x1x16xf32> to vector<1x16x16xf32>
    %202 = arith.addf %197, %201 : vector<1x16x16xf32>
    %cst_140 = arith.constant 0.000000e+00 : f32
    %203 = vector.broadcast %cst_140 : f32 to vector<1x16x16xf32>
    %204 = arith.maximumf %202, %203 : vector<1x16x16xf32>
    %c0_141 = arith.constant 0 : index
    %c0_142 = arith.constant 0 : index
    %c0_143 = arith.constant 0 : index
    %205 = vector.load %arg13[%c0_141, %c0_142, %c0_143] : memref<2x16x32xf32, #tpu.memory_space<vmem>>, vector<1x16x32xf32>
    %206 = vector.shape_cast %205 : vector<1x16x32xf32> to vector<16x32xf32>
    %cst_144 = arith.constant dense<0.000000e+00> : vector<1x16x32xf32>
    %207 = tpu.matmul %204, %206, %cst_144 {dimension_numbers = #tpu.dot_dimension_numbers<[2], [0], [0, 1], [1], [0, 0, 0, 1, 1, 1], [], []>} : vector<1x16x16xf32>, vector<16x32xf32>, vector<1x16x32xf32> -> vector<1x16x32xf32>
    %c0_145 = arith.constant 0 : index
    %c0_146 = arith.constant 0 : index
    %c0_147 = arith.constant 0 : index
    %208 = vector.load %arg14[%c0_145, %c0_146, %c0_147] : memref<2x1x32xf32, #tpu.memory_space<vmem>>, vector<1x1x32xf32>
    %209 = vector.shape_cast %208 : vector<1x1x32xf32> to vector<1x32xf32>
    %210 = vector.shape_cast %209 : vector<1x32xf32> to vector<1x1x32xf32>
    %211 = vector.broadcast %210 : vector<1x1x32xf32> to vector<1x16x32xf32>
    %212 = arith.addf %207, %211 : vector<1x16x32xf32>
    %213 = arith.addf %194, %212 : vector<1x16x32xf32>
    %c0_148 = arith.constant 0 : index
    %c0_149 = arith.constant 0 : index
    %c0_150 = arith.constant 0 : index
    %214 = vector.load %arg15[%c0_148, %c0_149, %c0_150] : memref<2x1x32xf32, #tpu.memory_space<vmem>>, vector<1x1x32xf32>
    %215 = vector.shape_cast %214 : vector<1x1x32xf32> to vector<1x32xf32>
    %c0_151 = arith.constant 0 : index
    %c0_152 = arith.constant 0 : index
    %c0_153 = arith.constant 0 : index
    %216 = vector.load %arg16[%c0_151, %c0_152, %c0_153] : memref<2x1x32xf32, #tpu.memory_space<vmem>>, vector<1x1x32xf32>
    %217 = vector.shape_cast %216 : vector<1x1x32xf32> to vector<1x32xf32>
    %cst_154 = arith.constant dense<0.000000e+00> : vector<1x16xf32>
    %218 = vector.multi_reduction <add>, %213, %cst_154 [2] : vector<1x16x32xf32> to vector<1x16xf32>
    %219 = vector.shape_cast %218 : vector<1x16xf32> to vector<1x16x1xf32>
    %cst_155 = arith.constant 3.200000e+01 : f32
    %220 = vector.broadcast %cst_155 : f32 to vector<1x16x1xf32>
    %221 = arith.divf %219, %220 : vector<1x16x1xf32>
    %222 = vector.broadcast %221 : vector<1x16x1xf32> to vector<1x16x32xf32>
    %223 = arith.subf %213, %222 : vector<1x16x32xf32>
    %224 = arith.mulf %223, %223 : vector<1x16x32xf32>
    %cst_156 = arith.constant dense<0.000000e+00> : vector<1x16xf32>
    %225 = vector.multi_reduction <add>, %224, %cst_156 [2] : vector<1x16x32xf32> to vector<1x16xf32>
    %226 = vector.shape_cast %225 : vector<1x16xf32> to vector<1x16x1xf32>
    %cst_157 = arith.constant 3.200000e+01 : f32
    %227 = vector.broadcast %cst_157 : f32 to vector<1x16x1xf32>
    %228 = arith.divf %226, %227 : vector<1x16x1xf32>
    %229 = vector.broadcast %221 : vector<1x16x1xf32> to vector<1x16x32xf32>
    %230 = arith.subf %213, %229 : vector<1x16x32xf32>
    %cst_158 = arith.constant 9.99999974E-6 : f32
    %231 = vector.broadcast %cst_158 : f32 to vector<1x16x1xf32>
    %232 = arith.addf %228, %231 : vector<1x16x1xf32>
    %233 = math.rsqrt %232 : vector<1x16x1xf32>
    %234 = vector.broadcast %233 : vector<1x16x1xf32> to vector<1x16x32xf32>
    %235 = arith.mulf %230, %234 : vector<1x16x32xf32>
    %236 = vector.shape_cast %215 : vector<1x32xf32> to vector<1x1x32xf32>
    %237 = vector.broadcast %236 : vector<1x1x32xf32> to vector<1x16x32xf32>
    %238 = arith.mulf %235, %237 : vector<1x16x32xf32>
    %239 = vector.shape_cast %217 : vector<1x32xf32> to vector<1x1x32xf32>
    %240 = vector.broadcast %239 : vector<1x1x32xf32> to vector<1x16x32xf32>
    %241 = arith.addf %238, %240 : vector<1x16x32xf32>
    %cst_159 = arith.constant 0.000000e+00 : f32
    %242 = vector.broadcast %cst_159 : f32 to vector<1x16x32xf32>
    %c4 = arith.constant 4 : index
    %c0_160 = arith.constant 0 : index
    %c0_161 = arith.constant 0 : index
    %243 = vector.load %arg2[%c4, %c0_160, %c0_161] : memref<8x8x32xf32, #tpu.memory_space<vmem>>, vector<1x8x32xf32>
    %244 = vector.shape_cast %243 : vector<1x8x32xf32> to vector<8x32xf32>
    %cst_162 = arith.constant dense<0.000000e+00> : vector<1x16x8xf32>
    %245 = tpu.matmul %241, %244, %cst_162 {dimension_numbers = #tpu.dot_dimension_numbers<[2], [1], [0, 1], [0], [0, 0, 0, 1, 1, 0], [], []>} : vector<1x16x32xf32>, vector<8x32xf32>, vector<1x16x8xf32> -> vector<1x16x8xf32>
    %c4_163 = arith.constant 4 : index
    %c0_164 = arith.constant 0 : index
    %c0_165 = arith.constant 0 : index
    %246 = vector.load %arg3[%c4_163, %c0_164, %c0_165] : memref<8x8x32xf32, #tpu.memory_space<vmem>>, vector<1x8x32xf32>
    %247 = vector.shape_cast %246 : vector<1x8x32xf32> to vector<8x32xf32>
    %cst_166 = arith.constant dense<0.000000e+00> : vector<1x16x8xf32>
    %248 = tpu.matmul %241, %247, %cst_166 {dimension_numbers = #tpu.dot_dimension_numbers<[2], [1], [0, 1], [0], [0, 0, 0, 1, 1, 0], [], []>} : vector<1x16x32xf32>, vector<8x32xf32>, vector<1x16x8xf32> -> vector<1x16x8xf32>
    %c4_167 = arith.constant 4 : index
    %c0_168 = arith.constant 0 : index
    %c0_169 = arith.constant 0 : index
    %249 = vector.load %arg4[%c4_167, %c0_168, %c0_169] : memref<8x8x32xf32, #tpu.memory_space<vmem>>, vector<1x8x32xf32>
    %250 = vector.shape_cast %249 : vector<1x8x32xf32> to vector<8x32xf32>
    %cst_170 = arith.constant dense<0.000000e+00> : vector<1x16x8xf32>
    %251 = tpu.matmul %241, %250, %cst_170 {dimension_numbers = #tpu.dot_dimension_numbers<[2], [1], [0, 1], [0], [0, 0, 0, 1, 1, 0], [], []>} : vector<1x16x32xf32>, vector<8x32xf32>, vector<1x16x8xf32> -> vector<1x16x8xf32>
    "tpu.trace_start"() <{level = 10 : i32, message = "bqd,bkd->bqk"}> : () -> ()
    %cst_171 = arith.constant dense<0.000000e+00> : vector<1x16x16xf32>
    %252 = tpu.matmul %245, %248, %cst_171 {dimension_numbers = #tpu.dot_dimension_numbers<[2], [2], [1], [1], [0, 0, 0, 1, 1, 1], [0], [0]>} : vector<1x16x8xf32>, vector<1x16x8xf32>, vector<1x16x16xf32> -> vector<1x16x16xf32>
    "tpu.trace_stop"() : () -> ()
    %cst_172 = arith.constant 0.353553385 : f32
    %253 = vector.broadcast %cst_172 : f32 to vector<1x16x16xf32>
    %254 = arith.mulf %252, %253 : vector<1x16x16xf32>
    %cst_173 = arith.constant -1.000000e+30 : f32
    %255 = vector.broadcast %cst_173 : f32 to vector<1x16x16xf32>
    %256 = arith.select %3, %254, %255 : vector<1x16x16xi1>, vector<1x16x16xf32>
    %cst_174 = arith.constant dense<0xFF800000> : vector<1x16xf32>
    %257 = vector.multi_reduction <maximumf>, %256, %cst_174 [2] : vector<1x16x16xf32> to vector<1x16xf32>
    %258 = vector.shape_cast %257 : vector<1x16xf32> to vector<1x16x1xf32>
    %259 = vector.broadcast %258 : vector<1x16x1xf32> to vector<1x16x16xf32>
    %260 = arith.subf %256, %259 : vector<1x16x16xf32>
    %261 = math.exp %260 : vector<1x16x16xf32>
    %cst_175 = arith.constant dense<0.000000e+00> : vector<1x16xf32>
    %262 = vector.multi_reduction <add>, %261, %cst_175 [2] : vector<1x16x16xf32> to vector<1x16xf32>
    %263 = vector.shape_cast %262 : vector<1x16xf32> to vector<1x16x1xf32>
    %cst_176 = arith.constant 9.99999997E-7 : f32
    %264 = vector.broadcast %cst_176 : f32 to vector<1x16x1xf32>
    %265 = arith.addf %263, %264 : vector<1x16x1xf32>
    %266 = tpu.reciprocal %265 : vector<1x16x1xf32> -> vector<1x16x1xf32>
    %267 = vector.broadcast %266 : vector<1x16x1xf32> to vector<1x16x16xf32>
    %268 = arith.mulf %261, %267 : vector<1x16x16xf32>
    "tpu.trace_start"() <{level = 10 : i32, message = "bqk,bkd->bqd"}> : () -> ()
    %cst_177 = arith.constant dense<0.000000e+00> : vector<1x16x8xf32>
    %269 = tpu.matmul %268, %251, %cst_177 {dimension_numbers = #tpu.dot_dimension_numbers<[2], [1], [1], [2], [0, 0, 0, 1, 1, 2], [0], [0]>} : vector<1x16x16xf32>, vector<1x16x8xf32>, vector<1x16x8xf32> -> vector<1x16x8xf32>
    "tpu.trace_stop"() : () -> ()
    %c4_178 = arith.constant 4 : index
    %c0_179 = arith.constant 0 : index
    %c0_180 = arith.constant 0 : index
    %270 = vector.load %arg5[%c4_178, %c0_179, %c0_180] : memref<8x8x8xf32, #tpu.memory_space<vmem>>, vector<1x8x8xf32>
    %271 = vector.shape_cast %270 : vector<1x8x8xf32> to vector<8x8xf32>
    %cst_181 = arith.constant dense<0.000000e+00> : vector<1x16x8xf32>
    %272 = tpu.matmul %269, %271, %cst_181 {dimension_numbers = #tpu.dot_dimension_numbers<[2], [1], [0, 1], [0], [0, 0, 0, 1, 1, 0], [], []>} : vector<1x16x8xf32>, vector<8x8xf32>, vector<1x16x8xf32> -> vector<1x16x8xf32>
    %c4_182 = arith.constant 4 : index
    %c0_183 = arith.constant 0 : index
    %c0_184 = arith.constant 0 : index
    %273 = vector.load %arg6[%c4_182, %c0_183, %c0_184] : memref<8x1x8xf32, #tpu.memory_space<vmem>>, vector<1x1x8xf32>
    %274 = vector.shape_cast %273 : vector<1x1x8xf32> to vector<1x8xf32>
    %275 = vector.shape_cast %274 : vector<1x8xf32> to vector<1x1x8xf32>
    %276 = vector.broadcast %275 : vector<1x1x8xf32> to vector<1x16x8xf32>
    %277 = arith.addf %272, %276 : vector<1x16x8xf32>
    %c4_185 = arith.constant 4 : index
    %c0_186 = arith.constant 0 : index
    %c0_187 = arith.constant 0 : index
    %278 = vector.load %arg7[%c4_185, %c0_186, %c0_187] : memref<8x32x8xf32, #tpu.memory_space<vmem>>, vector<1x32x8xf32>
    %279 = vector.shape_cast %278 : vector<1x32x8xf32> to vector<32x8xf32>
    %cst_188 = arith.constant dense<0.000000e+00> : vector<1x16x32xf32>
    %280 = tpu.matmul %277, %279, %cst_188 {dimension_numbers = #tpu.dot_dimension_numbers<[2], [1], [0, 1], [0], [0, 0, 0, 1, 1, 0], [], []>} : vector<1x16x8xf32>, vector<32x8xf32>, vector<1x16x32xf32> -> vector<1x16x32xf32>
    %281 = arith.addf %242, %280 : vector<1x16x32xf32>
    %c5 = arith.constant 5 : index
    %c0_189 = arith.constant 0 : index
    %c0_190 = arith.constant 0 : index
    %282 = vector.load %arg2[%c5, %c0_189, %c0_190] : memref<8x8x32xf32, #tpu.memory_space<vmem>>, vector<1x8x32xf32>
    %283 = vector.shape_cast %282 : vector<1x8x32xf32> to vector<8x32xf32>
    %cst_191 = arith.constant dense<0.000000e+00> : vector<1x16x8xf32>
    %284 = tpu.matmul %241, %283, %cst_191 {dimension_numbers = #tpu.dot_dimension_numbers<[2], [1], [0, 1], [0], [0, 0, 0, 1, 1, 0], [], []>} : vector<1x16x32xf32>, vector<8x32xf32>, vector<1x16x8xf32> -> vector<1x16x8xf32>
    %c5_192 = arith.constant 5 : index
    %c0_193 = arith.constant 0 : index
    %c0_194 = arith.constant 0 : index
    %285 = vector.load %arg3[%c5_192, %c0_193, %c0_194] : memref<8x8x32xf32, #tpu.memory_space<vmem>>, vector<1x8x32xf32>
    %286 = vector.shape_cast %285 : vector<1x8x32xf32> to vector<8x32xf32>
    %cst_195 = arith.constant dense<0.000000e+00> : vector<1x16x8xf32>
    %287 = tpu.matmul %241, %286, %cst_195 {dimension_numbers = #tpu.dot_dimension_numbers<[2], [1], [0, 1], [0], [0, 0, 0, 1, 1, 0], [], []>} : vector<1x16x32xf32>, vector<8x32xf32>, vector<1x16x8xf32> -> vector<1x16x8xf32>
    %c5_196 = arith.constant 5 : index
    %c0_197 = arith.constant 0 : index
    %c0_198 = arith.constant 0 : index
    %288 = vector.load %arg4[%c5_196, %c0_197, %c0_198] : memref<8x8x32xf32, #tpu.memory_space<vmem>>, vector<1x8x32xf32>
    %289 = vector.shape_cast %288 : vector<1x8x32xf32> to vector<8x32xf32>
    %cst_199 = arith.constant dense<0.000000e+00> : vector<1x16x8xf32>
    %290 = tpu.matmul %241, %289, %cst_199 {dimension_numbers = #tpu.dot_dimension_numbers<[2], [1], [0, 1], [0], [0, 0, 0, 1, 1, 0], [], []>} : vector<1x16x32xf32>, vector<8x32xf32>, vector<1x16x8xf32> -> vector<1x16x8xf32>
    "tpu.trace_start"() <{level = 10 : i32, message = "bqd,bkd->bqk"}> : () -> ()
    %cst_200 = arith.constant dense<0.000000e+00> : vector<1x16x16xf32>
    %291 = tpu.matmul %284, %287, %cst_200 {dimension_numbers = #tpu.dot_dimension_numbers<[2], [2], [1], [1], [0, 0, 0, 1, 1, 1], [0], [0]>} : vector<1x16x8xf32>, vector<1x16x8xf32>, vector<1x16x16xf32> -> vector<1x16x16xf32>
    "tpu.trace_stop"() : () -> ()
    %cst_201 = arith.constant 0.353553385 : f32
    %292 = vector.broadcast %cst_201 : f32 to vector<1x16x16xf32>
    %293 = arith.mulf %291, %292 : vector<1x16x16xf32>
    %cst_202 = arith.constant -1.000000e+30 : f32
    %294 = vector.broadcast %cst_202 : f32 to vector<1x16x16xf32>
    %295 = arith.select %3, %293, %294 : vector<1x16x16xi1>, vector<1x16x16xf32>
    %cst_203 = arith.constant dense<0xFF800000> : vector<1x16xf32>
    %296 = vector.multi_reduction <maximumf>, %295, %cst_203 [2] : vector<1x16x16xf32> to vector<1x16xf32>
    %297 = vector.shape_cast %296 : vector<1x16xf32> to vector<1x16x1xf32>
    %298 = vector.broadcast %297 : vector<1x16x1xf32> to vector<1x16x16xf32>
    %299 = arith.subf %295, %298 : vector<1x16x16xf32>
    %300 = math.exp %299 : vector<1x16x16xf32>
    %cst_204 = arith.constant dense<0.000000e+00> : vector<1x16xf32>
    %301 = vector.multi_reduction <add>, %300, %cst_204 [2] : vector<1x16x16xf32> to vector<1x16xf32>
    %302 = vector.shape_cast %301 : vector<1x16xf32> to vector<1x16x1xf32>
    %cst_205 = arith.constant 9.99999997E-7 : f32
    %303 = vector.broadcast %cst_205 : f32 to vector<1x16x1xf32>
    %304 = arith.addf %302, %303 : vector<1x16x1xf32>
    %305 = tpu.reciprocal %304 : vector<1x16x1xf32> -> vector<1x16x1xf32>
    %306 = vector.broadcast %305 : vector<1x16x1xf32> to vector<1x16x16xf32>
    %307 = arith.mulf %300, %306 : vector<1x16x16xf32>
    "tpu.trace_start"() <{level = 10 : i32, message = "bqk,bkd->bqd"}> : () -> ()
    %cst_206 = arith.constant dense<0.000000e+00> : vector<1x16x8xf32>
    %308 = tpu.matmul %307, %290, %cst_206 {dimension_numbers = #tpu.dot_dimension_numbers<[2], [1], [1], [2], [0, 0, 0, 1, 1, 2], [0], [0]>} : vector<1x16x16xf32>, vector<1x16x8xf32>, vector<1x16x8xf32> -> vector<1x16x8xf32>
    "tpu.trace_stop"() : () -> ()
    %c5_207 = arith.constant 5 : index
    %c0_208 = arith.constant 0 : index
    %c0_209 = arith.constant 0 : index
    %309 = vector.load %arg5[%c5_207, %c0_208, %c0_209] : memref<8x8x8xf32, #tpu.memory_space<vmem>>, vector<1x8x8xf32>
    %310 = vector.shape_cast %309 : vector<1x8x8xf32> to vector<8x8xf32>
    %cst_210 = arith.constant dense<0.000000e+00> : vector<1x16x8xf32>
    %311 = tpu.matmul %308, %310, %cst_210 {dimension_numbers = #tpu.dot_dimension_numbers<[2], [1], [0, 1], [0], [0, 0, 0, 1, 1, 0], [], []>} : vector<1x16x8xf32>, vector<8x8xf32>, vector<1x16x8xf32> -> vector<1x16x8xf32>
    %c5_211 = arith.constant 5 : index
    %c0_212 = arith.constant 0 : index
    %c0_213 = arith.constant 0 : index
    %312 = vector.load %arg6[%c5_211, %c0_212, %c0_213] : memref<8x1x8xf32, #tpu.memory_space<vmem>>, vector<1x1x8xf32>
    %313 = vector.shape_cast %312 : vector<1x1x8xf32> to vector<1x8xf32>
    %314 = vector.shape_cast %313 : vector<1x8xf32> to vector<1x1x8xf32>
    %315 = vector.broadcast %314 : vector<1x1x8xf32> to vector<1x16x8xf32>
    %316 = arith.addf %311, %315 : vector<1x16x8xf32>
    %c5_214 = arith.constant 5 : index
    %c0_215 = arith.constant 0 : index
    %c0_216 = arith.constant 0 : index
    %317 = vector.load %arg7[%c5_214, %c0_215, %c0_216] : memref<8x32x8xf32, #tpu.memory_space<vmem>>, vector<1x32x8xf32>
    %318 = vector.shape_cast %317 : vector<1x32x8xf32> to vector<32x8xf32>
    %cst_217 = arith.constant dense<0.000000e+00> : vector<1x16x32xf32>
    %319 = tpu.matmul %316, %318, %cst_217 {dimension_numbers = #tpu.dot_dimension_numbers<[2], [1], [0, 1], [0], [0, 0, 0, 1, 1, 0], [], []>} : vector<1x16x8xf32>, vector<32x8xf32>, vector<1x16x32xf32> -> vector<1x16x32xf32>
    %320 = arith.addf %281, %319 : vector<1x16x32xf32>
    %c6 = arith.constant 6 : index
    %c0_218 = arith.constant 0 : index
    %c0_219 = arith.constant 0 : index
    %321 = vector.load %arg2[%c6, %c0_218, %c0_219] : memref<8x8x32xf32, #tpu.memory_space<vmem>>, vector<1x8x32xf32>
    %322 = vector.shape_cast %321 : vector<1x8x32xf32> to vector<8x32xf32>
    %cst_220 = arith.constant dense<0.000000e+00> : vector<1x16x8xf32>
    %323 = tpu.matmul %241, %322, %cst_220 {dimension_numbers = #tpu.dot_dimension_numbers<[2], [1], [0, 1], [0], [0, 0, 0, 1, 1, 0], [], []>} : vector<1x16x32xf32>, vector<8x32xf32>, vector<1x16x8xf32> -> vector<1x16x8xf32>
    %c6_221 = arith.constant 6 : index
    %c0_222 = arith.constant 0 : index
    %c0_223 = arith.constant 0 : index
    %324 = vector.load %arg3[%c6_221, %c0_222, %c0_223] : memref<8x8x32xf32, #tpu.memory_space<vmem>>, vector<1x8x32xf32>
    %325 = vector.shape_cast %324 : vector<1x8x32xf32> to vector<8x32xf32>
    %cst_224 = arith.constant dense<0.000000e+00> : vector<1x16x8xf32>
    %326 = tpu.matmul %241, %325, %cst_224 {dimension_numbers = #tpu.dot_dimension_numbers<[2], [1], [0, 1], [0], [0, 0, 0, 1, 1, 0], [], []>} : vector<1x16x32xf32>, vector<8x32xf32>, vector<1x16x8xf32> -> vector<1x16x8xf32>
    %c6_225 = arith.constant 6 : index
    %c0_226 = arith.constant 0 : index
    %c0_227 = arith.constant 0 : index
    %327 = vector.load %arg4[%c6_225, %c0_226, %c0_227] : memref<8x8x32xf32, #tpu.memory_space<vmem>>, vector<1x8x32xf32>
    %328 = vector.shape_cast %327 : vector<1x8x32xf32> to vector<8x32xf32>
    %cst_228 = arith.constant dense<0.000000e+00> : vector<1x16x8xf32>
    %329 = tpu.matmul %241, %328, %cst_228 {dimension_numbers = #tpu.dot_dimension_numbers<[2], [1], [0, 1], [0], [0, 0, 0, 1, 1, 0], [], []>} : vector<1x16x32xf32>, vector<8x32xf32>, vector<1x16x8xf32> -> vector<1x16x8xf32>
    "tpu.trace_start"() <{level = 10 : i32, message = "bqd,bkd->bqk"}> : () -> ()
    %cst_229 = arith.constant dense<0.000000e+00> : vector<1x16x16xf32>
    %330 = tpu.matmul %323, %326, %cst_229 {dimension_numbers = #tpu.dot_dimension_numbers<[2], [2], [1], [1], [0, 0, 0, 1, 1, 1], [0], [0]>} : vector<1x16x8xf32>, vector<1x16x8xf32>, vector<1x16x16xf32> -> vector<1x16x16xf32>
    "tpu.trace_stop"() : () -> ()
    %cst_230 = arith.constant 0.353553385 : f32
    %331 = vector.broadcast %cst_230 : f32 to vector<1x16x16xf32>
    %332 = arith.mulf %330, %331 : vector<1x16x16xf32>
    %cst_231 = arith.constant -1.000000e+30 : f32
    %333 = vector.broadcast %cst_231 : f32 to vector<1x16x16xf32>
    %334 = arith.select %3, %332, %333 : vector<1x16x16xi1>, vector<1x16x16xf32>
    %cst_232 = arith.constant dense<0xFF800000> : vector<1x16xf32>
    %335 = vector.multi_reduction <maximumf>, %334, %cst_232 [2] : vector<1x16x16xf32> to vector<1x16xf32>
    %336 = vector.shape_cast %335 : vector<1x16xf32> to vector<1x16x1xf32>
    %337 = vector.broadcast %336 : vector<1x16x1xf32> to vector<1x16x16xf32>
    %338 = arith.subf %334, %337 : vector<1x16x16xf32>
    %339 = math.exp %338 : vector<1x16x16xf32>
    %cst_233 = arith.constant dense<0.000000e+00> : vector<1x16xf32>
    %340 = vector.multi_reduction <add>, %339, %cst_233 [2] : vector<1x16x16xf32> to vector<1x16xf32>
    %341 = vector.shape_cast %340 : vector<1x16xf32> to vector<1x16x1xf32>
    %cst_234 = arith.constant 9.99999997E-7 : f32
    %342 = vector.broadcast %cst_234 : f32 to vector<1x16x1xf32>
    %343 = arith.addf %341, %342 : vector<1x16x1xf32>
    %344 = tpu.reciprocal %343 : vector<1x16x1xf32> -> vector<1x16x1xf32>
    %345 = vector.broadcast %344 : vector<1x16x1xf32> to vector<1x16x16xf32>
    %346 = arith.mulf %339, %345 : vector<1x16x16xf32>
    "tpu.trace_start"() <{level = 10 : i32, message = "bqk,bkd->bqd"}> : () -> ()
    %cst_235 = arith.constant dense<0.000000e+00> : vector<1x16x8xf32>
    %347 = tpu.matmul %346, %329, %cst_235 {dimension_numbers = #tpu.dot_dimension_numbers<[2], [1], [1], [2], [0, 0, 0, 1, 1, 2], [0], [0]>} : vector<1x16x16xf32>, vector<1x16x8xf32>, vector<1x16x8xf32> -> vector<1x16x8xf32>
    "tpu.trace_stop"() : () -> ()
    %c6_236 = arith.constant 6 : index
    %c0_237 = arith.constant 0 : index
    %c0_238 = arith.constant 0 : index
    %348 = vector.load %arg5[%c6_236, %c0_237, %c0_238] : memref<8x8x8xf32, #tpu.memory_space<vmem>>, vector<1x8x8xf32>
    %349 = vector.shape_cast %348 : vector<1x8x8xf32> to vector<8x8xf32>
    %cst_239 = arith.constant dense<0.000000e+00> : vector<1x16x8xf32>
    %350 = tpu.matmul %347, %349, %cst_239 {dimension_numbers = #tpu.dot_dimension_numbers<[2], [1], [0, 1], [0], [0, 0, 0, 1, 1, 0], [], []>} : vector<1x16x8xf32>, vector<8x8xf32>, vector<1x16x8xf32> -> vector<1x16x8xf32>
    %c6_240 = arith.constant 6 : index
    %c0_241 = arith.constant 0 : index
    %c0_242 = arith.constant 0 : index
    %351 = vector.load %arg6[%c6_240, %c0_241, %c0_242] : memref<8x1x8xf32, #tpu.memory_space<vmem>>, vector<1x1x8xf32>
    %352 = vector.shape_cast %351 : vector<1x1x8xf32> to vector<1x8xf32>
    %353 = vector.shape_cast %352 : vector<1x8xf32> to vector<1x1x8xf32>
    %354 = vector.broadcast %353 : vector<1x1x8xf32> to vector<1x16x8xf32>
    %355 = arith.addf %350, %354 : vector<1x16x8xf32>
    %c6_243 = arith.constant 6 : index
    %c0_244 = arith.constant 0 : index
    %c0_245 = arith.constant 0 : index
    %356 = vector.load %arg7[%c6_243, %c0_244, %c0_245] : memref<8x32x8xf32, #tpu.memory_space<vmem>>, vector<1x32x8xf32>
    %357 = vector.shape_cast %356 : vector<1x32x8xf32> to vector<32x8xf32>
    %cst_246 = arith.constant dense<0.000000e+00> : vector<1x16x32xf32>
    %358 = tpu.matmul %355, %357, %cst_246 {dimension_numbers = #tpu.dot_dimension_numbers<[2], [1], [0, 1], [0], [0, 0, 0, 1, 1, 0], [], []>} : vector<1x16x8xf32>, vector<32x8xf32>, vector<1x16x32xf32> -> vector<1x16x32xf32>
    %359 = arith.addf %320, %358 : vector<1x16x32xf32>
    %c7 = arith.constant 7 : index
    %c0_247 = arith.constant 0 : index
    %c0_248 = arith.constant 0 : index
    %360 = vector.load %arg2[%c7, %c0_247, %c0_248] : memref<8x8x32xf32, #tpu.memory_space<vmem>>, vector<1x8x32xf32>
    %361 = vector.shape_cast %360 : vector<1x8x32xf32> to vector<8x32xf32>
    %cst_249 = arith.constant dense<0.000000e+00> : vector<1x16x8xf32>
    %362 = tpu.matmul %241, %361, %cst_249 {dimension_numbers = #tpu.dot_dimension_numbers<[2], [1], [0, 1], [0], [0, 0, 0, 1, 1, 0], [], []>} : vector<1x16x32xf32>, vector<8x32xf32>, vector<1x16x8xf32> -> vector<1x16x8xf32>
    %c7_250 = arith.constant 7 : index
    %c0_251 = arith.constant 0 : index
    %c0_252 = arith.constant 0 : index
    %363 = vector.load %arg3[%c7_250, %c0_251, %c0_252] : memref<8x8x32xf32, #tpu.memory_space<vmem>>, vector<1x8x32xf32>
    %364 = vector.shape_cast %363 : vector<1x8x32xf32> to vector<8x32xf32>
    %cst_253 = arith.constant dense<0.000000e+00> : vector<1x16x8xf32>
    %365 = tpu.matmul %241, %364, %cst_253 {dimension_numbers = #tpu.dot_dimension_numbers<[2], [1], [0, 1], [0], [0, 0, 0, 1, 1, 0], [], []>} : vector<1x16x32xf32>, vector<8x32xf32>, vector<1x16x8xf32> -> vector<1x16x8xf32>
    %c7_254 = arith.constant 7 : index
    %c0_255 = arith.constant 0 : index
    %c0_256 = arith.constant 0 : index
    %366 = vector.load %arg4[%c7_254, %c0_255, %c0_256] : memref<8x8x32xf32, #tpu.memory_space<vmem>>, vector<1x8x32xf32>
    %367 = vector.shape_cast %366 : vector<1x8x32xf32> to vector<8x32xf32>
    %cst_257 = arith.constant dense<0.000000e+00> : vector<1x16x8xf32>
    %368 = tpu.matmul %241, %367, %cst_257 {dimension_numbers = #tpu.dot_dimension_numbers<[2], [1], [0, 1], [0], [0, 0, 0, 1, 1, 0], [], []>} : vector<1x16x32xf32>, vector<8x32xf32>, vector<1x16x8xf32> -> vector<1x16x8xf32>
    "tpu.trace_start"() <{level = 10 : i32, message = "bqd,bkd->bqk"}> : () -> ()
    %cst_258 = arith.constant dense<0.000000e+00> : vector<1x16x16xf32>
    %369 = tpu.matmul %362, %365, %cst_258 {dimension_numbers = #tpu.dot_dimension_numbers<[2], [2], [1], [1], [0, 0, 0, 1, 1, 1], [0], [0]>} : vector<1x16x8xf32>, vector<1x16x8xf32>, vector<1x16x16xf32> -> vector<1x16x16xf32>
    "tpu.trace_stop"() : () -> ()
    %cst_259 = arith.constant 0.353553385 : f32
    %370 = vector.broadcast %cst_259 : f32 to vector<1x16x16xf32>
    %371 = arith.mulf %369, %370 : vector<1x16x16xf32>
    %cst_260 = arith.constant -1.000000e+30 : f32
    %372 = vector.broadcast %cst_260 : f32 to vector<1x16x16xf32>
    %373 = arith.select %3, %371, %372 : vector<1x16x16xi1>, vector<1x16x16xf32>
    %cst_261 = arith.constant dense<0xFF800000> : vector<1x16xf32>
    %374 = vector.multi_reduction <maximumf>, %373, %cst_261 [2] : vector<1x16x16xf32> to vector<1x16xf32>
    %375 = vector.shape_cast %374 : vector<1x16xf32> to vector<1x16x1xf32>
    %376 = vector.broadcast %375 : vector<1x16x1xf32> to vector<1x16x16xf32>
    %377 = arith.subf %373, %376 : vector<1x16x16xf32>
    %378 = math.exp %377 : vector<1x16x16xf32>
    %cst_262 = arith.constant dense<0.000000e+00> : vector<1x16xf32>
    %379 = vector.multi_reduction <add>, %378, %cst_262 [2] : vector<1x16x16xf32> to vector<1x16xf32>
    %380 = vector.shape_cast %379 : vector<1x16xf32> to vector<1x16x1xf32>
    %cst_263 = arith.constant 9.99999997E-7 : f32
    %381 = vector.broadcast %cst_263 : f32 to vector<1x16x1xf32>
    %382 = arith.addf %380, %381 : vector<1x16x1xf32>
    %383 = tpu.reciprocal %382 : vector<1x16x1xf32> -> vector<1x16x1xf32>
    %384 = vector.broadcast %383 : vector<1x16x1xf32> to vector<1x16x16xf32>
    %385 = arith.mulf %378, %384 : vector<1x16x16xf32>
    "tpu.trace_start"() <{level = 10 : i32, message = "bqk,bkd->bqd"}> : () -> ()
    %cst_264 = arith.constant dense<0.000000e+00> : vector<1x16x8xf32>
    %386 = tpu.matmul %385, %368, %cst_264 {dimension_numbers = #tpu.dot_dimension_numbers<[2], [1], [1], [2], [0, 0, 0, 1, 1, 2], [0], [0]>} : vector<1x16x16xf32>, vector<1x16x8xf32>, vector<1x16x8xf32> -> vector<1x16x8xf32>
    "tpu.trace_stop"() : () -> ()
    %c7_265 = arith.constant 7 : index
    %c0_266 = arith.constant 0 : index
    %c0_267 = arith.constant 0 : index
    %387 = vector.load %arg5[%c7_265, %c0_266, %c0_267] : memref<8x8x8xf32, #tpu.memory_space<vmem>>, vector<1x8x8xf32>
    %388 = vector.shape_cast %387 : vector<1x8x8xf32> to vector<8x8xf32>
    %cst_268 = arith.constant dense<0.000000e+00> : vector<1x16x8xf32>
    %389 = tpu.matmul %386, %388, %cst_268 {dimension_numbers = #tpu.dot_dimension_numbers<[2], [1], [0, 1], [0], [0, 0, 0, 1, 1, 0], [], []>} : vector<1x16x8xf32>, vector<8x8xf32>, vector<1x16x8xf32> -> vector<1x16x8xf32>
    %c7_269 = arith.constant 7 : index
    %c0_270 = arith.constant 0 : index
    %c0_271 = arith.constant 0 : index
    %390 = vector.load %arg6[%c7_269, %c0_270, %c0_271] : memref<8x1x8xf32, #tpu.memory_space<vmem>>, vector<1x1x8xf32>
    %391 = vector.shape_cast %390 : vector<1x1x8xf32> to vector<1x8xf32>
    %392 = vector.shape_cast %391 : vector<1x8xf32> to vector<1x1x8xf32>
    %393 = vector.broadcast %392 : vector<1x1x8xf32> to vector<1x16x8xf32>
    %394 = arith.addf %389, %393 : vector<1x16x8xf32>
    %c7_272 = arith.constant 7 : index
    %c0_273 = arith.constant 0 : index
    %c0_274 = arith.constant 0 : index
    %395 = vector.load %arg7[%c7_272, %c0_273, %c0_274] : memref<8x32x8xf32, #tpu.memory_space<vmem>>, vector<1x32x8xf32>
    %396 = vector.shape_cast %395 : vector<1x32x8xf32> to vector<32x8xf32>
    %cst_275 = arith.constant dense<0.000000e+00> : vector<1x16x32xf32>
    %397 = tpu.matmul %394, %396, %cst_275 {dimension_numbers = #tpu.dot_dimension_numbers<[2], [1], [0, 1], [0], [0, 0, 0, 1, 1, 0], [], []>} : vector<1x16x8xf32>, vector<32x8xf32>, vector<1x16x32xf32> -> vector<1x16x32xf32>
    %398 = arith.addf %359, %397 : vector<1x16x32xf32>
    %c1_276 = arith.constant 1 : index
    %c0_277 = arith.constant 0 : index
    %c0_278 = arith.constant 0 : index
    %399 = vector.load %arg8[%c1_276, %c0_277, %c0_278] : memref<2x1x32xf32, #tpu.memory_space<vmem>>, vector<1x1x32xf32>
    %400 = vector.shape_cast %399 : vector<1x1x32xf32> to vector<1x32xf32>
    %401 = vector.shape_cast %400 : vector<1x32xf32> to vector<1x1x32xf32>
    %402 = vector.broadcast %401 : vector<1x1x32xf32> to vector<1x16x32xf32>
    %403 = arith.addf %398, %402 : vector<1x16x32xf32>
    %404 = arith.addf %241, %403 : vector<1x16x32xf32>
    %c1_279 = arith.constant 1 : index
    %c0_280 = arith.constant 0 : index
    %c0_281 = arith.constant 0 : index
    %405 = vector.load %arg9[%c1_279, %c0_280, %c0_281] : memref<2x1x32xf32, #tpu.memory_space<vmem>>, vector<1x1x32xf32>
    %406 = vector.shape_cast %405 : vector<1x1x32xf32> to vector<1x32xf32>
    %c1_282 = arith.constant 1 : index
    %c0_283 = arith.constant 0 : index
    %c0_284 = arith.constant 0 : index
    %407 = vector.load %arg10[%c1_282, %c0_283, %c0_284] : memref<2x1x32xf32, #tpu.memory_space<vmem>>, vector<1x1x32xf32>
    %408 = vector.shape_cast %407 : vector<1x1x32xf32> to vector<1x32xf32>
    %cst_285 = arith.constant dense<0.000000e+00> : vector<1x16xf32>
    %409 = vector.multi_reduction <add>, %404, %cst_285 [2] : vector<1x16x32xf32> to vector<1x16xf32>
    %410 = vector.shape_cast %409 : vector<1x16xf32> to vector<1x16x1xf32>
    %cst_286 = arith.constant 3.200000e+01 : f32
    %411 = vector.broadcast %cst_286 : f32 to vector<1x16x1xf32>
    %412 = arith.divf %410, %411 : vector<1x16x1xf32>
    %413 = vector.broadcast %412 : vector<1x16x1xf32> to vector<1x16x32xf32>
    %414 = arith.subf %404, %413 : vector<1x16x32xf32>
    %415 = arith.mulf %414, %414 : vector<1x16x32xf32>
    %cst_287 = arith.constant dense<0.000000e+00> : vector<1x16xf32>
    %416 = vector.multi_reduction <add>, %415, %cst_287 [2] : vector<1x16x32xf32> to vector<1x16xf32>
    %417 = vector.shape_cast %416 : vector<1x16xf32> to vector<1x16x1xf32>
    %cst_288 = arith.constant 3.200000e+01 : f32
    %418 = vector.broadcast %cst_288 : f32 to vector<1x16x1xf32>
    %419 = arith.divf %417, %418 : vector<1x16x1xf32>
    %420 = vector.broadcast %412 : vector<1x16x1xf32> to vector<1x16x32xf32>
    %421 = arith.subf %404, %420 : vector<1x16x32xf32>
    %cst_289 = arith.constant 9.99999974E-6 : f32
    %422 = vector.broadcast %cst_289 : f32 to vector<1x16x1xf32>
    %423 = arith.addf %419, %422 : vector<1x16x1xf32>
    %424 = math.rsqrt %423 : vector<1x16x1xf32>
    %425 = vector.broadcast %424 : vector<1x16x1xf32> to vector<1x16x32xf32>
    %426 = arith.mulf %421, %425 : vector<1x16x32xf32>
    %427 = vector.shape_cast %406 : vector<1x32xf32> to vector<1x1x32xf32>
    %428 = vector.broadcast %427 : vector<1x1x32xf32> to vector<1x16x32xf32>
    %429 = arith.mulf %426, %428 : vector<1x16x32xf32>
    %430 = vector.shape_cast %408 : vector<1x32xf32> to vector<1x1x32xf32>
    %431 = vector.broadcast %430 : vector<1x1x32xf32> to vector<1x16x32xf32>
    %432 = arith.addf %429, %431 : vector<1x16x32xf32>
    %c1_290 = arith.constant 1 : index
    %c0_291 = arith.constant 0 : index
    %c0_292 = arith.constant 0 : index
    %433 = vector.load %arg11[%c1_290, %c0_291, %c0_292] : memref<2x32x16xf32, #tpu.memory_space<vmem>>, vector<1x32x16xf32>
    %434 = vector.shape_cast %433 : vector<1x32x16xf32> to vector<32x16xf32>
    %cst_293 = arith.constant dense<0.000000e+00> : vector<1x16x16xf32>
    %435 = tpu.matmul %432, %434, %cst_293 {dimension_numbers = #tpu.dot_dimension_numbers<[2], [0], [0, 1], [1], [0, 0, 0, 1, 1, 1], [], []>} : vector<1x16x32xf32>, vector<32x16xf32>, vector<1x16x16xf32> -> vector<1x16x16xf32>
    %c1_294 = arith.constant 1 : index
    %c0_295 = arith.constant 0 : index
    %c0_296 = arith.constant 0 : index
    %436 = vector.load %arg12[%c1_294, %c0_295, %c0_296] : memref<2x1x16xf32, #tpu.memory_space<vmem>>, vector<1x1x16xf32>
    %437 = vector.shape_cast %436 : vector<1x1x16xf32> to vector<1x16xf32>
    %438 = vector.shape_cast %437 : vector<1x16xf32> to vector<1x1x16xf32>
    %439 = vector.broadcast %438 : vector<1x1x16xf32> to vector<1x16x16xf32>
    %440 = arith.addf %435, %439 : vector<1x16x16xf32>
    %cst_297 = arith.constant 0.000000e+00 : f32
    %441 = vector.broadcast %cst_297 : f32 to vector<1x16x16xf32>
    %442 = arith.maximumf %440, %441 : vector<1x16x16xf32>
    %c1_298 = arith.constant 1 : index
    %c0_299 = arith.constant 0 : index
    %c0_300 = arith.constant 0 : index
    %443 = vector.load %arg13[%c1_298, %c0_299, %c0_300] : memref<2x16x32xf32, #tpu.memory_space<vmem>>, vector<1x16x32xf32>
    %444 = vector.shape_cast %443 : vector<1x16x32xf32> to vector<16x32xf32>
    %cst_301 = arith.constant dense<0.000000e+00> : vector<1x16x32xf32>
    %445 = tpu.matmul %442, %444, %cst_301 {dimension_numbers = #tpu.dot_dimension_numbers<[2], [0], [0, 1], [1], [0, 0, 0, 1, 1, 1], [], []>} : vector<1x16x16xf32>, vector<16x32xf32>, vector<1x16x32xf32> -> vector<1x16x32xf32>
    %c1_302 = arith.constant 1 : index
    %c0_303 = arith.constant 0 : index
    %c0_304 = arith.constant 0 : index
    %446 = vector.load %arg14[%c1_302, %c0_303, %c0_304] : memref<2x1x32xf32, #tpu.memory_space<vmem>>, vector<1x1x32xf32>
    %447 = vector.shape_cast %446 : vector<1x1x32xf32> to vector<1x32xf32>
    %448 = vector.shape_cast %447 : vector<1x32xf32> to vector<1x1x32xf32>
    %449 = vector.broadcast %448 : vector<1x1x32xf32> to vector<1x16x32xf32>
    %450 = arith.addf %445, %449 : vector<1x16x32xf32>
    %451 = arith.addf %432, %450 : vector<1x16x32xf32>
    %c1_305 = arith.constant 1 : index
    %c0_306 = arith.constant 0 : index
    %c0_307 = arith.constant 0 : index
    %452 = vector.load %arg15[%c1_305, %c0_306, %c0_307] : memref<2x1x32xf32, #tpu.memory_space<vmem>>, vector<1x1x32xf32>
    %453 = vector.shape_cast %452 : vector<1x1x32xf32> to vector<1x32xf32>
    %c1_308 = arith.constant 1 : index
    %c0_309 = arith.constant 0 : index
    %c0_310 = arith.constant 0 : index
    %454 = vector.load %arg16[%c1_308, %c0_309, %c0_310] : memref<2x1x32xf32, #tpu.memory_space<vmem>>, vector<1x1x32xf32>
    %455 = vector.shape_cast %454 : vector<1x1x32xf32> to vector<1x32xf32>
    %cst_311 = arith.constant dense<0.000000e+00> : vector<1x16xf32>
    %456 = vector.multi_reduction <add>, %451, %cst_311 [2] : vector<1x16x32xf32> to vector<1x16xf32>
    %457 = vector.shape_cast %456 : vector<1x16xf32> to vector<1x16x1xf32>
    %cst_312 = arith.constant 3.200000e+01 : f32
    %458 = vector.broadcast %cst_312 : f32 to vector<1x16x1xf32>
    %459 = arith.divf %457, %458 : vector<1x16x1xf32>
    %460 = vector.broadcast %459 : vector<1x16x1xf32> to vector<1x16x32xf32>
    %461 = arith.subf %451, %460 : vector<1x16x32xf32>
    %462 = arith.mulf %461, %461 : vector<1x16x32xf32>
    %cst_313 = arith.constant dense<0.000000e+00> : vector<1x16xf32>
    %463 = vector.multi_reduction <add>, %462, %cst_313 [2] : vector<1x16x32xf32> to vector<1x16xf32>
    %464 = vector.shape_cast %463 : vector<1x16xf32> to vector<1x16x1xf32>
    %cst_314 = arith.constant 3.200000e+01 : f32
    %465 = vector.broadcast %cst_314 : f32 to vector<1x16x1xf32>
    %466 = arith.divf %464, %465 : vector<1x16x1xf32>
    %467 = vector.broadcast %459 : vector<1x16x1xf32> to vector<1x16x32xf32>
    %468 = arith.subf %451, %467 : vector<1x16x32xf32>
    %cst_315 = arith.constant 9.99999974E-6 : f32
    %469 = vector.broadcast %cst_315 : f32 to vector<1x16x1xf32>
    %470 = arith.addf %466, %469 : vector<1x16x1xf32>
    %471 = math.rsqrt %470 : vector<1x16x1xf32>
    %472 = vector.broadcast %471 : vector<1x16x1xf32> to vector<1x16x32xf32>
    %473 = arith.mulf %468, %472 : vector<1x16x32xf32>
    %474 = vector.shape_cast %453 : vector<1x32xf32> to vector<1x1x32xf32>
    %475 = vector.broadcast %474 : vector<1x1x32xf32> to vector<1x16x32xf32>
    %476 = arith.mulf %473, %475 : vector<1x16x32xf32>
    %477 = vector.shape_cast %455 : vector<1x32xf32> to vector<1x1x32xf32>
    %478 = vector.broadcast %477 : vector<1x1x32xf32> to vector<1x16x32xf32>
    %479 = arith.addf %476, %478 : vector<1x16x32xf32>
    %c0_316 = arith.constant 0 : index
    %c0_317 = arith.constant 0 : index
    %480 = vector.load %arg17[%c0_316, %c0_317] : memref<1x32xf32, #tpu.memory_space<vmem>>, vector<1x32xf32>
    %c0_318 = arith.constant 0 : index
    %c0_319 = arith.constant 0 : index
    %481 = vector.load %arg18[%c0_318, %c0_319] : memref<1x32xf32, #tpu.memory_space<vmem>>, vector<1x32xf32>
    %cst_320 = arith.constant dense<0.000000e+00> : vector<1x16xf32>
    %482 = vector.multi_reduction <add>, %479, %cst_320 [2] : vector<1x16x32xf32> to vector<1x16xf32>
    %483 = vector.shape_cast %482 : vector<1x16xf32> to vector<1x16x1xf32>
    %cst_321 = arith.constant 3.200000e+01 : f32
    %484 = vector.broadcast %cst_321 : f32 to vector<1x16x1xf32>
    %485 = arith.divf %483, %484 : vector<1x16x1xf32>
    %486 = vector.broadcast %485 : vector<1x16x1xf32> to vector<1x16x32xf32>
    %487 = arith.subf %479, %486 : vector<1x16x32xf32>
    %488 = arith.mulf %487, %487 : vector<1x16x32xf32>
    %cst_322 = arith.constant dense<0.000000e+00> : vector<1x16xf32>
    %489 = vector.multi_reduction <add>, %488, %cst_322 [2] : vector<1x16x32xf32> to vector<1x16xf32>
    %490 = vector.shape_cast %489 : vector<1x16xf32> to vector<1x16x1xf32>
    %cst_323 = arith.constant 3.200000e+01 : f32
    %491 = vector.broadcast %cst_323 : f32 to vector<1x16x1xf32>
    %492 = arith.divf %490, %491 : vector<1x16x1xf32>
    %493 = vector.broadcast %485 : vector<1x16x1xf32> to vector<1x16x32xf32>
    %494 = arith.subf %479, %493 : vector<1x16x32xf32>
    %cst_324 = arith.constant 9.99999974E-6 : f32
    %495 = vector.broadcast %cst_324 : f32 to vector<1x16x1xf32>
    %496 = arith.addf %492, %495 : vector<1x16x1xf32>
    %497 = math.rsqrt %496 : vector<1x16x1xf32>
    %498 = vector.broadcast %497 : vector<1x16x1xf32> to vector<1x16x32xf32>
    %499 = arith.mulf %494, %498 : vector<1x16x32xf32>
    %500 = vector.shape_cast %480 : vector<1x32xf32> to vector<1x1x32xf32>
    %501 = vector.broadcast %500 : vector<1x1x32xf32> to vector<1x16x32xf32>
    %502 = arith.mulf %499, %501 : vector<1x16x32xf32>
    %503 = vector.shape_cast %481 : vector<1x32xf32> to vector<1x1x32xf32>
    %504 = vector.broadcast %503 : vector<1x1x32xf32> to vector<1x16x32xf32>
    %505 = arith.addf %502, %504 : vector<1x16x32xf32>
    %c0_325 = arith.constant 0 : index
    %c0_326 = arith.constant 0 : index
    %506 = vector.load %arg19[%c0_325, %c0_326] : memref<32x64xf32, #tpu.memory_space<vmem>>, vector<32x64xf32>
    %cst_327 = arith.constant dense<0.000000e+00> : vector<1x16x64xf32>
    %507 = tpu.matmul %505, %506, %cst_327 {dimension_numbers = #tpu.dot_dimension_numbers<[2], [0], [0, 1], [1], [0, 0, 0, 1, 1, 1], [], []>} : vector<1x16x32xf32>, vector<32x64xf32>, vector<1x16x64xf32> -> vector<1x16x64xf32>
    %c0_328 = arith.constant 0 : index
    %c0_329 = arith.constant 0 : index
    %508 = vector.load %arg20[%c0_328, %c0_329] : memref<1x64xf32, #tpu.memory_space<vmem>>, vector<1x64xf32>
    %509 = vector.shape_cast %508 : vector<1x64xf32> to vector<1x1x64xf32>
    %510 = vector.broadcast %509 : vector<1x1x64xf32> to vector<1x16x64xf32>
    %511 = arith.addf %507, %510 : vector<1x16x64xf32>
    %c0_330 = arith.constant 0 : index
    %c0_331 = arith.constant 0 : index
    %c0_332 = arith.constant 0 : index
    %512 = vector.load %arg21[%c0_330, %c0_331, %c0_332] : memref<1x16x64xf32, #tpu.memory_space<vmem>>, vector<1x16x64xf32>
    tpu.vector_store %arg21[%c0_330, %c0_331, %c0_332], %511 {strides = array<i32>} : memref<1x16x64xf32, #tpu.memory_space<vmem>>, vector<1x16x64xf32>,
    return
  }
  func.func @transform_0(%arg0: i32) -> (i32, i32, i32) {
    %c0_i32 = arith.constant 0 : i32
    %c0_i32_0 = arith.constant 0 : i32
    %c0_i32_1 = arith.constant 0 : i32
    return %arg0, %c0_i32, %c0_i32_0 : i32, i32, i32
  }
  func.func @transform_1(%arg0: i32) -> (i32, i32, i32) {
    %c0_i32 = arith.constant 0 : i32
    %c0_i32_0 = arith.constant 0 : i32
    %c0_i32_1 = arith.constant 0 : i32
    %c0_i32_2 = arith.constant 0 : i32
    return %c0_i32, %c0_i32_0, %c0_i32_1 : i32, i32, i32
  }
  func.func @transform_2(%arg0: i32) -> (i32, i32, i32) {
    %c0_i32 = arith.constant 0 : i32
    %c0_i32_0 = arith.constant 0 : i32
    %c0_i32_1 = arith.constant 0 : i32
    %c0_i32_2 = arith.constant 0 : i32
    return %c0_i32, %c0_i32_0, %c0_i32_1 : i32, i32, i32
  }
  func.func @transform_3(%arg0: i32) -> (i32, i32, i32) {
    %c0_i32 = arith.constant 0 : i32
    %c0_i32_0 = arith.constant 0 : i32
    %c0_i32_1 = arith.constant 0 : i32
    %c0_i32_2 = arith.constant 0 : i32
    return %c0_i32, %c0_i32_0, %c0_i32_1 : i32, i32, i32
  }
  func.func @transform_4(%arg0: i32) -> (i32, i32, i32) {
    %c0_i32 = arith.constant 0 : i32
    %c0_i32_0 = arith.constant 0 : i32
    %c0_i32_1 = arith.constant 0 : i32
    %c0_i32_2 = arith.constant 0 : i32
    return %c0_i32, %c0_i32_0, %c0_i32_1 : i32, i32, i32
  }
  func.func @transform_5(%arg0: i32) -> (i32, i32, i32) {
    %c0_i32 = arith.constant 0 : i32
    %c0_i32_0 = arith.constant 0 : i32
    %c0_i32_1 = arith.constant 0 : i32
    %c0_i32_2 = arith.constant 0 : i32
    return %c0_i32, %c0_i32_0, %c0_i32_1 : i32, i32, i32
  }
  func.func @transform_6(%arg0: i32) -> (i32, i32, i32) {
    %c0_i32 = arith.constant 0 : i32
    %c0_i32_0 = arith.constant 0 : i32
    %c0_i32_1 = arith.constant 0 : i32
    %c0_i32_2 = arith.constant 0 : i32
    return %c0_i32, %c0_i32_0, %c0_i32_1 : i32, i32, i32
  }
  func.func @transform_7(%arg0: i32) -> (i32, i32, i32) {
    %c0_i32 = arith.constant 0 : i32
    %c0_i32_0 = arith.constant 0 : i32
    %c0_i32_1 = arith.constant 0 : i32
    %c0_i32_2 = arith.constant 0 : i32
    return %c0_i32, %c0_i32_0, %c0_i32_1 : i32, i32, i32
  }
  func.func @transform_8(%arg0: i32) -> (i32, i32, i32) {
    %c0_i32 = arith.constant 0 : i32
    %c0_i32_0 = arith.constant 0 : i32
    %c0_i32_1 = arith.constant 0 : i32
    %c0_i32_2 = arith.constant 0 : i32
    return %c0_i32, %c0_i32_0, %c0_i32_1 : i32, i32, i32
  }
  func.func @transform_9(%arg0: i32) -> (i32, i32, i32) {
    %c0_i32 = arith.constant 0 : i32
    %c0_i32_0 = arith.constant 0 : i32
    %c0_i32_1 = arith.constant 0 : i32
    %c0_i32_2 = arith.constant 0 : i32
    return %c0_i32, %c0_i32_0, %c0_i32_1 : i32, i32, i32
  }
  func.func @transform_10(%arg0: i32) -> (i32, i32, i32) {
    %c0_i32 = arith.constant 0 : i32
    %c0_i32_0 = arith.constant 0 : i32
    %c0_i32_1 = arith.constant 0 : i32
    %c0_i32_2 = arith.constant 0 : i32
    return %c0_i32, %c0_i32_0, %c0_i32_1 : i32, i32, i32
  }
  func.func @transform_11(%arg0: i32) -> (i32, i32, i32) {
    %c0_i32 = arith.constant 0 : i32
    %c0_i32_0 = arith.constant 0 : i32
    %c0_i32_1 = arith.constant 0 : i32
    %c0_i32_2 = arith.constant 0 : i32
    return %c0_i32, %c0_i32_0, %c0_i32_1 : i32, i32, i32
  }
  func.func @transform_12(%arg0: i32) -> (i32, i32, i32) {
    %c0_i32 = arith.constant 0 : i32
    %c0_i32_0 = arith.constant 0 : i32
    %c0_i32_1 = arith.constant 0 : i32
    %c0_i32_2 = arith.constant 0 : i32
    return %c0_i32, %c0_i32_0, %c0_i32_1 : i32, i32, i32
  }
  func.func @transform_13(%arg0: i32) -> (i32, i32, i32) {
    %c0_i32 = arith.constant 0 : i32
    %c0_i32_0 = arith.constant 0 : i32
    %c0_i32_1 = arith.constant 0 : i32
    %c0_i32_2 = arith.constant 0 : i32
    return %c0_i32, %c0_i32_0, %c0_i32_1 : i32, i32, i32
  }
  func.func @transform_14(%arg0: i32) -> (i32, i32, i32) {
    %c0_i32 = arith.constant 0 : i32
    %c0_i32_0 = arith.constant 0 : i32
    %c0_i32_1 = arith.constant 0 : i32
    %c0_i32_2 = arith.constant 0 : i32
    return %c0_i32, %c0_i32_0, %c0_i32_1 : i32, i32, i32
  }
  func.func @transform_15(%arg0: i32) -> (i32, i32, i32) {
    %c0_i32 = arith.constant 0 : i32
    %c0_i32_0 = arith.constant 0 : i32
    %c0_i32_1 = arith.constant 0 : i32
    %c0_i32_2 = arith.constant 0 : i32
    return %c0_i32, %c0_i32_0, %c0_i32_1 : i32, i32, i32
  }
  func.func @transform_16(%arg0: i32) -> (i32, i32) {
    %c0_i32 = arith.constant 0 : i32
    %c0_i32_0 = arith.constant 0 : i32
    %c0_i32_1 = arith.constant 0 : i32
    return %c0_i32, %c0_i32_0 : i32, i32
  }
  func.func @transform_17(%arg0: i32) -> (i32, i32) {
    %c0_i32 = arith.constant 0 : i32
    %c0_i32_0 = arith.constant 0 : i32
    %c0_i32_1 = arith.constant 0 : i32
    return %c0_i32, %c0_i32_0 : i32, i32
  }
  func.func @transform_18(%arg0: i32) -> (i32, i32) {
    %c0_i32 = arith.constant 0 : i32
    %c0_i32_0 = arith.constant 0 : i32
    %c0_i32_1 = arith.constant 0 : i32
    return %c0_i32, %c0_i32_0 : i32, i32
  }
  func.func @transform_19(%arg0: i32) -> (i32, i32) {
    %c0_i32 = arith.constant 0 : i32
    %c0_i32_0 = arith.constant 0 : i32
    %c0_i32_1 = arith.constant 0 : i32
    return %c0_i32, %c0_i32_0 : i32, i32
  }
  func.func @transform_20(%arg0: i32) -> (i32, i32, i32) {
    %c0_i32 = arith.constant 0 : i32
    %c0_i32_0 = arith.constant 0 : i32
    %c0_i32_1 = arith.constant 0 : i32
    return %arg0, %c0_i32, %c0_i32_0 : i32, i32, i32
  }
}

</mosaic_0001>

<llo_original>
// kernel: gpt_forward.1
$region0: #{gpt_forward.1}
  #allocation0 [shape = 'u32[]', space=smem, size = 0x4, offset = 0x4, fixed_abs, tag = 'smem constant byte address 0x4 - core index']
  #allocation1 [shape = 'u32[144,128]{1,0:T(1,128)}', space=vmem, size = 0x12000, scoped, tag = 'internal scratch']
  %s0 = inlined_call_operand.vmem [shape: f32[2,16,32], index: 0, kind: input, shape index: {}]
  %s1 = inlined_call_operand.vmem [shape: f32[8,8,32], index: 1, kind: input, shape index: {}]
  %s2 = inlined_call_operand.vmem [shape: f32[8,8,32], index: 2, kind: input, shape index: {}]
  %s3 = inlined_call_operand.vmem [shape: f32[8,8,32], index: 3, kind: input, shape index: {}]
  %s4 = inlined_call_operand.vmem [shape: f32[8,8,8], index: 4, kind: input, shape index: {}]
  %s5 = inlined_call_operand.vmem [shape: f32[8,1,8], index: 5, kind: input, shape index: {}]
  %s6 = inlined_call_operand.vmem [shape: f32[8,32,8], index: 6, kind: input, shape index: {}]
  %s7 = inlined_call_operand.vmem [shape: f32[2,1,32], index: 7, kind: input, shape index: {}]
  %s8 = inlined_call_operand.vmem [shape: f32[2,1,32], index: 8, kind: input, shape index: {}]
  %s9 = inlined_call_operand.vmem [shape: f32[2,1,32], index: 9, kind: input, shape index: {}]
  %s10 = inlined_call_operand.vmem [shape: f32[2,32,16], index: 10, kind: input, shape index: {}]
  %s11 = inlined_call_operand.vmem [shape: f32[2,1,16], index: 11, kind: input, shape index: {}]
  %s12 = inlined_call_operand.vmem [shape: f32[2,16,32], index: 12, kind: input, shape index: {}]
  %s13 = inlined_call_operand.vmem [shape: f32[2,1,32], index: 13, kind: input, shape index: {}]
  %s14 = inlined_call_operand.vmem [shape: f32[2,1,32], index: 14, kind: input, shape index: {}]
  %s15 = inlined_call_operand.vmem [shape: f32[2,1,32], index: 15, kind: input, shape index: {}]
  %s16 = inlined_call_operand.vmem [shape: f32[1,32], index: 16, kind: input, shape index: {}]
  %s17 = inlined_call_operand.vmem [shape: f32[1,32], index: 17, kind: input, shape index: {}]
  %s18 = inlined_call_operand.vmem [shape: f32[32,64], index: 18, kind: input, shape index: {}]
  %s19 = inlined_call_operand.vmem [shape: f32[1,64], index: 19, kind: input, shape index: {}]
  %s20 = inlined_call_operand.hbm [shape: f32[2,16,64], index: 20, kind: output, shape index: {}]
  %s21 = sld [smem:[#allocation0]]
  $region113: #{gpt_forward.1} parent=0
    _
  %s23 = ssub.s32 1, %s21
  %s24 = scalar_select 0, %s23, %s21
  $region1: #{gpt_forward.1} parent=0
    #allocation2 [shape = 'u8[16384]{0}', space=vmem, size = 0x4000, scoped, tag = 'output window, operand 0']
    #allocation3 [shape = 's32[2]{0}', space=sflag, size = 0x8, scoped, tag = 'scoped memory for gpt_forward.1']
    %25 = vsyncpa [#allocation3], 0
    %s26 = scalar_lea.sflag [#allocation3], 1
    %27 = vsyncpa %s26, 0
    loop: start=0, step=1, limit=4
    $region2: #{gpt_forward.1} parent=1 // loop_pre_header
      _
    $region3: #{gpt_forward.1} parent=1 // loop_header
      %s29 = sphi 0, %s33
      %p30 = scmp.ge.s32.totalorder %s29, 4
      %s39 = sphi 0, %s41
      %s42 = sphi 0, %s39
      %s43 = sphi 0, %s42
      %s59 = sphi 0, %s43
      %s63 = sphi 0, %s63
      %s65 = sphi 0, %s63
      %s66 = sphi 0, %s65
      %s80 = sphi 0, %s66
      %s84 = sphi 0, %s84
      %s86 = sphi 0, %s84
      %s87 = sphi 0, %s86
      %s101 = sphi 0, %s87
      %s105 = sphi 0, %s105
      %s107 = sphi 0, %s105
      %s108 = sphi 0, %s107
      %s122 = sphi 0, %s108
      %s126 = sphi 0, %s126
      %s128 = sphi 0, %s126
      %s129 = sphi 0, %s128
      %s143 = sphi 0, %s129
      %s147 = sphi 0, %s147
      %s149 = sphi 0, %s147
      %s150 = sphi 0, %s149
      %s164 = sphi 0, %s150
      %s168 = sphi 0, %s168
      %s170 = sphi 0, %s168
      %s171 = sphi 0, %s170
      %s185 = sphi 0, %s171
      %s189 = sphi 0, %s189
      %s191 = sphi 0, %s189
      %s192 = sphi 0, %s191
      %s206 = sphi 0, %s192
      %s210 = sphi 0, %s210
      %s212 = sphi 0, %s210
      %s213 = sphi 0, %s212
      %s227 = sphi 0, %s213
      %s231 = sphi 0, %s231
      %s233 = sphi 0, %s231
      %s234 = sphi 0, %s233
      %s248 = sphi 0, %s234
      %s252 = sphi 0, %s252
      %s254 = sphi 0, %s252
      %s255 = sphi 0, %s254
      %s269 = sphi 0, %s255
      %s273 = sphi 0, %s273
      %s275 = sphi 0, %s273
      %s276 = sphi 0, %s275
      %s290 = sphi 0, %s276
      %s294 = sphi 0, %s294
      %s296 = sphi 0, %s294
      %s297 = sphi 0, %s296
      %s311 = sphi 0, %s297
      %s315 = sphi 0, %s315
      %s317 = sphi 0, %s315
      %s318 = sphi 0, %s317
      %s332 = sphi 0, %s318
      %s336 = sphi 0, %s336
      %s338 = sphi 0, %s336
      %s339 = sphi 0, %s338
      %s353 = sphi 0, %s339
      %s357 = sphi 0, %s357
      %s359 = sphi 0, %s357
      %s360 = sphi 0, %s359
      %s374 = sphi 0, %s360
      %s378 = sphi 0, %s378
      %s380 = sphi 0, %s378
      %s381 = sphi 0, %s380
      %s395 = sphi 0, %s381
      %s399 = sphi 0, %s399
      %s401 = sphi 0, %s399
      %s402 = sphi 0, %s401
      %s416 = sphi 0, %s402
      %s420 = sphi 0, %s420
      %s422 = sphi 0, %s420
      %s423 = sphi 0, %s422
      %s437 = sphi 0, %s423
      %s441 = sphi 0, %s441
      %s443 = sphi 0, %s441
      %s444 = sphi 0, %s443
      %s458 = sphi 0, %s444
      %s464 = sphi 0, %s466
      %s467 = sphi 0, %s464
      %s468 = sphi 0, %s467
      %s484 = sphi 0, %s468
    $region4: #{gpt_forward.1} parent=1 // loop_header_branch
      %32 = sbr.rel (%p30) target = $region8
    $region5: #{gpt_forward.1} parent=1 // loop_body
      %s34 = ssub.s32 %s29, 1
      %s35 = ssub.s32 %s29, 2
      %s36 = sadd.s32 %s29, 1
      %s37 = ssub.s32 %s29, %s36
      %p38 = scmp.eq.s32.totalorder %s37, 0
      %s40 = sadd.s32 %s39, 1
      %s41 = scalar_select %p38, %s39, %s40
      %p44 = pneg %p38
      %p45 = scmp.eq.s32.totalorder %s29, 1
      %p46 = por %p44, %p45
      %p47 = scmp.ne.s32.totalorder %s39, %s42
      %p48 = scmp.eq.s32.totalorder %s29, 0
      %p49 = por %p47, %p48
      %p50 = scmp.ne.s32.totalorder %s39, %s42
      %p51 = scmp.eq.s32.totalorder %s34, 1
      %p52 = por %p50, %p51
      %p53 = scmp.ne.s32.totalorder %s42, %s43
      %p54 = scmp.eq.s32.totalorder %s34, 0
      %p55 = por %p53, %p54
      %p56 = scmp.ne.s32.totalorder %s42, %s43
      %p57 = scmp.eq.s32.totalorder %s35, 1
      %p58 = por %p56, %p57
      %p60 = scmp.ne.s32.totalorder %s43, %s59
      %p61 = scmp.eq.s32.totalorder %s35, 0
      %p62 = por %p60, %p61
      %s64 = sadd.s32 %s63, 1
      %p67 = scmp.eq.s32.totalorder %s29, 1
      %p68 = scmp.ne.s32.totalorder %s63, %s65
      %p69 = scmp.eq.s32.totalorder %s29, 0
      %p70 = por %p68, %p69
      %p71 = scmp.ne.s32.totalorder %s63, %s65
      %p72 = scmp.eq.s32.totalorder %s34, 1
      %p73 = por %p71, %p72
      %p74 = scmp.ne.s32.totalorder %s65, %s66
      %p75 = scmp.eq.s32.totalorder %s34, 0
      %p76 = por %p74, %p75
      %p77 = scmp.ne.s32.totalorder %s65, %s66
      %p78 = scmp.eq.s32.totalorder %s35, 1
      %p79 = por %p77, %p78
      %p81 = scmp.ne.s32.totalorder %s66, %s80
      %p82 = scmp.eq.s32.totalorder %s35, 0
      %p83 = por %p81, %p82
      %s85 = sadd.s32 %s84, 1
      %p88 = scmp.eq.s32.totalorder %s29, 1
      %p89 = scmp.ne.s32.totalorder %s84, %s86
      %p90 = scmp.eq.s32.totalorder %s29, 0
      %p91 = por %p89, %p90
      %p92 = scmp.ne.s32.totalorder %s84, %s86
      %p93 = scmp.eq.s32.totalorder %s34, 1
      %p94 = por %p92, %p93
      %p95 = scmp.ne.s32.totalorder %s86, %s87
      %p96 = scmp.eq.s32.totalorder %s34, 0
      %p97 = por %p95, %p96
      %p98 = scmp.ne.s32.totalorder %s86, %s87
      %p99 = scmp.eq.s32.totalorder %s35, 1
      %p100 = por %p98, %p99
      %p102 = scmp.ne.s32.totalorder %s87, %s101
      %p103 = scmp.eq.s32.totalorder %s35, 0
      %p104 = por %p102, %p103
      %s106 = sadd.s32 %s105, 1
      %p109 = scmp.eq.s32.totalorder %s29, 1
      %p110 = scmp.ne.s32.totalorder %s105, %s107
      %p111 = scmp.eq.s32.totalorder %s29, 0
      %p112 = por %p110, %p111
      %p113 = scmp.ne.s32.totalorder %s105, %s107
      %p114 = scmp.eq.s32.totalorder %s34, 1
      %p115 = por %p113, %p114
      %p116 = scmp.ne.s32.totalorder %s107, %s108
      %p117 = scmp.eq.s32.totalorder %s34, 0
      %p118 = por %p116, %p117
      %p119 = scmp.ne.s32.totalorder %s107, %s108
      %p120 = scmp.eq.s32.totalorder %s35, 1
      %p121 = por %p119, %p120
      %p123 = scmp.ne.s32.totalorder %s108, %s122
      %p124 = scmp.eq.s32.totalorder %s35, 0
      %p125 = por %p123, %p124
      %s127 = sadd.s32 %s126, 1
      %p130 = scmp.eq.s32.totalorder %s29, 1
      %p131 = scmp.ne.s32.totalorder %s126, %s128
      %p132 = scmp.eq.s32.totalorder %s29, 0
      %p133 = por %p131, %p132
      %p134 = scmp.ne.s32.totalorder %s126, %s128
      %p135 = scmp.eq.s32.totalorder %s34, 1
      %p136 = por %p134, %p135
      %p137 = scmp.ne.s32.totalorder %s128, %s129
      %p138 = scmp.eq.s32.totalorder %s34, 0
      %p139 = por %p137, %p138
      %p140 = scmp.ne.s32.totalorder %s128, %s129
      %p141 = scmp.eq.s32.totalorder %s35, 1
      %p142 = por %p140, %p141
      %p144 = scmp.ne.s32.totalorder %s129, %s143
      %p145 = scmp.eq.s32.totalorder %s35, 0
      %p146 = por %p144, %p145
      %s148 = sadd.s32 %s147, 1
      %p151 = scmp.eq.s32.totalorder %s29, 1
      %p152 = scmp.ne.s32.totalorder %s147, %s149
      %p153 = scmp.eq.s32.totalorder %s29, 0
      %p154 = por %p152, %p153
      %p155 = scmp.ne.s32.totalorder %s147, %s149
      %p156 = scmp.eq.s32.totalorder %s34, 1
      %p157 = por %p155, %p156
      %p158 = scmp.ne.s32.totalorder %s149, %s150
      %p159 = scmp.eq.s32.totalorder %s34, 0
      %p160 = por %p158, %p159
      %p161 = scmp.ne.s32.totalorder %s149, %s150
      %p162 = scmp.eq.s32.totalorder %s35, 1
      %p163 = por %p161, %p162
      %p165 = scmp.ne.s32.totalorder %s150, %s164
      %p166 = scmp.eq.s32.totalorder %s35, 0
      %p167 = por %p165, %p166
      %s169 = sadd.s32 %s168, 1
      %p172 = scmp.eq.s32.totalorder %s29, 1
      %p173 = scmp.ne.s32.totalorder %s168, %s170
      %p174 = scmp.eq.s32.totalorder %s29, 0
      %p175 = por %p173, %p174
      %p176 = scmp.ne.s32.totalorder %s168, %s170
      %p177 = scmp.eq.s32.totalorder %s34, 1
      %p178 = por %p176, %p177
      %p179 = scmp.ne.s32.totalorder %s170, %s171
      %p180 = scmp.eq.s32.totalorder %s34, 0
      %p181 = por %p179, %p180
      %p182 = scmp.ne.s32.totalorder %s170, %s171
      %p183 = scmp.eq.s32.totalorder %s35, 1
      %p184 = por %p182, %p183
      %p186 = scmp.ne.s32.totalorder %s171, %s185
      %p187 = scmp.eq.s32.totalorder %s35, 0
      %p188 = por %p186, %p187
      %s190 = sadd.s32 %s189, 1
      %p193 = scmp.eq.s32.totalorder %s29, 1
      %p194 = scmp.ne.s32.totalorder %s189, %s191
      %p195 = scmp.eq.s32.totalorder %s29, 0
      %p196 = por %p194, %p195
      %p197 = scmp.ne.s32.totalorder %s189, %s191
      %p198 = scmp.eq.s32.totalorder %s34, 1
      %p199 = por %p197, %p198
      %p200 = scmp.ne.s32.totalorder %s191, %s192
      %p201 = scmp.eq.s32.totalorder %s34, 0
      %p202 = por %p200, %p201
      %p203 = scmp.ne.s32.totalorder %s191, %s192
      %p204 = scmp.eq.s32.totalorder %s35, 1
      %p205 = por %p203, %p204
      %p207 = scmp.ne.s32.totalorder %s192, %s206
      %p208 = scmp.eq.s32.totalorder %s35, 0
      %p209 = por %p207, %p208
      %s211 = sadd.s32 %s210, 1
      %p214 = scmp.eq.s32.totalorder %s29, 1
      %p215 = scmp.ne.s32.totalorder %s210, %s212
      %p216 = scmp.eq.s32.totalorder %s29, 0
      %p217 = por %p215, %p216
      %p218 = scmp.ne.s32.totalorder %s210, %s212
      %p219 = scmp.eq.s32.totalorder %s34, 1
      %p220 = por %p218, %p219
      %p221 = scmp.ne.s32.totalorder %s212, %s213
      %p222 = scmp.eq.s32.totalorder %s34, 0
      %p223 = por %p221, %p222
      %p224 = scmp.ne.s32.totalorder %s212, %s213
      %p225 = scmp.eq.s32.totalorder %s35, 1
      %p226 = por %p224, %p225
      %p228 = scmp.ne.s32.totalorder %s213, %s227
      %p229 = scmp.eq.s32.totalorder %s35, 0
      %p230 = por %p228, %p229
      %s232 = sadd.s32 %s231, 1
      %p235 = scmp.eq.s32.totalorder %s29, 1
      %p236 = scmp.ne.s32.totalorder %s231, %s233
      %p237 = scmp.eq.s32.totalorder %s29, 0
      %p238 = por %p236, %p237
      %p239 = scmp.ne.s32.totalorder %s231, %s233
      %p240 = scmp.eq.s32.totalorder %s34, 1
      %p241 = por %p239, %p240
      %p242 = scmp.ne.s32.totalorder %s233, %s234
      %p243 = scmp.eq.s32.totalorder %s34, 0
      %p244 = por %p242, %p243
      %p245 = scmp.ne.s32.totalorder %s233, %s234
      %p246 = scmp.eq.s32.totalorder %s35, 1
      %p247 = por %p245, %p246
      %p249 = scmp.ne.s32.totalorder %s234, %s248
      %p250 = scmp.eq.s32.totalorder %s35, 0
      %p251 = por %p249, %p250
      %s253 = sadd.s32 %s252, 1
      %p256 = scmp.eq.s32.totalorder %s29, 1
      %p257 = scmp.ne.s32.totalorder %s252, %s254
      %p258 = scmp.eq.s32.totalorder %s29, 0
      %p259 = por %p257, %p258
      %p260 = scmp.ne.s32.totalorder %s252, %s254
      %p261 = scmp.eq.s32.totalorder %s34, 1
      %p262 = por %p260, %p261
      %p263 = scmp.ne.s32.totalorder %s254, %s255
      %p264 = scmp.eq.s32.totalorder %s34, 0
      %p265 = por %p263, %p264
      %p266 = scmp.ne.s32.totalorder %s254, %s255
      %p267 = scmp.eq.s32.totalorder %s35, 1
      %p268 = por %p266, %p267
      %p270 = scmp.ne.s32.totalorder %s255, %s269
      %p271 = scmp.eq.s32.totalorder %s35, 0
      %p272 = por %p270, %p271
      %s274 = sadd.s32 %s273, 1
      %p277 = scmp.eq.s32.totalorder %s29, 1
      %p278 = scmp.ne.s32.totalorder %s273, %s275
      %p279 = scmp.eq.s32.totalorder %s29, 0
      %p280 = por %p278, %p279
      %p281 = scmp.ne.s32.totalorder %s273, %s275
      %p282 = scmp.eq.s32.totalorder %s34, 1
      %p283 = por %p281, %p282
      %p284 = scmp.ne.s32.totalorder %s275, %s276
      %p285 = scmp.eq.s32.totalorder %s34, 0
      %p286 = por %p284, %p285
      %p287 = scmp.ne.s32.totalorder %s275, %s276
      %p288 = scmp.eq.s32.totalorder %s35, 1
      %p289 = por %p287, %p288
      %p291 = scmp.ne.s32.totalorder %s276, %s290
      %p292 = scmp.eq.s32.totalorder %s35, 0
      %p293 = por %p291, %p292
      %s295 = sadd.s32 %s294, 1
      %p298 = scmp.eq.s32.totalorder %s29, 1
      %p299 = scmp.ne.s32.totalorder %s294, %s296
      %p300 = scmp.eq.s32.totalorder %s29, 0
      %p301 = por %p299, %p300
      %p302 = scmp.ne.s32.totalorder %s294, %s296
      %p303 = scmp.eq.s32.totalorder %s34, 1
      %p304 = por %p302, %p303
      %p305 = scmp.ne.s32.totalorder %s296, %s297
      %p306 = scmp.eq.s32.totalorder %s34, 0
      %p307 = por %p305, %p306
      %p308 = scmp.ne.s32.totalorder %s296, %s297
      %p309 = scmp.eq.s32.totalorder %s35, 1
      %p310 = por %p308, %p309
      %p312 = scmp.ne.s32.totalorder %s297, %s311
      %p313 = scmp.eq.s32.totalorder %s35, 0
      %p314 = por %p312, %p313
      %s316 = sadd.s32 %s315, 1
      %p319 = scmp.eq.s32.totalorder %s29, 1
      %p320 = scmp.ne.s32.totalorder %s315, %s317
      %p321 = scmp.eq.s32.totalorder %s29, 0
      %p322 = por %p320, %p321
      %p323 = scmp.ne.s32.totalorder %s315, %s317
      %p324 = scmp.eq.s32.totalorder %s34, 1
      %p325 = por %p323, %p324
      %p326 = scmp.ne.s32.totalorder %s317, %s318
      %p327 = scmp.eq.s32.totalorder %s34, 0
      %p328 = por %p326, %p327
      %p329 = scmp.ne.s32.totalorder %s317, %s318
      %p330 = scmp.eq.s32.totalorder %s35, 1
      %p331 = por %p329, %p330
      %p333 = scmp.ne.s32.totalorder %s318, %s332
      %p334 = scmp.eq.s32.totalorder %s35, 0
      %p335 = por %p333, %p334
      %s337 = sadd.s32 %s336, 1
      %p340 = scmp.eq.s32.totalorder %s29, 1
      %p341 = scmp.ne.s32.totalorder %s336, %s338
      %p342 = scmp.eq.s32.totalorder %s29, 0
      %p343 = por %p341, %p342
      %p344 = scmp.ne.s32.totalorder %s336, %s338
      %p345 = scmp.eq.s32.totalorder %s34, 1
      %p346 = por %p344, %p345
      %p347 = scmp.ne.s32.totalorder %s338, %s339
      %p348 = scmp.eq.s32.totalorder %s34, 0
      %p349 = por %p347, %p348
      %p350 = scmp.ne.s32.totalorder %s338, %s339
      %p351 = scmp.eq.s32.totalorder %s35, 1
      %p352 = por %p350, %p351
      %p354 = scmp.ne.s32.totalorder %s339, %s353
      %p355 = scmp.eq.s32.totalorder %s35, 0
      %p356 = por %p354, %p355
      %s358 = sadd.s32 %s357, 1
      %p361 = scmp.eq.s32.totalorder %s29, 1
      %p362 = scmp.ne.s32.totalorder %s357, %s359
      %p363 = scmp.eq.s32.totalorder %s29, 0
      %p364 = por %p362, %p363
      %p365 = scmp.ne.s32.totalorder %s357, %s359
      %p366 = scmp.eq.s32.totalorder %s34, 1
      %p367 = por %p365, %p366
      %p368 = scmp.ne.s32.totalorder %s359, %s360
      %p369 = scmp.eq.s32.totalorder %s34, 0
      %p370 = por %p368, %p369
      %p371 = scmp.ne.s32.totalorder %s359, %s360
      %p372 = scmp.eq.s32.totalorder %s35, 1
      %p373 = por %p371, %p372
      %p375 = scmp.ne.s32.totalorder %s360, %s374
      %p376 = scmp.eq.s32.totalorder %s35, 0
      %p377 = por %p375, %p376
      %s379 = sadd.s32 %s378, 1
      %p382 = scmp.eq.s32.totalorder %s29, 1
      %p383 = scmp.ne.s32.totalorder %s378, %s380
      %p384 = scmp.eq.s32.totalorder %s29, 0
      %p385 = por %p383, %p384
      %p386 = scmp.ne.s32.totalorder %s378, %s380
      %p387 = scmp.eq.s32.totalorder %s34, 1
      %p388 = por %p386, %p387
      %p389 = scmp.ne.s32.totalorder %s380, %s381
      %p390 = scmp.eq.s32.totalorder %s34, 0
      %p391 = por %p389, %p390
      %p392 = scmp.ne.s32.totalorder %s380, %s381
      %p393 = scmp.eq.s32.totalorder %s35, 1
      %p394 = por %p392, %p393
      %p396 = scmp.ne.s32.totalorder %s381, %s395
      %p397 = scmp.eq.s32.totalorder %s35, 0
      %p398 = por %p396, %p397
      %s400 = sadd.s32 %s399, 1
      %p403 = scmp.eq.s32.totalorder %s29, 1
      %p404 = scmp.ne.s32.totalorder %s399, %s401
      %p405 = scmp.eq.s32.totalorder %s29, 0
      %p406 = por %p404, %p405
      %p407 = scmp.ne.s32.totalorder %s399, %s401
      %p408 = scmp.eq.s32.totalorder %s34, 1
      %p409 = por %p407, %p408
      %p410 = scmp.ne.s32.totalorder %s401, %s402
      %p411 = scmp.eq.s32.totalorder %s34, 0
      %p412 = por %p410, %p411
      %p413 = scmp.ne.s32.totalorder %s401, %s402
      %p414 = scmp.eq.s32.totalorder %s35, 1
      %p415 = por %p413, %p414
      %p417 = scmp.ne.s32.totalorder %s402, %s416
      %p418 = scmp.eq.s32.totalorder %s35, 0
      %p419 = por %p417, %p418
      %s421 = sadd.s32 %s420, 1
      %p424 = scmp.eq.s32.totalorder %s29, 1
      %p425 = scmp.ne.s32.totalorder %s420, %s422
      %p426 = scmp.eq.s32.totalorder %s29, 0
      %p427 = por %p425, %p426
      %p428 = scmp.ne.s32.totalorder %s420, %s422
      %p429 = scmp.eq.s32.totalorder %s34, 1
      %p430 = por %p428, %p429
      %p431 = scmp.ne.s32.totalorder %s422, %s423
      %p432 = scmp.eq.s32.totalorder %s34, 0
      %p433 = por %p431, %p432
      %p434 = scmp.ne.s32.totalorder %s422, %s423
      %p435 = scmp.eq.s32.totalorder %s35, 1
      %p436 = por %p434, %p435
      %p438 = scmp.ne.s32.totalorder %s423, %s437
      %p439 = scmp.eq.s32.totalorder %s35, 0
      %p440 = por %p438, %p439
      %s442 = sadd.s32 %s441, 1
      %p445 = scmp.eq.s32.totalorder %s29, 1
      %p446 = scmp.ne.s32.totalorder %s441, %s443
      %p447 = scmp.eq.s32.totalorder %s29, 0
      %p448 = por %p446, %p447
      %p449 = scmp.ne.s32.totalorder %s441, %s443
      %p450 = scmp.eq.s32.totalorder %s34, 1
      %p451 = por %p449, %p450
      %p452 = scmp.ne.s32.totalorder %s443, %s444
      %p453 = scmp.eq.s32.totalorder %s34, 0
      %p454 = por %p452, %p453
      %p455 = scmp.ne.s32.totalorder %s443, %s444
      %p456 = scmp.eq.s32.totalorder %s35, 1
      %p457 = por %p455, %p456
      %p459 = scmp.ne.s32.totalorder %s444, %s458
      %p460 = scmp.eq.s32.totalorder %s35, 0
      %p461 = por %p459, %p460
      %s462 = ssub.s32 %s29, %s36
      %p463 = scmp.eq.s32.totalorder %s462, 0
      %s465 = sadd.s32 %s464, 1
      %s466 = scalar_select %p463, %s464, %s465
      %p469 = pneg %p463
      %p470 = scmp.eq.s32.totalorder %s29, 1
      %p471 = por %p469, %p470
      %p472 = scmp.ne.s32.totalorder %s464, %s467
      %p473 = scmp.eq.s32.totalorder %s29, 0
      %p474 = por %p472, %p473
      %p475 = scmp.ne.s32.totalorder %s464, %s467
      %p476 = scmp.eq.s32.totalorder %s34, 1
      %p477 = por %p475, %p476
      %p478 = scmp.ne.s32.totalorder %s467, %s468
      %p479 = scmp.eq.s32.totalorder %s34, 0
      %p480 = por %p478, %p479
      %p481 = scmp.ne.s32.totalorder %s467, %s468
      %p482 = scmp.eq.s32.totalorder %s35, 1
      %p483 = por %p481, %p482
      %p485 = scmp.ne.s32.totalorder %s468, %s484
      %p486 = scmp.eq.s32.totalorder %s35, 0
      %p487 = por %p485, %p486
      %p488 = scmp.le.s32.totalorder 1, %s29
      %p489 = scmp.lt.s32.totalorder %s29, 3
      %p490 = pnand %p488, %p489
      %p491 = pneg %p490
      // Predicated region
      $region9: #{gpt_forward.1} parent=5 // pred_check
        _
      $region10: #{gpt_forward.1} parent=5 // pred_check_branch
        %493 = sbr.rel (%p490) target = $region12
      $region11: #{gpt_forward.1} parent=5 // pred_region
        %s494 = ssub.s32 %s29, 1
        // Predicated region
        $region13: #{gpt_forward.1} parent=11 // pred_check
          %p495 = pneg %p76
        $region14: #{gpt_forward.1} parent=11 // pred_check_branch
          %497 = sbr.rel (%p495) target = $region16
        $region15: #{gpt_forward.1} parent=11 // pred_region
          _
        $region16: #{gpt_forward.1} parent=11 // pred_fallthru
          _
        // Predicated region
        $region17: #{gpt_forward.1} parent=11 // pred_check
          %p498 = pneg %p97
        $region18: #{gpt_forward.1} parent=11 // pred_check_branch
          %500 = sbr.rel (%p498) target = $region20
        $region19: #{gpt_forward.1} parent=11 // pred_region
          _
        $region20: #{gpt_forward.1} parent=11 // pred_fallthru
          _
        // Predicated region
        $region21: #{gpt_forward.1} parent=11 // pred_check
          %p501 = pneg %p118
        $region22: #{gpt_forward.1} parent=11 // pred_check_branch
          %503 = sbr.rel (%p501) target = $region24
        $region23: #{gpt_forward.1} parent=11 // pred_region
          _
        $region24: #{gpt_forward.1} parent=11 // pred_fallthru
          _
        // Predicated region
        $region25: #{gpt_forward.1} parent=11 // pred_check
          %p504 = pneg %p139
        $region26: #{gpt_forward.1} parent=11 // pred_check_branch
          %506 = sbr.rel (%p504) target = $region28
        $region27: #{gpt_forward.1} parent=11 // pred_region
          _
        $region28: #{gpt_forward.1} parent=11 // pred_fallthru
          _
        // Predicated region
        $region29: #{gpt_forward.1} parent=11 // pred_check
          %p507 = pneg %p160
        $region30: #{gpt_forward.1} parent=11 // pred_check_branch
          %509 = sbr.rel (%p507) target = $region32
        $region31: #{gpt_forward.1} parent=11 // pred_region
          _
        $region32: #{gpt_forward.1} parent=11 // pred_fallthru
          _
        // Predicated region
        $region33: #{gpt_forward.1} parent=11 // pred_check
          %p510 = pneg %p181
        $region34: #{gpt_forward.1} parent=11 // pred_check_branch
          %512 = sbr.rel (%p510) target = $region36
        $region35: #{gpt_forward.1} parent=11 // pred_region
          _
        $region36: #{gpt_forward.1} parent=11 // pred_fallthru
          _
        // Predicated region
        $region37: #{gpt_forward.1} parent=11 // pred_check
          %p513 = pneg %p202
        $region38: #{gpt_forward.1} parent=11 // pred_check_branch
          %515 = sbr.rel (%p513) target = $region40
        $region39: #{gpt_forward.1} parent=11 // pred_region
          _
        $region40: #{gpt_forward.1} parent=11 // pred_fallthru
          _
        // Predicated region
        $region41: #{gpt_forward.1} parent=11 // pred_check
          %p516 = pneg %p223
        $region42: #{gpt_forward.1} parent=11 // pred_check_branch
          %518 = sbr.rel (%p516) target = $region44
        $region43: #{gpt_forward.1} parent=11 // pred_region
          _
        $region44: #{gpt_forward.1} parent=11 // pred_fallthru
          _
        // Predicated region
        $region45: #{gpt_forward.1} parent=11 // pred_check
          %p519 = pneg %p244
        $region46: #{gpt_forward.1} parent=11 // pred_check_branch
          %521 = sbr.rel (%p519) target = $region48
        $region47: #{gpt_forward.1} parent=11 // pred_region
          _
        $region48: #{gpt_forward.1} parent=11 // pred_fallthru
          _
        // Predicated region
        $region49: #{gpt_forward.1} parent=11 // pred_check
          %p522 = pneg %p265
        $region50: #{gpt_forward.1} parent=11 // pred_check_branch
          %524 = sbr.rel (%p522) target = $region52
        $region51: #{gpt_forward.1} parent=11 // pred_region
          _
        $region52: #{gpt_forward.1} parent=11 // pred_fallthru
          _
        // Predicated region
        $region53: #{gpt_forward.1} parent=11 // pred_check
          %p525 = pneg %p286
        $region54: #{gpt_forward.1} parent=11 // pred_check_branch
          %527 = sbr.rel (%p525) target = $region56
        $region55: #{gpt_forward.1} parent=11 // pred_region
          _
        $region56: #{gpt_forward.1} parent=11 // pred_fallthru
          _
        // Predicated region
        $region57: #{gpt_forward.1} parent=11 // pred_check
          %p528 = pneg %p307
        $region58: #{gpt_forward.1} parent=11 // pred_check_branch
          %530 = sbr.rel (%p528) target = $region60
        $region59: #{gpt_forward.1} parent=11 // pred_region
          _
        $region60: #{gpt_forward.1} parent=11 // pred_fallthru
          _
        // Predicated region
        $region61: #{gpt_forward.1} parent=11 // pred_check
          %p531 = pneg %p328
        $region62: #{gpt_forward.1} parent=11 // pred_check_branch
          %533 = sbr.rel (%p531) target = $region64
        $region63: #{gpt_forward.1} parent=11 // pred_region
          _
        $region64: #{gpt_forward.1} parent=11 // pred_fallthru
          _
        // Predicated region
        $region65: #{gpt_forward.1} parent=11 // pred_check
          %p534 = pneg %p349
        $region66: #{gpt_forward.1} parent=11 // pred_check_branch
          %536 = sbr.rel (%p534) target = $region68
        $region67: #{gpt_forward.1} parent=11 // pred_region
          _
        $region68: #{gpt_forward.1} parent=11 // pred_fallthru
          _
        // Predicated region
        $region69: #{gpt_forward.1} parent=11 // pred_check
          %p537 = pneg %p370
        $region70: #{gpt_forward.1} parent=11 // pred_check_branch
          %539 = sbr.rel (%p537) target = $region72
        $region71: #{gpt_forward.1} parent=11 // pred_region
          _
        $region72: #{gpt_forward.1} parent=11 // pred_fallthru
          _
        // Predicated region
        $region73: #{gpt_forward.1} parent=11 // pred_check
          %p540 = pneg %p391
        $region74: #{gpt_forward.1} parent=11 // pred_check_branch
          %542 = sbr.rel (%p540) target = $region76
        $region75: #{gpt_forward.1} parent=11 // pred_region
          _
        $region76: #{gpt_forward.1} parent=11 // pred_fallthru
          _
        // Predicated region
        $region77: #{gpt_forward.1} parent=11 // pred_check
          %p543 = pneg %p412
        $region78: #{gpt_forward.1} parent=11 // pred_check_branch
          %545 = sbr.rel (%p543) target = $region80
        $region79: #{gpt_forward.1} parent=11 // pred_region
          _
        $region80: #{gpt_forward.1} parent=11 // pred_fallthru
          _
        // Predicated region
        $region81: #{gpt_forward.1} parent=11 // pred_check
          %p546 = pneg %p433
        $region82: #{gpt_forward.1} parent=11 // pred_check_branch
          %548 = sbr.rel (%p546) target = $region84
        $region83: #{gpt_forward.1} parent=11 // pred_region
          _
        $region84: #{gpt_forward.1} parent=11 // pred_fallthru
          _
        // Predicated region
        $region85: #{gpt_forward.1} parent=11 // pred_check
          %p549 = pneg %p454
        $region86: #{gpt_forward.1} parent=11 // pred_check_branch
          %551 = sbr.rel (%p549) target = $region88
        $region87: #{gpt_forward.1} parent=11 // pred_region
          _
        $region88: #{gpt_forward.1} parent=11 // pred_fallthru
          _
      $region12: #{gpt_forward.1} parent=5 // pred_fallthru
        _
      %p552 = scmp.lt.s32.totalorder %s29, 2
      // Predicated region
      $region89: #{gpt_forward.1} parent=5 // pred_check
        %p553 = pneg %p552
      $region90: #{gpt_forward.1} parent=5 // pred_check_branch
        %555 = sbr.rel (%p553) target = $region92
      $region91: #{gpt_forward.1} parent=5 // pred_region
        // Predicated region
        $region93: #{gpt_forward.1} parent=91 // pred_check
          %p556 = pneg %p49
        $region94: #{gpt_forward.1} parent=91 // pred_check_branch
          %558 = sbr.rel (%p556) target = $region96
        $region95: #{gpt_forward.1} parent=91 // pred_region
          %p559 = scmp.lt.s32.totalorder %s29, 1
          %s560 = scalar_select %p559, %s29, 1
          %s561 = smul.addr %s560, 2
          %s562 = smul.addr %s561, 8
          %s563 = scalar_lea.vmem %s0, %s562
        $region96: #{gpt_forward.1} parent=91 // pred_fallthru
          _
      $region92: #{gpt_forward.1} parent=5 // pred_fallthru
        _
      %p564 = scmp.le.s32.totalorder 1, %s29
      %p565 = scmp.lt.s32.totalorder %s29, 3
      %p566 = pnand %p564, %p565
      %p567 = pneg %p566
      // Predicated region
      $region97: #{gpt_forward.1} parent=5 // pred_check
        _
      $region98: #{gpt_forward.1} parent=5 // pred_check_branch
        %569 = sbr.rel (%p566) target = $region100
      $region99: #{gpt_forward.1} parent=5 // pred_region
        %s570 = ssub.s32 %s29, 1
        %p571 = scmp.lt.s32.totalorder %s34, 1
        %s572 = scalar_select %p571, %s34, 1
        %s573 = smul.addr %s572, 2
        %s574 = smul.addr %s573, 8
        %s575 = scalar_lea.vmem %s0, %s574
        %p576 = pneg %p55
        %p577 = pneg %p52
        %p578 = pneg %p76
        %p579 = pneg %p73
        %p580 = pneg %p97
        %p581 = pneg %p94
        %p582 = pneg %p118
        %p583 = pneg %p115
        %p584 = pneg %p139
        %p585 = pneg %p136
        %p586 = pneg %p160
        %p587 = pneg %p157
        %p588 = pneg %p181
        %p589 = pneg %p178
        %p590 = pneg %p202
        %p591 = pneg %p199
        %p592 = pneg %p223
        %p593 = pneg %p220
        %p594 = pneg %p244
        %p595 = pneg %p241
        %p596 = pneg %p265
        %p597 = pneg %p262
        %p598 = pneg %p286
        %p599 = pneg %p283
        %p600 = pneg %p307
        %p601 = pneg %p304
        %p602 = pneg %p328
        %p603 = pneg %p325
        %p604 = pneg %p349
        %p605 = pneg %p346
        %p606 = pneg %p370
        %p607 = pneg %p367
        %p608 = pneg %p391
        %p609 = pneg %p388
        %p610 = pneg %p412
        %p611 = pneg %p409
        %p612 = pneg %p433
        %p613 = pneg %p430
        %p614 = pneg %p454
        %p615 = pneg %p451
        %p616 = pneg %p480
        %p617 = pneg %p477
        %s618 = sand.u32 %s467, 1
        %s619 = scalar_lea.sflag [#allocation3], %s618
        %s620 = sand.u32 %s467, 1
        %s621 = smul.addr %s620, 16
        %s622 = scalar_lea.vmem [#allocation2], %s621
        %p623 = scmp.lt.s32.totalorder %s34, 1
        %s624 = scalar_select %p623, %s34, 1
        %s625 = smul.addr %s624, 2
        %s626 = smul.addr %s625, 8
        %s627 = scalar_lea.vmem %s0, %s626
        %v628 = vld [vmem:[%s627] sm:$0xff]
        %v629 = vld [vmem:[%s627 + $0x8] sm:$0xff]
        %v630 = vlaneseq
        %v631 = vshrl.u32 %v630, 7
        %v632 = vadd.s32 %v631, 8
        %v633 = vlaneseq
        %v634 = vand.u32 %v633, 127
        %vm635 = vcmp.le.s32.totalorder %v634, %v631
        %vm636 = vcmp.le.s32.totalorder %v634, %v632
        %v637 = vld [vmem:[%s1] sm:$0xff]
        %vm638 = vcmask 261120
        %v640 = vsel %vm638, %v628, 0
        %v643 = vsel %vm638, %v629, 0
        %v646 = vsel %vm638, %v637, 0
        %648 = vmatprep.subr.mxu0 0.0
        %649 = vmatpush1.xpose.msra.mxu0 0.0
        %650 = vmatprep.subr.mxu0 0.0
        %651 = vmatpush1.xpose.msra.mxu0 0.0
        %652 = vmatprep.subr.mxu0 0.0
        %653 = vmatpush1.xpose.msra.mxu0 0.0
        %654 = vmatprep.subr.mxu0 0.0
        %655 = vmatpush1.xpose.msra.mxu0 0.0
        %656 = vmatprep.subr.mxu0 0.0
        %657 = vmatpush1.xpose.msra.mxu0 0.0
        %658 = vmatprep.subr.mxu0 0.0
        %659 = vmatpush1.xpose.msra.mxu0 0.0
        %660 = vmatprep.subr.mxu0 0.0
        %661 = vmatpush1.xpose.msra.mxu0 0.0
        %662 = vmatprep.subr.mxu0 0.0
        %663 = vmatpush1.xpose.msra.mxu0 0.0
        %664 = vmatprep.subr.mxu0 0.0
        %665 = vmatpush1.xpose.msra.mxu0 0.0
        %666 = vmatprep.subr.mxu0 0.0
        %667 = vmatpush1.xpose.msra.mxu0 0.0
        %668 = vmatprep.subr.mxu0 0.0
        %669 = vmatpush1.xpose.msra.mxu0 0.0
        %670 = vmatprep.subr.mxu0 0.0
        %671 = vmatpush1.xpose.msra.mxu0 0.0
        %672 = vmatprep.subr.mxu0 0.0
        %673 = vmatpush1.xpose.msra.mxu0 0.0
        %674 = vmatprep.subr.mxu0 0.0
        %675 = vmatpush1.xpose.msra.mxu0 0.0
        %676 = vmatprep.subr.mxu0 0.0
        %677 = vmatpush1.xpose.msra.mxu0 0.0
        %678 = vmatprep.subr.mxu0 0.0
        %679 = vmatpush1.xpose.msra.mxu0 %v646
        %680 = vmatprep.subr.mxu0 0.0
        %681 = vmatpush2.xpose.msra.mxu0 0.0
        %682 = vmatprep.subr.mxu0 0.0
        %683 = vmatpush2.xpose.msra.mxu0 0.0
        %684 = vmatprep.subr.mxu0 0.0
        %685 = vmatpush2.xpose.msra.mxu0 0.0
        %686 = vmatprep.subr.mxu0 0.0
        %687 = vmatpush2.xpose.msra.mxu0 0.0
        %688 = vmatprep.subr.mxu0 0.0
        %689 = vmatpush2.xpose.msra.mxu0 0.0
        %690 = vmatprep.subr.mxu0 0.0
        %691 = vmatpush2.xpose.msra.mxu0 0.0
        %692 = vmatprep.subr.mxu0 0.0
        %693 = vmatpush2.xpose.msra.mxu0 0.0
        %694 = vmatprep.subr.mxu0 0.0
        %695 = vmatpush2.xpose.msra.mxu0 0.0
        %696 = vmatprep.subr.mxu0 0.0
        %697 = vmatpush2.xpose.msra.mxu0 0.0
        %698 = vmatprep.subr.mxu0 0.0
        %699 = vmatpush2.xpose.msra.mxu0 0.0
        %700 = vmatprep.subr.mxu0 0.0
        %701 = vmatpush2.xpose.msra.mxu0 0.0
        %702 = vmatprep.subr.mxu0 0.0
        %703 = vmatpush2.xpose.msra.mxu0 0.0
        %704 = vmatprep.subr.mxu0 0.0
        %705 = vmatpush2.xpose.msra.mxu0 0.0
        %706 = vmatprep.subr.mxu0 0.0
        %707 = vmatpush2.xpose.msra.mxu0 0.0
        %708 = vmatprep.subr.mxu0 0.0
        %709 = vmatpush2.xpose.msra.mxu0 0.0
        %710 = vmatprep.subr.mxu0 0.0
        %711 = vmatpush2.xpose.msra.mxu0 0.0
        %712 = vmatprep.mubr.f32.mxu0 0.0
        %713 = vmatmul.mubr.f32.gmra.mxu0 %v640
        %v714 = vpop.f32.mrf.mxu0
        %v715 = vadd.f32 0.0, %v714
        %v716 = vpop.f32.mrf.mxu0
        %717 = vmatprep.mubr.f32.mxu0 0.0
        %718 = vmatmul.mubr.f32.gmra.mxu0 %v643
        %v719 = vpop.f32.mrf.mxu0
        %v720 = vadd.f32 0.0, %v719
        %v721 = vpop.f32.mrf.mxu0
        %722 = vdwg.mxu0
        %v723 = vld [vmem:[%s2] sm:$0xff]
        %v725 = vsel %vm638, %v723, 0
        %727 = vmatprep.subr.mxu0 0.0
        %728 = vmatpush1.xpose.msra.mxu0 0.0
        %729 = vmatprep.subr.mxu0 0.0
        %730 = vmatpush1.xpose.msra.mxu0 0.0
        %731 = vmatprep.subr.mxu0 0.0
        %732 = vmatpush1.xpose.msra.mxu0 0.0
        %733 = vmatprep.subr.mxu0 0.0
        %734 = vmatpush1.xpose.msra.mxu0 0.0
        %735 = vmatprep.subr.mxu0 0.0
        %736 = vmatpush1.xpose.msra.mxu0 0.0
        %737 = vmatprep.subr.mxu0 0.0
        %738 = vmatpush1.xpose.msra.mxu0 0.0
        %739 = vmatprep.subr.mxu0 0.0
        %740 = vmatpush1.xpose.msra.mxu0 0.0
        %741 = vmatprep.subr.mxu0 0.0
        %742 = vmatpush1.xpose.msra.mxu0 0.0
        %743 = vmatprep.subr.mxu0 0.0
        %744 = vmatpush1.xpose.msra.mxu0 0.0
        %745 = vmatprep.subr.mxu0 0.0
        %746 = vmatpush1.xpose.msra.mxu0 0.0
        %747 = vmatprep.subr.mxu0 0.0
        %748 = vmatpush1.xpose.msra.mxu0 0.0
        %749 = vmatprep.subr.mxu0 0.0
        %750 = vmatpush1.xpose.msra.mxu0 0.0
        %751 = vmatprep.subr.mxu0 0.0
        %752 = vmatpush1.xpose.msra.mxu0 0.0
        %753 = vmatprep.subr.mxu0 0.0
        %754 = vmatpush1.xpose.msra.mxu0 0.0
        %755 = vmatprep.subr.mxu0 0.0
        %756 = vmatpush1.xpose.msra.mxu0 0.0
        %757 = vmatprep.subr.mxu0 0.0
        %758 = vmatpush1.xpose.msra.mxu0 %v725
        %759 = vmatprep.subr.mxu0 0.0
        %760 = vmatpush2.xpose.msra.mxu0 0.0
        %761 = vmatprep.subr.mxu0 0.0
        %762 = vmatpush2.xpose.msra.mxu0 0.0
        %763 = vmatprep.subr.mxu0 0.0
        %764 = vmatpush2.xpose.msra.mxu0 0.0
        %765 = vmatprep.subr.mxu0 0.0
        %766 = vmatpush2.xpose.msra.mxu0 0.0
        %767 = vmatprep.subr.mxu0 0.0
        %768 = vmatpush2.xpose.msra.mxu0 0.0
        %769 = vmatprep.subr.mxu0 0.0
        %770 = vmatpush2.xpose.msra.mxu0 0.0
        %771 = vmatprep.subr.mxu0 0.0
        %772 = vmatpush2.xpose.msra.mxu0 0.0
        %773 = vmatprep.subr.mxu0 0.0
        %774 = vmatpush2.xpose.msra.mxu0 0.0
        %775 = vmatprep.subr.mxu0 0.0
        %776 = vmatpush2.xpose.msra.mxu0 0.0
        %777 = vmatprep.subr.mxu0 0.0
        %778 = vmatpush2.xpose.msra.mxu0 0.0
        %779 = vmatprep.subr.mxu0 0.0
        %780 = vmatpush2.xpose.msra.mxu0 0.0
        %781 = vmatprep.subr.mxu0 0.0
        %782 = vmatpush2.xpose.msra.mxu0 0.0
        %783 = vmatprep.subr.mxu0 0.0
        %784 = vmatpush2.xpose.msra.mxu0 0.0
        %785 = vmatprep.subr.mxu0 0.0
        %786 = vmatpush2.xpose.msra.mxu0 0.0
        %787 = vmatprep.subr.mxu0 0.0
        %788 = vmatpush2.xpose.msra.mxu0 0.0
        %789 = vmatprep.subr.mxu0 0.0
        %790 = vmatpush2.xpose.msra.mxu0 0.0
        %791 = vmatprep.mubr.f32.mxu0 0.0
        %792 = vmatmul.mubr.f32.gmra.mxu0 %v640
        %v793 = vpop.f32.mrf.mxu0
        %v794 = vadd.f32 0.0, %v793
        %v795 = vpop.f32.mrf.mxu0
        %796 = vmatprep.mubr.f32.mxu0 0.0
        %797 = vmatmul.mubr.f32.gmra.mxu0 %v643
        %v798 = vpop.f32.mrf.mxu0
        %v799 = vadd.f32 0.0, %v798
        %v800 = vpop.f32.mrf.mxu0
        %801 = vdwg.mxu0
        %v802 = vld [vmem:[%s3] sm:$0xff]
        %v804 = vsel %vm638, %v802, 0
        %806 = vmatprep.subr.mxu0 0.0
        %807 = vmatpush1.xpose.msra.mxu0 0.0
        %808 = vmatprep.subr.mxu0 0.0
        %809 = vmatpush1.xpose.msra.mxu0 0.0
        %810 = vmatprep.subr.mxu0 0.0
        %811 = vmatpush1.xpose.msra.mxu0 0.0
        %812 = vmatprep.subr.mxu0 0.0
        %813 = vmatpush1.xpose.msra.mxu0 0.0
        %814 = vmatprep.subr.mxu0 0.0
        %815 = vmatpush1.xpose.msra.mxu0 0.0
        %816 = vmatprep.subr.mxu0 0.0
        %817 = vmatpush1.xpose.msra.mxu0 0.0
        %818 = vmatprep.subr.mxu0 0.0
        %819 = vmatpush1.xpose.msra.mxu0 0.0
        %820 = vmatprep.subr.mxu0 0.0
        %821 = vmatpush1.xpose.msra.mxu0 0.0
        %822 = vmatprep.subr.mxu0 0.0
        %823 = vmatpush1.xpose.msra.mxu0 0.0
        %824 = vmatprep.subr.mxu0 0.0
        %825 = vmatpush1.xpose.msra.mxu0 0.0
        %826 = vmatprep.subr.mxu0 0.0
        %827 = vmatpush1.xpose.msra.mxu0 0.0
        %828 = vmatprep.subr.mxu0 0.0
        %829 = vmatpush1.xpose.msra.mxu0 0.0
        %830 = vmatprep.subr.mxu0 0.0
        %831 = vmatpush1.xpose.msra.mxu0 0.0
        %832 = vmatprep.subr.mxu0 0.0
        %833 = vmatpush1.xpose.msra.mxu0 0.0
        %834 = vmatprep.subr.mxu0 0.0
        %835 = vmatpush1.xpose.msra.mxu0 0.0
        %836 = vmatprep.subr.mxu0 0.0
        %837 = vmatpush1.xpose.msra.mxu0 %v804
        %838 = vmatprep.subr.mxu0 0.0
        %839 = vmatpush2.xpose.msra.mxu0 0.0
        %840 = vmatprep.subr.mxu0 0.0
        %841 = vmatpush2.xpose.msra.mxu0 0.0
        %842 = vmatprep.subr.mxu0 0.0
        %843 = vmatpush2.xpose.msra.mxu0 0.0
        %844 = vmatprep.subr.mxu0 0.0
        %845 = vmatpush2.xpose.msra.mxu0 0.0
        %846 = vmatprep.subr.mxu0 0.0
        %847 = vmatpush2.xpose.msra.mxu0 0.0
        %848 = vmatprep.subr.mxu0 0.0
        %849 = vmatpush2.xpose.msra.mxu0 0.0
        %850 = vmatprep.subr.mxu0 0.0
        %851 = vmatpush2.xpose.msra.mxu0 0.0
        %852 = vmatprep.subr.mxu0 0.0
        %853 = vmatpush2.xpose.msra.mxu0 0.0
        %854 = vmatprep.subr.mxu0 0.0
        %855 = vmatpush2.xpose.msra.mxu0 0.0
        %856 = vmatprep.subr.mxu0 0.0
        %857 = vmatpush2.xpose.msra.mxu0 0.0
        %858 = vmatprep.subr.mxu0 0.0
        %859 = vmatpush2.xpose.msra.mxu0 0.0
        %860 = vmatprep.subr.mxu0 0.0
        %861 = vmatpush2.xpose.msra.mxu0 0.0
        %862 = vmatprep.subr.mxu0 0.0
        %863 = vmatpush2.xpose.msra.mxu0 0.0
        %864 = vmatprep.subr.mxu0 0.0
        %865 = vmatpush2.xpose.msra.mxu0 0.0
        %866 = vmatprep.subr.mxu0 0.0
        %867 = vmatpush2.xpose.msra.mxu0 0.0
        %868 = vmatprep.subr.mxu0 0.0
        %869 = vmatpush2.xpose.msra.mxu0 0.0
        %870 = vmatprep.mubr.f32.mxu0 0.0
        %871 = vmatmul.mubr.f32.gmra.mxu0 %v640
        %v872 = vpop.f32.mrf.mxu0
        %v873 = vadd.f32 0.0, %v872
        %v874 = vpop.f32.mrf.mxu0
        %875 = vmatprep.mubr.f32.mxu0 0.0
        %876 = vmatmul.mubr.f32.gmra.mxu0 %v643
        %v877 = vpop.f32.mrf.mxu0
        %v878 = vadd.f32 0.0, %v877
        %v879 = vpop.f32.mrf.mxu0
        %880 = vdwg.mxu0
        %vm881 = vcmask 64512
        %v883 = vsel %vm881, %v715, 0
        %v886 = vsel %vm881, %v720, 0
        %v889 = vsel %vm881, %v794, 0
        %v892 = vsel %vm881, %v799, 0
        %894 = vmatprep.subr.mxu0 0.0
        %895 = vmatpush1.xpose.msra.mxu0 0.0
        %896 = vmatprep.subr.mxu0 0.0
        %897 = vmatpush1.xpose.msra.mxu0 0.0
        %898 = vmatprep.subr.mxu0 0.0
        %899 = vmatpush1.xpose.msra.mxu0 0.0
        %900 = vmatprep.subr.mxu0 0.0
        %901 = vmatpush1.xpose.msra.mxu0 0.0
        %902 = vmatprep.subr.mxu0 0.0
        %903 = vmatpush1.xpose.msra.mxu0 0.0
        %904 = vmatprep.subr.mxu0 0.0
        %905 = vmatpush1.xpose.msra.mxu0 0.0
        %906 = vmatprep.subr.mxu0 0.0
        %907 = vmatpush1.xpose.msra.mxu0 0.0
        %908 = vmatprep.subr.mxu0 0.0
        %909 = vmatpush1.xpose.msra.mxu0 0.0
        %910 = vmatprep.subr.mxu0 0.0
        %911 = vmatpush1.xpose.msra.mxu0 0.0
        %912 = vmatprep.subr.mxu0 0.0
        %913 = vmatpush1.xpose.msra.mxu0 0.0
        %914 = vmatprep.subr.mxu0 0.0
        %915 = vmatpush1.xpose.msra.mxu0 0.0
        %916 = vmatprep.subr.mxu0 0.0
        %917 = vmatpush1.xpose.msra.mxu0 0.0
        %918 = vmatprep.subr.mxu0 0.0
        %919 = vmatpush1.xpose.msra.mxu0 0.0
        %920 = vmatprep.subr.mxu0 0.0
        %921 = vmatpush1.xpose.msra.mxu0 0.0
        %922 = vmatprep.subr.mxu0 0.0
        %923 = vmatpush1.xpose.msra.mxu0 %v892
        %924 = vmatprep.subr.mxu0 0.0
        %925 = vmatpush1.xpose.msra.mxu0 %v889
        %926 = vmatprep.subr.mxu0 0.0
        %927 = vmatpush2.xpose.msra.mxu0 0.0
        %928 = vmatprep.subr.mxu0 0.0
        %929 = vmatpush2.xpose.msra.mxu0 0.0
        %930 = vmatprep.subr.mxu0 0.0
        %931 = vmatpush2.xpose.msra.mxu0 0.0
        %932 = vmatprep.subr.mxu0 0.0
        %933 = vmatpush2.xpose.msra.mxu0 0.0
        %934 = vmatprep.subr.mxu0 0.0
        %935 = vmatpush2.xpose.msra.mxu0 0.0
        %936 = vmatprep.subr.mxu0 0.0
        %937 = vmatpush2.xpose.msra.mxu0 0.0
        %938 = vmatprep.subr.mxu0 0.0
        %939 = vmatpush2.xpose.msra.mxu0 0.0
        %940 = vmatprep.subr.mxu0 0.0
        %941 = vmatpush2.xpose.msra.mxu0 0.0
        %942 = vmatprep.subr.mxu0 0.0
        %943 = vmatpush2.xpose.msra.mxu0 0.0
        %944 = vmatprep.subr.mxu0 0.0
        %945 = vmatpush2.xpose.msra.mxu0 0.0
        %946 = vmatprep.subr.mxu0 0.0
        %947 = vmatpush2.xpose.msra.mxu0 0.0
        %948 = vmatprep.subr.mxu0 0.0
        %949 = vmatpush2.xpose.msra.mxu0 0.0
        %950 = vmatprep.subr.mxu0 0.0
        %951 = vmatpush2.xpose.msra.mxu0 0.0
        %952 = vmatprep.subr.mxu0 0.0
        %953 = vmatpush2.xpose.msra.mxu0 0.0
        %954 = vmatprep.subr.mxu0 0.0
        %955 = vmatpush2.xpose.msra.mxu0 0.0
        %956 = vmatprep.subr.mxu0 0.0
        %957 = vmatpush2.xpose.msra.mxu0 0.0
        %958 = vmatprep.mubr.f32.mxu0 0.0
        %959 = vmatmul.mubr.f32.gmra.mxu0 %v883
        %v960 = vpop.f32.mrf.mxu0
        %v961 = vadd.f32 0.0, %v960
        %v962 = vpop.f32.mrf.mxu0
        %963 = vmatprep.mubr.f32.mxu0 0.0
        %964 = vmatmul.mubr.f32.gmra.mxu0 %v886
        %v965 = vpop.f32.mrf.mxu0
        %v966 = vadd.f32 0.0, %v965
        %v967 = vpop.f32.mrf.mxu0
        %968 = vdwg.mxu0
        %v969 = vmul.f32 %v961, 0.35355338
        %v970 = vmul.f32 %v966, 0.35355338
        %v971 = vsel %vm635, %v969, -1e+30
        %v972 = vsel %vm636, %v970, -1e+30
        %vm973 = vcmask 130048
        %v974 = vsel %vm973, %v971, -inf
        %975 = vmax.xlane.f32.xlu0 %v974
        %v976 = vpop.xlane.xlu0 %975
        %v977 = vsel %vm973, %v972, -inf
        %978 = vmax.xlane.f32.xlu0 %v977
        %v979 = vpop.xlane.xlu0 %978
        %v980 = vsub.f32 %v971, %v976
        %v981 = vsub.f32 %v972, %v979
        %v982 = vmul.f32 %v980, 1.442695
        %v983 = vpow.pop %v982
        %v984 = vmul.f32 %v981, 1.442695
        %v985 = vpow.pop %v984
        %v986 = vsel %vm973, %v983, 0.0
        %987 = vadd.xlane.f32.xlu0 %v986
        %v988 = vpop.xlane.xlu0 %987
        %v989 = vsel %vm973, %v985, 0.0
        %990 = vadd.xlane.f32.xlu0 %v989
        %v991 = vpop.xlane.xlu0 %990
        %v992 = vadd.f32 %v988, 1e-06
        %v993 = vadd.f32 %v991, 1e-06
        %v994 = vrcp.pop %v992
        %v995 = vrcp.pop %v993
        %v996 = vmul.f32 %v983, %v994
        %v997 = vmul.f32 %v985, %v995
        %v999 = vsel %vm973, %v996, 0
        %v1002 = vsel %vm973, %v997, 0
        %1004 = vmatprep.subr.mxu0 0.0
        %1005 = vmatpush1.msra.mxu0 0.0
        %1006 = vmatprep.subr.mxu0 0.0
        %1007 = vmatpush1.msra.mxu0 0.0
        %1008 = vmatprep.subr.mxu0 0.0
        %1009 = vmatpush1.msra.mxu0 0.0
        %1010 = vmatprep.subr.mxu0 0.0
        %1011 = vmatpush1.msra.mxu0 0.0
        %1012 = vmatprep.subr.mxu0 0.0
        %1013 = vmatpush1.msra.mxu0 0.0
        %1014 = vmatprep.subr.mxu0 0.0
        %1015 = vmatpush1.msra.mxu0 0.0
        %1016 = vmatprep.subr.mxu0 0.0
        %1017 = vmatpush1.msra.mxu0 0.0
        %1018 = vmatprep.subr.mxu0 0.0
        %1019 = vmatpush1.msra.mxu0 0.0
        %1020 = vmatprep.subr.mxu0 0.0
        %1021 = vmatpush1.msra.mxu0 0.0
        %1022 = vmatprep.subr.mxu0 0.0
        %1023 = vmatpush1.msra.mxu0 0.0
        %1024 = vmatprep.subr.mxu0 0.0
        %1025 = vmatpush1.msra.mxu0 0.0
        %1026 = vmatprep.subr.mxu0 0.0
        %1027 = vmatpush1.msra.mxu0 0.0
        %1028 = vmatprep.subr.mxu0 0.0
        %1029 = vmatpush1.msra.mxu0 0.0
        %1030 = vmatprep.subr.mxu0 0.0
        %1031 = vmatpush1.msra.mxu0 0.0
        %1032 = vmatprep.subr.mxu0 0.0
        %1033 = vmatpush1.msra.mxu0 %v878
        %1034 = vmatprep.subr.mxu0 0.0
        %1035 = vmatpush1.msra.mxu0 %v873
        %1036 = vmatprep.subr.mxu0 0.0
        %1037 = vmatpush2.msra.mxu0 0.0
        %1038 = vmatprep.subr.mxu0 0.0
        %1039 = vmatpush2.msra.mxu0 0.0
        %1040 = vmatprep.subr.mxu0 0.0
        %1041 = vmatpush2.msra.mxu0 0.0
        %1042 = vmatprep.subr.mxu0 0.0
        %1043 = vmatpush2.msra.mxu0 0.0
        %1044 = vmatprep.subr.mxu0 0.0
        %1045 = vmatpush2.msra.mxu0 0.0
        %1046 = vmatprep.subr.mxu0 0.0
        %1047 = vmatpush2.msra.mxu0 0.0
        %1048 = vmatprep.subr.mxu0 0.0
        %1049 = vmatpush2.msra.mxu0 0.0
        %1050 = vmatprep.subr.mxu0 0.0
        %1051 = vmatpush2.msra.mxu0 0.0
        %1052 = vmatprep.subr.mxu0 0.0
        %1053 = vmatpush2.msra.mxu0 0.0
        %1054 = vmatprep.subr.mxu0 0.0
        %1055 = vmatpush2.msra.mxu0 0.0
        %1056 = vmatprep.subr.mxu0 0.0
        %1057 = vmatpush2.msra.mxu0 0.0
        %1058 = vmatprep.subr.mxu0 0.0
        %1059 = vmatpush2.msra.mxu0 0.0
        %1060 = vmatprep.subr.mxu0 0.0
        %1061 = vmatpush2.msra.mxu0 0.0
        %1062 = vmatprep.subr.mxu0 0.0
        %1063 = vmatpush2.msra.mxu0 0.0
        %1064 = vmatprep.subr.mxu0 0.0
        %1065 = vmatpush2.msra.mxu0 0.0
        %1066 = vmatprep.subr.mxu0 0.0
        %1067 = vmatpush2.msra.mxu0 0.0
        %1068 = vmatprep.mubr.f32.mxu0 0.0
        %1069 = vmatmul.mubr.f32.gmra.mxu0 %v999
        %v1070 = vpop.f32.mrf.mxu0
        %v1071 = vadd.f32 0.0, %v1070
        %v1072 = vpop.f32.mrf.mxu0
        %1073 = vmatprep.mubr.f32.mxu0 0.0
        %1074 = vmatmul.mubr.f32.gmra.mxu0 %v1002
        %v1075 = vpop.f32.mrf.mxu0
        %v1076 = vadd.f32 0.0, %v1075
        %v1077 = vpop.f32.mrf.mxu0
        %1078 = vdwg.mxu0
        %v1079 = vld [vmem:[%s4] sm:$0xff]
        %v1080 = vld [vmem:[%s5] sm:$0x1]
        %v1082 = vlaneseq
        %v1083 = vshrl.u32 %v1082, 7
        %v1084 = vsub.s32 0, %v1083
        %v1085 = vrot.slane %v1080, %v1084
        %v1088 = vsel %vm881, %v1071, 0
        %v1091 = vsel %vm881, %v1076, 0
        %v1094 = vsel %vm881, %v1079, 0
        %1096 = vmatprep.subr.mxu0 0.0
        %1097 = vmatpush1.xpose.msra.mxu0 0.0
        %1098 = vmatprep.subr.mxu0 0.0
        %1099 = vmatpush1.xpose.msra.mxu0 0.0
        %1100 = vmatprep.subr.mxu0 0.0
        %1101 = vmatpush1.xpose.msra.mxu0 0.0
        %1102 = vmatprep.subr.mxu0 0.0
        %1103 = vmatpush1.xpose.msra.mxu0 0.0
        %1104 = vmatprep.subr.mxu0 0.0
        %1105 = vmatpush1.xpose.msra.mxu0 0.0
        %1106 = vmatprep.subr.mxu0 0.0
        %1107 = vmatpush1.xpose.msra.mxu0 0.0
        %1108 = vmatprep.subr.mxu0 0.0
        %1109 = vmatpush1.xpose.msra.mxu0 0.0
        %1110 = vmatprep.subr.mxu0 0.0
        %1111 = vmatpush1.xpose.msra.mxu0 0.0
        %1112 = vmatprep.subr.mxu0 0.0
        %1113 = vmatpush1.xpose.msra.mxu0 0.0
        %1114 = vmatprep.subr.mxu0 0.0
        %1115 = vmatpush1.xpose.msra.mxu0 0.0
        %1116 = vmatprep.subr.mxu0 0.0
        %1117 = vmatpush1.xpose.msra.mxu0 0.0
        %1118 = vmatprep.subr.mxu0 0.0
        %1119 = vmatpush1.xpose.msra.mxu0 0.0
        %1120 = vmatprep.subr.mxu0 0.0
        %1121 = vmatpush1.xpose.msra.mxu0 0.0
        %1122 = vmatprep.subr.mxu0 0.0
        %1123 = vmatpush1.xpose.msra.mxu0 0.0
        %1124 = vmatprep.subr.mxu0 0.0
        %1125 = vmatpush1.xpose.msra.mxu0 0.0
        %1126 = vmatprep.subr.mxu0 0.0
        %1127 = vmatpush1.xpose.msra.mxu0 %v1094
        %1128 = vmatprep.subr.mxu0 0.0
        %1129 = vmatpush2.xpose.msra.mxu0 0.0
        %1130 = vmatprep.subr.mxu0 0.0
        %1131 = vmatpush2.xpose.msra.mxu0 0.0
        %1132 = vmatprep.subr.mxu0 0.0
        %1133 = vmatpush2.xpose.msra.mxu0 0.0
        %1134 = vmatprep.subr.mxu0 0.0
        %1135 = vmatpush2.xpose.msra.mxu0 0.0
        %1136 = vmatprep.subr.mxu0 0.0
        %1137 = vmatpush2.xpose.msra.mxu0 0.0
        %1138 = vmatprep.subr.mxu0 0.0
        %1139 = vmatpush2.xpose.msra.mxu0 0.0
        %1140 = vmatprep.subr.mxu0 0.0
        %1141 = vmatpush2.xpose.msra.mxu0 0.0
        %1142 = vmatprep.subr.mxu0 0.0
        %1143 = vmatpush2.xpose.msra.mxu0 0.0
        %1144 = vmatprep.subr.mxu0 0.0
        %1145 = vmatpush2.xpose.msra.mxu0 0.0
        %1146 = vmatprep.subr.mxu0 0.0
        %1147 = vmatpush2.xpose.msra.mxu0 0.0
        %1148 = vmatprep.subr.mxu0 0.0
        %1149 = vmatpush2.xpose.msra.mxu0 0.0
        %1150 = vmatprep.subr.mxu0 0.0
        %1151 = vmatpush2.xpose.msra.mxu0 0.0
        %1152 = vmatprep.subr.mxu0 0.0
        %1153 = vmatpush2.xpose.msra.mxu0 0.0
        %1154 = vmatprep.subr.mxu0 0.0
        %1155 = vmatpush2.xpose.msra.mxu0 0.0
        %1156 = vmatprep.subr.mxu0 0.0
        %1157 = vmatpush2.xpose.msra.mxu0 0.0
        %1158 = vmatprep.subr.mxu0 0.0
        %1159 = vmatpush2.xpose.msra.mxu0 0.0
        %1160 = vmatprep.mubr.f32.mxu0 0.0
        %1161 = vmatmul.mubr.f32.gmra.mxu0 %v1088
        %v1162 = vpop.f32.mrf.mxu0
        %v1163 = vadd.f32 %v1085, %v1162
        %v1164 = vpop.f32.mrf.mxu0
        %1165 = vmatprep.mubr.f32.mxu0 0.0
        %1166 = vmatmul.mubr.f32.gmra.mxu0 %v1091
        %v1167 = vpop.f32.mrf.mxu0
        %v1168 = vadd.f32 %v1085, %v1167
        %v1169 = vpop.f32.mrf.mxu0
        %1170 = vdwg.mxu0
        %v1171 = vld [vmem:[%s6] sm:$0xff]
        %v1172 = vld [vmem:[%s6 + $0x8] sm:$0xff]
        %v1173 = vld [vmem:[%s6 + $0x10] sm:$0xff]
        %v1174 = vld [vmem:[%s6 + $0x18] sm:$0xff]
        %s1175 = scalar_lea.vmem %s1, 8
        %v1176 = vld [vmem:[%s1175] sm:$0xff]
        %v1178 = vsel %vm638, %v1176, 0
        %1180 = vmatprep.subr.mxu0 0.0
        %1181 = vmatpush1.xpose.msra.mxu0 0.0
        %1182 = vmatprep.subr.mxu0 0.0
        %1183 = vmatpush1.xpose.msra.mxu0 0.0
        %1184 = vmatprep.subr.mxu0 0.0
        %1185 = vmatpush1.xpose.msra.mxu0 0.0
        %1186 = vmatprep.subr.mxu0 0.0
        %1187 = vmatpush1.xpose.msra.mxu0 0.0
        %1188 = vmatprep.subr.mxu0 0.0
        %1189 = vmatpush1.xpose.msra.mxu0 0.0
        %1190 = vmatprep.subr.mxu0 0.0
        %1191 = vmatpush1.xpose.msra.mxu0 0.0
        %1192 = vmatprep.subr.mxu0 0.0
        %1193 = vmatpush1.xpose.msra.mxu0 0.0
        %1194 = vmatprep.subr.mxu0 0.0
        %1195 = vmatpush1.xpose.msra.mxu0 0.0
        %1196 = vmatprep.subr.mxu0 0.0
        %1197 = vmatpush1.xpose.msra.mxu0 0.0
        %1198 = vmatprep.subr.mxu0 0.0
        %1199 = vmatpush1.xpose.msra.mxu0 0.0
        %1200 = vmatprep.subr.mxu0 0.0
        %1201 = vmatpush1.xpose.msra.mxu0 0.0
        %1202 = vmatprep.subr.mxu0 0.0
        %1203 = vmatpush1.xpose.msra.mxu0 0.0
        %1204 = vmatprep.subr.mxu0 0.0
        %1205 = vmatpush1.xpose.msra.mxu0 0.0
        %1206 = vmatprep.subr.mxu0 0.0
        %1207 = vmatpush1.xpose.msra.mxu0 0.0
        %1208 = vmatprep.subr.mxu0 0.0
        %1209 = vmatpush1.xpose.msra.mxu0 0.0
        %1210 = vmatprep.subr.mxu0 0.0
        %1211 = vmatpush1.xpose.msra.mxu0 %v1178
        %1212 = vmatprep.subr.mxu0 0.0
        %1213 = vmatpush2.xpose.msra.mxu0 0.0
        %1214 = vmatprep.subr.mxu0 0.0
        %1215 = vmatpush2.xpose.msra.mxu0 0.0
        %1216 = vmatprep.subr.mxu0 0.0
        %1217 = vmatpush2.xpose.msra.mxu0 0.0
        %1218 = vmatprep.subr.mxu0 0.0
        %1219 = vmatpush2.xpose.msra.mxu0 0.0
        %1220 = vmatprep.subr.mxu0 0.0
        %1221 = vmatpush2.xpose.msra.mxu0 0.0
        %1222 = vmatprep.subr.mxu0 0.0
        %1223 = vmatpush2.xpose.msra.mxu0 0.0
        %1224 = vmatprep.subr.mxu0 0.0
        %1225 = vmatpush2.xpose.msra.mxu0 0.0
        %1226 = vmatprep.subr.mxu0 0.0
        %1227 = vmatpush2.xpose.msra.mxu0 0.0
        %1228 = vmatprep.subr.mxu0 0.0
        %1229 = vmatpush2.xpose.msra.mxu0 0.0
        %1230 = vmatprep.subr.mxu0 0.0
        %1231 = vmatpush2.xpose.msra.mxu0 0.0
        %1232 = vmatprep.subr.mxu0 0.0
        %1233 = vmatpush2.xpose.msra.mxu0 0.0
        %1234 = vmatprep.subr.mxu0 0.0
        %1235 = vmatpush2.xpose.msra.mxu0 0.0
        %1236 = vmatprep.subr.mxu0 0.0
        %1237 = vmatpush2.xpose.msra.mxu0 0.0
        %1238 = vmatprep.subr.mxu0 0.0
        %1239 = vmatpush2.xpose.msra.mxu0 0.0
        %1240 = vmatprep.subr.mxu0 0.0
        %1241 = vmatpush2.xpose.msra.mxu0 0.0
        %1242 = vmatprep.subr.mxu0 0.0
        %1243 = vmatpush2.xpose.msra.mxu0 0.0
        %1244 = vmatprep.mubr.f32.mxu0 0.0
        %1245 = vmatmul.mubr.f32.gmra.mxu0 %v640
        %v1246 = vpop.f32.mrf.mxu0
        %v1247 = vadd.f32 0.0, %v1246
        %v1248 = vpop.f32.mrf.mxu0
        %1249 = vmatprep.mubr.f32.mxu0 0.0
        %1250 = vmatmul.mubr.f32.gmra.mxu0 %v643
        %v1251 = vpop.f32.mrf.mxu0
        %v1252 = vadd.f32 0.0, %v1251
        %v1253 = vpop.f32.mrf.mxu0
        %1254 = vdwg.mxu0
        %s1255 = scalar_lea.vmem %s2, 8
        %v1256 = vld [vmem:[%s1255] sm:$0xff]
        %v1258 = vsel %vm638, %v1256, 0
        %1260 = vmatprep.subr.mxu0 0.0
        %1261 = vmatpush1.xpose.msra.mxu0 0.0
        %1262 = vmatprep.subr.mxu0 0.0
        %1263 = vmatpush1.xpose.msra.mxu0 0.0
        %1264 = vmatprep.subr.mxu0 0.0
        %1265 = vmatpush1.xpose.msra.mxu0 0.0
        %1266 = vmatprep.subr.mxu0 0.0
        %1267 = vmatpush1.xpose.msra.mxu0 0.0
        %1268 = vmatprep.subr.mxu0 0.0
        %1269 = vmatpush1.xpose.msra.mxu0 0.0
        %1270 = vmatprep.subr.mxu0 0.0
        %1271 = vmatpush1.xpose.msra.mxu0 0.0
        %1272 = vmatprep.subr.mxu0 0.0
        %1273 = vmatpush1.xpose.msra.mxu0 0.0
        %1274 = vmatprep.subr.mxu0 0.0
        %1275 = vmatpush1.xpose.msra.mxu0 0.0
        %1276 = vmatprep.subr.mxu0 0.0
        %1277 = vmatpush1.xpose.msra.mxu0 0.0
        %1278 = vmatprep.subr.mxu0 0.0
        %1279 = vmatpush1.xpose.msra.mxu0 0.0
        %1280 = vmatprep.subr.mxu0 0.0
        %1281 = vmatpush1.xpose.msra.mxu0 0.0
        %1282 = vmatprep.subr.mxu0 0.0
        %1283 = vmatpush1.xpose.msra.mxu0 0.0
        %1284 = vmatprep.subr.mxu0 0.0
        %1285 = vmatpush1.xpose.msra.mxu0 0.0
        %1286 = vmatprep.subr.mxu0 0.0
        %1287 = vmatpush1.xpose.msra.mxu0 0.0
        %1288 = vmatprep.subr.mxu0 0.0
        %1289 = vmatpush1.xpose.msra.mxu0 0.0
        %1290 = vmatprep.subr.mxu0 0.0
        %1291 = vmatpush1.xpose.msra.mxu0 %v1258
        %1292 = vmatprep.subr.mxu0 0.0
        %1293 = vmatpush2.xpose.msra.mxu0 0.0
        %1294 = vmatprep.subr.mxu0 0.0
        %1295 = vmatpush2.xpose.msra.mxu0 0.0
        %1296 = vmatprep.subr.mxu0 0.0
        %1297 = vmatpush2.xpose.msra.mxu0 0.0
        %1298 = vmatprep.subr.mxu0 0.0
        %1299 = vmatpush2.xpose.msra.mxu0 0.0
        %1300 = vmatprep.subr.mxu0 0.0
        %1301 = vmatpush2.xpose.msra.mxu0 0.0
        %1302 = vmatprep.subr.mxu0 0.0
        %1303 = vmatpush2.xpose.msra.mxu0 0.0
        %1304 = vmatprep.subr.mxu0 0.0
        %1305 = vmatpush2.xpose.msra.mxu0 0.0
        %1306 = vmatprep.subr.mxu0 0.0
        %1307 = vmatpush2.xpose.msra.mxu0 0.0
        %1308 = vmatprep.subr.mxu0 0.0
        %1309 = vmatpush2.xpose.msra.mxu0 0.0
        %1310 = vmatprep.subr.mxu0 0.0
        %1311 = vmatpush2.xpose.msra.mxu0 0.0
        %1312 = vmatprep.subr.mxu0 0.0
        %1313 = vmatpush2.xpose.msra.mxu0 0.0
        %1314 = vmatprep.subr.mxu0 0.0
        %1315 = vmatpush2.xpose.msra.mxu0 0.0
        %1316 = vmatprep.subr.mxu0 0.0
        %1317 = vmatpush2.xpose.msra.mxu0 0.0
        %1318 = vmatprep.subr.mxu0 0.0
        %1319 = vmatpush2.xpose.msra.mxu0 0.0
        %1320 = vmatprep.subr.mxu0 0.0
        %1321 = vmatpush2.xpose.msra.mxu0 0.0
        %1322 = vmatprep.subr.mxu0 0.0
        %1323 = vmatpush2.xpose.msra.mxu0 0.0
        %1324 = vmatprep.mubr.f32.mxu0 0.0
        %1325 = vmatmul.mubr.f32.gmra.mxu0 %v640
        %v1326 = vpop.f32.mrf.mxu0
        %v1327 = vadd.f32 0.0, %v1326
        %v1328 = vpop.f32.mrf.mxu0
        %1329 = vmatprep.mubr.f32.mxu0 0.0
        %1330 = vmatmul.mubr.f32.gmra.mxu0 %v643
        %v1331 = vpop.f32.mrf.mxu0
        %v1332 = vadd.f32 0.0, %v1331
        %v1333 = vpop.f32.mrf.mxu0
        %1334 = vdwg.mxu0
        %s1335 = scalar_lea.vmem %s3, 8
        %v1336 = vld [vmem:[%s1335] sm:$0xff]
        %v1338 = vsel %vm638, %v1336, 0
        %1340 = vmatprep.subr.mxu0 0.0
        %1341 = vmatpush1.xpose.msra.mxu0 0.0
        %1342 = vmatprep.subr.mxu0 0.0
        %1343 = vmatpush1.xpose.msra.mxu0 0.0
        %1344 = vmatprep.subr.mxu0 0.0
        %1345 = vmatpush1.xpose.msra.mxu0 0.0
        %1346 = vmatprep.subr.mxu0 0.0
        %1347 = vmatpush1.xpose.msra.mxu0 0.0
        %1348 = vmatprep.subr.mxu0 0.0
        %1349 = vmatpush1.xpose.msra.mxu0 0.0
        %1350 = vmatprep.subr.mxu0 0.0
        %1351 = vmatpush1.xpose.msra.mxu0 0.0
        %1352 = vmatprep.subr.mxu0 0.0
        %1353 = vmatpush1.xpose.msra.mxu0 0.0
        %1354 = vmatprep.subr.mxu0 0.0
        %1355 = vmatpush1.xpose.msra.mxu0 0.0
        %1356 = vmatprep.subr.mxu0 0.0
        %1357 = vmatpush1.xpose.msra.mxu0 0.0
        %1358 = vmatprep.subr.mxu0 0.0
        %1359 = vmatpush1.xpose.msra.mxu0 0.0
        %1360 = vmatprep.subr.mxu0 0.0
        %1361 = vmatpush1.xpose.msra.mxu0 0.0
        %1362 = vmatprep.subr.mxu0 0.0
        %1363 = vmatpush1.xpose.msra.mxu0 0.0
        %1364 = vmatprep.subr.mxu0 0.0
        %1365 = vmatpush1.xpose.msra.mxu0 0.0
        %1366 = vmatprep.subr.mxu0 0.0
        %1367 = vmatpush1.xpose.msra.mxu0 0.0
        %1368 = vmatprep.subr.mxu0 0.0
        %1369 = vmatpush1.xpose.msra.mxu0 0.0
        %1370 = vmatprep.subr.mxu0 0.0
        %1371 = vmatpush1.xpose.msra.mxu0 %v1338
        %1372 = vmatprep.subr.mxu0 0.0
        %1373 = vmatpush2.xpose.msra.mxu0 0.0
        %1374 = vmatprep.subr.mxu0 0.0
        %1375 = vmatpush2.xpose.msra.mxu0 0.0
        %1376 = vmatprep.subr.mxu0 0.0
        %1377 = vmatpush2.xpose.msra.mxu0 0.0
        %1378 = vmatprep.subr.mxu0 0.0
        %1379 = vmatpush2.xpose.msra.mxu0 0.0
        %1380 = vmatprep.subr.mxu0 0.0
        %1381 = vmatpush2.xpose.msra.mxu0 0.0
        %1382 = vmatprep.subr.mxu0 0.0
        %1383 = vmatpush2.xpose.msra.mxu0 0.0
        %1384 = vmatprep.subr.mxu0 0.0
        %1385 = vmatpush2.xpose.msra.mxu0 0.0
        %1386 = vmatprep.subr.mxu0 0.0
        %1387 = vmatpush2.xpose.msra.mxu0 0.0
        %1388 = vmatprep.subr.mxu0 0.0
        %1389 = vmatpush2.xpose.msra.mxu0 0.0
        %1390 = vmatprep.subr.mxu0 0.0
        %1391 = vmatpush2.xpose.msra.mxu0 0.0
        %1392 = vmatprep.subr.mxu0 0.0
        %1393 = vmatpush2.xpose.msra.mxu0 0.0
        %1394 = vmatprep.subr.mxu0 0.0
        %1395 = vmatpush2.xpose.msra.mxu0 0.0
        %1396 = vmatprep.subr.mxu0 0.0
        %1397 = vmatpush2.xpose.msra.mxu0 0.0
        %1398 = vmatprep.subr.mxu0 0.0
        %1399 = vmatpush2.xpose.msra.mxu0 0.0
        %1400 = vmatprep.subr.mxu0 0.0
        %1401 = vmatpush2.xpose.msra.mxu0 0.0
        %1402 = vmatprep.subr.mxu0 0.0
        %1403 = vmatpush2.xpose.msra.mxu0 0.0
        %1404 = vmatprep.mubr.f32.mxu0 0.0
        %1405 = vmatmul.mubr.f32.gmra.mxu0 %v640
        %v1406 = vpop.f32.mrf.mxu0
        %v1407 = vadd.f32 0.0, %v1406
        %v1408 = vpop.f32.mrf.mxu0
        %1409 = vmatprep.mubr.f32.mxu0 0.0
        %1410 = vmatmul.mubr.f32.gmra.mxu0 %v643
        %v1411 = vpop.f32.mrf.mxu0
        %v1412 = vadd.f32 0.0, %v1411
        %v1413 = vpop.f32.mrf.mxu0
        %1414 = vdwg.mxu0
        %v1416 = vsel %vm881, %v1247, 0
        %v1419 = vsel %vm881, %v1252, 0
        %v1422 = vsel %vm881, %v1327, 0
        %v1425 = vsel %vm881, %v1332, 0
        %1427 = vmatprep.subr.mxu0 0.0
        %1428 = vmatpush1.xpose.msra.mxu0 0.0
        %1429 = vmatprep.subr.mxu0 0.0
        %1430 = vmatpush1.xpose.msra.mxu0 0.0
        %1431 = vmatprep.subr.mxu0 0.0
        %1432 = vmatpush1.xpose.msra.mxu0 0.0
        %1433 = vmatprep.subr.mxu0 0.0
        %1434 = vmatpush1.xpose.msra.mxu0 0.0
        %1435 = vmatprep.subr.mxu0 0.0
        %1436 = vmatpush1.xpose.msra.mxu0 0.0
        %1437 = vmatprep.subr.mxu0 0.0
        %1438 = vmatpush1.xpose.msra.mxu0 0.0
        %1439 = vmatprep.subr.mxu0 0.0
        %1440 = vmatpush1.xpose.msra.mxu0 0.0
        %1441 = vmatprep.subr.mxu0 0.0
        %1442 = vmatpush1.xpose.msra.mxu0 0.0
        %1443 = vmatprep.subr.mxu0 0.0
        %1444 = vmatpush1.xpose.msra.mxu0 0.0
        %1445 = vmatprep.subr.mxu0 0.0
        %1446 = vmatpush1.xpose.msra.mxu0 0.0
        %1447 = vmatprep.subr.mxu0 0.0
        %1448 = vmatpush1.xpose.msra.mxu0 0.0
        %1449 = vmatprep.subr.mxu0 0.0
        %1450 = vmatpush1.xpose.msra.mxu0 0.0
        %1451 = vmatprep.subr.mxu0 0.0
        %1452 = vmatpush1.xpose.msra.mxu0 0.0
        %1453 = vmatprep.subr.mxu0 0.0
        %1454 = vmatpush1.xpose.msra.mxu0 0.0
        %1455 = vmatprep.subr.mxu0 0.0
        %1456 = vmatpush1.xpose.msra.mxu0 %v1425
        %1457 = vmatprep.subr.mxu0 0.0
        %1458 = vmatpush1.xpose.msra.mxu0 %v1422
        %1459 = vmatprep.subr.mxu0 0.0
        %1460 = vmatpush2.xpose.msra.mxu0 0.0
        %1461 = vmatprep.subr.mxu0 0.0
        %1462 = vmatpush2.xpose.msra.mxu0 0.0
        %1463 = vmatprep.subr.mxu0 0.0
        %1464 = vmatpush2.xpose.msra.mxu0 0.0
        %1465 = vmatprep.subr.mxu0 0.0
        %1466 = vmatpush2.xpose.msra.mxu0 0.0
        %1467 = vmatprep.subr.mxu0 0.0
        %1468 = vmatpush2.xpose.msra.mxu0 0.0
        %1469 = vmatprep.subr.mxu0 0.0
        %1470 = vmatpush2.xpose.msra.mxu0 0.0
        %1471 = vmatprep.subr.mxu0 0.0
        %1472 = vmatpush2.xpose.msra.mxu0 0.0
        %1473 = vmatprep.subr.mxu0 0.0
        %1474 = vmatpush2.xpose.msra.mxu0 0.0
        %1475 = vmatprep.subr.mxu0 0.0
        %1476 = vmatpush2.xpose.msra.mxu0 0.0
        %1477 = vmatprep.subr.mxu0 0.0
        %1478 = vmatpush2.xpose.msra.mxu0 0.0
        %1479 = vmatprep.subr.mxu0 0.0
        %1480 = vmatpush2.xpose.msra.mxu0 0.0
        %1481 = vmatprep.subr.mxu0 0.0
        %1482 = vmatpush2.xpose.msra.mxu0 0.0
        %1483 = vmatprep.subr.mxu0 0.0
        %1484 = vmatpush2.xpose.msra.mxu0 0.0
        %1485 = vmatprep.subr.mxu0 0.0
        %1486 = vmatpush2.xpose.msra.mxu0 0.0
        %1487 = vmatprep.subr.mxu0 0.0
        %1488 = vmatpush2.xpose.msra.mxu0 0.0
        %1489 = vmatprep.subr.mxu0 0.0
        %1490 = vmatpush2.xpose.msra.mxu0 0.0
        %1491 = vmatprep.mubr.f32.mxu0 0.0
        %1492 = vmatmul.mubr.f32.gmra.mxu0 %v1416
        %v1493 = vpop.f32.mrf.mxu0
        %v1494 = vadd.f32 0.0, %v1493
        %v1495 = vpop.f32.mrf.mxu0
        %1496 = vmatprep.mubr.f32.mxu0 0.0
        %1497 = vmatmul.mubr.f32.gmra.mxu0 %v1419
        %v1498 = vpop.f32.mrf.mxu0
        %v1499 = vadd.f32 0.0, %v1498
        %v1500 = vpop.f32.mrf.mxu0
        %1501 = vdwg.mxu0
        %v1502 = vmul.f32 %v1494, 0.35355338
        %v1503 = vmul.f32 %v1499, 0.35355338
        %v1504 = vsel %vm635, %v1502, -1e+30
        %v1505 = vsel %vm636, %v1503, -1e+30
        %v1506 = vsel %vm973, %v1504, -inf
        %1507 = vmax.xlane.f32.xlu0 %v1506
        %v1508 = vpop.xlane.xlu0 %1507
        %v1509 = vsel %vm973, %v1505, -inf
        %1510 = vmax.xlane.f32.xlu0 %v1509
        %v1511 = vpop.xlane.xlu0 %1510
        %v1512 = vsub.f32 %v1504, %v1508
        %v1513 = vsub.f32 %v1505, %v1511
        %v1514 = vmul.f32 %v1512, 1.442695
        %v1515 = vpow.pop %v1514
        %v1516 = vmul.f32 %v1513, 1.442695
        %v1517 = vpow.pop %v1516
        %v1518 = vsel %vm973, %v1515, 0.0
        %1519 = vadd.xlane.f32.xlu0 %v1518
        %v1520 = vpop.xlane.xlu0 %1519
        %v1521 = vsel %vm973, %v1517, 0.0
        %1522 = vadd.xlane.f32.xlu0 %v1521
        %v1523 = vpop.xlane.xlu0 %1522
        %v1524 = vadd.f32 %v1520, 1e-06
        %v1525 = vadd.f32 %v1523, 1e-06
        %v1526 = vrcp.pop %v1524
        %v1527 = vrcp.pop %v1525
        %v1528 = vmul.f32 %v1515, %v1526
        %v1529 = vmul.f32 %v1517, %v1527
        %v1531 = vsel %vm973, %v1528, 0
        %v1534 = vsel %vm973, %v1529, 0
        %1536 = vmatprep.subr.mxu0 0.0
        %1537 = vmatpush1.msra.mxu0 0.0
        %1538 = vmatprep.subr.mxu0 0.0
        %1539 = vmatpush1.msra.mxu0 0.0
        %1540 = vmatprep.subr.mxu0 0.0
        %1541 = vmatpush1.msra.mxu0 0.0
        %1542 = vmatprep.subr.mxu0 0.0
        %1543 = vmatpush1.msra.mxu0 0.0
        %1544 = vmatprep.subr.mxu0 0.0
        %1545 = vmatpush1.msra.mxu0 0.0
        %1546 = vmatprep.subr.mxu0 0.0
        %1547 = vmatpush1.msra.mxu0 0.0
        %1548 = vmatprep.subr.mxu0 0.0
        %1549 = vmatpush1.msra.mxu0 0.0
        %1550 = vmatprep.subr.mxu0 0.0
        %1551 = vmatpush1.msra.mxu0 0.0
        %1552 = vmatprep.subr.mxu0 0.0
        %1553 = vmatpush1.msra.mxu0 0.0
        %1554 = vmatprep.subr.mxu0 0.0
        %1555 = vmatpush1.msra.mxu0 0.0
        %1556 = vmatprep.subr.mxu0 0.0
        %1557 = vmatpush1.msra.mxu0 0.0
        %1558 = vmatprep.subr.mxu0 0.0
        %1559 = vmatpush1.msra.mxu0 0.0
        %1560 = vmatprep.subr.mxu0 0.0
        %1561 = vmatpush1.msra.mxu0 0.0
        %1562 = vmatprep.subr.mxu0 0.0
        %1563 = vmatpush1.msra.mxu0 0.0
        %1564 = vmatprep.subr.mxu0 0.0
        %1565 = vmatpush1.msra.mxu0 %v1412
        %1566 = vmatprep.subr.mxu0 0.0
        %1567 = vmatpush1.msra.mxu0 %v1407
        %1568 = vmatprep.subr.mxu0 0.0
        %1569 = vmatpush2.msra.mxu0 0.0
        %1570 = vmatprep.subr.mxu0 0.0
        %1571 = vmatpush2.msra.mxu0 0.0
        %1572 = vmatprep.subr.mxu0 0.0
        %1573 = vmatpush2.msra.mxu0 0.0
        %1574 = vmatprep.subr.mxu0 0.0
        %1575 = vmatpush2.msra.mxu0 0.0
        %1576 = vmatprep.subr.mxu0 0.0
        %1577 = vmatpush2.msra.mxu0 0.0
        %1578 = vmatprep.subr.mxu0 0.0
        %1579 = vmatpush2.msra.mxu0 0.0
        %1580 = vmatprep.subr.mxu0 0.0
        %1581 = vmatpush2.msra.mxu0 0.0
        %1582 = vmatprep.subr.mxu0 0.0
        %1583 = vmatpush2.msra.mxu0 0.0
        %1584 = vmatprep.subr.mxu0 0.0
        %1585 = vmatpush2.msra.mxu0 0.0
        %1586 = vmatprep.subr.mxu0 0.0
        %1587 = vmatpush2.msra.mxu0 0.0
        %1588 = vmatprep.subr.mxu0 0.0
        %1589 = vmatpush2.msra.mxu0 0.0
        %1590 = vmatprep.subr.mxu0 0.0
        %1591 = vmatpush2.msra.mxu0 0.0
        %1592 = vmatprep.subr.mxu0 0.0
        %1593 = vmatpush2.msra.mxu0 0.0
        %1594 = vmatprep.subr.mxu0 0.0
        %1595 = vmatpush2.msra.mxu0 0.0
        %1596 = vmatprep.subr.mxu0 0.0
        %1597 = vmatpush2.msra.mxu0 0.0
        %1598 = vmatprep.subr.mxu0 0.0
        %1599 = vmatpush2.msra.mxu0 0.0
        %1600 = vmatprep.mubr.f32.mxu0 0.0
        %1601 = vmatmul.mubr.f32.gmra.mxu0 %v1531
        %v1602 = vpop.f32.mrf.mxu0
        %v1603 = vadd.f32 0.0, %v1602
        %v1604 = vpop.f32.mrf.mxu0
        %1605 = vmatprep.mubr.f32.mxu0 0.0
        %1606 = vmatmul.mubr.f32.gmra.mxu0 %v1534
        %v1607 = vpop.f32.mrf.mxu0
        %v1608 = vadd.f32 0.0, %v1607
        %v1609 = vpop.f32.mrf.mxu0
        %1610 = vdwg.mxu0
        %s1611 = scalar_lea.vmem %s4, 8
        %v1612 = vld [vmem:[%s1611] sm:$0xff]
        %s1613 = scalar_lea.vmem %s5, 1
        %v1614 = vld [vmem:[%s1613] sm:$0x1]
        %v1616 = vlaneseq
        %v1617 = vshrl.u32 %v1616, 7
        %v1618 = vsub.s32 0, %v1617
        %v1619 = vrot.slane %v1614, %v1618
        %v1622 = vsel %vm881, %v1603, 0
        %v1625 = vsel %vm881, %v1608, 0
        %v1628 = vsel %vm881, %v1612, 0
        %1630 = vmatprep.subr.mxu0 0.0
        %1631 = vmatpush1.xpose.msra.mxu0 0.0
        %1632 = vmatprep.subr.mxu0 0.0
        %1633 = vmatpush1.xpose.msra.mxu0 0.0
        %1634 = vmatprep.subr.mxu0 0.0
        %1635 = vmatpush1.xpose.msra.mxu0 0.0
        %1636 = vmatprep.subr.mxu0 0.0
        %1637 = vmatpush1.xpose.msra.mxu0 0.0
        %1638 = vmatprep.subr.mxu0 0.0
        %1639 = vmatpush1.xpose.msra.mxu0 0.0
        %1640 = vmatprep.subr.mxu0 0.0
        %1641 = vmatpush1.xpose.msra.mxu0 0.0
        %1642 = vmatprep.subr.mxu0 0.0
        %1643 = vmatpush1.xpose.msra.mxu0 0.0
        %1644 = vmatprep.subr.mxu0 0.0
        %1645 = vmatpush1.xpose.msra.mxu0 0.0
        %1646 = vmatprep.subr.mxu0 0.0
        %1647 = vmatpush1.xpose.msra.mxu0 0.0
        %1648 = vmatprep.subr.mxu0 0.0
        %1649 = vmatpush1.xpose.msra.mxu0 0.0
        %1650 = vmatprep.subr.mxu0 0.0
        %1651 = vmatpush1.xpose.msra.mxu0 0.0
        %1652 = vmatprep.subr.mxu0 0.0
        %1653 = vmatpush1.xpose.msra.mxu0 0.0
        %1654 = vmatprep.subr.mxu0 0.0
        %1655 = vmatpush1.xpose.msra.mxu0 0.0
        %1656 = vmatprep.subr.mxu0 0.0
        %1657 = vmatpush1.xpose.msra.mxu0 0.0
        %1658 = vmatprep.subr.mxu0 0.0
        %1659 = vmatpush1.xpose.msra.mxu0 0.0
        %1660 = vmatprep.subr.mxu0 0.0
        %1661 = vmatpush1.xpose.msra.mxu0 %v1628
        %1662 = vmatprep.subr.mxu0 0.0
        %1663 = vmatpush2.xpose.msra.mxu0 0.0
        %1664 = vmatprep.subr.mxu0 0.0
        %1665 = vmatpush2.xpose.msra.mxu0 0.0
        %1666 = vmatprep.subr.mxu0 0.0
        %1667 = vmatpush2.xpose.msra.mxu0 0.0
        %1668 = vmatprep.subr.mxu0 0.0
        %1669 = vmatpush2.xpose.msra.mxu0 0.0
        %1670 = vmatprep.subr.mxu0 0.0
        %1671 = vmatpush2.xpose.msra.mxu0 0.0
        %1672 = vmatprep.subr.mxu0 0.0
        %1673 = vmatpush2.xpose.msra.mxu0 0.0
        %1674 = vmatprep.subr.mxu0 0.0
        %1675 = vmatpush2.xpose.msra.mxu0 0.0
        %1676 = vmatprep.subr.mxu0 0.0
        %1677 = vmatpush2.xpose.msra.mxu0 0.0
        %1678 = vmatprep.subr.mxu0 0.0
        %1679 = vmatpush2.xpose.msra.mxu0 0.0
        %1680 = vmatprep.subr.mxu0 0.0
        %1681 = vmatpush2.xpose.msra.mxu0 0.0
        %1682 = vmatprep.subr.mxu0 0.0
        %1683 = vmatpush2.xpose.msra.mxu0 0.0
        %1684 = vmatprep.subr.mxu0 0.0
        %1685 = vmatpush2.xpose.msra.mxu0 0.0
        %1686 = vmatprep.subr.mxu0 0.0
        %1687 = vmatpush2.xpose.msra.mxu0 0.0
        %1688 = vmatprep.subr.mxu0 0.0
        %1689 = vmatpush2.xpose.msra.mxu0 0.0
        %1690 = vmatprep.subr.mxu0 0.0
        %1691 = vmatpush2.xpose.msra.mxu0 0.0
        %1692 = vmatprep.subr.mxu0 0.0
        %1693 = vmatpush2.xpose.msra.mxu0 0.0
        %1694 = vmatprep.mubr.f32.mxu0 0.0
        %1695 = vmatmul.mubr.f32.gmra.mxu0 %v1622
        %v1696 = vpop.f32.mrf.mxu0
        %v1697 = vadd.f32 %v1619, %v1696
        %v1698 = vpop.f32.mrf.mxu0
        %1699 = vmatprep.mubr.f32.mxu0 0.0
        %1700 = vmatmul.mubr.f32.gmra.mxu0 %v1625
        %v1701 = vpop.f32.mrf.mxu0
        %v1702 = vadd.f32 %v1619, %v1701
        %v1703 = vpop.f32.mrf.mxu0
        %1704 = vdwg.mxu0
        %s1705 = scalar_lea.vmem %s6, 32
        %v1706 = vld [vmem:[%s1705] sm:$0xff]
        %v1707 = vld [vmem:[%s1705 + $0x8] sm:$0xff]
        %v1708 = vld [vmem:[%s1705 + $0x10] sm:$0xff]
        %v1709 = vld [vmem:[%s1705 + $0x18] sm:$0xff]
        %v1711 = vsel %vm881, %v1697, 0
        %v1714 = vsel %vm881, %v1702, 0
        %v1717 = vsel %vm881, %v1706, 0
        %v1720 = vsel %vm881, %v1707, 0
        %v1723 = vsel %vm881, %v1708, 0
        %v1726 = vsel %vm881, %v1709, 0
        %1728 = vmatprep.subr.mxu0 0.0
        %1729 = vmatpush1.xpose.msra.mxu0 0.0
        %1730 = vmatprep.subr.mxu0 0.0
        %1731 = vmatpush1.xpose.msra.mxu0 0.0
        %1732 = vmatprep.subr.mxu0 0.0
        %1733 = vmatpush1.xpose.msra.mxu0 0.0
        %1734 = vmatprep.subr.mxu0 0.0
        %1735 = vmatpush1.xpose.msra.mxu0 0.0
        %1736 = vmatprep.subr.mxu0 0.0
        %1737 = vmatpush1.xpose.msra.mxu0 0.0
        %1738 = vmatprep.subr.mxu0 0.0
        %1739 = vmatpush1.xpose.msra.mxu0 0.0
        %1740 = vmatprep.subr.mxu0 0.0
        %1741 = vmatpush1.xpose.msra.mxu0 0.0
        %1742 = vmatprep.subr.mxu0 0.0
        %1743 = vmatpush1.xpose.msra.mxu0 0.0
        %1744 = vmatprep.subr.mxu0 0.0
        %1745 = vmatpush1.xpose.msra.mxu0 0.0
        %1746 = vmatprep.subr.mxu0 0.0
        %1747 = vmatpush1.xpose.msra.mxu0 0.0
        %1748 = vmatprep.subr.mxu0 0.0
        %1749 = vmatpush1.xpose.msra.mxu0 0.0
        %1750 = vmatprep.subr.mxu0 0.0
        %1751 = vmatpush1.xpose.msra.mxu0 0.0
        %1752 = vmatprep.subr.mxu0 0.0
        %1753 = vmatpush1.xpose.msra.mxu0 %v1726
        %1754 = vmatprep.subr.mxu0 0.0
        %1755 = vmatpush1.xpose.msra.mxu0 %v1723
        %1756 = vmatprep.subr.mxu0 0.0
        %1757 = vmatpush1.xpose.msra.mxu0 %v1720
        %1758 = vmatprep.subr.mxu0 0.0
        %1759 = vmatpush1.xpose.msra.mxu0 %v1717
        %1760 = vmatprep.subr.mxu0 0.0
        %1761 = vmatpush2.xpose.msra.mxu0 0.0
        %1762 = vmatprep.subr.mxu0 0.0
        %1763 = vmatpush2.xpose.msra.mxu0 0.0
        %1764 = vmatprep.subr.mxu0 0.0
        %1765 = vmatpush2.xpose.msra.mxu0 0.0
        %1766 = vmatprep.subr.mxu0 0.0
        %1767 = vmatpush2.xpose.msra.mxu0 0.0
        %1768 = vmatprep.subr.mxu0 0.0
        %1769 = vmatpush2.xpose.msra.mxu0 0.0
        %1770 = vmatprep.subr.mxu0 0.0
        %1771 = vmatpush2.xpose.msra.mxu0 0.0
        %1772 = vmatprep.subr.mxu0 0.0
        %1773 = vmatpush2.xpose.msra.mxu0 0.0
        %1774 = vmatprep.subr.mxu0 0.0
        %1775 = vmatpush2.xpose.msra.mxu0 0.0
        %1776 = vmatprep.subr.mxu0 0.0
        %1777 = vmatpush2.xpose.msra.mxu0 0.0
        %1778 = vmatprep.subr.mxu0 0.0
        %1779 = vmatpush2.xpose.msra.mxu0 0.0
        %1780 = vmatprep.subr.mxu0 0.0
        %1781 = vmatpush2.xpose.msra.mxu0 0.0
        %1782 = vmatprep.subr.mxu0 0.0
        %1783 = vmatpush2.xpose.msra.mxu0 0.0
        %1784 = vmatprep.subr.mxu0 0.0
        %1785 = vmatpush2.xpose.msra.mxu0 0.0
        %1786 = vmatprep.subr.mxu0 0.0
        %1787 = vmatpush2.xpose.msra.mxu0 0.0
        %1788 = vmatprep.subr.mxu0 0.0
        %1789 = vmatpush2.xpose.msra.mxu0 0.0
        %1790 = vmatprep.subr.mxu0 0.0
        %1791 = vmatpush2.xpose.msra.mxu0 0.0
        %1792 = vmatprep.mubr.f32.mxu0 0.0
        %1793 = vmatmul.mubr.f32.gmra.mxu0 %v1711
        %v1794 = vpop.f32.mrf.mxu0
        %v1795 = vadd.f32 0.0, %v1794
        %v1796 = vpop.f32.mrf.mxu0
        %1797 = vmatprep.mubr.f32.mxu0 0.0
        %1798 = vmatmul.mubr.f32.gmra.mxu0 %v1714
        %v1799 = vpop.f32.mrf.mxu0
        %v1800 = vadd.f32 0.0, %v1799
        %v1801 = vpop.f32.mrf.mxu0
        %1802 = vdwg.mxu0
        %v1804 = vsel %vm881, %v1163, 0
        %v1807 = vsel %vm881, %v1168, 0
        %v1810 = vsel %vm881, %v1171, 0
        %v1813 = vsel %vm881, %v1172, 0
        %v1816 = vsel %vm881, %v1173, 0
        %v1819 = vsel %vm881, %v1174, 0
        %1821 = vmatprep.subr.mxu0 0.0
        %1822 = vmatpush1.xpose.msra.mxu0 0.0
        %1823 = vmatprep.subr.mxu0 0.0
        %1824 = vmatpush1.xpose.msra.mxu0 0.0
        %1825 = vmatprep.subr.mxu0 0.0
        %1826 = vmatpush1.xpose.msra.mxu0 0.0
        %1827 = vmatprep.subr.mxu0 0.0
        %1828 = vmatpush1.xpose.msra.mxu0 0.0
        %1829 = vmatprep.subr.mxu0 0.0
        %1830 = vmatpush1.xpose.msra.mxu0 0.0
        %1831 = vmatprep.subr.mxu0 0.0
        %1832 = vmatpush1.xpose.msra.mxu0 0.0
        %1833 = vmatprep.subr.mxu0 0.0
        %1834 = vmatpush1.xpose.msra.mxu0 0.0
        %1835 = vmatprep.subr.mxu0 0.0
        %1836 = vmatpush1.xpose.msra.mxu0 0.0
        %1837 = vmatprep.subr.mxu0 0.0
        %1838 = vmatpush1.xpose.msra.mxu0 0.0
        %1839 = vmatprep.subr.mxu0 0.0
        %1840 = vmatpush1.xpose.msra.mxu0 0.0
        %1841 = vmatprep.subr.mxu0 0.0
        %1842 = vmatpush1.xpose.msra.mxu0 0.0
        %1843 = vmatprep.subr.mxu0 0.0
        %1844 = vmatpush1.xpose.msra.mxu0 0.0
        %1845 = vmatprep.subr.mxu0 0.0
        %1846 = vmatpush1.xpose.msra.mxu0 %v1819
        %1847 = vmatprep.subr.mxu0 0.0
        %1848 = vmatpush1.xpose.msra.mxu0 %v1816
        %1849 = vmatprep.subr.mxu0 0.0
        %1850 = vmatpush1.xpose.msra.mxu0 %v1813
        %1851 = vmatprep.subr.mxu0 0.0
        %1852 = vmatpush1.xpose.msra.mxu0 %v1810
        %1853 = vmatprep.subr.mxu0 0.0
        %1854 = vmatpush2.xpose.msra.mxu0 0.0
        %1855 = vmatprep.subr.mxu0 0.0
        %1856 = vmatpush2.xpose.msra.mxu0 0.0
        %1857 = vmatprep.subr.mxu0 0.0
        %1858 = vmatpush2.xpose.msra.mxu0 0.0
        %1859 = vmatprep.subr.mxu0 0.0
        %1860 = vmatpush2.xpose.msra.mxu0 0.0
        %1861 = vmatprep.subr.mxu0 0.0
        %1862 = vmatpush2.xpose.msra.mxu0 0.0
        %1863 = vmatprep.subr.mxu0 0.0
        %1864 = vmatpush2.xpose.msra.mxu0 0.0
        %1865 = vmatprep.subr.mxu0 0.0
        %1866 = vmatpush2.xpose.msra.mxu0 0.0
        %1867 = vmatprep.subr.mxu0 0.0
        %1868 = vmatpush2.xpose.msra.mxu0 0.0
        %1869 = vmatprep.subr.mxu0 0.0
        %1870 = vmatpush2.xpose.msra.mxu0 0.0
        %1871 = vmatprep.subr.mxu0 0.0
        %1872 = vmatpush2.xpose.msra.mxu0 0.0
        %1873 = vmatprep.subr.mxu0 0.0
        %1874 = vmatpush2.xpose.msra.mxu0 0.0
        %1875 = vmatprep.subr.mxu0 0.0
        %1876 = vmatpush2.xpose.msra.mxu0 0.0
        %1877 = vmatprep.subr.mxu0 0.0
        %1878 = vmatpush2.xpose.msra.mxu0 0.0
        %1879 = vmatprep.subr.mxu0 0.0
        %1880 = vmatpush2.xpose.msra.mxu0 0.0
        %1881 = vmatprep.subr.mxu0 0.0
        %1882 = vmatpush2.xpose.msra.mxu0 0.0
        %1883 = vmatprep.subr.mxu0 0.0
        %1884 = vmatpush2.xpose.msra.mxu0 0.0
        %1885 = vmatprep.mubr.f32.mxu0 0.0
        %1886 = vmatmul.mubr.f32.gmra.mxu0 %v1804
        %v1887 = vpop.f32.mrf.mxu0
        %v1888 = vadd.f32 %v1795, %v1887
        %v1889 = vpop.f32.mrf.mxu0
        %1890 = vmatprep.mubr.f32.mxu0 0.0
        %1891 = vmatmul.mubr.f32.gmra.mxu0 %v1807
        %v1892 = vpop.f32.mrf.mxu0
        %v1893 = vadd.f32 %v1800, %v1892
        %v1894 = vpop.f32.mrf.mxu0
        %1895 = vdwg.mxu0
        %s1896 = scalar_lea.vmem %s1, 16
        %v1897 = vld [vmem:[%s1896] sm:$0xff]
        %v1899 = vsel %vm638, %v1897, 0
        %1901 = vmatprep.subr.mxu0 0.0
        %1902 = vmatpush1.xpose.msra.mxu0 0.0
        %1903 = vmatprep.subr.mxu0 0.0
        %1904 = vmatpush1.xpose.msra.mxu0 0.0
        %1905 = vmatprep.subr.mxu0 0.0
        %1906 = vmatpush1.xpose.msra.mxu0 0.0
        %1907 = vmatprep.subr.mxu0 0.0
        %1908 = vmatpush1.xpose.msra.mxu0 0.0
        %1909 = vmatprep.subr.mxu0 0.0
        %1910 = vmatpush1.xpose.msra.mxu0 0.0
        %1911 = vmatprep.subr.mxu0 0.0
        %1912 = vmatpush1.xpose.msra.mxu0 0.0
        %1913 = vmatprep.subr.mxu0 0.0
        %1914 = vmatpush1.xpose.msra.mxu0 0.0
        %1915 = vmatprep.subr.mxu0 0.0
        %1916 = vmatpush1.xpose.msra.mxu0 0.0
        %1917 = vmatprep.subr.mxu0 0.0
        %1918 = vmatpush1.xpose.msra.mxu0 0.0
        %1919 = vmatprep.subr.mxu0 0.0
        %1920 = vmatpush1.xpose.msra.mxu0 0.0
        %1921 = vmatprep.subr.mxu0 0.0
        %1922 = vmatpush1.xpose.msra.mxu0 0.0
        %1923 = vmatprep.subr.mxu0 0.0
        %1924 = vmatpush1.xpose.msra.mxu0 0.0
        %1925 = vmatprep.subr.mxu0 0.0
        %1926 = vmatpush1.xpose.msra.mxu0 0.0
        %1927 = vmatprep.subr.mxu0 0.0
        %1928 = vmatpush1.xpose.msra.mxu0 0.0
        %1929 = vmatprep.subr.mxu0 0.0
        %1930 = vmatpush1.xpose.msra.mxu0 0.0
        %1931 = vmatprep.subr.mxu0 0.0
        %1932 = vmatpush1.xpose.msra.mxu0 %v1899
        %1933 = vmatprep.subr.mxu0 0.0
        %1934 = vmatpush2.xpose.msra.mxu0 0.0
        %1935 = vmatprep.subr.mxu0 0.0
        %1936 = vmatpush2.xpose.msra.mxu0 0.0
        %1937 = vmatprep.subr.mxu0 0.0
        %1938 = vmatpush2.xpose.msra.mxu0 0.0
        %1939 = vmatprep.subr.mxu0 0.0
        %1940 = vmatpush2.xpose.msra.mxu0 0.0
        %1941 = vmatprep.subr.mxu0 0.0
        %1942 = vmatpush2.xpose.msra.mxu0 0.0
        %1943 = vmatprep.subr.mxu0 0.0
        %1944 = vmatpush2.xpose.msra.mxu0 0.0
        %1945 = vmatprep.subr.mxu0 0.0
        %1946 = vmatpush2.xpose.msra.mxu0 0.0
        %1947 = vmatprep.subr.mxu0 0.0
        %1948 = vmatpush2.xpose.msra.mxu0 0.0
        %1949 = vmatprep.subr.mxu0 0.0
        %1950 = vmatpush2.xpose.msra.mxu0 0.0
        %1951 = vmatprep.subr.mxu0 0.0
        %1952 = vmatpush2.xpose.msra.mxu0 0.0
        %1953 = vmatprep.subr.mxu0 0.0
        %1954 = vmatpush2.xpose.msra.mxu0 0.0
        %1955 = vmatprep.subr.mxu0 0.0
        %1956 = vmatpush2.xpose.msra.mxu0 0.0
        %1957 = vmatprep.subr.mxu0 0.0
        %1958 = vmatpush2.xpose.msra.mxu0 0.0
        %1959 = vmatprep.subr.mxu0 0.0
        %1960 = vmatpush2.xpose.msra.mxu0 0.0
        %1961 = vmatprep.subr.mxu0 0.0
        %1962 = vmatpush2.xpose.msra.mxu0 0.0
        %1963 = vmatprep.subr.mxu0 0.0
        %1964 = vmatpush2.xpose.msra.mxu0 0.0
        %1965 = vmatprep.mubr.f32.mxu0 0.0
        %1966 = vmatmul.mubr.f32.gmra.mxu0 %v640
        %v1967 = vpop.f32.mrf.mxu0
        %v1968 = vadd.f32 0.0, %v1967
        %v1969 = vpop.f32.mrf.mxu0
        %1970 = vmatprep.mubr.f32.mxu0 0.0
        %1971 = vmatmul.mubr.f32.gmra.mxu0 %v643
        %v1972 = vpop.f32.mrf.mxu0
        %v1973 = vadd.f32 0.0, %v1972
        %v1974 = vpop.f32.mrf.mxu0
        %1975 = vdwg.mxu0
        %s1976 = scalar_lea.vmem %s2, 16
        %v1977 = vld [vmem:[%s1976] sm:$0xff]
        %v1979 = vsel %vm638, %v1977, 0
        %1981 = vmatprep.subr.mxu0 0.0
        %1982 = vmatpush1.xpose.msra.mxu0 0.0
        %1983 = vmatprep.subr.mxu0 0.0
        %1984 = vmatpush1.xpose.msra.mxu0 0.0
        %1985 = vmatprep.subr.mxu0 0.0
        %1986 = vmatpush1.xpose.msra.mxu0 0.0
        %1987 = vmatprep.subr.mxu0 0.0
        %1988 = vmatpush1.xpose.msra.mxu0 0.0
        %1989 = vmatprep.subr.mxu0 0.0
        %1990 = vmatpush1.xpose.msra.mxu0 0.0
        %1991 = vmatprep.subr.mxu0 0.0
        %1992 = vmatpush1.xpose.msra.mxu0 0.0
        %1993 = vmatprep.subr.mxu0 0.0
        %1994 = vmatpush1.xpose.msra.mxu0 0.0
        %1995 = vmatprep.subr.mxu0 0.0
        %1996 = vmatpush1.xpose.msra.mxu0 0.0
        %1997 = vmatprep.subr.mxu0 0.0
        %1998 = vmatpush1.xpose.msra.mxu0 0.0
        %1999 = vmatprep.subr.mxu0 0.0
        %2000 = vmatpush1.xpose.msra.mxu0 0.0
        %2001 = vmatprep.subr.mxu0 0.0
        %2002 = vmatpush1.xpose.msra.mxu0 0.0
        %2003 = vmatprep.subr.mxu0 0.0
        %2004 = vmatpush1.xpose.msra.mxu0 0.0
        %2005 = vmatprep.subr.mxu0 0.0
        %2006 = vmatpush1.xpose.msra.mxu0 0.0
        %2007 = vmatprep.subr.mxu0 0.0
        %2008 = vmatpush1.xpose.msra.mxu0 0.0
        %2009 = vmatprep.subr.mxu0 0.0
        %2010 = vmatpush1.xpose.msra.mxu0 0.0
        %2011 = vmatprep.subr.mxu0 0.0
        %2012 = vmatpush1.xpose.msra.mxu0 %v1979
        %2013 = vmatprep.subr.mxu0 0.0
        %2014 = vmatpush2.xpose.msra.mxu0 0.0
        %2015 = vmatprep.subr.mxu0 0.0
        %2016 = vmatpush2.xpose.msra.mxu0 0.0
        %2017 = vmatprep.subr.mxu0 0.0
        %2018 = vmatpush2.xpose.msra.mxu0 0.0
        %2019 = vmatprep.subr.mxu0 0.0
        %2020 = vmatpush2.xpose.msra.mxu0 0.0
        %2021 = vmatprep.subr.mxu0 0.0
        %2022 = vmatpush2.xpose.msra.mxu0 0.0
        %2023 = vmatprep.subr.mxu0 0.0
        %2024 = vmatpush2.xpose.msra.mxu0 0.0
        %2025 = vmatprep.subr.mxu0 0.0
        %2026 = vmatpush2.xpose.msra.mxu0 0.0
        %2027 = vmatprep.subr.mxu0 0.0
        %2028 = vmatpush2.xpose.msra.mxu0 0.0
        %2029 = vmatprep.subr.mxu0 0.0
        %2030 = vmatpush2.xpose.msra.mxu0 0.0
        %2031 = vmatprep.subr.mxu0 0.0
        %2032 = vmatpush2.xpose.msra.mxu0 0.0
        %2033 = vmatprep.subr.mxu0 0.0
        %2034 = vmatpush2.xpose.msra.mxu0 0.0
        %2035 = vmatprep.subr.mxu0 0.0
        %2036 = vmatpush2.xpose.msra.mxu0 0.0
        %2037 = vmatprep.subr.mxu0 0.0
        %2038 = vmatpush2.xpose.msra.mxu0 0.0
        %2039 = vmatprep.subr.mxu0 0.0
        %2040 = vmatpush2.xpose.msra.mxu0 0.0
        %2041 = vmatprep.subr.mxu0 0.0
        %2042 = vmatpush2.xpose.msra.mxu0 0.0
        %2043 = vmatprep.subr.mxu0 0.0
        %2044 = vmatpush2.xpose.msra.mxu0 0.0
        %2045 = vmatprep.mubr.f32.mxu0 0.0
        %2046 = vmatmul.mubr.f32.gmra.mxu0 %v640
        %v2047 = vpop.f32.mrf.mxu0
        %v2048 = vadd.f32 0.0, %v2047
        %v2049 = vpop.f32.mrf.mxu0
        %2050 = vmatprep.mubr.f32.mxu0 0.0
        %2051 = vmatmul.mubr.f32.gmra.mxu0 %v643
        %v2052 = vpop.f32.mrf.mxu0
        %v2053 = vadd.f32 0.0, %v2052
        %v2054 = vpop.f32.mrf.mxu0
        %2055 = vdwg.mxu0
        %s2056 = scalar_lea.vmem %s3, 16
        %v2057 = vld [vmem:[%s2056] sm:$0xff]
        %v2059 = vsel %vm638, %v2057, 0
        %2061 = vmatprep.subr.mxu0 0.0
        %2062 = vmatpush1.xpose.msra.mxu0 0.0
        %2063 = vmatprep.subr.mxu0 0.0
        %2064 = vmatpush1.xpose.msra.mxu0 0.0
        %2065 = vmatprep.subr.mxu0 0.0
        %2066 = vmatpush1.xpose.msra.mxu0 0.0
        %2067 = vmatprep.subr.mxu0 0.0
        %2068 = vmatpush1.xpose.msra.mxu0 0.0
        %2069 = vmatprep.subr.mxu0 0.0
        %2070 = vmatpush1.xpose.msra.mxu0 0.0
        %2071 = vmatprep.subr.mxu0 0.0
        %2072 = vmatpush1.xpose.msra.mxu0 0.0
        %2073 = vmatprep.subr.mxu0 0.0
        %2074 = vmatpush1.xpose.msra.mxu0 0.0
        %2075 = vmatprep.subr.mxu0 0.0
        %2076 = vmatpush1.xpose.msra.mxu0 0.0
        %2077 = vmatprep.subr.mxu0 0.0
        %2078 = vmatpush1.xpose.msra.mxu0 0.0
        %2079 = vmatprep.subr.mxu0 0.0
        %2080 = vmatpush1.xpose.msra.mxu0 0.0
        %2081 = vmatprep.subr.mxu0 0.0
        %2082 = vmatpush1.xpose.msra.mxu0 0.0
        %2083 = vmatprep.subr.mxu0 0.0
        %2084 = vmatpush1.xpose.msra.mxu0 0.0
        %2085 = vmatprep.subr.mxu0 0.0
        %2086 = vmatpush1.xpose.msra.mxu0 0.0
        %2087 = vmatprep.subr.mxu0 0.0
        %2088 = vmatpush1.xpose.msra.mxu0 0.0
        %2089 = vmatprep.subr.mxu0 0.0
        %2090 = vmatpush1.xpose.msra.mxu0 0.0
        %2091 = vmatprep.subr.mxu0 0.0
        %2092 = vmatpush1.xpose.msra.mxu0 %v2059
        %2093 = vmatprep.subr.mxu0 0.0
        %2094 = vmatpush2.xpose.msra.mxu0 0.0
        %2095 = vmatprep.subr.mxu0 0.0
        %2096 = vmatpush2.xpose.msra.mxu0 0.0
        %2097 = vmatprep.subr.mxu0 0.0
        %2098 = vmatpush2.xpose.msra.mxu0 0.0
        %2099 = vmatprep.subr.mxu0 0.0
        %2100 = vmatpush2.xpose.msra.mxu0 0.0
        %2101 = vmatprep.subr.mxu0 0.0
        %2102 = vmatpush2.xpose.msra.mxu0 0.0
        %2103 = vmatprep.subr.mxu0 0.0
        %2104 = vmatpush2.xpose.msra.mxu0 0.0
        %2105 = vmatprep.subr.mxu0 0.0
        %2106 = vmatpush2.xpose.msra.mxu0 0.0
        %2107 = vmatprep.subr.mxu0 0.0
        %2108 = vmatpush2.xpose.msra.mxu0 0.0
        %2109 = vmatprep.subr.mxu0 0.0
        %2110 = vmatpush2.xpose.msra.mxu0 0.0
        %2111 = vmatprep.subr.mxu0 0.0
        %2112 = vmatpush2.xpose.msra.mxu0 0.0
        %2113 = vmatprep.subr.mxu0 0.0
        %2114 = vmatpush2.xpose.msra.mxu0 0.0
        %2115 = vmatprep.subr.mxu0 0.0
        %2116 = vmatpush2.xpose.msra.mxu0 0.0
        %2117 = vmatprep.subr.mxu0 0.0
        %2118 = vmatpush2.xpose.msra.mxu0 0.0
        %2119 = vmatprep.subr.mxu0 0.0
        %2120 = vmatpush2.xpose.msra.mxu0 0.0
        %2121 = vmatprep.subr.mxu0 0.0
        %2122 = vmatpush2.xpose.msra.mxu0 0.0
        %2123 = vmatprep.subr.mxu0 0.0
        %2124 = vmatpush2.xpose.msra.mxu0 0.0
        %2125 = vmatprep.mubr.f32.mxu0 0.0
        %2126 = vmatmul.mubr.f32.gmra.mxu0 %v640
        %v2127 = vpop.f32.mrf.mxu0
        %v2128 = vadd.f32 0.0, %v2127
        %v2129 = vpop.f32.mrf.mxu0
        %2130 = vmatprep.mubr.f32.mxu0 0.0
        %2131 = vmatmul.mubr.f32.gmra.mxu0 %v643
        %v2132 = vpop.f32.mrf.mxu0
        %v2133 = vadd.f32 0.0, %v2132
        %v2134 = vpop.f32.mrf.mxu0
        %2135 = vdwg.mxu0
        %v2137 = vsel %vm881, %v1968, 0
        %v2140 = vsel %vm881, %v1973, 0
        %v2143 = vsel %vm881, %v2048, 0
        %v2146 = vsel %vm881, %v2053, 0
        %2148 = vmatprep.subr.mxu0 0.0
        %2149 = vmatpush1.xpose.msra.mxu0 0.0
        %2150 = vmatprep.subr.mxu0 0.0
        %2151 = vmatpush1.xpose.msra.mxu0 0.0
        %2152 = vmatprep.subr.mxu0 0.0
        %2153 = vmatpush1.xpose.msra.mxu0 0.0
        %2154 = vmatprep.subr.mxu0 0.0
        %2155 = vmatpush1.xpose.msra.mxu0 0.0
        %2156 = vmatprep.subr.mxu0 0.0
        %2157 = vmatpush1.xpose.msra.mxu0 0.0
        %2158 = vmatprep.subr.mxu0 0.0
        %2159 = vmatpush1.xpose.msra.mxu0 0.0
        %2160 = vmatprep.subr.mxu0 0.0
        %2161 = vmatpush1.xpose.msra.mxu0 0.0
        %2162 = vmatprep.subr.mxu0 0.0
        %2163 = vmatpush1.xpose.msra.mxu0 0.0
        %2164 = vmatprep.subr.mxu0 0.0
        %2165 = vmatpush1.xpose.msra.mxu0 0.0
        %2166 = vmatprep.subr.mxu0 0.0
        %2167 = vmatpush1.xpose.msra.mxu0 0.0
        %2168 = vmatprep.subr.mxu0 0.0
        %2169 = vmatpush1.xpose.msra.mxu0 0.0
        %2170 = vmatprep.subr.mxu0 0.0
        %2171 = vmatpush1.xpose.msra.mxu0 0.0
        %2172 = vmatprep.subr.mxu0 0.0
        %2173 = vmatpush1.xpose.msra.mxu0 0.0
        %2174 = vmatprep.subr.mxu0 0.0
        %2175 = vmatpush1.xpose.msra.mxu0 0.0
        %2176 = vmatprep.subr.mxu0 0.0
        %2177 = vmatpush1.xpose.msra.mxu0 %v2146
        %2178 = vmatprep.subr.mxu0 0.0
        %2179 = vmatpush1.xpose.msra.mxu0 %v2143
        %2180 = vmatprep.subr.mxu0 0.0
        %2181 = vmatpush2.xpose.msra.mxu0 0.0
        %2182 = vmatprep.subr.mxu0 0.0
        %2183 = vmatpush2.xpose.msra.mxu0 0.0
        %2184 = vmatprep.subr.mxu0 0.0
        %2185 = vmatpush2.xpose.msra.mxu0 0.0
        %2186 = vmatprep.subr.mxu0 0.0
        %2187 = vmatpush2.xpose.msra.mxu0 0.0
        %2188 = vmatprep.subr.mxu0 0.0
        %2189 = vmatpush2.xpose.msra.mxu0 0.0
        %2190 = vmatprep.subr.mxu0 0.0
        %2191 = vmatpush2.xpose.msra.mxu0 0.0
        %2192 = vmatprep.subr.mxu0 0.0
        %2193 = vmatpush2.xpose.msra.mxu0 0.0
        %2194 = vmatprep.subr.mxu0 0.0
        %2195 = vmatpush2.xpose.msra.mxu0 0.0
        %2196 = vmatprep.subr.mxu0 0.0
        %2197 = vmatpush2.xpose.msra.mxu0 0.0
        %2198 = vmatprep.subr.mxu0 0.0
        %2199 = vmatpush2.xpose.msra.mxu0 0.0
        %2200 = vmatprep.subr.mxu0 0.0
        %2201 = vmatpush2.xpose.msra.mxu0 0.0
        %2202 = vmatprep.subr.mxu0 0.0
        %2203 = vmatpush2.xpose.msra.mxu0 0.0
        %2204 = vmatprep.subr.mxu0 0.0
        %2205 = vmatpush2.xpose.msra.mxu0 0.0
        %2206 = vmatprep.subr.mxu0 0.0
        %2207 = vmatpush2.xpose.msra.mxu0 0.0
        %2208 = vmatprep.subr.mxu0 0.0
        %2209 = vmatpush2.xpose.msra.mxu0 0.0
        %2210 = vmatprep.subr.mxu0 0.0
        %2211 = vmatpush2.xpose.msra.mxu0 0.0
        %2212 = vmatprep.mubr.f32.mxu0 0.0
        %2213 = vmatmul.mubr.f32.gmra.mxu0 %v2137
        %v2214 = vpop.f32.mrf.mxu0
        %v2215 = vadd.f32 0.0, %v2214
        %v2216 = vpop.f32.mrf.mxu0
        %2217 = vmatprep.mubr.f32.mxu0 0.0
        %2218 = vmatmul.mubr.f32.gmra.mxu0 %v2140
        %v2219 = vpop.f32.mrf.mxu0
        %v2220 = vadd.f32 0.0, %v2219
        %v2221 = vpop.f32.mrf.mxu0
        %2222 = vdwg.mxu0
        %v2223 = vmul.f32 %v2215, 0.35355338
        %v2224 = vmul.f32 %v2220, 0.35355338
        %v2225 = vsel %vm635, %v2223, -1e+30
        %v2226 = vsel %vm636, %v2224, -1e+30
        %v2227 = vsel %vm973, %v2225, -inf
        %2228 = vmax.xlane.f32.xlu0 %v2227
        %v2229 = vpop.xlane.xlu0 %2228
        %v2230 = vsel %vm973, %v2226, -inf
        %2231 = vmax.xlane.f32.xlu0 %v2230
        %v2232 = vpop.xlane.xlu0 %2231
        %v2233 = vsub.f32 %v2225, %v2229
        %v2234 = vsub.f32 %v2226, %v2232
        %v2235 = vmul.f32 %v2233, 1.442695
        %v2236 = vpow.pop %v2235
        %v2237 = vmul.f32 %v2234, 1.442695
        %v2238 = vpow.pop %v2237
        %v2239 = vsel %vm973, %v2236, 0.0
        %2240 = vadd.xlane.f32.xlu0 %v2239
        %v2241 = vpop.xlane.xlu0 %2240
        %v2242 = vsel %vm973, %v2238, 0.0
        %2243 = vadd.xlane.f32.xlu0 %v2242
        %v2244 = vpop.xlane.xlu0 %2243
        %v2245 = vadd.f32 %v2241, 1e-06
        %v2246 = vadd.f32 %v2244, 1e-06
        %v2247 = vrcp.pop %v2245
        %v2248 = vrcp.pop %v2246
        %v2249 = vmul.f32 %v2236, %v2247
        %v2250 = vmul.f32 %v2238, %v2248
        %v2252 = vsel %vm973, %v2249, 0
        %v2255 = vsel %vm973, %v2250, 0
        %2257 = vmatprep.subr.mxu0 0.0
        %2258 = vmatpush1.msra.mxu0 0.0
        %2259 = vmatprep.subr.mxu0 0.0
        %2260 = vmatpush1.msra.mxu0 0.0
        %2261 = vmatprep.subr.mxu0 0.0
        %2262 = vmatpush1.msra.mxu0 0.0
        %2263 = vmatprep.subr.mxu0 0.0
        %2264 = vmatpush1.msra.mxu0 0.0
        %2265 = vmatprep.subr.mxu0 0.0
        %2266 = vmatpush1.msra.mxu0 0.0
        %2267 = vmatprep.subr.mxu0 0.0
        %2268 = vmatpush1.msra.mxu0 0.0
        %2269 = vmatprep.subr.mxu0 0.0
        %2270 = vmatpush1.msra.mxu0 0.0
        %2271 = vmatprep.subr.mxu0 0.0
        %2272 = vmatpush1.msra.mxu0 0.0
        %2273 = vmatprep.subr.mxu0 0.0
        %2274 = vmatpush1.msra.mxu0 0.0
        %2275 = vmatprep.subr.mxu0 0.0
        %2276 = vmatpush1.msra.mxu0 0.0
        %2277 = vmatprep.subr.mxu0 0.0
        %2278 = vmatpush1.msra.mxu0 0.0
        %2279 = vmatprep.subr.mxu0 0.0
        %2280 = vmatpush1.msra.mxu0 0.0
        %2281 = vmatprep.subr.mxu0 0.0
        %2282 = vmatpush1.msra.mxu0 0.0
        %2283 = vmatprep.subr.mxu0 0.0
        %2284 = vmatpush1.msra.mxu0 0.0
        %2285 = vmatprep.subr.mxu0 0.0
        %2286 = vmatpush1.msra.mxu0 %v2133
        %2287 = vmatprep.subr.mxu0 0.0
        %2288 = vmatpush1.msra.mxu0 %v2128
        %2289 = vmatprep.subr.mxu0 0.0
        %2290 = vmatpush2.msra.mxu0 0.0
        %2291 = vmatprep.subr.mxu0 0.0
        %2292 = vmatpush2.msra.mxu0 0.0
        %2293 = vmatprep.subr.mxu0 0.0
        %2294 = vmatpush2.msra.mxu0 0.0
        %2295 = vmatprep.subr.mxu0 0.0
        %2296 = vmatpush2.msra.mxu0 0.0
        %2297 = vmatprep.subr.mxu0 0.0
        %2298 = vmatpush2.msra.mxu0 0.0
        %2299 = vmatprep.subr.mxu0 0.0
        %2300 = vmatpush2.msra.mxu0 0.0
        %2301 = vmatprep.subr.mxu0 0.0
        %2302 = vmatpush2.msra.mxu0 0.0
        %2303 = vmatprep.subr.mxu0 0.0
        %2304 = vmatpush2.msra.mxu0 0.0
        %2305 = vmatprep.subr.mxu0 0.0
        %2306 = vmatpush2.msra.mxu0 0.0
        %2307 = vmatprep.subr.mxu0 0.0
        %2308 = vmatpush2.msra.mxu0 0.0
        %2309 = vmatprep.subr.mxu0 0.0
        %2310 = vmatpush2.msra.mxu0 0.0
        %2311 = vmatprep.subr.mxu0 0.0
        %2312 = vmatpush2.msra.mxu0 0.0
        %2313 = vmatprep.subr.mxu0 0.0
        %2314 = vmatpush2.msra.mxu0 0.0
        %2315 = vmatprep.subr.mxu0 0.0
        %2316 = vmatpush2.msra.mxu0 0.0
        %2317 = vmatprep.subr.mxu0 0.0
        %2318 = vmatpush2.msra.mxu0 0.0
        %2319 = vmatprep.subr.mxu0 0.0
        %2320 = vmatpush2.msra.mxu0 0.0
        %2321 = vmatprep.mubr.f32.mxu0 0.0
        %2322 = vmatmul.mubr.f32.gmra.mxu0 %v2252
        %v2323 = vpop.f32.mrf.mxu0
        %v2324 = vadd.f32 0.0, %v2323
        %v2325 = vpop.f32.mrf.mxu0
        %2326 = vmatprep.mubr.f32.mxu0 0.0
        %2327 = vmatmul.mubr.f32.gmra.mxu0 %v2255
        %v2328 = vpop.f32.mrf.mxu0
        %v2329 = vadd.f32 0.0, %v2328
        %v2330 = vpop.f32.mrf.mxu0
        %2331 = vdwg.mxu0
        %s2332 = scalar_lea.vmem %s4, 16
        %v2333 = vld [vmem:[%s2332] sm:$0xff]
        %s2334 = scalar_lea.vmem %s5, 2
        %v2335 = vld [vmem:[%s2334] sm:$0x1]
        %v2337 = vlaneseq
        %v2338 = vshrl.u32 %v2337, 7
        %v2339 = vsub.s32 0, %v2338
        %v2340 = vrot.slane %v2335, %v2339
        %v2343 = vsel %vm881, %v2324, 0
        %v2346 = vsel %vm881, %v2329, 0
        %v2349 = vsel %vm881, %v2333, 0
        %2351 = vmatprep.subr.mxu0 0.0
        %2352 = vmatpush1.xpose.msra.mxu0 0.0
        %2353 = vmatprep.subr.mxu0 0.0
        %2354 = vmatpush1.xpose.msra.mxu0 0.0
        %2355 = vmatprep.subr.mxu0 0.0
        %2356 = vmatpush1.xpose.msra.mxu0 0.0
        %2357 = vmatprep.subr.mxu0 0.0
        %2358 = vmatpush1.xpose.msra.mxu0 0.0
        %2359 = vmatprep.subr.mxu0 0.0
        %2360 = vmatpush1.xpose.msra.mxu0 0.0
        %2361 = vmatprep.subr.mxu0 0.0
        %2362 = vmatpush1.xpose.msra.mxu0 0.0
        %2363 = vmatprep.subr.mxu0 0.0
        %2364 = vmatpush1.xpose.msra.mxu0 0.0
        %2365 = vmatprep.subr.mxu0 0.0
        %2366 = vmatpush1.xpose.msra.mxu0 0.0
        %2367 = vmatprep.subr.mxu0 0.0
        %2368 = vmatpush1.xpose.msra.mxu0 0.0
        %2369 = vmatprep.subr.mxu0 0.0
        %2370 = vmatpush1.xpose.msra.mxu0 0.0
        %2371 = vmatprep.subr.mxu0 0.0
        %2372 = vmatpush1.xpose.msra.mxu0 0.0
        %2373 = vmatprep.subr.mxu0 0.0
        %2374 = vmatpush1.xpose.msra.mxu0 0.0
        %2375 = vmatprep.subr.mxu0 0.0
        %2376 = vmatpush1.xpose.msra.mxu0 0.0
        %2377 = vmatprep.subr.mxu0 0.0
        %2378 = vmatpush1.xpose.msra.mxu0 0.0
        %2379 = vmatprep.subr.mxu0 0.0
        %2380 = vmatpush1.xpose.msra.mxu0 0.0
        %2381 = vmatprep.subr.mxu0 0.0
        %2382 = vmatpush1.xpose.msra.mxu0 %v2349
        %2383 = vmatprep.subr.mxu0 0.0
        %2384 = vmatpush2.xpose.msra.mxu0 0.0
        %2385 = vmatprep.subr.mxu0 0.0
        %2386 = vmatpush2.xpose.msra.mxu0 0.0
        %2387 = vmatprep.subr.mxu0 0.0
        %2388 = vmatpush2.xpose.msra.mxu0 0.0
        %2389 = vmatprep.subr.mxu0 0.0
        %2390 = vmatpush2.xpose.msra.mxu0 0.0
        %2391 = vmatprep.subr.mxu0 0.0
        %2392 = vmatpush2.xpose.msra.mxu0 0.0
        %2393 = vmatprep.subr.mxu0 0.0
        %2394 = vmatpush2.xpose.msra.mxu0 0.0
        %2395 = vmatprep.subr.mxu0 0.0
        %2396 = vmatpush2.xpose.msra.mxu0 0.0
        %2397 = vmatprep.subr.mxu0 0.0
        %2398 = vmatpush2.xpose.msra.mxu0 0.0
        %2399 = vmatprep.subr.mxu0 0.0
        %2400 = vmatpush2.xpose.msra.mxu0 0.0
        %2401 = vmatprep.subr.mxu0 0.0
        %2402 = vmatpush2.xpose.msra.mxu0 0.0
        %2403 = vmatprep.subr.mxu0 0.0
        %2404 = vmatpush2.xpose.msra.mxu0 0.0
        %2405 = vmatprep.subr.mxu0 0.0
        %2406 = vmatpush2.xpose.msra.mxu0 0.0
        %2407 = vmatprep.subr.mxu0 0.0
        %2408 = vmatpush2.xpose.msra.mxu0 0.0
        %2409 = vmatprep.subr.mxu0 0.0
        %2410 = vmatpush2.xpose.msra.mxu0 0.0
        %2411 = vmatprep.subr.mxu0 0.0
        %2412 = vmatpush2.xpose.msra.mxu0 0.0
        %2413 = vmatprep.subr.mxu0 0.0
        %2414 = vmatpush2.xpose.msra.mxu0 0.0
        %2415 = vmatprep.mubr.f32.mxu0 0.0
        %2416 = vmatmul.mubr.f32.gmra.mxu0 %v2343
        %v2417 = vpop.f32.mrf.mxu0
        %v2418 = vadd.f32 %v2340, %v2417
        %v2419 = vpop.f32.mrf.mxu0
        %2420 = vmatprep.mubr.f32.mxu0 0.0
        %2421 = vmatmul.mubr.f32.gmra.mxu0 %v2346
        %v2422 = vpop.f32.mrf.mxu0
        %v2423 = vadd.f32 %v2340, %v2422
        %v2424 = vpop.f32.mrf.mxu0
        %2425 = vdwg.mxu0
        %s2426 = scalar_lea.vmem %s6, 64
        %v2427 = vld [vmem:[%s2426] sm:$0xff]
        %v2428 = vld [vmem:[%s2426 + $0x8] sm:$0xff]
        %v2429 = vld [vmem:[%s2426 + $0x10] sm:$0xff]
        %v2430 = vld [vmem:[%s2426 + $0x18] sm:$0xff]
        %v2432 = vsel %vm881, %v2418, 0
        %v2435 = vsel %vm881, %v2423, 0
        %v2438 = vsel %vm881, %v2427, 0
        %v2441 = vsel %vm881, %v2428, 0
        %v2444 = vsel %vm881, %v2429, 0
        %v2447 = vsel %vm881, %v2430, 0
        %2449 = vmatprep.subr.mxu0 0.0
        %2450 = vmatpush1.xpose.msra.mxu0 0.0
        %2451 = vmatprep.subr.mxu0 0.0
        %2452 = vmatpush1.xpose.msra.mxu0 0.0
        %2453 = vmatprep.subr.mxu0 0.0
        %2454 = vmatpush1.xpose.msra.mxu0 0.0
        %2455 = vmatprep.subr.mxu0 0.0
        %2456 = vmatpush1.xpose.msra.mxu0 0.0
        %2457 = vmatprep.subr.mxu0 0.0
        %2458 = vmatpush1.xpose.msra.mxu0 0.0
        %2459 = vmatprep.subr.mxu0 0.0
        %2460 = vmatpush1.xpose.msra.mxu0 0.0
        %2461 = vmatprep.subr.mxu0 0.0
        %2462 = vmatpush1.xpose.msra.mxu0 0.0
        %2463 = vmatprep.subr.mxu0 0.0
        %2464 = vmatpush1.xpose.msra.mxu0 0.0
        %2465 = vmatprep.subr.mxu0 0.0
        %2466 = vmatpush1.xpose.msra.mxu0 0.0
        %2467 = vmatprep.subr.mxu0 0.0
        %2468 = vmatpush1.xpose.msra.mxu0 0.0
        %2469 = vmatprep.subr.mxu0 0.0
        %2470 = vmatpush1.xpose.msra.mxu0 0.0
        %2471 = vmatprep.subr.mxu0 0.0
        %2472 = vmatpush1.xpose.msra.mxu0 0.0
        %2473 = vmatprep.subr.mxu0 0.0
        %2474 = vmatpush1.xpose.msra.mxu0 %v2447
        %2475 = vmatprep.subr.mxu0 0.0
        %2476 = vmatpush1.xpose.msra.mxu0 %v2444
        %2477 = vmatprep.subr.mxu0 0.0
        %2478 = vmatpush1.xpose.msra.mxu0 %v2441
        %2479 = vmatprep.subr.mxu0 0.0
        %2480 = vmatpush1.xpose.msra.mxu0 %v2438
        %2481 = vmatprep.subr.mxu0 0.0
        %2482 = vmatpush2.xpose.msra.mxu0 0.0
        %2483 = vmatprep.subr.mxu0 0.0
        %2484 = vmatpush2.xpose.msra.mxu0 0.0
        %2485 = vmatprep.subr.mxu0 0.0
        %2486 = vmatpush2.xpose.msra.mxu0 0.0
        %2487 = vmatprep.subr.mxu0 0.0
        %2488 = vmatpush2.xpose.msra.mxu0 0.0
        %2489 = vmatprep.subr.mxu0 0.0
        %2490 = vmatpush2.xpose.msra.mxu0 0.0
        %2491 = vmatprep.subr.mxu0 0.0
        %2492 = vmatpush2.xpose.msra.mxu0 0.0
        %2493 = vmatprep.subr.mxu0 0.0
        %2494 = vmatpush2.xpose.msra.mxu0 0.0
        %2495 = vmatprep.subr.mxu0 0.0
        %2496 = vmatpush2.xpose.msra.mxu0 0.0
        %2497 = vmatprep.subr.mxu0 0.0
        %2498 = vmatpush2.xpose.msra.mxu0 0.0
        %2499 = vmatprep.subr.mxu0 0.0
        %2500 = vmatpush2.xpose.msra.mxu0 0.0
        %2501 = vmatprep.subr.mxu0 0.0
        %2502 = vmatpush2.xpose.msra.mxu0 0.0
        %2503 = vmatprep.subr.mxu0 0.0
        %2504 = vmatpush2.xpose.msra.mxu0 0.0
        %2505 = vmatprep.subr.mxu0 0.0
        %2506 = vmatpush2.xpose.msra.mxu0 0.0
        %2507 = vmatprep.subr.mxu0 0.0
        %2508 = vmatpush2.xpose.msra.mxu0 0.0
        %2509 = vmatprep.subr.mxu0 0.0
        %2510 = vmatpush2.xpose.msra.mxu0 0.0
        %2511 = vmatprep.subr.mxu0 0.0
        %2512 = vmatpush2.xpose.msra.mxu0 0.0
        %2513 = vmatprep.mubr.f32.mxu0 0.0
        %2514 = vmatmul.mubr.f32.gmra.mxu0 %v2432
        %v2515 = vpop.f32.mrf.mxu0
        %v2516 = vadd.f32 0.0, %v2515
        %v2517 = vpop.f32.mrf.mxu0
        %2518 = vmatprep.mubr.f32.mxu0 0.0
        %2519 = vmatmul.mubr.f32.gmra.mxu0 %v2435
        %v2520 = vpop.f32.mrf.mxu0
        %v2521 = vadd.f32 0.0, %v2520
        %v2522 = vpop.f32.mrf.mxu0
        %2523 = vdwg.mxu0
        %v2524 = vadd.f32 %v1888, %v2516
        %v2525 = vadd.f32 %v1893, %v2521
        %s2526 = scalar_lea.vmem %s1, 24
        %v2527 = vld [vmem:[%s2526] sm:$0xff]
        %v2529 = vsel %vm638, %v2527, 0
        %2531 = vmatprep.subr.mxu0 0.0
        %2532 = vmatpush1.xpose.msra.mxu0 0.0
        %2533 = vmatprep.subr.mxu0 0.0
        %2534 = vmatpush1.xpose.msra.mxu0 0.0
        %2535 = vmatprep.subr.mxu0 0.0
        %2536 = vmatpush1.xpose.msra.mxu0 0.0
        %2537 = vmatprep.subr.mxu0 0.0
        %2538 = vmatpush1.xpose.msra.mxu0 0.0
        %2539 = vmatprep.subr.mxu0 0.0
        %2540 = vmatpush1.xpose.msra.mxu0 0.0
        %2541 = vmatprep.subr.mxu0 0.0
        %2542 = vmatpush1.xpose.msra.mxu0 0.0
        %2543 = vmatprep.subr.mxu0 0.0
        %2544 = vmatpush1.xpose.msra.mxu0 0.0
        %2545 = vmatprep.subr.mxu0 0.0
        %2546 = vmatpush1.xpose.msra.mxu0 0.0
        %2547 = vmatprep.subr.mxu0 0.0
        %2548 = vmatpush1.xpose.msra.mxu0 0.0
        %2549 = vmatprep.subr.mxu0 0.0
        %2550 = vmatpush1.xpose.msra.mxu0 0.0
        %2551 = vmatprep.subr.mxu0 0.0
        %2552 = vmatpush1.xpose.msra.mxu0 0.0
        %2553 = vmatprep.subr.mxu0 0.0
        %2554 = vmatpush1.xpose.msra.mxu0 0.0
        %2555 = vmatprep.subr.mxu0 0.0
        %2556 = vmatpush1.xpose.msra.mxu0 0.0
        %2557 = vmatprep.subr.mxu0 0.0
        %2558 = vmatpush1.xpose.msra.mxu0 0.0
        %2559 = vmatprep.subr.mxu0 0.0
        %2560 = vmatpush1.xpose.msra.mxu0 0.0
        %2561 = vmatprep.subr.mxu0 0.0
        %2562 = vmatpush1.xpose.msra.mxu0 %v2529
        %2563 = vmatprep.subr.mxu0 0.0
        %2564 = vmatpush2.xpose.msra.mxu0 0.0
        %2565 = vmatprep.subr.mxu0 0.0
        %2566 = vmatpush2.xpose.msra.mxu0 0.0
        %2567 = vmatprep.subr.mxu0 0.0
        %2568 = vmatpush2.xpose.msra.mxu0 0.0
        %2569 = vmatprep.subr.mxu0 0.0
        %2570 = vmatpush2.xpose.msra.mxu0 0.0
        %2571 = vmatprep.subr.mxu0 0.0
        %2572 = vmatpush2.xpose.msra.mxu0 0.0
        %2573 = vmatprep.subr.mxu0 0.0
        %2574 = vmatpush2.xpose.msra.mxu0 0.0
        %2575 = vmatprep.subr.mxu0 0.0
        %2576 = vmatpush2.xpose.msra.mxu0 0.0
        %2577 = vmatprep.subr.mxu0 0.0
        %2578 = vmatpush2.xpose.msra.mxu0 0.0
        %2579 = vmatprep.subr.mxu0 0.0
        %2580 = vmatpush2.xpose.msra.mxu0 0.0
        %2581 = vmatprep.subr.mxu0 0.0
        %2582 = vmatpush2.xpose.msra.mxu0 0.0
        %2583 = vmatprep.subr.mxu0 0.0
        %2584 = vmatpush2.xpose.msra.mxu0 0.0
        %2585 = vmatprep.subr.mxu0 0.0
        %2586 = vmatpush2.xpose.msra.mxu0 0.0
        %2587 = vmatprep.subr.mxu0 0.0
        %2588 = vmatpush2.xpose.msra.mxu0 0.0
        %2589 = vmatprep.subr.mxu0 0.0
        %2590 = vmatpush2.xpose.msra.mxu0 0.0
        %2591 = vmatprep.subr.mxu0 0.0
        %2592 = vmatpush2.xpose.msra.mxu0 0.0
        %2593 = vmatprep.subr.mxu0 0.0
        %2594 = vmatpush2.xpose.msra.mxu0 0.0
        %2595 = vmatprep.mubr.f32.mxu0 0.0
        %2596 = vmatmul.mubr.f32.gmra.mxu0 %v640
        %v2597 = vpop.f32.mrf.mxu0
        %v2598 = vadd.f32 0.0, %v2597
        %v2599 = vpop.f32.mrf.mxu0
        %2600 = vmatprep.mubr.f32.mxu0 0.0
        %2601 = vmatmul.mubr.f32.gmra.mxu0 %v643
        %v2602 = vpop.f32.mrf.mxu0
        %v2603 = vadd.f32 0.0, %v2602
        %v2604 = vpop.f32.mrf.mxu0
        %2605 = vdwg.mxu0
        %s2606 = scalar_lea.vmem %s2, 24
        %v2607 = vld [vmem:[%s2606] sm:$0xff]
        %v2609 = vsel %vm638, %v2607, 0
        %2611 = vmatprep.subr.mxu0 0.0
        %2612 = vmatpush1.xpose.msra.mxu0 0.0
        %2613 = vmatprep.subr.mxu0 0.0
        %2614 = vmatpush1.xpose.msra.mxu0 0.0
        %2615 = vmatprep.subr.mxu0 0.0
        %2616 = vmatpush1.xpose.msra.mxu0 0.0
        %2617 = vmatprep.subr.mxu0 0.0
        %2618 = vmatpush1.xpose.msra.mxu0 0.0
        %2619 = vmatprep.subr.mxu0 0.0
        %2620 = vmatpush1.xpose.msra.mxu0 0.0
        %2621 = vmatprep.subr.mxu0 0.0
        %2622 = vmatpush1.xpose.msra.mxu0 0.0
        %2623 = vmatprep.subr.mxu0 0.0
        %2624 = vmatpush1.xpose.msra.mxu0 0.0
        %2625 = vmatprep.subr.mxu0 0.0
        %2626 = vmatpush1.xpose.msra.mxu0 0.0
        %2627 = vmatprep.subr.mxu0 0.0
        %2628 = vmatpush1.xpose.msra.mxu0 0.0
        %2629 = vmatprep.subr.mxu0 0.0
        %2630 = vmatpush1.xpose.msra.mxu0 0.0
        %2631 = vmatprep.subr.mxu0 0.0
        %2632 = vmatpush1.xpose.msra.mxu0 0.0
        %2633 = vmatprep.subr.mxu0 0.0
        %2634 = vmatpush1.xpose.msra.mxu0 0.0
        %2635 = vmatprep.subr.mxu0 0.0
        %2636 = vmatpush1.xpose.msra.mxu0 0.0
        %2637 = vmatprep.subr.mxu0 0.0
        %2638 = vmatpush1.xpose.msra.mxu0 0.0
        %2639 = vmatprep.subr.mxu0 0.0
        %2640 = vmatpush1.xpose.msra.mxu0 0.0
        %2641 = vmatprep.subr.mxu0 0.0
        %2642 = vmatpush1.xpose.msra.mxu0 %v2609
        %2643 = vmatprep.subr.mxu0 0.0
        %2644 = vmatpush2.xpose.msra.mxu0 0.0
        %2645 = vmatprep.subr.mxu0 0.0
        %2646 = vmatpush2.xpose.msra.mxu0 0.0
        %2647 = vmatprep.subr.mxu0 0.0
        %2648 = vmatpush2.xpose.msra.mxu0 0.0
        %2649 = vmatprep.subr.mxu0 0.0
        %2650 = vmatpush2.xpose.msra.mxu0 0.0
        %2651 = vmatprep.subr.mxu0 0.0
        %2652 = vmatpush2.xpose.msra.mxu0 0.0
        %2653 = vmatprep.subr.mxu0 0.0
        %2654 = vmatpush2.xpose.msra.mxu0 0.0
        %2655 = vmatprep.subr.mxu0 0.0
        %2656 = vmatpush2.xpose.msra.mxu0 0.0
        %2657 = vmatprep.subr.mxu0 0.0
        %2658 = vmatpush2.xpose.msra.mxu0 0.0
        %2659 = vmatprep.subr.mxu0 0.0
        %2660 = vmatpush2.xpose.msra.mxu0 0.0
        %2661 = vmatprep.subr.mxu0 0.0
        %2662 = vmatpush2.xpose.msra.mxu0 0.0
        %2663 = vmatprep.subr.mxu0 0.0
        %2664 = vmatpush2.xpose.msra.mxu0 0.0
        %2665 = vmatprep.subr.mxu0 0.0
        %2666 = vmatpush2.xpose.msra.mxu0 0.0
        %2667 = vmatprep.subr.mxu0 0.0
        %2668 = vmatpush2.xpose.msra.mxu0 0.0
        %2669 = vmatprep.subr.mxu0 0.0
        %2670 = vmatpush2.xpose.msra.mxu0 0.0
        %2671 = vmatprep.subr.mxu0 0.0
        %2672 = vmatpush2.xpose.msra.mxu0 0.0
        %2673 = vmatprep.subr.mxu0 0.0
        %2674 = vmatpush2.xpose.msra.mxu0 0.0
        %2675 = vmatprep.mubr.f32.mxu0 0.0
        %2676 = vmatmul.mubr.f32.gmra.mxu0 %v640
        %v2677 = vpop.f32.mrf.mxu0
        %v2678 = vadd.f32 0.0, %v2677
        %v2679 = vpop.f32.mrf.mxu0
        %2680 = vmatprep.mubr.f32.mxu0 0.0
        %2681 = vmatmul.mubr.f32.gmra.mxu0 %v643
        %v2682 = vpop.f32.mrf.mxu0
        %v2683 = vadd.f32 0.0, %v2682
        %v2684 = vpop.f32.mrf.mxu0
        %2685 = vdwg.mxu0
        %s2686 = scalar_lea.vmem %s3, 24
        %v2687 = vld [vmem:[%s2686] sm:$0xff]
        %v2689 = vsel %vm638, %v2687, 0
        %2691 = vmatprep.subr.mxu0 0.0
        %2692 = vmatpush1.xpose.msra.mxu0 0.0
        %2693 = vmatprep.subr.mxu0 0.0
        %2694 = vmatpush1.xpose.msra.mxu0 0.0
        %2695 = vmatprep.subr.mxu0 0.0
        %2696 = vmatpush1.xpose.msra.mxu0 0.0
        %2697 = vmatprep.subr.mxu0 0.0
        %2698 = vmatpush1.xpose.msra.mxu0 0.0
        %2699 = vmatprep.subr.mxu0 0.0
        %2700 = vmatpush1.xpose.msra.mxu0 0.0
        %2701 = vmatprep.subr.mxu0 0.0
        %2702 = vmatpush1.xpose.msra.mxu0 0.0
        %2703 = vmatprep.subr.mxu0 0.0
        %2704 = vmatpush1.xpose.msra.mxu0 0.0
        %2705 = vmatprep.subr.mxu0 0.0
        %2706 = vmatpush1.xpose.msra.mxu0 0.0
        %2707 = vmatprep.subr.mxu0 0.0
        %2708 = vmatpush1.xpose.msra.mxu0 0.0
        %2709 = vmatprep.subr.mxu0 0.0
        %2710 = vmatpush1.xpose.msra.mxu0 0.0
        %2711 = vmatprep.subr.mxu0 0.0
        %2712 = vmatpush1.xpose.msra.mxu0 0.0
        %2713 = vmatprep.subr.mxu0 0.0
        %2714 = vmatpush1.xpose.msra.mxu0 0.0
        %2715 = vmatprep.subr.mxu0 0.0
        %2716 = vmatpush1.xpose.msra.mxu0 0.0
        %2717 = vmatprep.subr.mxu0 0.0
        %2718 = vmatpush1.xpose.msra.mxu0 0.0
        %2719 = vmatprep.subr.mxu0 0.0
        %2720 = vmatpush1.xpose.msra.mxu0 0.0
        %2721 = vmatprep.subr.mxu0 0.0
        %2722 = vmatpush1.xpose.msra.mxu0 %v2689
        %2723 = vmatprep.subr.mxu0 0.0
        %2724 = vmatpush2.xpose.msra.mxu0 0.0
        %2725 = vmatprep.subr.mxu0 0.0
        %2726 = vmatpush2.xpose.msra.mxu0 0.0
        %2727 = vmatprep.subr.mxu0 0.0
        %2728 = vmatpush2.xpose.msra.mxu0 0.0
        %2729 = vmatprep.subr.mxu0 0.0
        %2730 = vmatpush2.xpose.msra.mxu0 0.0
        %2731 = vmatprep.subr.mxu0 0.0
        %2732 = vmatpush2.xpose.msra.mxu0 0.0
        %2733 = vmatprep.subr.mxu0 0.0
        %2734 = vmatpush2.xpose.msra.mxu0 0.0
        %2735 = vmatprep.subr.mxu0 0.0
        %2736 = vmatpush2.xpose.msra.mxu0 0.0
        %2737 = vmatprep.subr.mxu0 0.0
        %2738 = vmatpush2.xpose.msra.mxu0 0.0
        %2739 = vmatprep.subr.mxu0 0.0
        %2740 = vmatpush2.xpose.msra.mxu0 0.0
        %2741 = vmatprep.subr.mxu0 0.0
        %2742 = vmatpush2.xpose.msra.mxu0 0.0
        %2743 = vmatprep.subr.mxu0 0.0
        %2744 = vmatpush2.xpose.msra.mxu0 0.0
        %2745 = vmatprep.subr.mxu0 0.0
        %2746 = vmatpush2.xpose.msra.mxu0 0.0
        %2747 = vmatprep.subr.mxu0 0.0
        %2748 = vmatpush2.xpose.msra.mxu0 0.0
        %2749 = vmatprep.subr.mxu0 0.0
        %2750 = vmatpush2.xpose.msra.mxu0 0.0
        %2751 = vmatprep.subr.mxu0 0.0
        %2752 = vmatpush2.xpose.msra.mxu0 0.0
        %2753 = vmatprep.subr.mxu0 0.0
        %2754 = vmatpush2.xpose.msra.mxu0 0.0
        %2755 = vmatprep.mubr.f32.mxu0 0.0
        %2756 = vmatmul.mubr.f32.gmra.mxu0 %v640
        %v2757 = vpop.f32.mrf.mxu0
        %v2758 = vadd.f32 0.0, %v2757
        %v2759 = vpop.f32.mrf.mxu0
        %2760 = vmatprep.mubr.f32.mxu0 0.0
        %2761 = vmatmul.mubr.f32.gmra.mxu0 %v643
        %v2762 = vpop.f32.mrf.mxu0
        %v2763 = vadd.f32 0.0, %v2762
        %v2764 = vpop.f32.mrf.mxu0
        %2765 = vdwg.mxu0
        %v2767 = vsel %vm881, %v2598, 0
        %v2770 = vsel %vm881, %v2603, 0
        %v2773 = vsel %vm881, %v2678, 0
        %v2776 = vsel %vm881, %v2683, 0
        %2778 = vmatprep.subr.mxu0 0.0
        %2779 = vmatpush1.xpose.msra.mxu0 0.0
        %2780 = vmatprep.subr.mxu0 0.0
        %2781 = vmatpush1.xpose.msra.mxu0 0.0
        %2782 = vmatprep.subr.mxu0 0.0
        %2783 = vmatpush1.xpose.msra.mxu0 0.0
        %2784 = vmatprep.subr.mxu0 0.0
        %2785 = vmatpush1.xpose.msra.mxu0 0.0
        %2786 = vmatprep.subr.mxu0 0.0
        %2787 = vmatpush1.xpose.msra.mxu0 0.0
        %2788 = vmatprep.subr.mxu0 0.0
        %2789 = vmatpush1.xpose.msra.mxu0 0.0
        %2790 = vmatprep.subr.mxu0 0.0
        %2791 = vmatpush1.xpose.msra.mxu0 0.0
        %2792 = vmatprep.subr.mxu0 0.0
        %2793 = vmatpush1.xpose.msra.mxu0 0.0
        %2794 = vmatprep.subr.mxu0 0.0
        %2795 = vmatpush1.xpose.msra.mxu0 0.0
        %2796 = vmatprep.subr.mxu0 0.0
        %2797 = vmatpush1.xpose.msra.mxu0 0.0
        %2798 = vmatprep.subr.mxu0 0.0
        %2799 = vmatpush1.xpose.msra.mxu0 0.0
        %2800 = vmatprep.subr.mxu0 0.0
        %2801 = vmatpush1.xpose.msra.mxu0 0.0
        %2802 = vmatprep.subr.mxu0 0.0
        %2803 = vmatpush1.xpose.msra.mxu0 0.0
        %2804 = vmatprep.subr.mxu0 0.0
        %2805 = vmatpush1.xpose.msra.mxu0 0.0
        %2806 = vmatprep.subr.mxu0 0.0
        %2807 = vmatpush1.xpose.msra.mxu0 %v2776
        %2808 = vmatprep.subr.mxu0 0.0
        %2809 = vmatpush1.xpose.msra.mxu0 %v2773
        %2810 = vmatprep.subr.mxu0 0.0
        %2811 = vmatpush2.xpose.msra.mxu0 0.0
        %2812 = vmatprep.subr.mxu0 0.0
        %2813 = vmatpush2.xpose.msra.mxu0 0.0
        %2814 = vmatprep.subr.mxu0 0.0
        %2815 = vmatpush2.xpose.msra.mxu0 0.0
        %2816 = vmatprep.subr.mxu0 0.0
        %2817 = vmatpush2.xpose.msra.mxu0 0.0
        %2818 = vmatprep.subr.mxu0 0.0
        %2819 = vmatpush2.xpose.msra.mxu0 0.0
        %2820 = vmatprep.subr.mxu0 0.0
        %2821 = vmatpush2.xpose.msra.mxu0 0.0
        %2822 = vmatprep.subr.mxu0 0.0
        %2823 = vmatpush2.xpose.msra.mxu0 0.0
        %2824 = vmatprep.subr.mxu0 0.0
        %2825 = vmatpush2.xpose.msra.mxu0 0.0
        %2826 = vmatprep.subr.mxu0 0.0
        %2827 = vmatpush2.xpose.msra.mxu0 0.0
        %2828 = vmatprep.subr.mxu0 0.0
        %2829 = vmatpush2.xpose.msra.mxu0 0.0
        %2830 = vmatprep.subr.mxu0 0.0
        %2831 = vmatpush2.xpose.msra.mxu0 0.0
        %2832 = vmatprep.subr.mxu0 0.0
        %2833 = vmatpush2.xpose.msra.mxu0 0.0
        %2834 = vmatprep.subr.mxu0 0.0
        %2835 = vmatpush2.xpose.msra.mxu0 0.0
        %2836 = vmatprep.subr.mxu0 0.0
        %2837 = vmatpush2.xpose.msra.mxu0 0.0
        %2838 = vmatprep.subr.mxu0 0.0
        %2839 = vmatpush2.xpose.msra.mxu0 0.0
        %2840 = vmatprep.subr.mxu0 0.0
        %2841 = vmatpush2.xpose.msra.mxu0 0.0
        %2842 = vmatprep.mubr.f32.mxu0 0.0
        %2843 = vmatmul.mubr.f32.gmra.mxu0 %v2767
        %v2844 = vpop.f32.mrf.mxu0
        %v2845 = vadd.f32 0.0, %v2844
        %v2846 = vpop.f32.mrf.mxu0
        %2847 = vmatprep.mubr.f32.mxu0 0.0
        %2848 = vmatmul.mubr.f32.gmra.mxu0 %v2770
        %v2849 = vpop.f32.mrf.mxu0
        %v2850 = vadd.f32 0.0, %v2849
        %v2851 = vpop.f32.mrf.mxu0
        %2852 = vdwg.mxu0
        %v2853 = vmul.f32 %v2845, 0.35355338
        %v2854 = vmul.f32 %v2850, 0.35355338
        %v2855 = vsel %vm635, %v2853, -1e+30
        %v2856 = vsel %vm636, %v2854, -1e+30
        %v2857 = vsel %vm973, %v2855, -inf
        %2858 = vmax.xlane.f32.xlu0 %v2857
        %v2859 = vpop.xlane.xlu0 %2858
        %v2860 = vsel %vm973, %v2856, -inf
        %2861 = vmax.xlane.f32.xlu0 %v2860
        %v2862 = vpop.xlane.xlu0 %2861
        %v2863 = vsub.f32 %v2855, %v2859
        %v2864 = vsub.f32 %v2856, %v2862
        %v2865 = vmul.f32 %v2863, 1.442695
        %v2866 = vpow.pop %v2865
        %v2867 = vmul.f32 %v2864, 1.442695
        %v2868 = vpow.pop %v2867
        %v2869 = vsel %vm973, %v2866, 0.0
        %2870 = vadd.xlane.f32.xlu0 %v2869
        %v2871 = vpop.xlane.xlu0 %2870
        %v2872 = vsel %vm973, %v2868, 0.0
        %2873 = vadd.xlane.f32.xlu0 %v2872
        %v2874 = vpop.xlane.xlu0 %2873
        %v2875 = vadd.f32 %v2871, 1e-06
        %v2876 = vadd.f32 %v2874, 1e-06
        %v2877 = vrcp.pop %v2875
        %v2878 = vrcp.pop %v2876
        %v2879 = vmul.f32 %v2866, %v2877
        %v2880 = vmul.f32 %v2868, %v2878
        %v2882 = vsel %vm973, %v2879, 0
        %v2885 = vsel %vm973, %v2880, 0
        %2887 = vmatprep.subr.mxu0 0.0
        %2888 = vmatpush1.msra.mxu0 0.0
        %2889 = vmatprep.subr.mxu0 0.0
        %2890 = vmatpush1.msra.mxu0 0.0
        %2891 = vmatprep.subr.mxu0 0.0
        %2892 = vmatpush1.msra.mxu0 0.0
        %2893 = vmatprep.subr.mxu0 0.0
        %2894 = vmatpush1.msra.mxu0 0.0
        %2895 = vmatprep.subr.mxu0 0.0
        %2896 = vmatpush1.msra.mxu0 0.0
        %2897 = vmatprep.subr.mxu0 0.0
        %2898 = vmatpush1.msra.mxu0 0.0
        %2899 = vmatprep.subr.mxu0 0.0
        %2900 = vmatpush1.msra.mxu0 0.0
        %2901 = vmatprep.subr.mxu0 0.0
        %2902 = vmatpush1.msra.mxu0 0.0
        %2903 = vmatprep.subr.mxu0 0.0
        %2904 = vmatpush1.msra.mxu0 0.0
        %2905 = vmatprep.subr.mxu0 0.0
        %2906 = vmatpush1.msra.mxu0 0.0
        %2907 = vmatprep.subr.mxu0 0.0
        %2908 = vmatpush1.msra.mxu0 0.0
        %2909 = vmatprep.subr.mxu0 0.0
        %2910 = vmatpush1.msra.mxu0 0.0
        %2911 = vmatprep.subr.mxu0 0.0
        %2912 = vmatpush1.msra.mxu0 0.0
        %2913 = vmatprep.subr.mxu0 0.0
        %2914 = vmatpush1.msra.mxu0 0.0
        %2915 = vmatprep.subr.mxu0 0.0
        %2916 = vmatpush1.msra.mxu0 %v2763
        %2917 = vmatprep.subr.mxu0 0.0
        %2918 = vmatpush1.msra.mxu0 %v2758
        %2919 = vmatprep.subr.mxu0 0.0
        %2920 = vmatpush2.msra.mxu0 0.0
        %2921 = vmatprep.subr.mxu0 0.0
        %2922 = vmatpush2.msra.mxu0 0.0
        %2923 = vmatprep.subr.mxu0 0.0
        %2924 = vmatpush2.msra.mxu0 0.0
        %2925 = vmatprep.subr.mxu0 0.0
        %2926 = vmatpush2.msra.mxu0 0.0
        %2927 = vmatprep.subr.mxu0 0.0
        %2928 = vmatpush2.msra.mxu0 0.0
        %2929 = vmatprep.subr.mxu0 0.0
        %2930 = vmatpush2.msra.mxu0 0.0
        %2931 = vmatprep.subr.mxu0 0.0
        %2932 = vmatpush2.msra.mxu0 0.0
        %2933 = vmatprep.subr.mxu0 0.0
        %2934 = vmatpush2.msra.mxu0 0.0
        %2935 = vmatprep.subr.mxu0 0.0
        %2936 = vmatpush2.msra.mxu0 0.0
        %2937 = vmatprep.subr.mxu0 0.0
        %2938 = vmatpush2.msra.mxu0 0.0
        %2939 = vmatprep.subr.mxu0 0.0
        %2940 = vmatpush2.msra.mxu0 0.0
        %2941 = vmatprep.subr.mxu0 0.0
        %2942 = vmatpush2.msra.mxu0 0.0
        %2943 = vmatprep.subr.mxu0 0.0
        %2944 = vmatpush2.msra.mxu0 0.0
        %2945 = vmatprep.subr.mxu0 0.0
        %2946 = vmatpush2.msra.mxu0 0.0
        %2947 = vmatprep.subr.mxu0 0.0
        %2948 = vmatpush2.msra.mxu0 0.0
        %2949 = vmatprep.subr.mxu0 0.0
        %2950 = vmatpush2.msra.mxu0 0.0
        %2951 = vmatprep.mubr.f32.mxu0 0.0
        %2952 = vmatmul.mubr.f32.gmra.mxu0 %v2882
        %v2953 = vpop.f32.mrf.mxu0
        %v2954 = vadd.f32 0.0, %v2953
        %v2955 = vpop.f32.mrf.mxu0
        %2956 = vmatprep.mubr.f32.mxu0 0.0
        %2957 = vmatmul.mubr.f32.gmra.mxu0 %v2885
        %v2958 = vpop.f32.mrf.mxu0
        %v2959 = vadd.f32 0.0, %v2958
        %v2960 = vpop.f32.mrf.mxu0
        %2961 = vdwg.mxu0
        %s2962 = scalar_lea.vmem %s4, 24
        %v2963 = vld [vmem:[%s2962] sm:$0xff]
        %s2964 = scalar_lea.vmem %s5, 3
        %v2965 = vld [vmem:[%s2964] sm:$0x1]
        %v2967 = vlaneseq
        %v2968 = vshrl.u32 %v2967, 7
        %v2969 = vsub.s32 0, %v2968
        %v2970 = vrot.slane %v2965, %v2969
        %v2973 = vsel %vm881, %v2954, 0
        %v2976 = vsel %vm881, %v2959, 0
        %v2979 = vsel %vm881, %v2963, 0
        %2981 = vmatprep.subr.mxu0 0.0
        %2982 = vmatpush1.xpose.msra.mxu0 0.0
        %2983 = vmatprep.subr.mxu0 0.0
        %2984 = vmatpush1.xpose.msra.mxu0 0.0
        %2985 = vmatprep.subr.mxu0 0.0
        %2986 = vmatpush1.xpose.msra.mxu0 0.0
        %2987 = vmatprep.subr.mxu0 0.0
        %2988 = vmatpush1.xpose.msra.mxu0 0.0
        %2989 = vmatprep.subr.mxu0 0.0
        %2990 = vmatpush1.xpose.msra.mxu0 0.0
        %2991 = vmatprep.subr.mxu0 0.0
        %2992 = vmatpush1.xpose.msra.mxu0 0.0
        %2993 = vmatprep.subr.mxu0 0.0
        %2994 = vmatpush1.xpose.msra.mxu0 0.0
        %2995 = vmatprep.subr.mxu0 0.0
        %2996 = vmatpush1.xpose.msra.mxu0 0.0
        %2997 = vmatprep.subr.mxu0 0.0
        %2998 = vmatpush1.xpose.msra.mxu0 0.0
        %2999 = vmatprep.subr.mxu0 0.0
        %3000 = vmatpush1.xpose.msra.mxu0 0.0
        %3001 = vmatprep.subr.mxu0 0.0
        %3002 = vmatpush1.xpose.msra.mxu0 0.0
        %3003 = vmatprep.subr.mxu0 0.0
        %3004 = vmatpush1.xpose.msra.mxu0 0.0
        %3005 = vmatprep.subr.mxu0 0.0
        %3006 = vmatpush1.xpose.msra.mxu0 0.0
        %3007 = vmatprep.subr.mxu0 0.0
        %3008 = vmatpush1.xpose.msra.mxu0 0.0
        %3009 = vmatprep.subr.mxu0 0.0
        %3010 = vmatpush1.xpose.msra.mxu0 0.0
        %3011 = vmatprep.subr.mxu0 0.0
        %3012 = vmatpush1.xpose.msra.mxu0 %v2979
        %3013 = vmatprep.subr.mxu0 0.0
        %3014 = vmatpush2.xpose.msra.mxu0 0.0
        %3015 = vmatprep.subr.mxu0 0.0
        %3016 = vmatpush2.xpose.msra.mxu0 0.0
        %3017 = vmatprep.subr.mxu0 0.0
        %3018 = vmatpush2.xpose.msra.mxu0 0.0
        %3019 = vmatprep.subr.mxu0 0.0
        %3020 = vmatpush2.xpose.msra.mxu0 0.0
        %3021 = vmatprep.subr.mxu0 0.0
        %3022 = vmatpush2.xpose.msra.mxu0 0.0
        %3023 = vmatprep.subr.mxu0 0.0
        %3024 = vmatpush2.xpose.msra.mxu0 0.0
        %3025 = vmatprep.subr.mxu0 0.0
        %3026 = vmatpush2.xpose.msra.mxu0 0.0
        %3027 = vmatprep.subr.mxu0 0.0
        %3028 = vmatpush2.xpose.msra.mxu0 0.0
        %3029 = vmatprep.subr.mxu0 0.0
        %3030 = vmatpush2.xpose.msra.mxu0 0.0
        %3031 = vmatprep.subr.mxu0 0.0
        %3032 = vmatpush2.xpose.msra.mxu0 0.0
        %3033 = vmatprep.subr.mxu0 0.0
        %3034 = vmatpush2.xpose.msra.mxu0 0.0
        %3035 = vmatprep.subr.mxu0 0.0
        %3036 = vmatpush2.xpose.msra.mxu0 0.0
        %3037 = vmatprep.subr.mxu0 0.0
        %3038 = vmatpush2.xpose.msra.mxu0 0.0
        %3039 = vmatprep.subr.mxu0 0.0
        %3040 = vmatpush2.xpose.msra.mxu0 0.0
        %3041 = vmatprep.subr.mxu0 0.0
        %3042 = vmatpush2.xpose.msra.mxu0 0.0
        %3043 = vmatprep.subr.mxu0 0.0
        %3044 = vmatpush2.xpose.msra.mxu0 0.0
        %3045 = vmatprep.mubr.f32.mxu0 0.0
        %3046 = vmatmul.mubr.f32.gmra.mxu0 %v2973
        %v3047 = vpop.f32.mrf.mxu0
        %v3048 = vadd.f32 %v2970, %v3047
        %v3049 = vpop.f32.mrf.mxu0
        %3050 = vmatprep.mubr.f32.mxu0 0.0
        %3051 = vmatmul.mubr.f32.gmra.mxu0 %v2976
        %v3052 = vpop.f32.mrf.mxu0
        %v3053 = vadd.f32 %v2970, %v3052
        %v3054 = vpop.f32.mrf.mxu0
        %3055 = vdwg.mxu0
        %s3056 = scalar_lea.vmem %s6, 96
        %v3057 = vld [vmem:[%s3056] sm:$0xff]
        %v3058 = vld [vmem:[%s3056 + $0x8] sm:$0xff]
        %v3059 = vld [vmem:[%s3056 + $0x10] sm:$0xff]
        %v3060 = vld [vmem:[%s3056 + $0x18] sm:$0xff]
        %v3062 = vsel %vm881, %v3048, 0
        %v3065 = vsel %vm881, %v3053, 0
        %v3068 = vsel %vm881, %v3057, 0
        %v3071 = vsel %vm881, %v3058, 0
        %v3074 = vsel %vm881, %v3059, 0
        %v3077 = vsel %vm881, %v3060, 0
        %3079 = vmatprep.subr.mxu0 0.0
        %3080 = vmatpush1.xpose.msra.mxu0 0.0
        %3081 = vmatprep.subr.mxu0 0.0
        %3082 = vmatpush1.xpose.msra.mxu0 0.0
        %3083 = vmatprep.subr.mxu0 0.0
        %3084 = vmatpush1.xpose.msra.mxu0 0.0
        %3085 = vmatprep.subr.mxu0 0.0
        %3086 = vmatpush1.xpose.msra.mxu0 0.0
        %3087 = vmatprep.subr.mxu0 0.0
        %3088 = vmatpush1.xpose.msra.mxu0 0.0
        %3089 = vmatprep.subr.mxu0 0.0
        %3090 = vmatpush1.xpose.msra.mxu0 0.0
        %3091 = vmatprep.subr.mxu0 0.0
        %3092 = vmatpush1.xpose.msra.mxu0 0.0
        %3093 = vmatprep.subr.mxu0 0.0
        %3094 = vmatpush1.xpose.msra.mxu0 0.0
        %3095 = vmatprep.subr.mxu0 0.0
        %3096 = vmatpush1.xpose.msra.mxu0 0.0
        %3097 = vmatprep.subr.mxu0 0.0
        %3098 = vmatpush1.xpose.msra.mxu0 0.0
        %3099 = vmatprep.subr.mxu0 0.0
        %3100 = vmatpush1.xpose.msra.mxu0 0.0
        %3101 = vmatprep.subr.mxu0 0.0
        %3102 = vmatpush1.xpose.msra.mxu0 0.0
        %3103 = vmatprep.subr.mxu0 0.0
        %3104 = vmatpush1.xpose.msra.mxu0 %v3077
        %3105 = vmatprep.subr.mxu0 0.0
        %3106 = vmatpush1.xpose.msra.mxu0 %v3074
        %3107 = vmatprep.subr.mxu0 0.0
        %3108 = vmatpush1.xpose.msra.mxu0 %v3071
        %3109 = vmatprep.subr.mxu0 0.0
        %3110 = vmatpush1.xpose.msra.mxu0 %v3068
        %3111 = vmatprep.subr.mxu0 0.0
        %3112 = vmatpush2.xpose.msra.mxu0 0.0
        %3113 = vmatprep.subr.mxu0 0.0
        %3114 = vmatpush2.xpose.msra.mxu0 0.0
        %3115 = vmatprep.subr.mxu0 0.0
        %3116 = vmatpush2.xpose.msra.mxu0 0.0
        %3117 = vmatprep.subr.mxu0 0.0
        %3118 = vmatpush2.xpose.msra.mxu0 0.0
        %3119 = vmatprep.subr.mxu0 0.0
        %3120 = vmatpush2.xpose.msra.mxu0 0.0
        %3121 = vmatprep.subr.mxu0 0.0
        %3122 = vmatpush2.xpose.msra.mxu0 0.0
        %3123 = vmatprep.subr.mxu0 0.0
        %3124 = vmatpush2.xpose.msra.mxu0 0.0
        %3125 = vmatprep.subr.mxu0 0.0
        %3126 = vmatpush2.xpose.msra.mxu0 0.0
        %3127 = vmatprep.subr.mxu0 0.0
        %3128 = vmatpush2.xpose.msra.mxu0 0.0
        %3129 = vmatprep.subr.mxu0 0.0
        %3130 = vmatpush2.xpose.msra.mxu0 0.0
        %3131 = vmatprep.subr.mxu0 0.0
        %3132 = vmatpush2.xpose.msra.mxu0 0.0
        %3133 = vmatprep.subr.mxu0 0.0
        %3134 = vmatpush2.xpose.msra.mxu0 0.0
        %3135 = vmatprep.subr.mxu0 0.0
        %3136 = vmatpush2.xpose.msra.mxu0 0.0
        %3137 = vmatprep.subr.mxu0 0.0
        %3138 = vmatpush2.xpose.msra.mxu0 0.0
        %3139 = vmatprep.subr.mxu0 0.0
        %3140 = vmatpush2.xpose.msra.mxu0 0.0
        %3141 = vmatprep.subr.mxu0 0.0
        %3142 = vmatpush2.xpose.msra.mxu0 0.0
        %3143 = vmatprep.mubr.f32.mxu0 0.0
        %3144 = vmatmul.mubr.f32.gmra.mxu0 %v3062
        %v3145 = vpop.f32.mrf.mxu0
        %v3146 = vadd.f32 0.0, %v3145
        %v3147 = vpop.f32.mrf.mxu0
        %3148 = vmatprep.mubr.f32.mxu0 0.0
        %3149 = vmatmul.mubr.f32.gmra.mxu0 %v3065
        %v3150 = vpop.f32.mrf.mxu0
        %v3151 = vadd.f32 0.0, %v3150
        %v3152 = vpop.f32.mrf.mxu0
        %3153 = vdwg.mxu0
        %v3154 = vadd.f32 %v2524, %v3146
        %v3155 = vadd.f32 %v2525, %v3151
        %v3156 = vld [vmem:[%s7] sm:$0x1]
        %v3158 = vlaneseq
        %v3159 = vshrl.u32 %v3158, 7
        %v3160 = vsub.s32 0, %v3159
        %v3161 = vrot.slane %v3156, %v3160
        %v3163 = vadd.f32 %v3154, %v3161
        %v3164 = vadd.f32 %v3155, %v3161
        %v3165 = vadd.f32 %v628, %v3163
        %v3166 = vadd.f32 %v629, %v3164
        %v3167 = vld [vmem:[%s8] sm:$0x1]
        %v3168 = vld [vmem:[%s9] sm:$0x1]
        %v3169 = vsel %vm638, %v3165, 0.0
        %3170 = vadd.xlane.f32.xlu0 %v3169
        %v3171 = vpop.xlane.xlu0 %3170
        %v3172 = vsel %vm638, %v3166, 0.0
        %3173 = vadd.xlane.f32.xlu0 %v3172
        %v3174 = vpop.xlane.xlu0 %3173
        %v3175 = vrcp.pop 32.0
        %v3176 = vmul.f32 %v3171, %v3175
        %v3177 = vmul.f32 %v3174, %v3175
        %v3178 = vsub.f32 %v3165, %v3176
        %v3179 = vsub.f32 %v3166, %v3177
        %v3180 = vmul.f32 %v3178, %v3178
        %v3181 = vmul.f32 %v3179, %v3179
        %v3182 = vsel %vm638, %v3180, 0.0
        %3183 = vadd.xlane.f32.xlu0 %v3182
        %v3184 = vpop.xlane.xlu0 %3183
        %v3185 = vsel %vm638, %v3181, 0.0
        %3186 = vadd.xlane.f32.xlu0 %v3185
        %v3187 = vpop.xlane.xlu0 %3186
        %v3188 = vmul.f32 %v3184, %v3175
        %v3189 = vmul.f32 %v3187, %v3175
        %v3190 = vadd.f32 %v3188, 1e-05
        %v3191 = vadd.f32 %v3189, 1e-05
        %v3192 = vrsqrt.pop %v3190
        %v3193 = vrsqrt.pop %v3191
        %v3194 = vmul.f32 %v3178, %v3192
        %v3195 = vmul.f32 %v3179, %v3193
        %v3197 = vlaneseq
        %v3198 = vshrl.u32 %v3197, 7
        %v3199 = vsub.s32 0, %v3198
        %v3200 = vrot.slane %v3167, %v3199
        %v3202 = vmul.f32 %v3194, %v3200
        %v3203 = vmul.f32 %v3195, %v3200
        %v3205 = vlaneseq
        %v3206 = vshrl.u32 %v3205, 7
        %v3207 = vsub.s32 0, %v3206
        %v3208 = vrot.slane %v3168, %v3207
        %v3210 = vadd.f32 %v3202, %v3208
        %v3211 = vadd.f32 %v3203, %v3208
        %v3212 = vld [vmem:[%s10] sm:$0xff]
        %v3213 = vld [vmem:[%s10 + $0x8] sm:$0xff]
        %v3214 = vld [vmem:[%s10 + $0x10] sm:$0xff]
        %v3215 = vld [vmem:[%s10 + $0x18] sm:$0xff]
        %v3216 = vld [vmem:[%s11] sm:$0x1]
        %v3218 = vlaneseq
        %v3219 = vshrl.u32 %v3218, 7
        %v3220 = vsub.s32 0, %v3219
        %v3221 = vrot.slane %v3216, %v3220
        %v3224 = vsel %vm638, %v3210, 0
        %v3227 = vsel %vm638, %v3211, 0
        %3229 = vmatprep.subr.mxu0 0.0
        %3230 = vmatpush1.msra.mxu0 0.0
        %3231 = vmatprep.subr.mxu0 0.0
        %3232 = vmatpush1.msra.mxu0 0.0
        %3233 = vmatprep.subr.mxu0 0.0
        %3234 = vmatpush1.msra.mxu0 0.0
        %3235 = vmatprep.subr.mxu0 0.0
        %3236 = vmatpush1.msra.mxu0 0.0
        %3237 = vmatprep.subr.mxu0 0.0
        %3238 = vmatpush1.msra.mxu0 0.0
        %3239 = vmatprep.subr.mxu0 0.0
        %3240 = vmatpush1.msra.mxu0 0.0
        %3241 = vmatprep.subr.mxu0 0.0
        %3242 = vmatpush1.msra.mxu0 0.0
        %3243 = vmatprep.subr.mxu0 0.0
        %3244 = vmatpush1.msra.mxu0 0.0
        %3245 = vmatprep.subr.mxu0 0.0
        %3246 = vmatpush1.msra.mxu0 0.0
        %3247 = vmatprep.subr.mxu0 0.0
        %3248 = vmatpush1.msra.mxu0 0.0
        %3249 = vmatprep.subr.mxu0 0.0
        %3250 = vmatpush1.msra.mxu0 0.0
        %3251 = vmatprep.subr.mxu0 0.0
        %3252 = vmatpush1.msra.mxu0 0.0
        %3253 = vmatprep.subr.mxu0 0.0
        %3254 = vmatpush1.msra.mxu0 %v3215
        %3255 = vmatprep.subr.mxu0 0.0
        %3256 = vmatpush1.msra.mxu0 %v3214
        %3257 = vmatprep.subr.mxu0 0.0
        %3258 = vmatpush1.msra.mxu0 %v3213
        %3259 = vmatprep.subr.mxu0 0.0
        %3260 = vmatpush1.msra.mxu0 %v3212
        %3261 = vmatprep.subr.mxu0 0.0
        %3262 = vmatpush2.msra.mxu0 0.0
        %3263 = vmatprep.subr.mxu0 0.0
        %3264 = vmatpush2.msra.mxu0 0.0
        %3265 = vmatprep.subr.mxu0 0.0
        %3266 = vmatpush2.msra.mxu0 0.0
        %3267 = vmatprep.subr.mxu0 0.0
        %3268 = vmatpush2.msra.mxu0 0.0
        %3269 = vmatprep.subr.mxu0 0.0
        %3270 = vmatpush2.msra.mxu0 0.0
        %3271 = vmatprep.subr.mxu0 0.0
        %3272 = vmatpush2.msra.mxu0 0.0
        %3273 = vmatprep.subr.mxu0 0.0
        %3274 = vmatpush2.msra.mxu0 0.0
        %3275 = vmatprep.subr.mxu0 0.0
        %3276 = vmatpush2.msra.mxu0 0.0
        %3277 = vmatprep.subr.mxu0 0.0
        %3278 = vmatpush2.msra.mxu0 0.0
        %3279 = vmatprep.subr.mxu0 0.0
        %3280 = vmatpush2.msra.mxu0 0.0
        %3281 = vmatprep.subr.mxu0 0.0
        %3282 = vmatpush2.msra.mxu0 0.0
        %3283 = vmatprep.subr.mxu0 0.0
        %3284 = vmatpush2.msra.mxu0 0.0
        %3285 = vmatprep.subr.mxu0 0.0
        %3286 = vmatpush2.msra.mxu0 0.0
        %3287 = vmatprep.subr.mxu0 0.0
        %3288 = vmatpush2.msra.mxu0 0.0
        %3289 = vmatprep.subr.mxu0 0.0
        %3290 = vmatpush2.msra.mxu0 0.0
        %3291 = vmatprep.subr.mxu0 0.0
        %3292 = vmatpush2.msra.mxu0 0.0
        %3293 = vmatprep.mubr.f32.mxu0 0.0
        %3294 = vmatmul.mubr.f32.gmra.mxu0 %v3224
        %v3295 = vpop.f32.mrf.mxu0
        %v3296 = vadd.f32 %v3221, %v3295
        %v3297 = vpop.f32.mrf.mxu0
        %3298 = vmatprep.mubr.f32.mxu0 0.0
        %3299 = vmatmul.mubr.f32.gmra.mxu0 %v3227
        %v3300 = vpop.f32.mrf.mxu0
        %v3301 = vadd.f32 %v3221, %v3300
        %v3302 = vpop.f32.mrf.mxu0
        %3303 = vdwg.mxu0
        %v3304 = vmax.f32 %v3296, 0.0
        %v3305 = vmax.f32 %v3301, 0.0
        %v3306 = vld [vmem:[%s12] sm:$0xff]
        %v3307 = vld [vmem:[%s12 + $0x8] sm:$0xff]
        %v3308 = vld [vmem:[%s13] sm:$0x1]
        %v3310 = vlaneseq
        %v3311 = vshrl.u32 %v3310, 7
        %v3312 = vsub.s32 0, %v3311
        %v3313 = vrot.slane %v3308, %v3312
        %v3316 = vsel %vm973, %v3304, 0
        %v3319 = vsel %vm973, %v3305, 0
        %3321 = vmatprep.subr.mxu0 0.0
        %3322 = vmatpush1.msra.mxu0 0.0
        %3323 = vmatprep.subr.mxu0 0.0
        %3324 = vmatpush1.msra.mxu0 0.0
        %3325 = vmatprep.subr.mxu0 0.0
        %3326 = vmatpush1.msra.mxu0 0.0
        %3327 = vmatprep.subr.mxu0 0.0
        %3328 = vmatpush1.msra.mxu0 0.0
        %3329 = vmatprep.subr.mxu0 0.0
        %3330 = vmatpush1.msra.mxu0 0.0
        %3331 = vmatprep.subr.mxu0 0.0
        %3332 = vmatpush1.msra.mxu0 0.0
        %3333 = vmatprep.subr.mxu0 0.0
        %3334 = vmatpush1.msra.mxu0 0.0
        %3335 = vmatprep.subr.mxu0 0.0
        %3336 = vmatpush1.msra.mxu0 0.0
        %3337 = vmatprep.subr.mxu0 0.0
        %3338 = vmatpush1.msra.mxu0 0.0
        %3339 = vmatprep.subr.mxu0 0.0
        %3340 = vmatpush1.msra.mxu0 0.0
        %3341 = vmatprep.subr.mxu0 0.0
        %3342 = vmatpush1.msra.mxu0 0.0
        %3343 = vmatprep.subr.mxu0 0.0
        %3344 = vmatpush1.msra.mxu0 0.0
        %3345 = vmatprep.subr.mxu0 0.0
        %3346 = vmatpush1.msra.mxu0 0.0
        %3347 = vmatprep.subr.mxu0 0.0
        %3348 = vmatpush1.msra.mxu0 0.0
        %3349 = vmatprep.subr.mxu0 0.0
        %3350 = vmatpush1.msra.mxu0 %v3307
        %3351 = vmatprep.subr.mxu0 0.0
        %3352 = vmatpush1.msra.mxu0 %v3306
        %3353 = vmatprep.subr.mxu0 0.0
        %3354 = vmatpush2.msra.mxu0 0.0
        %3355 = vmatprep.subr.mxu0 0.0
        %3356 = vmatpush2.msra.mxu0 0.0
        %3357 = vmatprep.subr.mxu0 0.0
        %3358 = vmatpush2.msra.mxu0 0.0
        %3359 = vmatprep.subr.mxu0 0.0
        %3360 = vmatpush2.msra.mxu0 0.0
        %3361 = vmatprep.subr.mxu0 0.0
        %3362 = vmatpush2.msra.mxu0 0.0
        %3363 = vmatprep.subr.mxu0 0.0
        %3364 = vmatpush2.msra.mxu0 0.0
        %3365 = vmatprep.subr.mxu0 0.0
        %3366 = vmatpush2.msra.mxu0 0.0
        %3367 = vmatprep.subr.mxu0 0.0
        %3368 = vmatpush2.msra.mxu0 0.0
        %3369 = vmatprep.subr.mxu0 0.0
        %3370 = vmatpush2.msra.mxu0 0.0
        %3371 = vmatprep.subr.mxu0 0.0
        %3372 = vmatpush2.msra.mxu0 0.0
        %3373 = vmatprep.subr.mxu0 0.0
        %3374 = vmatpush2.msra.mxu0 0.0
        %3375 = vmatprep.subr.mxu0 0.0
        %3376 = vmatpush2.msra.mxu0 0.0
        %3377 = vmatprep.subr.mxu0 0.0
        %3378 = vmatpush2.msra.mxu0 0.0
        %3379 = vmatprep.subr.mxu0 0.0
        %3380 = vmatpush2.msra.mxu0 0.0
        %3381 = vmatprep.subr.mxu0 0.0
        %3382 = vmatpush2.msra.mxu0 0.0
        %3383 = vmatprep.subr.mxu0 0.0
        %3384 = vmatpush2.msra.mxu0 0.0
        %3385 = vmatprep.mubr.f32.mxu0 0.0
        %3386 = vmatmul.mubr.f32.gmra.mxu0 %v3316
        %v3387 = vpop.f32.mrf.mxu0
        %v3388 = vadd.f32 %v3313, %v3387
        %v3389 = vpop.f32.mrf.mxu0
        %3390 = vmatprep.mubr.f32.mxu0 0.0
        %3391 = vmatmul.mubr.f32.gmra.mxu0 %v3319
        %v3392 = vpop.f32.mrf.mxu0
        %v3393 = vadd.f32 %v3313, %v3392
        %v3394 = vpop.f32.mrf.mxu0
        %3395 = vdwg.mxu0
        %v3396 = vadd.f32 %v3210, %v3388
        %v3397 = vadd.f32 %v3211, %v3393
        %v3398 = vld [vmem:[%s14] sm:$0x1]
        %v3399 = vld [vmem:[%s15] sm:$0x1]
        %v3400 = vsel %vm638, %v3396, 0.0
        %3401 = vadd.xlane.f32.xlu0 %v3400
        %v3402 = vpop.xlane.xlu0 %3401
        %v3403 = vsel %vm638, %v3397, 0.0
        %3404 = vadd.xlane.f32.xlu0 %v3403
        %v3405 = vpop.xlane.xlu0 %3404
        %v3406 = vmul.f32 %v3402, %v3175
        %v3407 = vmul.f32 %v3405, %v3175
        %v3408 = vsub.f32 %v3396, %v3406
        %v3409 = vsub.f32 %v3397, %v3407
        %v3410 = vmul.f32 %v3408, %v3408
        %v3411 = vmul.f32 %v3409, %v3409
        %v3412 = vsel %vm638, %v3410, 0.0
        %3413 = vadd.xlane.f32.xlu0 %v3412
        %v3414 = vpop.xlane.xlu0 %3413
        %v3415 = vsel %vm638, %v3411, 0.0
        %3416 = vadd.xlane.f32.xlu0 %v3415
        %v3417 = vpop.xlane.xlu0 %3416
        %v3418 = vmul.f32 %v3414, %v3175
        %v3419 = vmul.f32 %v3417, %v3175
        %v3420 = vadd.f32 %v3418, 1e-05
        %v3421 = vadd.f32 %v3419, 1e-05
        %v3422 = vrsqrt.pop %v3420
        %v3423 = vrsqrt.pop %v3421
        %v3424 = vmul.f32 %v3408, %v3422
        %v3425 = vmul.f32 %v3409, %v3423
        %v3427 = vlaneseq
        %v3428 = vshrl.u32 %v3427, 7
        %v3429 = vsub.s32 0, %v3428
        %v3430 = vrot.slane %v3398, %v3429
        %v3432 = vmul.f32 %v3424, %v3430
        %v3433 = vmul.f32 %v3425, %v3430
        %v3435 = vlaneseq
        %v3436 = vshrl.u32 %v3435, 7
        %v3437 = vsub.s32 0, %v3436
        %v3438 = vrot.slane %v3399, %v3437
        %v3440 = vadd.f32 %v3432, %v3438
        %v3441 = vadd.f32 %v3433, %v3438
        %s3442 = scalar_lea.vmem %s1, 32
        %v3443 = vld [vmem:[%s3442] sm:$0xff]
        %v3445 = vsel %vm638, %v3440, 0
        %v3448 = vsel %vm638, %v3441, 0
        %v3451 = vsel %vm638, %v3443, 0
        %3453 = vmatprep.subr.mxu0 0.0
        %3454 = vmatpush1.xpose.msra.mxu0 0.0
        %3455 = vmatprep.subr.mxu0 0.0
        %3456 = vmatpush1.xpose.msra.mxu0 0.0
        %3457 = vmatprep.subr.mxu0 0.0
        %3458 = vmatpush1.xpose.msra.mxu0 0.0
        %3459 = vmatprep.subr.mxu0 0.0
        %3460 = vmatpush1.xpose.msra.mxu0 0.0
        %3461 = vmatprep.subr.mxu0 0.0
        %3462 = vmatpush1.xpose.msra.mxu0 0.0
        %3463 = vmatprep.subr.mxu0 0.0
        %3464 = vmatpush1.xpose.msra.mxu0 0.0
        %3465 = vmatprep.subr.mxu0 0.0
        %3466 = vmatpush1.xpose.msra.mxu0 0.0
        %3467 = vmatprep.subr.mxu0 0.0
        %3468 = vmatpush1.xpose.msra.mxu0 0.0
        %3469 = vmatprep.subr.mxu0 0.0
        %3470 = vmatpush1.xpose.msra.mxu0 0.0
        %3471 = vmatprep.subr.mxu0 0.0
        %3472 = vmatpush1.xpose.msra.mxu0 0.0
        %3473 = vmatprep.subr.mxu0 0.0
        %3474 = vmatpush1.xpose.msra.mxu0 0.0
        %3475 = vmatprep.subr.mxu0 0.0
        %3476 = vmatpush1.xpose.msra.mxu0 0.0
        %3477 = vmatprep.subr.mxu0 0.0
        %3478 = vmatpush1.xpose.msra.mxu0 0.0
        %3479 = vmatprep.subr.mxu0 0.0
        %3480 = vmatpush1.xpose.msra.mxu0 0.0
        %3481 = vmatprep.subr.mxu0 0.0
        %3482 = vmatpush1.xpose.msra.mxu0 0.0
        %3483 = vmatprep.subr.mxu0 0.0
        %3484 = vmatpush1.xpose.msra.mxu0 %v3451
        %3485 = vmatprep.subr.mxu0 0.0
        %3486 = vmatpush2.xpose.msra.mxu0 0.0
        %3487 = vmatprep.subr.mxu0 0.0
        %3488 = vmatpush2.xpose.msra.mxu0 0.0
        %3489 = vmatprep.subr.mxu0 0.0
        %3490 = vmatpush2.xpose.msra.mxu0 0.0
        %3491 = vmatprep.subr.mxu0 0.0
        %3492 = vmatpush2.xpose.msra.mxu0 0.0
        %3493 = vmatprep.subr.mxu0 0.0
        %3494 = vmatpush2.xpose.msra.mxu0 0.0
        %3495 = vmatprep.subr.mxu0 0.0
        %3496 = vmatpush2.xpose.msra.mxu0 0.0
        %3497 = vmatprep.subr.mxu0 0.0
        %3498 = vmatpush2.xpose.msra.mxu0 0.0
        %3499 = vmatprep.subr.mxu0 0.0
        %3500 = vmatpush2.xpose.msra.mxu0 0.0
        %3501 = vmatprep.subr.mxu0 0.0
        %3502 = vmatpush2.xpose.msra.mxu0 0.0
        %3503 = vmatprep.subr.mxu0 0.0
        %3504 = vmatpush2.xpose.msra.mxu0 0.0
        %3505 = vmatprep.subr.mxu0 0.0
        %3506 = vmatpush2.xpose.msra.mxu0 0.0
        %3507 = vmatprep.subr.mxu0 0.0
        %3508 = vmatpush2.xpose.msra.mxu0 0.0
        %3509 = vmatprep.subr.mxu0 0.0
        %3510 = vmatpush2.xpose.msra.mxu0 0.0
        %3511 = vmatprep.subr.mxu0 0.0
        %3512 = vmatpush2.xpose.msra.mxu0 0.0
        %3513 = vmatprep.subr.mxu0 0.0
        %3514 = vmatpush2.xpose.msra.mxu0 0.0
        %3515 = vmatprep.subr.mxu0 0.0
        %3516 = vmatpush2.xpose.msra.mxu0 0.0
        %3517 = vmatprep.mubr.f32.mxu0 0.0
        %3518 = vmatmul.mubr.f32.gmra.mxu0 %v3445
        %v3519 = vpop.f32.mrf.mxu0
        %v3520 = vadd.f32 0.0, %v3519
        %v3521 = vpop.f32.mrf.mxu0
        %3522 = vmatprep.mubr.f32.mxu0 0.0
        %3523 = vmatmul.mubr.f32.gmra.mxu0 %v3448
        %v3524 = vpop.f32.mrf.mxu0
        %v3525 = vadd.f32 0.0, %v3524
        %v3526 = vpop.f32.mrf.mxu0
        %3527 = vdwg.mxu0
        %s3528 = scalar_lea.vmem %s2, 32
        %v3529 = vld [vmem:[%s3528] sm:$0xff]
        %v3531 = vsel %vm638, %v3529, 0
        %3533 = vmatprep.subr.mxu0 0.0
        %3534 = vmatpush1.xpose.msra.mxu0 0.0
        %3535 = vmatprep.subr.mxu0 0.0
        %3536 = vmatpush1.xpose.msra.mxu0 0.0
        %3537 = vmatprep.subr.mxu0 0.0
        %3538 = vmatpush1.xpose.msra.mxu0 0.0
        %3539 = vmatprep.subr.mxu0 0.0
        %3540 = vmatpush1.xpose.msra.mxu0 0.0
        %3541 = vmatprep.subr.mxu0 0.0
        %3542 = vmatpush1.xpose.msra.mxu0 0.0
        %3543 = vmatprep.subr.mxu0 0.0
        %3544 = vmatpush1.xpose.msra.mxu0 0.0
        %3545 = vmatprep.subr.mxu0 0.0
        %3546 = vmatpush1.xpose.msra.mxu0 0.0
        %3547 = vmatprep.subr.mxu0 0.0
        %3548 = vmatpush1.xpose.msra.mxu0 0.0
        %3549 = vmatprep.subr.mxu0 0.0
        %3550 = vmatpush1.xpose.msra.mxu0 0.0
        %3551 = vmatprep.subr.mxu0 0.0
        %3552 = vmatpush1.xpose.msra.mxu0 0.0
        %3553 = vmatprep.subr.mxu0 0.0
        %3554 = vmatpush1.xpose.msra.mxu0 0.0
        %3555 = vmatprep.subr.mxu0 0.0
        %3556 = vmatpush1.xpose.msra.mxu0 0.0
        %3557 = vmatprep.subr.mxu0 0.0
        %3558 = vmatpush1.xpose.msra.mxu0 0.0
        %3559 = vmatprep.subr.mxu0 0.0
        %3560 = vmatpush1.xpose.msra.mxu0 0.0
        %3561 = vmatprep.subr.mxu0 0.0
        %3562 = vmatpush1.xpose.msra.mxu0 0.0
        %3563 = vmatprep.subr.mxu0 0.0
        %3564 = vmatpush1.xpose.msra.mxu0 %v3531
        %3565 = vmatprep.subr.mxu0 0.0
        %3566 = vmatpush2.xpose.msra.mxu0 0.0
        %3567 = vmatprep.subr.mxu0 0.0
        %3568 = vmatpush2.xpose.msra.mxu0 0.0
        %3569 = vmatprep.subr.mxu0 0.0
        %3570 = vmatpush2.xpose.msra.mxu0 0.0
        %3571 = vmatprep.subr.mxu0 0.0
        %3572 = vmatpush2.xpose.msra.mxu0 0.0
        %3573 = vmatprep.subr.mxu0 0.0
        %3574 = vmatpush2.xpose.msra.mxu0 0.0
        %3575 = vmatprep.subr.mxu0 0.0
        %3576 = vmatpush2.xpose.msra.mxu0 0.0
        %3577 = vmatprep.subr.mxu0 0.0
        %3578 = vmatpush2.xpose.msra.mxu0 0.0
        %3579 = vmatprep.subr.mxu0 0.0
        %3580 = vmatpush2.xpose.msra.mxu0 0.0
        %3581 = vmatprep.subr.mxu0 0.0
        %3582 = vmatpush2.xpose.msra.mxu0 0.0
        %3583 = vmatprep.subr.mxu0 0.0
        %3584 = vmatpush2.xpose.msra.mxu0 0.0
        %3585 = vmatprep.subr.mxu0 0.0
        %3586 = vmatpush2.xpose.msra.mxu0 0.0
        %3587 = vmatprep.subr.mxu0 0.0
        %3588 = vmatpush2.xpose.msra.mxu0 0.0
        %3589 = vmatprep.subr.mxu0 0.0
        %3590 = vmatpush2.xpose.msra.mxu0 0.0
        %3591 = vmatprep.subr.mxu0 0.0
        %3592 = vmatpush2.xpose.msra.mxu0 0.0
        %3593 = vmatprep.subr.mxu0 0.0
        %3594 = vmatpush2.xpose.msra.mxu0 0.0
        %3595 = vmatprep.subr.mxu0 0.0
        %3596 = vmatpush2.xpose.msra.mxu0 0.0
        %3597 = vmatprep.mubr.f32.mxu0 0.0
        %3598 = vmatmul.mubr.f32.gmra.mxu0 %v3445
        %v3599 = vpop.f32.mrf.mxu0
        %v3600 = vadd.f32 0.0, %v3599
        %v3601 = vpop.f32.mrf.mxu0
        %3602 = vmatprep.mubr.f32.mxu0 0.0
        %3603 = vmatmul.mubr.f32.gmra.mxu0 %v3448
        %v3604 = vpop.f32.mrf.mxu0
        %v3605 = vadd.f32 0.0, %v3604
        %v3606 = vpop.f32.mrf.mxu0
        %3607 = vdwg.mxu0
        %s3608 = scalar_lea.vmem %s3, 32
        %v3609 = vld [vmem:[%s3608] sm:$0xff]
        %v3611 = vsel %vm638, %v3609, 0
        %3613 = vmatprep.subr.mxu0 0.0
        %3614 = vmatpush1.xpose.msra.mxu0 0.0
        %3615 = vmatprep.subr.mxu0 0.0
        %3616 = vmatpush1.xpose.msra.mxu0 0.0
        %3617 = vmatprep.subr.mxu0 0.0
        %3618 = vmatpush1.xpose.msra.mxu0 0.0
        %3619 = vmatprep.subr.mxu0 0.0
        %3620 = vmatpush1.xpose.msra.mxu0 0.0
        %3621 = vmatprep.subr.mxu0 0.0
        %3622 = vmatpush1.xpose.msra.mxu0 0.0
        %3623 = vmatprep.subr.mxu0 0.0
        %3624 = vmatpush1.xpose.msra.mxu0 0.0
        %3625 = vmatprep.subr.mxu0 0.0
        %3626 = vmatpush1.xpose.msra.mxu0 0.0
        %3627 = vmatprep.subr.mxu0 0.0
        %3628 = vmatpush1.xpose.msra.mxu0 0.0
        %3629 = vmatprep.subr.mxu0 0.0
        %3630 = vmatpush1.xpose.msra.mxu0 0.0
        %3631 = vmatprep.subr.mxu0 0.0
        %3632 = vmatpush1.xpose.msra.mxu0 0.0
        %3633 = vmatprep.subr.mxu0 0.0
        %3634 = vmatpush1.xpose.msra.mxu0 0.0
        %3635 = vmatprep.subr.mxu0 0.0
        %3636 = vmatpush1.xpose.msra.mxu0 0.0
        %3637 = vmatprep.subr.mxu0 0.0
        %3638 = vmatpush1.xpose.msra.mxu0 0.0
        %3639 = vmatprep.subr.mxu0 0.0
        %3640 = vmatpush1.xpose.msra.mxu0 0.0
        %3641 = vmatprep.subr.mxu0 0.0
        %3642 = vmatpush1.xpose.msra.mxu0 0.0
        %3643 = vmatprep.subr.mxu0 0.0
        %3644 = vmatpush1.xpose.msra.mxu0 %v3611
        %3645 = vmatprep.subr.mxu0 0.0
        %3646 = vmatpush2.xpose.msra.mxu0 0.0
        %3647 = vmatprep.subr.mxu0 0.0
        %3648 = vmatpush2.xpose.msra.mxu0 0.0
        %3649 = vmatprep.subr.mxu0 0.0
        %3650 = vmatpush2.xpose.msra.mxu0 0.0
        %3651 = vmatprep.subr.mxu0 0.0
        %3652 = vmatpush2.xpose.msra.mxu0 0.0
        %3653 = vmatprep.subr.mxu0 0.0
        %3654 = vmatpush2.xpose.msra.mxu0 0.0
        %3655 = vmatprep.subr.mxu0 0.0
        %3656 = vmatpush2.xpose.msra.mxu0 0.0
        %3657 = vmatprep.subr.mxu0 0.0
        %3658 = vmatpush2.xpose.msra.mxu0 0.0
        %3659 = vmatprep.subr.mxu0 0.0
        %3660 = vmatpush2.xpose.msra.mxu0 0.0
        %3661 = vmatprep.subr.mxu0 0.0
        %3662 = vmatpush2.xpose.msra.mxu0 0.0
        %3663 = vmatprep.subr.mxu0 0.0
        %3664 = vmatpush2.xpose.msra.mxu0 0.0
        %3665 = vmatprep.subr.mxu0 0.0
        %3666 = vmatpush2.xpose.msra.mxu0 0.0
        %3667 = vmatprep.subr.mxu0 0.0
        %3668 = vmatpush2.xpose.msra.mxu0 0.0
        %3669 = vmatprep.subr.mxu0 0.0
        %3670 = vmatpush2.xpose.msra.mxu0 0.0
        %3671 = vmatprep.subr.mxu0 0.0
        %3672 = vmatpush2.xpose.msra.mxu0 0.0
        %3673 = vmatprep.subr.mxu0 0.0
        %3674 = vmatpush2.xpose.msra.mxu0 0.0
        %3675 = vmatprep.subr.mxu0 0.0
        %3676 = vmatpush2.xpose.msra.mxu0 0.0
        %3677 = vmatprep.mubr.f32.mxu0 0.0
        %3678 = vmatmul.mubr.f32.gmra.mxu0 %v3445
        %v3679 = vpop.f32.mrf.mxu0
        %v3680 = vadd.f32 0.0, %v3679
        %v3681 = vpop.f32.mrf.mxu0
        %3682 = vmatprep.mubr.f32.mxu0 0.0
        %3683 = vmatmul.mubr.f32.gmra.mxu0 %v3448
        %v3684 = vpop.f32.mrf.mxu0
        %v3685 = vadd.f32 0.0, %v3684
        %v3686 = vpop.f32.mrf.mxu0
        %3687 = vdwg.mxu0
        %v3689 = vsel %vm881, %v3520, 0
        %v3692 = vsel %vm881, %v3525, 0
        %v3695 = vsel %vm881, %v3600, 0
        %v3698 = vsel %vm881, %v3605, 0
        %3700 = vmatprep.subr.mxu0 0.0
        %3701 = vmatpush1.xpose.msra.mxu0 0.0
        %3702 = vmatprep.subr.mxu0 0.0
        %3703 = vmatpush1.xpose.msra.mxu0 0.0
        %3704 = vmatprep.subr.mxu0 0.0
        %3705 = vmatpush1.xpose.msra.mxu0 0.0
        %3706 = vmatprep.subr.mxu0 0.0
        %3707 = vmatpush1.xpose.msra.mxu0 0.0
        %3708 = vmatprep.subr.mxu0 0.0
        %3709 = vmatpush1.xpose.msra.mxu0 0.0
        %3710 = vmatprep.subr.mxu0 0.0
        %3711 = vmatpush1.xpose.msra.mxu0 0.0
        %3712 = vmatprep.subr.mxu0 0.0
        %3713 = vmatpush1.xpose.msra.mxu0 0.0
        %3714 = vmatprep.subr.mxu0 0.0
        %3715 = vmatpush1.xpose.msra.mxu0 0.0
        %3716 = vmatprep.subr.mxu0 0.0
        %3717 = vmatpush1.xpose.msra.mxu0 0.0
        %3718 = vmatprep.subr.mxu0 0.0
        %3719 = vmatpush1.xpose.msra.mxu0 0.0
        %3720 = vmatprep.subr.mxu0 0.0
        %3721 = vmatpush1.xpose.msra.mxu0 0.0
        %3722 = vmatprep.subr.mxu0 0.0
        %3723 = vmatpush1.xpose.msra.mxu0 0.0
        %3724 = vmatprep.subr.mxu0 0.0
        %3725 = vmatpush1.xpose.msra.mxu0 0.0
        %3726 = vmatprep.subr.mxu0 0.0
        %3727 = vmatpush1.xpose.msra.mxu0 0.0
        %3728 = vmatprep.subr.mxu0 0.0
        %3729 = vmatpush1.xpose.msra.mxu0 %v3698
        %3730 = vmatprep.subr.mxu0 0.0
        %3731 = vmatpush1.xpose.msra.mxu0 %v3695
        %3732 = vmatprep.subr.mxu0 0.0
        %3733 = vmatpush2.xpose.msra.mxu0 0.0
        %3734 = vmatprep.subr.mxu0 0.0
        %3735 = vmatpush2.xpose.msra.mxu0 0.0
        %3736 = vmatprep.subr.mxu0 0.0
        %3737 = vmatpush2.xpose.msra.mxu0 0.0
        %3738 = vmatprep.subr.mxu0 0.0
        %3739 = vmatpush2.xpose.msra.mxu0 0.0
        %3740 = vmatprep.subr.mxu0 0.0
        %3741 = vmatpush2.xpose.msra.mxu0 0.0
        %3742 = vmatprep.subr.mxu0 0.0
        %3743 = vmatpush2.xpose.msra.mxu0 0.0
        %3744 = vmatprep.subr.mxu0 0.0
        %3745 = vmatpush2.xpose.msra.mxu0 0.0
        %3746 = vmatprep.subr.mxu0 0.0
        %3747 = vmatpush2.xpose.msra.mxu0 0.0
        %3748 = vmatprep.subr.mxu0 0.0
        %3749 = vmatpush2.xpose.msra.mxu0 0.0
        %3750 = vmatprep.subr.mxu0 0.0
        %3751 = vmatpush2.xpose.msra.mxu0 0.0
        %3752 = vmatprep.subr.mxu0 0.0
        %3753 = vmatpush2.xpose.msra.mxu0 0.0
        %3754 = vmatprep.subr.mxu0 0.0
        %3755 = vmatpush2.xpose.msra.mxu0 0.0
        %3756 = vmatprep.subr.mxu0 0.0
        %3757 = vmatpush2.xpose.msra.mxu0 0.0
        %3758 = vmatprep.subr.mxu0 0.0
        %3759 = vmatpush2.xpose.msra.mxu0 0.0
        %3760 = vmatprep.subr.mxu0 0.0
        %3761 = vmatpush2.xpose.msra.mxu0 0.0
        %3762 = vmatprep.subr.mxu0 0.0
        %3763 = vmatpush2.xpose.msra.mxu0 0.0
        %3764 = vmatprep.mubr.f32.mxu0 0.0
        %3765 = vmatmul.mubr.f32.gmra.mxu0 %v3689
        %v3766 = vpop.f32.mrf.mxu0
        %v3767 = vadd.f32 0.0, %v3766
        %v3768 = vpop.f32.mrf.mxu0
        %3769 = vmatprep.mubr.f32.mxu0 0.0
        %3770 = vmatmul.mubr.f32.gmra.mxu0 %v3692
        %v3771 = vpop.f32.mrf.mxu0
        %v3772 = vadd.f32 0.0, %v3771
        %v3773 = vpop.f32.mrf.mxu0
        %3774 = vdwg.mxu0
        %v3775 = vmul.f32 %v3767, 0.35355338
        %v3776 = vmul.f32 %v3772, 0.35355338
        %v3777 = vsel %vm635, %v3775, -1e+30
        %v3778 = vsel %vm636, %v3776, -1e+30
        %v3779 = vsel %vm973, %v3777, -inf
        %3780 = vmax.xlane.f32.xlu0 %v3779
        %v3781 = vpop.xlane.xlu0 %3780
        %v3782 = vsel %vm973, %v3778, -inf
        %3783 = vmax.xlane.f32.xlu0 %v3782
        %v3784 = vpop.xlane.xlu0 %3783
        %v3785 = vsub.f32 %v3777, %v3781
        %v3786 = vsub.f32 %v3778, %v3784
        %v3787 = vmul.f32 %v3785, 1.442695
        %v3788 = vpow.pop %v3787
        %v3789 = vmul.f32 %v3786, 1.442695
        %v3790 = vpow.pop %v3789
        %v3791 = vsel %vm973, %v3788, 0.0
        %3792 = vadd.xlane.f32.xlu0 %v3791
        %v3793 = vpop.xlane.xlu0 %3792
        %v3794 = vsel %vm973, %v3790, 0.0
        %3795 = vadd.xlane.f32.xlu0 %v3794
        %v3796 = vpop.xlane.xlu0 %3795
        %v3797 = vadd.f32 %v3793, 1e-06
        %v3798 = vadd.f32 %v3796, 1e-06
        %v3799 = vrcp.pop %v3797
        %v3800 = vrcp.pop %v3798
        %v3801 = vmul.f32 %v3788, %v3799
        %v3802 = vmul.f32 %v3790, %v3800
        %v3804 = vsel %vm973, %v3801, 0
        %v3807 = vsel %vm973, %v3802, 0
        %3809 = vmatprep.subr.mxu0 0.0
        %3810 = vmatpush1.msra.mxu0 0.0
        %3811 = vmatprep.subr.mxu0 0.0
        %3812 = vmatpush1.msra.mxu0 0.0
        %3813 = vmatprep.subr.mxu0 0.0
        %3814 = vmatpush1.msra.mxu0 0.0
        %3815 = vmatprep.subr.mxu0 0.0
        %3816 = vmatpush1.msra.mxu0 0.0
        %3817 = vmatprep.subr.mxu0 0.0
        %3818 = vmatpush1.msra.mxu0 0.0
        %3819 = vmatprep.subr.mxu0 0.0
        %3820 = vmatpush1.msra.mxu0 0.0
        %3821 = vmatprep.subr.mxu0 0.0
        %3822 = vmatpush1.msra.mxu0 0.0
        %3823 = vmatprep.subr.mxu0 0.0
        %3824 = vmatpush1.msra.mxu0 0.0
        %3825 = vmatprep.subr.mxu0 0.0
        %3826 = vmatpush1.msra.mxu0 0.0
        %3827 = vmatprep.subr.mxu0 0.0
        %3828 = vmatpush1.msra.mxu0 0.0
        %3829 = vmatprep.subr.mxu0 0.0
        %3830 = vmatpush1.msra.mxu0 0.0
        %3831 = vmatprep.subr.mxu0 0.0
        %3832 = vmatpush1.msra.mxu0 0.0
        %3833 = vmatprep.subr.mxu0 0.0
        %3834 = vmatpush1.msra.mxu0 0.0
        %3835 = vmatprep.subr.mxu0 0.0
        %3836 = vmatpush1.msra.mxu0 0.0
        %3837 = vmatprep.subr.mxu0 0.0
        %3838 = vmatpush1.msra.mxu0 %v3685
        %3839 = vmatprep.subr.mxu0 0.0
        %3840 = vmatpush1.msra.mxu0 %v3680
        %3841 = vmatprep.subr.mxu0 0.0
        %3842 = vmatpush2.msra.mxu0 0.0
        %3843 = vmatprep.subr.mxu0 0.0
        %3844 = vmatpush2.msra.mxu0 0.0
        %3845 = vmatprep.subr.mxu0 0.0
        %3846 = vmatpush2.msra.mxu0 0.0
        %3847 = vmatprep.subr.mxu0 0.0
        %3848 = vmatpush2.msra.mxu0 0.0
        %3849 = vmatprep.subr.mxu0 0.0
        %3850 = vmatpush2.msra.mxu0 0.0
        %3851 = vmatprep.subr.mxu0 0.0
        %3852 = vmatpush2.msra.mxu0 0.0
        %3853 = vmatprep.subr.mxu0 0.0
        %3854 = vmatpush2.msra.mxu0 0.0
        %3855 = vmatprep.subr.mxu0 0.0
        %3856 = vmatpush2.msra.mxu0 0.0
        %3857 = vmatprep.subr.mxu0 0.0
        %3858 = vmatpush2.msra.mxu0 0.0
        %3859 = vmatprep.subr.mxu0 0.0
        %3860 = vmatpush2.msra.mxu0 0.0
        %3861 = vmatprep.subr.mxu0 0.0
        %3862 = vmatpush2.msra.mxu0 0.0
        %3863 = vmatprep.subr.mxu0 0.0
        %3864 = vmatpush2.msra.mxu0 0.0
        %3865 = vmatprep.subr.mxu0 0.0
        %3866 = vmatpush2.msra.mxu0 0.0
        %3867 = vmatprep.subr.mxu0 0.0
        %3868 = vmatpush2.msra.mxu0 0.0
        %3869 = vmatprep.subr.mxu0 0.0
        %3870 = vmatpush2.msra.mxu0 0.0
        %3871 = vmatprep.subr.mxu0 0.0
        %3872 = vmatpush2.msra.mxu0 0.0
        %3873 = vmatprep.mubr.f32.mxu0 0.0
        %3874 = vmatmul.mubr.f32.gmra.mxu0 %v3804
        %v3875 = vpop.f32.mrf.mxu0
        %v3876 = vadd.f32 0.0, %v3875
        %v3877 = vpop.f32.mrf.mxu0
        %3878 = vmatprep.mubr.f32.mxu0 0.0
        %3879 = vmatmul.mubr.f32.gmra.mxu0 %v3807
        %v3880 = vpop.f32.mrf.mxu0
        %v3881 = vadd.f32 0.0, %v3880
        %v3882 = vpop.f32.mrf.mxu0
        %3883 = vdwg.mxu0
        %s3884 = scalar_lea.vmem %s4, 32
        %v3885 = vld [vmem:[%s3884] sm:$0xff]
        %s3886 = scalar_lea.vmem %s5, 4
        %v3887 = vld [vmem:[%s3886] sm:$0x1]
        %v3889 = vlaneseq
        %v3890 = vshrl.u32 %v3889, 7
        %v3891 = vsub.s32 0, %v3890
        %v3892 = vrot.slane %v3887, %v3891
        %v3895 = vsel %vm881, %v3876, 0
        %v3898 = vsel %vm881, %v3881, 0
        %v3901 = vsel %vm881, %v3885, 0
        %3903 = vmatprep.subr.mxu0 0.0
        %3904 = vmatpush1.xpose.msra.mxu0 0.0
        %3905 = vmatprep.subr.mxu0 0.0
        %3906 = vmatpush1.xpose.msra.mxu0 0.0
        %3907 = vmatprep.subr.mxu0 0.0
        %3908 = vmatpush1.xpose.msra.mxu0 0.0
        %3909 = vmatprep.subr.mxu0 0.0
        %3910 = vmatpush1.xpose.msra.mxu0 0.0
        %3911 = vmatprep.subr.mxu0 0.0
        %3912 = vmatpush1.xpose.msra.mxu0 0.0
        %3913 = vmatprep.subr.mxu0 0.0
        %3914 = vmatpush1.xpose.msra.mxu0 0.0
        %3915 = vmatprep.subr.mxu0 0.0
        %3916 = vmatpush1.xpose.msra.mxu0 0.0
        %3917 = vmatprep.subr.mxu0 0.0
        %3918 = vmatpush1.xpose.msra.mxu0 0.0
        %3919 = vmatprep.subr.mxu0 0.0
        %3920 = vmatpush1.xpose.msra.mxu0 0.0
        %3921 = vmatprep.subr.mxu0 0.0
        %3922 = vmatpush1.xpose.msra.mxu0 0.0
        %3923 = vmatprep.subr.mxu0 0.0
        %3924 = vmatpush1.xpose.msra.mxu0 0.0
        %3925 = vmatprep.subr.mxu0 0.0
        %3926 = vmatpush1.xpose.msra.mxu0 0.0
        %3927 = vmatprep.subr.mxu0 0.0
        %3928 = vmatpush1.xpose.msra.mxu0 0.0
        %3929 = vmatprep.subr.mxu0 0.0
        %3930 = vmatpush1.xpose.msra.mxu0 0.0
        %3931 = vmatprep.subr.mxu0 0.0
        %3932 = vmatpush1.xpose.msra.mxu0 0.0
        %3933 = vmatprep.subr.mxu0 0.0
        %3934 = vmatpush1.xpose.msra.mxu0 %v3901
        %3935 = vmatprep.subr.mxu0 0.0
        %3936 = vmatpush2.xpose.msra.mxu0 0.0
        %3937 = vmatprep.subr.mxu0 0.0
        %3938 = vmatpush2.xpose.msra.mxu0 0.0
        %3939 = vmatprep.subr.mxu0 0.0
        %3940 = vmatpush2.xpose.msra.mxu0 0.0
        %3941 = vmatprep.subr.mxu0 0.0
        %3942 = vmatpush2.xpose.msra.mxu0 0.0
        %3943 = vmatprep.subr.mxu0 0.0
        %3944 = vmatpush2.xpose.msra.mxu0 0.0
        %3945 = vmatprep.subr.mxu0 0.0
        %3946 = vmatpush2.xpose.msra.mxu0 0.0
        %3947 = vmatprep.subr.mxu0 0.0
        %3948 = vmatpush2.xpose.msra.mxu0 0.0
        %3949 = vmatprep.subr.mxu0 0.0
        %3950 = vmatpush2.xpose.msra.mxu0 0.0
        %3951 = vmatprep.subr.mxu0 0.0
        %3952 = vmatpush2.xpose.msra.mxu0 0.0
        %3953 = vmatprep.subr.mxu0 0.0
        %3954 = vmatpush2.xpose.msra.mxu0 0.0
        %3955 = vmatprep.subr.mxu0 0.0
        %3956 = vmatpush2.xpose.msra.mxu0 0.0
        %3957 = vmatprep.subr.mxu0 0.0
        %3958 = vmatpush2.xpose.msra.mxu0 0.0
        %3959 = vmatprep.subr.mxu0 0.0
        %3960 = vmatpush2.xpose.msra.mxu0 0.0
        %3961 = vmatprep.subr.mxu0 0.0
        %3962 = vmatpush2.xpose.msra.mxu0 0.0
        %3963 = vmatprep.subr.mxu0 0.0
        %3964 = vmatpush2.xpose.msra.mxu0 0.0
        %3965 = vmatprep.subr.mxu0 0.0
        %3966 = vmatpush2.xpose.msra.mxu0 0.0
        %3967 = vmatprep.mubr.f32.mxu0 0.0
        %3968 = vmatmul.mubr.f32.gmra.mxu0 %v3895
        %v3969 = vpop.f32.mrf.mxu0
        %v3970 = vadd.f32 %v3892, %v3969
        %v3971 = vpop.f32.mrf.mxu0
        %3972 = vmatprep.mubr.f32.mxu0 0.0
        %3973 = vmatmul.mubr.f32.gmra.mxu0 %v3898
        %v3974 = vpop.f32.mrf.mxu0
        %v3975 = vadd.f32 %v3892, %v3974
        %v3976 = vpop.f32.mrf.mxu0
        %3977 = vdwg.mxu0
        %s3978 = scalar_lea.vmem %s6, 128
        %v3979 = vld [vmem:[%s3978] sm:$0xff]
        %v3980 = vld [vmem:[%s3978 + $0x8] sm:$0xff]
        %v3981 = vld [vmem:[%s3978 + $0x10] sm:$0xff]
        %v3982 = vld [vmem:[%s3978 + $0x18] sm:$0xff]
        %s3983 = scalar_lea.vmem %s1, 40
        %v3984 = vld [vmem:[%s3983] sm:$0xff]
        %v3986 = vsel %vm638, %v3984, 0
        %3988 = vmatprep.subr.mxu0 0.0
        %3989 = vmatpush1.xpose.msra.mxu0 0.0
        %3990 = vmatprep.subr.mxu0 0.0
        %3991 = vmatpush1.xpose.msra.mxu0 0.0
        %3992 = vmatprep.subr.mxu0 0.0
        %3993 = vmatpush1.xpose.msra.mxu0 0.0
        %3994 = vmatprep.subr.mxu0 0.0
        %3995 = vmatpush1.xpose.msra.mxu0 0.0
        %3996 = vmatprep.subr.mxu0 0.0
        %3997 = vmatpush1.xpose.msra.mxu0 0.0
        %3998 = vmatprep.subr.mxu0 0.0
        %3999 = vmatpush1.xpose.msra.mxu0 0.0
        %4000 = vmatprep.subr.mxu0 0.0
        %4001 = vmatpush1.xpose.msra.mxu0 0.0
        %4002 = vmatprep.subr.mxu0 0.0
        %4003 = vmatpush1.xpose.msra.mxu0 0.0
        %4004 = vmatprep.subr.mxu0 0.0
        %4005 = vmatpush1.xpose.msra.mxu0 0.0
        %4006 = vmatprep.subr.mxu0 0.0
        %4007 = vmatpush1.xpose.msra.mxu0 0.0
        %4008 = vmatprep.subr.mxu0 0.0
        %4009 = vmatpush1.xpose.msra.mxu0 0.0
        %4010 = vmatprep.subr.mxu0 0.0
        %4011 = vmatpush1.xpose.msra.mxu0 0.0
        %4012 = vmatprep.subr.mxu0 0.0
        %4013 = vmatpush1.xpose.msra.mxu0 0.0
        %4014 = vmatprep.subr.mxu0 0.0
        %4015 = vmatpush1.xpose.msra.mxu0 0.0
        %4016 = vmatprep.subr.mxu0 0.0
        %4017 = vmatpush1.xpose.msra.mxu0 0.0
        %4018 = vmatprep.subr.mxu0 0.0
        %4019 = vmatpush1.xpose.msra.mxu0 %v3986
        %4020 = vmatprep.subr.mxu0 0.0
        %4021 = vmatpush2.xpose.msra.mxu0 0.0
        %4022 = vmatprep.subr.mxu0 0.0
        %4023 = vmatpush2.xpose.msra.mxu0 0.0
        %4024 = vmatprep.subr.mxu0 0.0
        %4025 = vmatpush2.xpose.msra.mxu0 0.0
        %4026 = vmatprep.subr.mxu0 0.0
        %4027 = vmatpush2.xpose.msra.mxu0 0.0
        %4028 = vmatprep.subr.mxu0 0.0
        %4029 = vmatpush2.xpose.msra.mxu0 0.0
        %4030 = vmatprep.subr.mxu0 0.0
        %4031 = vmatpush2.xpose.msra.mxu0 0.0
        %4032 = vmatprep.subr.mxu0 0.0
        %4033 = vmatpush2.xpose.msra.mxu0 0.0
        %4034 = vmatprep.subr.mxu0 0.0
        %4035 = vmatpush2.xpose.msra.mxu0 0.0
        %4036 = vmatprep.subr.mxu0 0.0
        %4037 = vmatpush2.xpose.msra.mxu0 0.0
        %4038 = vmatprep.subr.mxu0 0.0
        %4039 = vmatpush2.xpose.msra.mxu0 0.0
        %4040 = vmatprep.subr.mxu0 0.0
        %4041 = vmatpush2.xpose.msra.mxu0 0.0
        %4042 = vmatprep.subr.mxu0 0.0
        %4043 = vmatpush2.xpose.msra.mxu0 0.0
        %4044 = vmatprep.subr.mxu0 0.0
        %4045 = vmatpush2.xpose.msra.mxu0 0.0
        %4046 = vmatprep.subr.mxu0 0.0
        %4047 = vmatpush2.xpose.msra.mxu0 0.0
        %4048 = vmatprep.subr.mxu0 0.0
        %4049 = vmatpush2.xpose.msra.mxu0 0.0
        %4050 = vmatprep.subr.mxu0 0.0
        %4051 = vmatpush2.xpose.msra.mxu0 0.0
        %4052 = vmatprep.mubr.f32.mxu0 0.0
        %4053 = vmatmul.mubr.f32.gmra.mxu0 %v3445
        %v4054 = vpop.f32.mrf.mxu0
        %v4055 = vadd.f32 0.0, %v4054
        %v4056 = vpop.f32.mrf.mxu0
        %4057 = vmatprep.mubr.f32.mxu0 0.0
        %4058 = vmatmul.mubr.f32.gmra.mxu0 %v3448
        %v4059 = vpop.f32.mrf.mxu0
        %v4060 = vadd.f32 0.0, %v4059
        %v4061 = vpop.f32.mrf.mxu0
        %4062 = vdwg.mxu0
        %s4063 = scalar_lea.vmem %s2, 40
        %v4064 = vld [vmem:[%s4063] sm:$0xff]
        %v4066 = vsel %vm638, %v4064, 0
        %4068 = vmatprep.subr.mxu0 0.0
        %4069 = vmatpush1.xpose.msra.mxu0 0.0
        %4070 = vmatprep.subr.mxu0 0.0
        %4071 = vmatpush1.xpose.msra.mxu0 0.0
        %4072 = vmatprep.subr.mxu0 0.0
        %4073 = vmatpush1.xpose.msra.mxu0 0.0
        %4074 = vmatprep.subr.mxu0 0.0
        %4075 = vmatpush1.xpose.msra.mxu0 0.0
        %4076 = vmatprep.subr.mxu0 0.0
        %4077 = vmatpush1.xpose.msra.mxu0 0.0
        %4078 = vmatprep.subr.mxu0 0.0
        %4079 = vmatpush1.xpose.msra.mxu0 0.0
        %4080 = vmatprep.subr.mxu0 0.0
        %4081 = vmatpush1.xpose.msra.mxu0 0.0
        %4082 = vmatprep.subr.mxu0 0.0
        %4083 = vmatpush1.xpose.msra.mxu0 0.0
        %4084 = vmatprep.subr.mxu0 0.0
        %4085 = vmatpush1.xpose.msra.mxu0 0.0
        %4086 = vmatprep.subr.mxu0 0.0
        %4087 = vmatpush1.xpose.msra.mxu0 0.0
        %4088 = vmatprep.subr.mxu0 0.0
        %4089 = vmatpush1.xpose.msra.mxu0 0.0
        %4090 = vmatprep.subr.mxu0 0.0
        %4091 = vmatpush1.xpose.msra.mxu0 0.0
        %4092 = vmatprep.subr.mxu0 0.0
        %4093 = vmatpush1.xpose.msra.mxu0 0.0
        %4094 = vmatprep.subr.mxu0 0.0
        %4095 = vmatpush1.xpose.msra.mxu0 0.0
        %4096 = vmatprep.subr.mxu0 0.0
        %4097 = vmatpush1.xpose.msra.mxu0 0.0
        %4098 = vmatprep.subr.mxu0 0.0
        %4099 = vmatpush1.xpose.msra.mxu0 %v4066
        %4100 = vmatprep.subr.mxu0 0.0
        %4101 = vmatpush2.xpose.msra.mxu0 0.0
        %4102 = vmatprep.subr.mxu0 0.0
        %4103 = vmatpush2.xpose.msra.mxu0 0.0
        %4104 = vmatprep.subr.mxu0 0.0
        %4105 = vmatpush2.xpose.msra.mxu0 0.0
        %4106 = vmatprep.subr.mxu0 0.0
        %4107 = vmatpush2.xpose.msra.mxu0 0.0
        %4108 = vmatprep.subr.mxu0 0.0
        %4109 = vmatpush2.xpose.msra.mxu0 0.0
        %4110 = vmatprep.subr.mxu0 0.0
        %4111 = vmatpush2.xpose.msra.mxu0 0.0
        %4112 = vmatprep.subr.mxu0 0.0
        %4113 = vmatpush2.xpose.msra.mxu0 0.0
        %4114 = vmatprep.subr.mxu0 0.0
        %4115 = vmatpush2.xpose.msra.mxu0 0.0
        %4116 = vmatprep.subr.mxu0 0.0
        %4117 = vmatpush2.xpose.msra.mxu0 0.0
        %4118 = vmatprep.subr.mxu0 0.0
        %4119 = vmatpush2.xpose.msra.mxu0 0.0
        %4120 = vmatprep.subr.mxu0 0.0
        %4121 = vmatpush2.xpose.msra.mxu0 0.0
        %4122 = vmatprep.subr.mxu0 0.0
        %4123 = vmatpush2.xpose.msra.mxu0 0.0
        %4124 = vmatprep.subr.mxu0 0.0
        %4125 = vmatpush2.xpose.msra.mxu0 0.0
        %4126 = vmatprep.subr.mxu0 0.0
        %4127 = vmatpush2.xpose.msra.mxu0 0.0
        %4128 = vmatprep.subr.mxu0 0.0
        %4129 = vmatpush2.xpose.msra.mxu0 0.0
        %4130 = vmatprep.subr.mxu0 0.0
        %4131 = vmatpush2.xpose.msra.mxu0 0.0
        %4132 = vmatprep.mubr.f32.mxu0 0.0
        %4133 = vmatmul.mubr.f32.gmra.mxu0 %v3445
        %v4134 = vpop.f32.mrf.mxu0
        %v4135 = vadd.f32 0.0, %v4134
        %v4136 = vpop.f32.mrf.mxu0
        %4137 = vmatprep.mubr.f32.mxu0 0.0
        %4138 = vmatmul.mubr.f32.gmra.mxu0 %v3448
        %v4139 = vpop.f32.mrf.mxu0
        %v4140 = vadd.f32 0.0, %v4139
        %v4141 = vpop.f32.mrf.mxu0
        %4142 = vdwg.mxu0
        %s4143 = scalar_lea.vmem %s3, 40
        %v4144 = vld [vmem:[%s4143] sm:$0xff]
        %v4146 = vsel %vm638, %v4144, 0
        %4148 = vmatprep.subr.mxu0 0.0
        %4149 = vmatpush1.xpose.msra.mxu0 0.0
        %4150 = vmatprep.subr.mxu0 0.0
        %4151 = vmatpush1.xpose.msra.mxu0 0.0
        %4152 = vmatprep.subr.mxu0 0.0
        %4153 = vmatpush1.xpose.msra.mxu0 0.0
        %4154 = vmatprep.subr.mxu0 0.0
        %4155 = vmatpush1.xpose.msra.mxu0 0.0
        %4156 = vmatprep.subr.mxu0 0.0
        %4157 = vmatpush1.xpose.msra.mxu0 0.0
        %4158 = vmatprep.subr.mxu0 0.0
        %4159 = vmatpush1.xpose.msra.mxu0 0.0
        %4160 = vmatprep.subr.mxu0 0.0
        %4161 = vmatpush1.xpose.msra.mxu0 0.0
        %4162 = vmatprep.subr.mxu0 0.0
        %4163 = vmatpush1.xpose.msra.mxu0 0.0
        %4164 = vmatprep.subr.mxu0 0.0
        %4165 = vmatpush1.xpose.msra.mxu0 0.0
        %4166 = vmatprep.subr.mxu0 0.0
        %4167 = vmatpush1.xpose.msra.mxu0 0.0
        %4168 = vmatprep.subr.mxu0 0.0
        %4169 = vmatpush1.xpose.msra.mxu0 0.0
        %4170 = vmatprep.subr.mxu0 0.0
        %4171 = vmatpush1.xpose.msra.mxu0 0.0
        %4172 = vmatprep.subr.mxu0 0.0
        %4173 = vmatpush1.xpose.msra.mxu0 0.0
        %4174 = vmatprep.subr.mxu0 0.0
        %4175 = vmatpush1.xpose.msra.mxu0 0.0
        %4176 = vmatprep.subr.mxu0 0.0
        %4177 = vmatpush1.xpose.msra.mxu0 0.0
        %4178 = vmatprep.subr.mxu0 0.0
        %4179 = vmatpush1.xpose.msra.mxu0 %v4146
        %4180 = vmatprep.subr.mxu0 0.0
        %4181 = vmatpush2.xpose.msra.mxu0 0.0
        %4182 = vmatprep.subr.mxu0 0.0
        %4183 = vmatpush2.xpose.msra.mxu0 0.0
        %4184 = vmatprep.subr.mxu0 0.0
        %4185 = vmatpush2.xpose.msra.mxu0 0.0
        %4186 = vmatprep.subr.mxu0 0.0
        %4187 = vmatpush2.xpose.msra.mxu0 0.0
        %4188 = vmatprep.subr.mxu0 0.0
        %4189 = vmatpush2.xpose.msra.mxu0 0.0
        %4190 = vmatprep.subr.mxu0 0.0
        %4191 = vmatpush2.xpose.msra.mxu0 0.0
        %4192 = vmatprep.subr.mxu0 0.0
        %4193 = vmatpush2.xpose.msra.mxu0 0.0
        %4194 = vmatprep.subr.mxu0 0.0
        %4195 = vmatpush2.xpose.msra.mxu0 0.0
        %4196 = vmatprep.subr.mxu0 0.0
        %4197 = vmatpush2.xpose.msra.mxu0 0.0
        %4198 = vmatprep.subr.mxu0 0.0
        %4199 = vmatpush2.xpose.msra.mxu0 0.0
        %4200 = vmatprep.subr.mxu0 0.0
        %4201 = vmatpush2.xpose.msra.mxu0 0.0
        %4202 = vmatprep.subr.mxu0 0.0
        %4203 = vmatpush2.xpose.msra.mxu0 0.0
        %4204 = vmatprep.subr.mxu0 0.0
        %4205 = vmatpush2.xpose.msra.mxu0 0.0
        %4206 = vmatprep.subr.mxu0 0.0
        %4207 = vmatpush2.xpose.msra.mxu0 0.0
        %4208 = vmatprep.subr.mxu0 0.0
        %4209 = vmatpush2.xpose.msra.mxu0 0.0
        %4210 = vmatprep.subr.mxu0 0.0
        %4211 = vmatpush2.xpose.msra.mxu0 0.0
        %4212 = vmatprep.mubr.f32.mxu0 0.0
        %4213 = vmatmul.mubr.f32.gmra.mxu0 %v3445
        %v4214 = vpop.f32.mrf.mxu0
        %v4215 = vadd.f32 0.0, %v4214
        %v4216 = vpop.f32.mrf.mxu0
        %4217 = vmatprep.mubr.f32.mxu0 0.0
        %4218 = vmatmul.mubr.f32.gmra.mxu0 %v3448
        %v4219 = vpop.f32.mrf.mxu0
        %v4220 = vadd.f32 0.0, %v4219
        %v4221 = vpop.f32.mrf.mxu0
        %4222 = vdwg.mxu0
        %v4224 = vsel %vm881, %v4055, 0
        %v4227 = vsel %vm881, %v4060, 0
        %v4230 = vsel %vm881, %v4135, 0
        %v4233 = vsel %vm881, %v4140, 0
        %4235 = vmatprep.subr.mxu0 0.0
        %4236 = vmatpush1.xpose.msra.mxu0 0.0
        %4237 = vmatprep.subr.mxu0 0.0
        %4238 = vmatpush1.xpose.msra.mxu0 0.0
        %4239 = vmatprep.subr.mxu0 0.0
        %4240 = vmatpush1.xpose.msra.mxu0 0.0
        %4241 = vmatprep.subr.mxu0 0.0
        %4242 = vmatpush1.xpose.msra.mxu0 0.0
        %4243 = vmatprep.subr.mxu0 0.0
        %4244 = vmatpush1.xpose.msra.mxu0 0.0
        %4245 = vmatprep.subr.mxu0 0.0
        %4246 = vmatpush1.xpose.msra.mxu0 0.0
        %4247 = vmatprep.subr.mxu0 0.0
        %4248 = vmatpush1.xpose.msra.mxu0 0.0
        %4249 = vmatprep.subr.mxu0 0.0
        %4250 = vmatpush1.xpose.msra.mxu0 0.0
        %4251 = vmatprep.subr.mxu0 0.0
        %4252 = vmatpush1.xpose.msra.mxu0 0.0
        %4253 = vmatprep.subr.mxu0 0.0
        %4254 = vmatpush1.xpose.msra.mxu0 0.0
        %4255 = vmatprep.subr.mxu0 0.0
        %4256 = vmatpush1.xpose.msra.mxu0 0.0
        %4257 = vmatprep.subr.mxu0 0.0
        %4258 = vmatpush1.xpose.msra.mxu0 0.0
        %4259 = vmatprep.subr.mxu0 0.0
        %4260 = vmatpush1.xpose.msra.mxu0 0.0
        %4261 = vmatprep.subr.mxu0 0.0
        %4262 = vmatpush1.xpose.msra.mxu0 0.0
        %4263 = vmatprep.subr.mxu0 0.0
        %4264 = vmatpush1.xpose.msra.mxu0 %v4233
        %4265 = vmatprep.subr.mxu0 0.0
        %4266 = vmatpush1.xpose.msra.mxu0 %v4230
        %4267 = vmatprep.subr.mxu0 0.0
        %4268 = vmatpush2.xpose.msra.mxu0 0.0
        %4269 = vmatprep.subr.mxu0 0.0
        %4270 = vmatpush2.xpose.msra.mxu0 0.0
        %4271 = vmatprep.subr.mxu0 0.0
        %4272 = vmatpush2.xpose.msra.mxu0 0.0
        %4273 = vmatprep.subr.mxu0 0.0
        %4274 = vmatpush2.xpose.msra.mxu0 0.0
        %4275 = vmatprep.subr.mxu0 0.0
        %4276 = vmatpush2.xpose.msra.mxu0 0.0
        %4277 = vmatprep.subr.mxu0 0.0
        %4278 = vmatpush2.xpose.msra.mxu0 0.0
        %4279 = vmatprep.subr.mxu0 0.0
        %4280 = vmatpush2.xpose.msra.mxu0 0.0
        %4281 = vmatprep.subr.mxu0 0.0
        %4282 = vmatpush2.xpose.msra.mxu0 0.0
        %4283 = vmatprep.subr.mxu0 0.0
        %4284 = vmatpush2.xpose.msra.mxu0 0.0
        %4285 = vmatprep.subr.mxu0 0.0
        %4286 = vmatpush2.xpose.msra.mxu0 0.0
        %4287 = vmatprep.subr.mxu0 0.0
        %4288 = vmatpush2.xpose.msra.mxu0 0.0
        %4289 = vmatprep.subr.mxu0 0.0
        %4290 = vmatpush2.xpose.msra.mxu0 0.0
        %4291 = vmatprep.subr.mxu0 0.0
        %4292 = vmatpush2.xpose.msra.mxu0 0.0
        %4293 = vmatprep.subr.mxu0 0.0
        %4294 = vmatpush2.xpose.msra.mxu0 0.0
        %4295 = vmatprep.subr.mxu0 0.0
        %4296 = vmatpush2.xpose.msra.mxu0 0.0
        %4297 = vmatprep.subr.mxu0 0.0
        %4298 = vmatpush2.xpose.msra.mxu0 0.0
        %4299 = vmatprep.mubr.f32.mxu0 0.0
        %4300 = vmatmul.mubr.f32.gmra.mxu0 %v4224
        %v4301 = vpop.f32.mrf.mxu0
        %v4302 = vadd.f32 0.0, %v4301
        %v4303 = vpop.f32.mrf.mxu0
        %4304 = vmatprep.mubr.f32.mxu0 0.0
        %4305 = vmatmul.mubr.f32.gmra.mxu0 %v4227
        %v4306 = vpop.f32.mrf.mxu0
        %v4307 = vadd.f32 0.0, %v4306
        %v4308 = vpop.f32.mrf.mxu0
        %4309 = vdwg.mxu0
        %v4310 = vmul.f32 %v4302, 0.35355338
        %v4311 = vmul.f32 %v4307, 0.35355338
        %v4312 = vsel %vm635, %v4310, -1e+30
        %v4313 = vsel %vm636, %v4311, -1e+30
        %v4314 = vsel %vm973, %v4312, -inf
        %4315 = vmax.xlane.f32.xlu0 %v4314
        %v4316 = vpop.xlane.xlu0 %4315
        %v4317 = vsel %vm973, %v4313, -inf
        %4318 = vmax.xlane.f32.xlu0 %v4317
        %v4319 = vpop.xlane.xlu0 %4318
        %v4320 = vsub.f32 %v4312, %v4316
        %v4321 = vsub.f32 %v4313, %v4319
        %v4322 = vmul.f32 %v4320, 1.442695
        %v4323 = vpow.pop %v4322
        %v4324 = vmul.f32 %v4321, 1.442695
        %v4325 = vpow.pop %v4324
        %v4326 = vsel %vm973, %v4323, 0.0
        %4327 = vadd.xlane.f32.xlu0 %v4326
        %v4328 = vpop.xlane.xlu0 %4327
        %v4329 = vsel %vm973, %v4325, 0.0
        %4330 = vadd.xlane.f32.xlu0 %v4329
        %v4331 = vpop.xlane.xlu0 %4330
        %v4332 = vadd.f32 %v4328, 1e-06
        %v4333 = vadd.f32 %v4331, 1e-06
        %v4334 = vrcp.pop %v4332
        %v4335 = vrcp.pop %v4333
        %v4336 = vmul.f32 %v4323, %v4334
        %v4337 = vmul.f32 %v4325, %v4335
        %v4339 = vsel %vm973, %v4336, 0
        %v4342 = vsel %vm973, %v4337, 0
        %4344 = vmatprep.subr.mxu0 0.0
        %4345 = vmatpush1.msra.mxu0 0.0
        %4346 = vmatprep.subr.mxu0 0.0
        %4347 = vmatpush1.msra.mxu0 0.0
        %4348 = vmatprep.subr.mxu0 0.0
        %4349 = vmatpush1.msra.mxu0 0.0
        %4350 = vmatprep.subr.mxu0 0.0
        %4351 = vmatpush1.msra.mxu0 0.0
        %4352 = vmatprep.subr.mxu0 0.0
        %4353 = vmatpush1.msra.mxu0 0.0
        %4354 = vmatprep.subr.mxu0 0.0
        %4355 = vmatpush1.msra.mxu0 0.0
        %4356 = vmatprep.subr.mxu0 0.0
        %4357 = vmatpush1.msra.mxu0 0.0
        %4358 = vmatprep.subr.mxu0 0.0
        %4359 = vmatpush1.msra.mxu0 0.0
        %4360 = vmatprep.subr.mxu0 0.0
        %4361 = vmatpush1.msra.mxu0 0.0
        %4362 = vmatprep.subr.mxu0 0.0
        %4363 = vmatpush1.msra.mxu0 0.0
        %4364 = vmatprep.subr.mxu0 0.0
        %4365 = vmatpush1.msra.mxu0 0.0
        %4366 = vmatprep.subr.mxu0 0.0
        %4367 = vmatpush1.msra.mxu0 0.0
        %4368 = vmatprep.subr.mxu0 0.0
        %4369 = vmatpush1.msra.mxu0 0.0
        %4370 = vmatprep.subr.mxu0 0.0
        %4371 = vmatpush1.msra.mxu0 0.0
        %4372 = vmatprep.subr.mxu0 0.0
        %4373 = vmatpush1.msra.mxu0 %v4220
        %4374 = vmatprep.subr.mxu0 0.0
        %4375 = vmatpush1.msra.mxu0 %v4215
        %4376 = vmatprep.subr.mxu0 0.0
        %4377 = vmatpush2.msra.mxu0 0.0
        %4378 = vmatprep.subr.mxu0 0.0
        %4379 = vmatpush2.msra.mxu0 0.0
        %4380 = vmatprep.subr.mxu0 0.0
        %4381 = vmatpush2.msra.mxu0 0.0
        %4382 = vmatprep.subr.mxu0 0.0
        %4383 = vmatpush2.msra.mxu0 0.0
        %4384 = vmatprep.subr.mxu0 0.0
        %4385 = vmatpush2.msra.mxu0 0.0
        %4386 = vmatprep.subr.mxu0 0.0
        %4387 = vmatpush2.msra.mxu0 0.0
        %4388 = vmatprep.subr.mxu0 0.0
        %4389 = vmatpush2.msra.mxu0 0.0
        %4390 = vmatprep.subr.mxu0 0.0
        %4391 = vmatpush2.msra.mxu0 0.0
        %4392 = vmatprep.subr.mxu0 0.0
        %4393 = vmatpush2.msra.mxu0 0.0
        %4394 = vmatprep.subr.mxu0 0.0
        %4395 = vmatpush2.msra.mxu0 0.0
        %4396 = vmatprep.subr.mxu0 0.0
        %4397 = vmatpush2.msra.mxu0 0.0
        %4398 = vmatprep.subr.mxu0 0.0
        %4399 = vmatpush2.msra.mxu0 0.0
        %4400 = vmatprep.subr.mxu0 0.0
        %4401 = vmatpush2.msra.mxu0 0.0
        %4402 = vmatprep.subr.mxu0 0.0
        %4403 = vmatpush2.msra.mxu0 0.0
        %4404 = vmatprep.subr.mxu0 0.0
        %4405 = vmatpush2.msra.mxu0 0.0
        %4406 = vmatprep.subr.mxu0 0.0
        %4407 = vmatpush2.msra.mxu0 0.0
        %4408 = vmatprep.mubr.f32.mxu0 0.0
        %4409 = vmatmul.mubr.f32.gmra.mxu0 %v4339
        %v4410 = vpop.f32.mrf.mxu0
        %v4411 = vadd.f32 0.0, %v4410
        %v4412 = vpop.f32.mrf.mxu0
        %4413 = vmatprep.mubr.f32.mxu0 0.0
        %4414 = vmatmul.mubr.f32.gmra.mxu0 %v4342
        %v4415 = vpop.f32.mrf.mxu0
        %v4416 = vadd.f32 0.0, %v4415
        %v4417 = vpop.f32.mrf.mxu0
        %4418 = vdwg.mxu0
        %s4419 = scalar_lea.vmem %s4, 40
        %v4420 = vld [vmem:[%s4419] sm:$0xff]
        %s4421 = scalar_lea.vmem %s5, 5
        %v4422 = vld [vmem:[%s4421] sm:$0x1]
        %v4424 = vlaneseq
        %v4425 = vshrl.u32 %v4424, 7
        %v4426 = vsub.s32 0, %v4425
        %v4427 = vrot.slane %v4422, %v4426
        %v4430 = vsel %vm881, %v4411, 0
        %v4433 = vsel %vm881, %v4416, 0
        %v4436 = vsel %vm881, %v4420, 0
        %4438 = vmatprep.subr.mxu0 0.0
        %4439 = vmatpush1.xpose.msra.mxu0 0.0
        %4440 = vmatprep.subr.mxu0 0.0
        %4441 = vmatpush1.xpose.msra.mxu0 0.0
        %4442 = vmatprep.subr.mxu0 0.0
        %4443 = vmatpush1.xpose.msra.mxu0 0.0
        %4444 = vmatprep.subr.mxu0 0.0
        %4445 = vmatpush1.xpose.msra.mxu0 0.0
        %4446 = vmatprep.subr.mxu0 0.0
        %4447 = vmatpush1.xpose.msra.mxu0 0.0
        %4448 = vmatprep.subr.mxu0 0.0
        %4449 = vmatpush1.xpose.msra.mxu0 0.0
        %4450 = vmatprep.subr.mxu0 0.0
        %4451 = vmatpush1.xpose.msra.mxu0 0.0
        %4452 = vmatprep.subr.mxu0 0.0
        %4453 = vmatpush1.xpose.msra.mxu0 0.0
        %4454 = vmatprep.subr.mxu0 0.0
        %4455 = vmatpush1.xpose.msra.mxu0 0.0
        %4456 = vmatprep.subr.mxu0 0.0
        %4457 = vmatpush1.xpose.msra.mxu0 0.0
        %4458 = vmatprep.subr.mxu0 0.0
        %4459 = vmatpush1.xpose.msra.mxu0 0.0
        %4460 = vmatprep.subr.mxu0 0.0
        %4461 = vmatpush1.xpose.msra.mxu0 0.0
        %4462 = vmatprep.subr.mxu0 0.0
        %4463 = vmatpush1.xpose.msra.mxu0 0.0
        %4464 = vmatprep.subr.mxu0 0.0
        %4465 = vmatpush1.xpose.msra.mxu0 0.0
        %4466 = vmatprep.subr.mxu0 0.0
        %4467 = vmatpush1.xpose.msra.mxu0 0.0
        %4468 = vmatprep.subr.mxu0 0.0
        %4469 = vmatpush1.xpose.msra.mxu0 %v4436
        %4470 = vmatprep.subr.mxu0 0.0
        %4471 = vmatpush2.xpose.msra.mxu0 0.0
        %4472 = vmatprep.subr.mxu0 0.0
        %4473 = vmatpush2.xpose.msra.mxu0 0.0
        %4474 = vmatprep.subr.mxu0 0.0
        %4475 = vmatpush2.xpose.msra.mxu0 0.0
        %4476 = vmatprep.subr.mxu0 0.0
        %4477 = vmatpush2.xpose.msra.mxu0 0.0
        %4478 = vmatprep.subr.mxu0 0.0
        %4479 = vmatpush2.xpose.msra.mxu0 0.0
        %4480 = vmatprep.subr.mxu0 0.0
        %4481 = vmatpush2.xpose.msra.mxu0 0.0
        %4482 = vmatprep.subr.mxu0 0.0
        %4483 = vmatpush2.xpose.msra.mxu0 0.0
        %4484 = vmatprep.subr.mxu0 0.0
        %4485 = vmatpush2.xpose.msra.mxu0 0.0
        %4486 = vmatprep.subr.mxu0 0.0
        %4487 = vmatpush2.xpose.msra.mxu0 0.0
        %4488 = vmatprep.subr.mxu0 0.0
        %4489 = vmatpush2.xpose.msra.mxu0 0.0
        %4490 = vmatprep.subr.mxu0 0.0
        %4491 = vmatpush2.xpose.msra.mxu0 0.0
        %4492 = vmatprep.subr.mxu0 0.0
        %4493 = vmatpush2.xpose.msra.mxu0 0.0
        %4494 = vmatprep.subr.mxu0 0.0
        %4495 = vmatpush2.xpose.msra.mxu0 0.0
        %4496 = vmatprep.subr.mxu0 0.0
        %4497 = vmatpush2.xpose.msra.mxu0 0.0
        %4498 = vmatprep.subr.mxu0 0.0
        %4499 = vmatpush2.xpose.msra.mxu0 0.0
        %4500 = vmatprep.subr.mxu0 0.0
        %4501 = vmatpush2.xpose.msra.mxu0 0.0
        %4502 = vmatprep.mubr.f32.mxu0 0.0
        %4503 = vmatmul.mubr.f32.gmra.mxu0 %v4430
        %v4504 = vpop.f32.mrf.mxu0
        %v4505 = vadd.f32 %v4427, %v4504
        %v4506 = vpop.f32.mrf.mxu0
        %4507 = vmatprep.mubr.f32.mxu0 0.0
        %4508 = vmatmul.mubr.f32.gmra.mxu0 %v4433
        %v4509 = vpop.f32.mrf.mxu0
        %v4510 = vadd.f32 %v4427, %v4509
        %v4511 = vpop.f32.mrf.mxu0
        %4512 = vdwg.mxu0
        %s4513 = scalar_lea.vmem %s6, 160
        %v4514 = vld [vmem:[%s4513] sm:$0xff]
        %v4515 = vld [vmem:[%s4513 + $0x8] sm:$0xff]
        %v4516 = vld [vmem:[%s4513 + $0x10] sm:$0xff]
        %v4517 = vld [vmem:[%s4513 + $0x18] sm:$0xff]
        %v4519 = vsel %vm881, %v4505, 0
        %v4522 = vsel %vm881, %v4510, 0
        %v4525 = vsel %vm881, %v4514, 0
        %v4528 = vsel %vm881, %v4515, 0
        %v4531 = vsel %vm881, %v4516, 0
        %v4534 = vsel %vm881, %v4517, 0
        %4536 = vmatprep.subr.mxu0 0.0
        %4537 = vmatpush1.xpose.msra.mxu0 0.0
        %4538 = vmatprep.subr.mxu0 0.0
        %4539 = vmatpush1.xpose.msra.mxu0 0.0
        %4540 = vmatprep.subr.mxu0 0.0
        %4541 = vmatpush1.xpose.msra.mxu0 0.0
        %4542 = vmatprep.subr.mxu0 0.0
        %4543 = vmatpush1.xpose.msra.mxu0 0.0
        %4544 = vmatprep.subr.mxu0 0.0
        %4545 = vmatpush1.xpose.msra.mxu0 0.0
        %4546 = vmatprep.subr.mxu0 0.0
        %4547 = vmatpush1.xpose.msra.mxu0 0.0
        %4548 = vmatprep.subr.mxu0 0.0
        %4549 = vmatpush1.xpose.msra.mxu0 0.0
        %4550 = vmatprep.subr.mxu0 0.0
        %4551 = vmatpush1.xpose.msra.mxu0 0.0
        %4552 = vmatprep.subr.mxu0 0.0
        %4553 = vmatpush1.xpose.msra.mxu0 0.0
        %4554 = vmatprep.subr.mxu0 0.0
        %4555 = vmatpush1.xpose.msra.mxu0 0.0
        %4556 = vmatprep.subr.mxu0 0.0
        %4557 = vmatpush1.xpose.msra.mxu0 0.0
        %4558 = vmatprep.subr.mxu0 0.0
        %4559 = vmatpush1.xpose.msra.mxu0 0.0
        %4560 = vmatprep.subr.mxu0 0.0
        %4561 = vmatpush1.xpose.msra.mxu0 %v4534
        %4562 = vmatprep.subr.mxu0 0.0
        %4563 = vmatpush1.xpose.msra.mxu0 %v4531
        %4564 = vmatprep.subr.mxu0 0.0
        %4565 = vmatpush1.xpose.msra.mxu0 %v4528
        %4566 = vmatprep.subr.mxu0 0.0
        %4567 = vmatpush1.xpose.msra.mxu0 %v4525
        %4568 = vmatprep.subr.mxu0 0.0
        %4569 = vmatpush2.xpose.msra.mxu0 0.0
        %4570 = vmatprep.subr.mxu0 0.0
        %4571 = vmatpush2.xpose.msra.mxu0 0.0
        %4572 = vmatprep.subr.mxu0 0.0
        %4573 = vmatpush2.xpose.msra.mxu0 0.0
        %4574 = vmatprep.subr.mxu0 0.0
        %4575 = vmatpush2.xpose.msra.mxu0 0.0
        %4576 = vmatprep.subr.mxu0 0.0
        %4577 = vmatpush2.xpose.msra.mxu0 0.0
        %4578 = vmatprep.subr.mxu0 0.0
        %4579 = vmatpush2.xpose.msra.mxu0 0.0
        %4580 = vmatprep.subr.mxu0 0.0
        %4581 = vmatpush2.xpose.msra.mxu0 0.0
        %4582 = vmatprep.subr.mxu0 0.0
        %4583 = vmatpush2.xpose.msra.mxu0 0.0
        %4584 = vmatprep.subr.mxu0 0.0
        %4585 = vmatpush2.xpose.msra.mxu0 0.0
        %4586 = vmatprep.subr.mxu0 0.0
        %4587 = vmatpush2.xpose.msra.mxu0 0.0
        %4588 = vmatprep.subr.mxu0 0.0
        %4589 = vmatpush2.xpose.msra.mxu0 0.0
        %4590 = vmatprep.subr.mxu0 0.0
        %4591 = vmatpush2.xpose.msra.mxu0 0.0
        %4592 = vmatprep.subr.mxu0 0.0
        %4593 = vmatpush2.xpose.msra.mxu0 0.0
        %4594 = vmatprep.subr.mxu0 0.0
        %4595 = vmatpush2.xpose.msra.mxu0 0.0
        %4596 = vmatprep.subr.mxu0 0.0
        %4597 = vmatpush2.xpose.msra.mxu0 0.0
        %4598 = vmatprep.subr.mxu0 0.0
        %4599 = vmatpush2.xpose.msra.mxu0 0.0
        %4600 = vmatprep.mubr.f32.mxu0 0.0
        %4601 = vmatmul.mubr.f32.gmra.mxu0 %v4519
        %v4602 = vpop.f32.mrf.mxu0
        %v4603 = vadd.f32 0.0, %v4602
        %v4604 = vpop.f32.mrf.mxu0
        %4605 = vmatprep.mubr.f32.mxu0 0.0
        %4606 = vmatmul.mubr.f32.gmra.mxu0 %v4522
        %v4607 = vpop.f32.mrf.mxu0
        %v4608 = vadd.f32 0.0, %v4607
        %v4609 = vpop.f32.mrf.mxu0
        %4610 = vdwg.mxu0
        %v4612 = vsel %vm881, %v3970, 0
        %v4615 = vsel %vm881, %v3975, 0
        %v4618 = vsel %vm881, %v3979, 0
        %v4621 = vsel %vm881, %v3980, 0
        %v4624 = vsel %vm881, %v3981, 0
        %v4627 = vsel %vm881, %v3982, 0
        %4629 = vmatprep.subr.mxu0 0.0
        %4630 = vmatpush1.xpose.msra.mxu0 0.0
        %4631 = vmatprep.subr.mxu0 0.0
        %4632 = vmatpush1.xpose.msra.mxu0 0.0
        %4633 = vmatprep.subr.mxu0 0.0
        %4634 = vmatpush1.xpose.msra.mxu0 0.0
        %4635 = vmatprep.subr.mxu0 0.0
        %4636 = vmatpush1.xpose.msra.mxu0 0.0
        %4637 = vmatprep.subr.mxu0 0.0
        %4638 = vmatpush1.xpose.msra.mxu0 0.0
        %4639 = vmatprep.subr.mxu0 0.0
        %4640 = vmatpush1.xpose.msra.mxu0 0.0
        %4641 = vmatprep.subr.mxu0 0.0
        %4642 = vmatpush1.xpose.msra.mxu0 0.0
        %4643 = vmatprep.subr.mxu0 0.0
        %4644 = vmatpush1.xpose.msra.mxu0 0.0
        %4645 = vmatprep.subr.mxu0 0.0
        %4646 = vmatpush1.xpose.msra.mxu0 0.0
        %4647 = vmatprep.subr.mxu0 0.0
        %4648 = vmatpush1.xpose.msra.mxu0 0.0
        %4649 = vmatprep.subr.mxu0 0.0
        %4650 = vmatpush1.xpose.msra.mxu0 0.0
        %4651 = vmatprep.subr.mxu0 0.0
        %4652 = vmatpush1.xpose.msra.mxu0 0.0
        %4653 = vmatprep.subr.mxu0 0.0
        %4654 = vmatpush1.xpose.msra.mxu0 %v4627
        %4655 = vmatprep.subr.mxu0 0.0
        %4656 = vmatpush1.xpose.msra.mxu0 %v4624
        %4657 = vmatprep.subr.mxu0 0.0
        %4658 = vmatpush1.xpose.msra.mxu0 %v4621
        %4659 = vmatprep.subr.mxu0 0.0
        %4660 = vmatpush1.xpose.msra.mxu0 %v4618
        %4661 = vmatprep.subr.mxu0 0.0
        %4662 = vmatpush2.xpose.msra.mxu0 0.0
        %4663 = vmatprep.subr.mxu0 0.0
        %4664 = vmatpush2.xpose.msra.mxu0 0.0
        %4665 = vmatprep.subr.mxu0 0.0
        %4666 = vmatpush2.xpose.msra.mxu0 0.0
        %4667 = vmatprep.subr.mxu0 0.0
        %4668 = vmatpush2.xpose.msra.mxu0 0.0
        %4669 = vmatprep.subr.mxu0 0.0
        %4670 = vmatpush2.xpose.msra.mxu0 0.0
        %4671 = vmatprep.subr.mxu0 0.0
        %4672 = vmatpush2.xpose.msra.mxu0 0.0
        %4673 = vmatprep.subr.mxu0 0.0
        %4674 = vmatpush2.xpose.msra.mxu0 0.0
        %4675 = vmatprep.subr.mxu0 0.0
        %4676 = vmatpush2.xpose.msra.mxu0 0.0
        %4677 = vmatprep.subr.mxu0 0.0
        %4678 = vmatpush2.xpose.msra.mxu0 0.0
        %4679 = vmatprep.subr.mxu0 0.0
        %4680 = vmatpush2.xpose.msra.mxu0 0.0
        %4681 = vmatprep.subr.mxu0 0.0
        %4682 = vmatpush2.xpose.msra.mxu0 0.0
        %4683 = vmatprep.subr.mxu0 0.0
        %4684 = vmatpush2.xpose.msra.mxu0 0.0
        %4685 = vmatprep.subr.mxu0 0.0
        %4686 = vmatpush2.xpose.msra.mxu0 0.0
        %4687 = vmatprep.subr.mxu0 0.0
        %4688 = vmatpush2.xpose.msra.mxu0 0.0
        %4689 = vmatprep.subr.mxu0 0.0
        %4690 = vmatpush2.xpose.msra.mxu0 0.0
        %4691 = vmatprep.subr.mxu0 0.0
        %4692 = vmatpush2.xpose.msra.mxu0 0.0
        %4693 = vmatprep.mubr.f32.mxu0 0.0
        %4694 = vmatmul.mubr.f32.gmra.mxu0 %v4612
        %v4695 = vpop.f32.mrf.mxu0
        %v4696 = vadd.f32 %v4603, %v4695
        %v4697 = vpop.f32.mrf.mxu0
        %4698 = vmatprep.mubr.f32.mxu0 0.0
        %4699 = vmatmul.mubr.f32.gmra.mxu0 %v4615
        %v4700 = vpop.f32.mrf.mxu0
        %v4701 = vadd.f32 %v4608, %v4700
        %v4702 = vpop.f32.mrf.mxu0
        %4703 = vdwg.mxu0
        %s4704 = scalar_lea.vmem %s1, 48
        %v4705 = vld [vmem:[%s4704] sm:$0xff]
        %v4707 = vsel %vm638, %v4705, 0
        %4709 = vmatprep.subr.mxu0 0.0
        %4710 = vmatpush1.xpose.msra.mxu0 0.0
        %4711 = vmatprep.subr.mxu0 0.0
        %4712 = vmatpush1.xpose.msra.mxu0 0.0
        %4713 = vmatprep.subr.mxu0 0.0
        %4714 = vmatpush1.xpose.msra.mxu0 0.0
        %4715 = vmatprep.subr.mxu0 0.0
        %4716 = vmatpush1.xpose.msra.mxu0 0.0
        %4717 = vmatprep.subr.mxu0 0.0
        %4718 = vmatpush1.xpose.msra.mxu0 0.0
        %4719 = vmatprep.subr.mxu0 0.0
        %4720 = vmatpush1.xpose.msra.mxu0 0.0
        %4721 = vmatprep.subr.mxu0 0.0
        %4722 = vmatpush1.xpose.msra.mxu0 0.0
        %4723 = vmatprep.subr.mxu0 0.0
        %4724 = vmatpush1.xpose.msra.mxu0 0.0
        %4725 = vmatprep.subr.mxu0 0.0
        %4726 = vmatpush1.xpose.msra.mxu0 0.0
        %4727 = vmatprep.subr.mxu0 0.0
        %4728 = vmatpush1.xpose.msra.mxu0 0.0
        %4729 = vmatprep.subr.mxu0 0.0
        %4730 = vmatpush1.xpose.msra.mxu0 0.0
        %4731 = vmatprep.subr.mxu0 0.0
        %4732 = vmatpush1.xpose.msra.mxu0 0.0
        %4733 = vmatprep.subr.mxu0 0.0
        %4734 = vmatpush1.xpose.msra.mxu0 0.0
        %4735 = vmatprep.subr.mxu0 0.0
        %4736 = vmatpush1.xpose.msra.mxu0 0.0
        %4737 = vmatprep.subr.mxu0 0.0
        %4738 = vmatpush1.xpose.msra.mxu0 0.0
        %4739 = vmatprep.subr.mxu0 0.0
        %4740 = vmatpush1.xpose.msra.mxu0 %v4707
        %4741 = vmatprep.subr.mxu0 0.0
        %4742 = vmatpush2.xpose.msra.mxu0 0.0
        %4743 = vmatprep.subr.mxu0 0.0
        %4744 = vmatpush2.xpose.msra.mxu0 0.0
        %4745 = vmatprep.subr.mxu0 0.0
        %4746 = vmatpush2.xpose.msra.mxu0 0.0
        %4747 = vmatprep.subr.mxu0 0.0
        %4748 = vmatpush2.xpose.msra.mxu0 0.0
        %4749 = vmatprep.subr.mxu0 0.0
        %4750 = vmatpush2.xpose.msra.mxu0 0.0
        %4751 = vmatprep.subr.mxu0 0.0
        %4752 = vmatpush2.xpose.msra.mxu0 0.0
        %4753 = vmatprep.subr.mxu0 0.0
        %4754 = vmatpush2.xpose.msra.mxu0 0.0
        %4755 = vmatprep.subr.mxu0 0.0
        %4756 = vmatpush2.xpose.msra.mxu0 0.0
        %4757 = vmatprep.subr.mxu0 0.0
        %4758 = vmatpush2.xpose.msra.mxu0 0.0
        %4759 = vmatprep.subr.mxu0 0.0
        %4760 = vmatpush2.xpose.msra.mxu0 0.0
        %4761 = vmatprep.subr.mxu0 0.0
        %4762 = vmatpush2.xpose.msra.mxu0 0.0
        %4763 = vmatprep.subr.mxu0 0.0
        %4764 = vmatpush2.xpose.msra.mxu0 0.0
        %4765 = vmatprep.subr.mxu0 0.0
        %4766 = vmatpush2.xpose.msra.mxu0 0.0
        %4767 = vmatprep.subr.mxu0 0.0
        %4768 = vmatpush2.xpose.msra.mxu0 0.0
        %4769 = vmatprep.subr.mxu0 0.0
        %4770 = vmatpush2.xpose.msra.mxu0 0.0
        %4771 = vmatprep.subr.mxu0 0.0
        %4772 = vmatpush2.xpose.msra.mxu0 0.0
        %4773 = vmatprep.mubr.f32.mxu0 0.0
        %4774 = vmatmul.mubr.f32.gmra.mxu0 %v3445
        %v4775 = vpop.f32.mrf.mxu0
        %v4776 = vadd.f32 0.0, %v4775
        %v4777 = vpop.f32.mrf.mxu0
        %4778 = vmatprep.mubr.f32.mxu0 0.0
        %4779 = vmatmul.mubr.f32.gmra.mxu0 %v3448
        %v4780 = vpop.f32.mrf.mxu0
        %v4781 = vadd.f32 0.0, %v4780
        %v4782 = vpop.f32.mrf.mxu0
        %4783 = vdwg.mxu0
        %s4784 = scalar_lea.vmem %s2, 48
        %v4785 = vld [vmem:[%s4784] sm:$0xff]
        %v4787 = vsel %vm638, %v4785, 0
        %4789 = vmatprep.subr.mxu0 0.0
        %4790 = vmatpush1.xpose.msra.mxu0 0.0
        %4791 = vmatprep.subr.mxu0 0.0
        %4792 = vmatpush1.xpose.msra.mxu0 0.0
        %4793 = vmatprep.subr.mxu0 0.0
        %4794 = vmatpush1.xpose.msra.mxu0 0.0
        %4795 = vmatprep.subr.mxu0 0.0
        %4796 = vmatpush1.xpose.msra.mxu0 0.0
        %4797 = vmatprep.subr.mxu0 0.0
        %4798 = vmatpush1.xpose.msra.mxu0 0.0
        %4799 = vmatprep.subr.mxu0 0.0
        %4800 = vmatpush1.xpose.msra.mxu0 0.0
        %4801 = vmatprep.subr.mxu0 0.0
        %4802 = vmatpush1.xpose.msra.mxu0 0.0
        %4803 = vmatprep.subr.mxu0 0.0
        %4804 = vmatpush1.xpose.msra.mxu0 0.0
        %4805 = vmatprep.subr.mxu0 0.0
        %4806 = vmatpush1.xpose.msra.mxu0 0.0
        %4807 = vmatprep.subr.mxu0 0.0
        %4808 = vmatpush1.xpose.msra.mxu0 0.0
        %4809 = vmatprep.subr.mxu0 0.0
        %4810 = vmatpush1.xpose.msra.mxu0 0.0
        %4811 = vmatprep.subr.mxu0 0.0
        %4812 = vmatpush1.xpose.msra.mxu0 0.0
        %4813 = vmatprep.subr.mxu0 0.0
        %4814 = vmatpush1.xpose.msra.mxu0 0.0
        %4815 = vmatprep.subr.mxu0 0.0
        %4816 = vmatpush1.xpose.msra.mxu0 0.0
        %4817 = vmatprep.subr.mxu0 0.0
        %4818 = vmatpush1.xpose.msra.mxu0 0.0
        %4819 = vmatprep.subr.mxu0 0.0
        %4820 = vmatpush1.xpose.msra.mxu0 %v4787
        %4821 = vmatprep.subr.mxu0 0.0
        %4822 = vmatpush2.xpose.msra.mxu0 0.0
        %4823 = vmatprep.subr.mxu0 0.0
        %4824 = vmatpush2.xpose.msra.mxu0 0.0
        %4825 = vmatprep.subr.mxu0 0.0
        %4826 = vmatpush2.xpose.msra.mxu0 0.0
        %4827 = vmatprep.subr.mxu0 0.0
        %4828 = vmatpush2.xpose.msra.mxu0 0.0
        %4829 = vmatprep.subr.mxu0 0.0
        %4830 = vmatpush2.xpose.msra.mxu0 0.0
        %4831 = vmatprep.subr.mxu0 0.0
        %4832 = vmatpush2.xpose.msra.mxu0 0.0
        %4833 = vmatprep.subr.mxu0 0.0
        %4834 = vmatpush2.xpose.msra.mxu0 0.0
        %4835 = vmatprep.subr.mxu0 0.0
        %4836 = vmatpush2.xpose.msra.mxu0 0.0
        %4837 = vmatprep.subr.mxu0 0.0
        %4838 = vmatpush2.xpose.msra.mxu0 0.0
        %4839 = vmatprep.subr.mxu0 0.0
        %4840 = vmatpush2.xpose.msra.mxu0 0.0
        %4841 = vmatprep.subr.mxu0 0.0
        %4842 = vmatpush2.xpose.msra.mxu0 0.0
        %4843 = vmatprep.subr.mxu0 0.0
        %4844 = vmatpush2.xpose.msra.mxu0 0.0
        %4845 = vmatprep.subr.mxu0 0.0
        %4846 = vmatpush2.xpose.msra.mxu0 0.0
        %4847 = vmatprep.subr.mxu0 0.0
        %4848 = vmatpush2.xpose.msra.mxu0 0.0
        %4849 = vmatprep.subr.mxu0 0.0
        %4850 = vmatpush2.xpose.msra.mxu0 0.0
        %4851 = vmatprep.subr.mxu0 0.0
        %4852 = vmatpush2.xpose.msra.mxu0 0.0
        %4853 = vmatprep.mubr.f32.mxu0 0.0
        %4854 = vmatmul.mubr.f32.gmra.mxu0 %v3445
        %v4855 = vpop.f32.mrf.mxu0
        %v4856 = vadd.f32 0.0, %v4855
        %v4857 = vpop.f32.mrf.mxu0
        %4858 = vmatprep.mubr.f32.mxu0 0.0
        %4859 = vmatmul.mubr.f32.gmra.mxu0 %v3448
        %v4860 = vpop.f32.mrf.mxu0
        %v4861 = vadd.f32 0.0, %v4860
        %v4862 = vpop.f32.mrf.mxu0
        %4863 = vdwg.mxu0
        %s4864 = scalar_lea.vmem %s3, 48
        %v4865 = vld [vmem:[%s4864] sm:$0xff]
        %v4867 = vsel %vm638, %v4865, 0
        %4869 = vmatprep.subr.mxu0 0.0
        %4870 = vmatpush1.xpose.msra.mxu0 0.0
        %4871 = vmatprep.subr.mxu0 0.0
        %4872 = vmatpush1.xpose.msra.mxu0 0.0
        %4873 = vmatprep.subr.mxu0 0.0
        %4874 = vmatpush1.xpose.msra.mxu0 0.0
        %4875 = vmatprep.subr.mxu0 0.0
        %4876 = vmatpush1.xpose.msra.mxu0 0.0
        %4877 = vmatprep.subr.mxu0 0.0
        %4878 = vmatpush1.xpose.msra.mxu0 0.0
        %4879 = vmatprep.subr.mxu0 0.0
        %4880 = vmatpush1.xpose.msra.mxu0 0.0
        %4881 = vmatprep.subr.mxu0 0.0
        %4882 = vmatpush1.xpose.msra.mxu0 0.0
        %4883 = vmatprep.subr.mxu0 0.0
        %4884 = vmatpush1.xpose.msra.mxu0 0.0
        %4885 = vmatprep.subr.mxu0 0.0
        %4886 = vmatpush1.xpose.msra.mxu0 0.0
        %4887 = vmatprep.subr.mxu0 0.0
        %4888 = vmatpush1.xpose.msra.mxu0 0.0
        %4889 = vmatprep.subr.mxu0 0.0
        %4890 = vmatpush1.xpose.msra.mxu0 0.0
        %4891 = vmatprep.subr.mxu0 0.0
        %4892 = vmatpush1.xpose.msra.mxu0 0.0
        %4893 = vmatprep.subr.mxu0 0.0
        %4894 = vmatpush1.xpose.msra.mxu0 0.0
        %4895 = vmatprep.subr.mxu0 0.0
        %4896 = vmatpush1.xpose.msra.mxu0 0.0
        %4897 = vmatprep.subr.mxu0 0.0
        %4898 = vmatpush1.xpose.msra.mxu0 0.0
        %4899 = vmatprep.subr.mxu0 0.0
        %4900 = vmatpush1.xpose.msra.mxu0 %v4867
        %4901 = vmatprep.subr.mxu0 0.0
        %4902 = vmatpush2.xpose.msra.mxu0 0.0
        %4903 = vmatprep.subr.mxu0 0.0
        %4904 = vmatpush2.xpose.msra.mxu0 0.0
        %4905 = vmatprep.subr.mxu0 0.0
        %4906 = vmatpush2.xpose.msra.mxu0 0.0
        %4907 = vmatprep.subr.mxu0 0.0
        %4908 = vmatpush2.xpose.msra.mxu0 0.0
        %4909 = vmatprep.subr.mxu0 0.0
        %4910 = vmatpush2.xpose.msra.mxu0 0.0
        %4911 = vmatprep.subr.mxu0 0.0
        %4912 = vmatpush2.xpose.msra.mxu0 0.0
        %4913 = vmatprep.subr.mxu0 0.0
        %4914 = vmatpush2.xpose.msra.mxu0 0.0
        %4915 = vmatprep.subr.mxu0 0.0
        %4916 = vmatpush2.xpose.msra.mxu0 0.0
        %4917 = vmatprep.subr.mxu0 0.0
        %4918 = vmatpush2.xpose.msra.mxu0 0.0
        %4919 = vmatprep.subr.mxu0 0.0
        %4920 = vmatpush2.xpose.msra.mxu0 0.0
        %4921 = vmatprep.subr.mxu0 0.0
        %4922 = vmatpush2.xpose.msra.mxu0 0.0
        %4923 = vmatprep.subr.mxu0 0.0
        %4924 = vmatpush2.xpose.msra.mxu0 0.0
        %4925 = vmatprep.subr.mxu0 0.0
        %4926 = vmatpush2.xpose.msra.mxu0 0.0
        %4927 = vmatprep.subr.mxu0 0.0
        %4928 = vmatpush2.xpose.msra.mxu0 0.0
        %4929 = vmatprep.subr.mxu0 0.0
        %4930 = vmatpush2.xpose.msra.mxu0 0.0
        %4931 = vmatprep.subr.mxu0 0.0
        %4932 = vmatpush2.xpose.msra.mxu0 0.0
        %4933 = vmatprep.mubr.f32.mxu0 0.0
        %4934 = vmatmul.mubr.f32.gmra.mxu0 %v3445
        %v4935 = vpop.f32.mrf.mxu0
        %v4936 = vadd.f32 0.0, %v4935
        %v4937 = vpop.f32.mrf.mxu0
        %4938 = vmatprep.mubr.f32.mxu0 0.0
        %4939 = vmatmul.mubr.f32.gmra.mxu0 %v3448
        %v4940 = vpop.f32.mrf.mxu0
        %v4941 = vadd.f32 0.0, %v4940
        %v4942 = vpop.f32.mrf.mxu0
        %4943 = vdwg.mxu0
        %v4945 = vsel %vm881, %v4776, 0
        %v4948 = vsel %vm881, %v4781, 0
        %v4951 = vsel %vm881, %v4856, 0
        %v4954 = vsel %vm881, %v4861, 0
        %4956 = vmatprep.subr.mxu0 0.0
        %4957 = vmatpush1.xpose.msra.mxu0 0.0
        %4958 = vmatprep.subr.mxu0 0.0
        %4959 = vmatpush1.xpose.msra.mxu0 0.0
        %4960 = vmatprep.subr.mxu0 0.0
        %4961 = vmatpush1.xpose.msra.mxu0 0.0
        %4962 = vmatprep.subr.mxu0 0.0
        %4963 = vmatpush1.xpose.msra.mxu0 0.0
        %4964 = vmatprep.subr.mxu0 0.0
        %4965 = vmatpush1.xpose.msra.mxu0 0.0
        %4966 = vmatprep.subr.mxu0 0.0
        %4967 = vmatpush1.xpose.msra.mxu0 0.0
        %4968 = vmatprep.subr.mxu0 0.0
        %4969 = vmatpush1.xpose.msra.mxu0 0.0
        %4970 = vmatprep.subr.mxu0 0.0
        %4971 = vmatpush1.xpose.msra.mxu0 0.0
        %4972 = vmatprep.subr.mxu0 0.0
        %4973 = vmatpush1.xpose.msra.mxu0 0.0
        %4974 = vmatprep.subr.mxu0 0.0
        %4975 = vmatpush1.xpose.msra.mxu0 0.0
        %4976 = vmatprep.subr.mxu0 0.0
        %4977 = vmatpush1.xpose.msra.mxu0 0.0
        %4978 = vmatprep.subr.mxu0 0.0
        %4979 = vmatpush1.xpose.msra.mxu0 0.0
        %4980 = vmatprep.subr.mxu0 0.0
        %4981 = vmatpush1.xpose.msra.mxu0 0.0
        %4982 = vmatprep.subr.mxu0 0.0
        %4983 = vmatpush1.xpose.msra.mxu0 0.0
        %4984 = vmatprep.subr.mxu0 0.0
        %4985 = vmatpush1.xpose.msra.mxu0 %v4954
        %4986 = vmatprep.subr.mxu0 0.0
        %4987 = vmatpush1.xpose.msra.mxu0 %v4951
        %4988 = vmatprep.subr.mxu0 0.0
        %4989 = vmatpush2.xpose.msra.mxu0 0.0
        %4990 = vmatprep.subr.mxu0 0.0
        %4991 = vmatpush2.xpose.msra.mxu0 0.0
        %4992 = vmatprep.subr.mxu0 0.0
        %4993 = vmatpush2.xpose.msra.mxu0 0.0
        %4994 = vmatprep.subr.mxu0 0.0
        %4995 = vmatpush2.xpose.msra.mxu0 0.0
        %4996 = vmatprep.subr.mxu0 0.0
        %4997 = vmatpush2.xpose.msra.mxu0 0.0
        %4998 = vmatprep.subr.mxu0 0.0
        %4999 = vmatpush2.xpose.msra.mxu0 0.0
        %5000 = vmatprep.subr.mxu0 0.0
        %5001 = vmatpush2.xpose.msra.mxu0 0.0
        %5002 = vmatprep.subr.mxu0 0.0
        %5003 = vmatpush2.xpose.msra.mxu0 0.0
        %5004 = vmatprep.subr.mxu0 0.0
        %5005 = vmatpush2.xpose.msra.mxu0 0.0
        %5006 = vmatprep.subr.mxu0 0.0
        %5007 = vmatpush2.xpose.msra.mxu0 0.0
        %5008 = vmatprep.subr.mxu0 0.0
        %5009 = vmatpush2.xpose.msra.mxu0 0.0
        %5010 = vmatprep.subr.mxu0 0.0
        %5011 = vmatpush2.xpose.msra.mxu0 0.0
        %5012 = vmatprep.subr.mxu0 0.0
        %5013 = vmatpush2.xpose.msra.mxu0 0.0
        %5014 = vmatprep.subr.mxu0 0.0
        %5015 = vmatpush2.xpose.msra.mxu0 0.0
        %5016 = vmatprep.subr.mxu0 0.0
        %5017 = vmatpush2.xpose.msra.mxu0 0.0
        %5018 = vmatprep.subr.mxu0 0.0
        %5019 = vmatpush2.xpose.msra.mxu0 0.0
        %5020 = vmatprep.mubr.f32.mxu0 0.0
        %5021 = vmatmul.mubr.f32.gmra.mxu0 %v4945
        %v5022 = vpop.f32.mrf.mxu0
        %v5023 = vadd.f32 0.0, %v5022
        %v5024 = vpop.f32.mrf.mxu0
        %5025 = vmatprep.mubr.f32.mxu0 0.0
        %5026 = vmatmul.mubr.f32.gmra.mxu0 %v4948
        %v5027 = vpop.f32.mrf.mxu0
        %v5028 = vadd.f32 0.0, %v5027
        %v5029 = vpop.f32.mrf.mxu0
        %5030 = vdwg.mxu0
        %v5031 = vmul.f32 %v5023, 0.35355338
        %v5032 = vmul.f32 %v5028, 0.35355338
        %v5033 = vsel %vm635, %v5031, -1e+30
        %v5034 = vsel %vm636, %v5032, -1e+30
        %v5035 = vsel %vm973, %v5033, -inf
        %5036 = vmax.xlane.f32.xlu0 %v5035
        %v5037 = vpop.xlane.xlu0 %5036
        %v5038 = vsel %vm973, %v5034, -inf
        %5039 = vmax.xlane.f32.xlu0 %v5038
        %v5040 = vpop.xlane.xlu0 %5039
        %v5041 = vsub.f32 %v5033, %v5037
        %v5042 = vsub.f32 %v5034, %v5040
        %v5043 = vmul.f32 %v5041, 1.442695
        %v5044 = vpow.pop %v5043
        %v5045 = vmul.f32 %v5042, 1.442695
        %v5046 = vpow.pop %v5045
        %v5047 = vsel %vm973, %v5044, 0.0
        %5048 = vadd.xlane.f32.xlu0 %v5047
        %v5049 = vpop.xlane.xlu0 %5048
        %v5050 = vsel %vm973, %v5046, 0.0
        %5051 = vadd.xlane.f32.xlu0 %v5050
        %v5052 = vpop.xlane.xlu0 %5051
        %v5053 = vadd.f32 %v5049, 1e-06
        %v5054 = vadd.f32 %v5052, 1e-06
        %v5055 = vrcp.pop %v5053
        %v5056 = vrcp.pop %v5054
        %v5057 = vmul.f32 %v5044, %v5055
        %v5058 = vmul.f32 %v5046, %v5056
        %v5060 = vsel %vm973, %v5057, 0
        %v5063 = vsel %vm973, %v5058, 0
        %5065 = vmatprep.subr.mxu0 0.0
        %5066 = vmatpush1.msra.mxu0 0.0
        %5067 = vmatprep.subr.mxu0 0.0
        %5068 = vmatpush1.msra.mxu0 0.0
        %5069 = vmatprep.subr.mxu0 0.0
        %5070 = vmatpush1.msra.mxu0 0.0
        %5071 = vmatprep.subr.mxu0 0.0
        %5072 = vmatpush1.msra.mxu0 0.0
        %5073 = vmatprep.subr.mxu0 0.0
        %5074 = vmatpush1.msra.mxu0 0.0
        %5075 = vmatprep.subr.mxu0 0.0
        %5076 = vmatpush1.msra.mxu0 0.0
        %5077 = vmatprep.subr.mxu0 0.0
        %5078 = vmatpush1.msra.mxu0 0.0
        %5079 = vmatprep.subr.mxu0 0.0
        %5080 = vmatpush1.msra.mxu0 0.0
        %5081 = vmatprep.subr.mxu0 0.0
        %5082 = vmatpush1.msra.mxu0 0.0
        %5083 = vmatprep.subr.mxu0 0.0
        %5084 = vmatpush1.msra.mxu0 0.0
        %5085 = vmatprep.subr.mxu0 0.0
        %5086 = vmatpush1.msra.mxu0 0.0
        %5087 = vmatprep.subr.mxu0 0.0
        %5088 = vmatpush1.msra.mxu0 0.0
        %5089 = vmatprep.subr.mxu0 0.0
        %5090 = vmatpush1.msra.mxu0 0.0
        %5091 = vmatprep.subr.mxu0 0.0
        %5092 = vmatpush1.msra.mxu0 0.0
        %5093 = vmatprep.subr.mxu0 0.0
        %5094 = vmatpush1.msra.mxu0 %v4941
        %5095 = vmatprep.subr.mxu0 0.0
        %5096 = vmatpush1.msra.mxu0 %v4936
        %5097 = vmatprep.subr.mxu0 0.0
        %5098 = vmatpush2.msra.mxu0 0.0
        %5099 = vmatprep.subr.mxu0 0.0
        %5100 = vmatpush2.msra.mxu0 0.0
        %5101 = vmatprep.subr.mxu0 0.0
        %5102 = vmatpush2.msra.mxu0 0.0
        %5103 = vmatprep.subr.mxu0 0.0
        %5104 = vmatpush2.msra.mxu0 0.0
        %5105 = vmatprep.subr.mxu0 0.0
        %5106 = vmatpush2.msra.mxu0 0.0
        %5107 = vmatprep.subr.mxu0 0.0
        %5108 = vmatpush2.msra.mxu0 0.0
        %5109 = vmatprep.subr.mxu0 0.0
        %5110 = vmatpush2.msra.mxu0 0.0
        %5111 = vmatprep.subr.mxu0 0.0
        %5112 = vmatpush2.msra.mxu0 0.0
        %5113 = vmatprep.subr.mxu0 0.0
        %5114 = vmatpush2.msra.mxu0 0.0
        %5115 = vmatprep.subr.mxu0 0.0
        %5116 = vmatpush2.msra.mxu0 0.0
        %5117 = vmatprep.subr.mxu0 0.0
        %5118 = vmatpush2.msra.mxu0 0.0
        %5119 = vmatprep.subr.mxu0 0.0
        %5120 = vmatpush2.msra.mxu0 0.0
        %5121 = vmatprep.subr.mxu0 0.0
        %5122 = vmatpush2.msra.mxu0 0.0
        %5123 = vmatprep.subr.mxu0 0.0
        %5124 = vmatpush2.msra.mxu0 0.0
        %5125 = vmatprep.subr.mxu0 0.0
        %5126 = vmatpush2.msra.mxu0 0.0
        %5127 = vmatprep.subr.mxu0 0.0
        %5128 = vmatpush2.msra.mxu0 0.0
        %5129 = vmatprep.mubr.f32.mxu0 0.0
        %5130 = vmatmul.mubr.f32.gmra.mxu0 %v5060
        %v5131 = vpop.f32.mrf.mxu0
        %v5132 = vadd.f32 0.0, %v5131
        %v5133 = vpop.f32.mrf.mxu0
        %5134 = vmatprep.mubr.f32.mxu0 0.0
        %5135 = vmatmul.mubr.f32.gmra.mxu0 %v5063
        %v5136 = vpop.f32.mrf.mxu0
        %v5137 = vadd.f32 0.0, %v5136
        %v5138 = vpop.f32.mrf.mxu0
        %5139 = vdwg.mxu0
        %s5140 = scalar_lea.vmem %s4, 48
        %v5141 = vld [vmem:[%s5140] sm:$0xff]
        %s5142 = scalar_lea.vmem %s5, 6
        %v5143 = vld [vmem:[%s5142] sm:$0x1]
        %v5145 = vlaneseq
        %v5146 = vshrl.u32 %v5145, 7
        %v5147 = vsub.s32 0, %v5146
        %v5148 = vrot.slane %v5143, %v5147
        %v5151 = vsel %vm881, %v5132, 0
        %v5154 = vsel %vm881, %v5137, 0
        %v5157 = vsel %vm881, %v5141, 0
        %5159 = vmatprep.subr.mxu0 0.0
        %5160 = vmatpush1.xpose.msra.mxu0 0.0
        %5161 = vmatprep.subr.mxu0 0.0
        %5162 = vmatpush1.xpose.msra.mxu0 0.0
        %5163 = vmatprep.subr.mxu0 0.0
        %5164 = vmatpush1.xpose.msra.mxu0 0.0
        %5165 = vmatprep.subr.mxu0 0.0
        %5166 = vmatpush1.xpose.msra.mxu0 0.0
        %5167 = vmatprep.subr.mxu0 0.0
        %5168 = vmatpush1.xpose.msra.mxu0 0.0
        %5169 = vmatprep.subr.mxu0 0.0
        %5170 = vmatpush1.xpose.msra.mxu0 0.0
        %5171 = vmatprep.subr.mxu0 0.0
        %5172 = vmatpush1.xpose.msra.mxu0 0.0
        %5173 = vmatprep.subr.mxu0 0.0
        %5174 = vmatpush1.xpose.msra.mxu0 0.0
        %5175 = vmatprep.subr.mxu0 0.0
        %5176 = vmatpush1.xpose.msra.mxu0 0.0
        %5177 = vmatprep.subr.mxu0 0.0
        %5178 = vmatpush1.xpose.msra.mxu0 0.0
        %5179 = vmatprep.subr.mxu0 0.0
        %5180 = vmatpush1.xpose.msra.mxu0 0.0
        %5181 = vmatprep.subr.mxu0 0.0
        %5182 = vmatpush1.xpose.msra.mxu0 0.0
        %5183 = vmatprep.subr.mxu0 0.0
        %5184 = vmatpush1.xpose.msra.mxu0 0.0
        %5185 = vmatprep.subr.mxu0 0.0
        %5186 = vmatpush1.xpose.msra.mxu0 0.0
        %5187 = vmatprep.subr.mxu0 0.0
        %5188 = vmatpush1.xpose.msra.mxu0 0.0
        %5189 = vmatprep.subr.mxu0 0.0
        %5190 = vmatpush1.xpose.msra.mxu0 %v5157
        %5191 = vmatprep.subr.mxu0 0.0
        %5192 = vmatpush2.xpose.msra.mxu0 0.0
        %5193 = vmatprep.subr.mxu0 0.0
        %5194 = vmatpush2.xpose.msra.mxu0 0.0
        %5195 = vmatprep.subr.mxu0 0.0
        %5196 = vmatpush2.xpose.msra.mxu0 0.0
        %5197 = vmatprep.subr.mxu0 0.0
        %5198 = vmatpush2.xpose.msra.mxu0 0.0
        %5199 = vmatprep.subr.mxu0 0.0
        %5200 = vmatpush2.xpose.msra.mxu0 0.0
        %5201 = vmatprep.subr.mxu0 0.0
        %5202 = vmatpush2.xpose.msra.mxu0 0.0
        %5203 = vmatprep.subr.mxu0 0.0
        %5204 = vmatpush2.xpose.msra.mxu0 0.0
        %5205 = vmatprep.subr.mxu0 0.0
        %5206 = vmatpush2.xpose.msra.mxu0 0.0
        %5207 = vmatprep.subr.mxu0 0.0
        %5208 = vmatpush2.xpose.msra.mxu0 0.0
        %5209 = vmatprep.subr.mxu0 0.0
        %5210 = vmatpush2.xpose.msra.mxu0 0.0
        %5211 = vmatprep.subr.mxu0 0.0
        %5212 = vmatpush2.xpose.msra.mxu0 0.0
        %5213 = vmatprep.subr.mxu0 0.0
        %5214 = vmatpush2.xpose.msra.mxu0 0.0
        %5215 = vmatprep.subr.mxu0 0.0
        %5216 = vmatpush2.xpose.msra.mxu0 0.0
        %5217 = vmatprep.subr.mxu0 0.0
        %5218 = vmatpush2.xpose.msra.mxu0 0.0
        %5219 = vmatprep.subr.mxu0 0.0
        %5220 = vmatpush2.xpose.msra.mxu0 0.0
        %5221 = vmatprep.subr.mxu0 0.0
        %5222 = vmatpush2.xpose.msra.mxu0 0.0
        %5223 = vmatprep.mubr.f32.mxu0 0.0
        %5224 = vmatmul.mubr.f32.gmra.mxu0 %v5151
        %v5225 = vpop.f32.mrf.mxu0
        %v5226 = vadd.f32 %v5148, %v5225
        %v5227 = vpop.f32.mrf.mxu0
        %5228 = vmatprep.mubr.f32.mxu0 0.0
        %5229 = vmatmul.mubr.f32.gmra.mxu0 %v5154
        %v5230 = vpop.f32.mrf.mxu0
        %v5231 = vadd.f32 %v5148, %v5230
        %v5232 = vpop.f32.mrf.mxu0
        %5233 = vdwg.mxu0
        %s5234 = scalar_lea.vmem %s6, 192
        %v5235 = vld [vmem:[%s5234] sm:$0xff]
        %v5236 = vld [vmem:[%s5234 + $0x8] sm:$0xff]
        %v5237 = vld [vmem:[%s5234 + $0x10] sm:$0xff]
        %v5238 = vld [vmem:[%s5234 + $0x18] sm:$0xff]
        %v5240 = vsel %vm881, %v5226, 0
        %v5243 = vsel %vm881, %v5231, 0
        %v5246 = vsel %vm881, %v5235, 0
        %v5249 = vsel %vm881, %v5236, 0
        %v5252 = vsel %vm881, %v5237, 0
        %v5255 = vsel %vm881, %v5238, 0
        %5257 = vmatprep.subr.mxu0 0.0
        %5258 = vmatpush1.xpose.msra.mxu0 0.0
        %5259 = vmatprep.subr.mxu0 0.0
        %5260 = vmatpush1.xpose.msra.mxu0 0.0
        %5261 = vmatprep.subr.mxu0 0.0
        %5262 = vmatpush1.xpose.msra.mxu0 0.0
        %5263 = vmatprep.subr.mxu0 0.0
        %5264 = vmatpush1.xpose.msra.mxu0 0.0
        %5265 = vmatprep.subr.mxu0 0.0
        %5266 = vmatpush1.xpose.msra.mxu0 0.0
        %5267 = vmatprep.subr.mxu0 0.0
        %5268 = vmatpush1.xpose.msra.mxu0 0.0
        %5269 = vmatprep.subr.mxu0 0.0
        %5270 = vmatpush1.xpose.msra.mxu0 0.0
        %5271 = vmatprep.subr.mxu0 0.0
        %5272 = vmatpush1.xpose.msra.mxu0 0.0
        %5273 = vmatprep.subr.mxu0 0.0
        %5274 = vmatpush1.xpose.msra.mxu0 0.0
        %5275 = vmatprep.subr.mxu0 0.0
        %5276 = vmatpush1.xpose.msra.mxu0 0.0
        %5277 = vmatprep.subr.mxu0 0.0
        %5278 = vmatpush1.xpose.msra.mxu0 0.0
        %5279 = vmatprep.subr.mxu0 0.0
        %5280 = vmatpush1.xpose.msra.mxu0 0.0
        %5281 = vmatprep.subr.mxu0 0.0
        %5282 = vmatpush1.xpose.msra.mxu0 %v5255
        %5283 = vmatprep.subr.mxu0 0.0
        %5284 = vmatpush1.xpose.msra.mxu0 %v5252
        %5285 = vmatprep.subr.mxu0 0.0
        %5286 = vmatpush1.xpose.msra.mxu0 %v5249
        %5287 = vmatprep.subr.mxu0 0.0
        %5288 = vmatpush1.xpose.msra.mxu0 %v5246
        %5289 = vmatprep.subr.mxu0 0.0
        %5290 = vmatpush2.xpose.msra.mxu0 0.0
        %5291 = vmatprep.subr.mxu0 0.0
        %5292 = vmatpush2.xpose.msra.mxu0 0.0
        %5293 = vmatprep.subr.mxu0 0.0
        %5294 = vmatpush2.xpose.msra.mxu0 0.0
        %5295 = vmatprep.subr.mxu0 0.0
        %5296 = vmatpush2.xpose.msra.mxu0 0.0
        %5297 = vmatprep.subr.mxu0 0.0
        %5298 = vmatpush2.xpose.msra.mxu0 0.0
        %5299 = vmatprep.subr.mxu0 0.0
        %5300 = vmatpush2.xpose.msra.mxu0 0.0
        %5301 = vmatprep.subr.mxu0 0.0
        %5302 = vmatpush2.xpose.msra.mxu0 0.0
        %5303 = vmatprep.subr.mxu0 0.0
        %5304 = vmatpush2.xpose.msra.mxu0 0.0
        %5305 = vmatprep.subr.mxu0 0.0
        %5306 = vmatpush2.xpose.msra.mxu0 0.0
        %5307 = vmatprep.subr.mxu0 0.0
        %5308 = vmatpush2.xpose.msra.mxu0 0.0
        %5309 = vmatprep.subr.mxu0 0.0
        %5310 = vmatpush2.xpose.msra.mxu0 0.0
        %5311 = vmatprep.subr.mxu0 0.0
        %5312 = vmatpush2.xpose.msra.mxu0 0.0
        %5313 = vmatprep.subr.mxu0 0.0
        %5314 = vmatpush2.xpose.msra.mxu0 0.0
        %5315 = vmatprep.subr.mxu0 0.0
        %5316 = vmatpush2.xpose.msra.mxu0 0.0
        %5317 = vmatprep.subr.mxu0 0.0
        %5318 = vmatpush2.xpose.msra.mxu0 0.0
        %5319 = vmatprep.subr.mxu0 0.0
        %5320 = vmatpush2.xpose.msra.mxu0 0.0
        %5321 = vmatprep.mubr.f32.mxu0 0.0
        %5322 = vmatmul.mubr.f32.gmra.mxu0 %v5240
        %v5323 = vpop.f32.mrf.mxu0
        %v5324 = vadd.f32 0.0, %v5323
        %v5325 = vpop.f32.mrf.mxu0
        %5326 = vmatprep.mubr.f32.mxu0 0.0
        %5327 = vmatmul.mubr.f32.gmra.mxu0 %v5243
        %v5328 = vpop.f32.mrf.mxu0
        %v5329 = vadd.f32 0.0, %v5328
        %v5330 = vpop.f32.mrf.mxu0
        %5331 = vdwg.mxu0
        %v5332 = vadd.f32 %v4696, %v5324
        %v5333 = vadd.f32 %v4701, %v5329
        %s5334 = scalar_lea.vmem %s1, 56
        %v5335 = vld [vmem:[%s5334] sm:$0xff]
        %v5337 = vsel %vm638, %v5335, 0
        %5339 = vmatprep.subr.mxu0 0.0
        %5340 = vmatpush1.xpose.msra.mxu0 0.0
        %5341 = vmatprep.subr.mxu0 0.0
        %5342 = vmatpush1.xpose.msra.mxu0 0.0
        %5343 = vmatprep.subr.mxu0 0.0
        %5344 = vmatpush1.xpose.msra.mxu0 0.0
        %5345 = vmatprep.subr.mxu0 0.0
        %5346 = vmatpush1.xpose.msra.mxu0 0.0
        %5347 = vmatprep.subr.mxu0 0.0
        %5348 = vmatpush1.xpose.msra.mxu0 0.0
        %5349 = vmatprep.subr.mxu0 0.0
        %5350 = vmatpush1.xpose.msra.mxu0 0.0
        %5351 = vmatprep.subr.mxu0 0.0
        %5352 = vmatpush1.xpose.msra.mxu0 0.0
        %5353 = vmatprep.subr.mxu0 0.0
        %5354 = vmatpush1.xpose.msra.mxu0 0.0
        %5355 = vmatprep.subr.mxu0 0.0
        %5356 = vmatpush1.xpose.msra.mxu0 0.0
        %5357 = vmatprep.subr.mxu0 0.0
        %5358 = vmatpush1.xpose.msra.mxu0 0.0
        %5359 = vmatprep.subr.mxu0 0.0
        %5360 = vmatpush1.xpose.msra.mxu0 0.0
        %5361 = vmatprep.subr.mxu0 0.0
        %5362 = vmatpush1.xpose.msra.mxu0 0.0
        %5363 = vmatprep.subr.mxu0 0.0
        %5364 = vmatpush1.xpose.msra.mxu0 0.0
        %5365 = vmatprep.subr.mxu0 0.0
        %5366 = vmatpush1.xpose.msra.mxu0 0.0
        %5367 = vmatprep.subr.mxu0 0.0
        %5368 = vmatpush1.xpose.msra.mxu0 0.0
        %5369 = vmatprep.subr.mxu0 0.0
        %5370 = vmatpush1.xpose.msra.mxu0 %v5337
        %5371 = vmatprep.subr.mxu0 0.0
        %5372 = vmatpush2.xpose.msra.mxu0 0.0
        %5373 = vmatprep.subr.mxu0 0.0
        %5374 = vmatpush2.xpose.msra.mxu0 0.0
        %5375 = vmatprep.subr.mxu0 0.0
        %5376 = vmatpush2.xpose.msra.mxu0 0.0
        %5377 = vmatprep.subr.mxu0 0.0
        %5378 = vmatpush2.xpose.msra.mxu0 0.0
        %5379 = vmatprep.subr.mxu0 0.0
        %5380 = vmatpush2.xpose.msra.mxu0 0.0
        %5381 = vmatprep.subr.mxu0 0.0
        %5382 = vmatpush2.xpose.msra.mxu0 0.0
        %5383 = vmatprep.subr.mxu0 0.0
        %5384 = vmatpush2.xpose.msra.mxu0 0.0
        %5385 = vmatprep.subr.mxu0 0.0
        %5386 = vmatpush2.xpose.msra.mxu0 0.0
        %5387 = vmatprep.subr.mxu0 0.0
        %5388 = vmatpush2.xpose.msra.mxu0 0.0
        %5389 = vmatprep.subr.mxu0 0.0
        %5390 = vmatpush2.xpose.msra.mxu0 0.0
        %5391 = vmatprep.subr.mxu0 0.0
        %5392 = vmatpush2.xpose.msra.mxu0 0.0
        %5393 = vmatprep.subr.mxu0 0.0
        %5394 = vmatpush2.xpose.msra.mxu0 0.0
        %5395 = vmatprep.subr.mxu0 0.0
        %5396 = vmatpush2.xpose.msra.mxu0 0.0
        %5397 = vmatprep.subr.mxu0 0.0
        %5398 = vmatpush2.xpose.msra.mxu0 0.0
        %5399 = vmatprep.subr.mxu0 0.0
        %5400 = vmatpush2.xpose.msra.mxu0 0.0
        %5401 = vmatprep.subr.mxu0 0.0
        %5402 = vmatpush2.xpose.msra.mxu0 0.0
        %5403 = vmatprep.mubr.f32.mxu0 0.0
        %5404 = vmatmul.mubr.f32.gmra.mxu0 %v3445
        %v5405 = vpop.f32.mrf.mxu0
        %v5406 = vadd.f32 0.0, %v5405
        %v5407 = vpop.f32.mrf.mxu0
        %5408 = vmatprep.mubr.f32.mxu0 0.0
        %5409 = vmatmul.mubr.f32.gmra.mxu0 %v3448
        %v5410 = vpop.f32.mrf.mxu0
        %v5411 = vadd.f32 0.0, %v5410
        %v5412 = vpop.f32.mrf.mxu0
        %5413 = vdwg.mxu0
        %s5414 = scalar_lea.vmem %s2, 56
        %v5415 = vld [vmem:[%s5414] sm:$0xff]
        %v5417 = vsel %vm638, %v5415, 0
        %5419 = vmatprep.subr.mxu0 0.0
        %5420 = vmatpush1.xpose.msra.mxu0 0.0
        %5421 = vmatprep.subr.mxu0 0.0
        %5422 = vmatpush1.xpose.msra.mxu0 0.0
        %5423 = vmatprep.subr.mxu0 0.0
        %5424 = vmatpush1.xpose.msra.mxu0 0.0
        %5425 = vmatprep.subr.mxu0 0.0
        %5426 = vmatpush1.xpose.msra.mxu0 0.0
        %5427 = vmatprep.subr.mxu0 0.0
        %5428 = vmatpush1.xpose.msra.mxu0 0.0
        %5429 = vmatprep.subr.mxu0 0.0
        %5430 = vmatpush1.xpose.msra.mxu0 0.0
        %5431 = vmatprep.subr.mxu0 0.0
        %5432 = vmatpush1.xpose.msra.mxu0 0.0
        %5433 = vmatprep.subr.mxu0 0.0
        %5434 = vmatpush1.xpose.msra.mxu0 0.0
        %5435 = vmatprep.subr.mxu0 0.0
        %5436 = vmatpush1.xpose.msra.mxu0 0.0
        %5437 = vmatprep.subr.mxu0 0.0
        %5438 = vmatpush1.xpose.msra.mxu0 0.0
        %5439 = vmatprep.subr.mxu0 0.0
        %5440 = vmatpush1.xpose.msra.mxu0 0.0
        %5441 = vmatprep.subr.mxu0 0.0
        %5442 = vmatpush1.xpose.msra.mxu0 0.0
        %5443 = vmatprep.subr.mxu0 0.0
        %5444 = vmatpush1.xpose.msra.mxu0 0.0
        %5445 = vmatprep.subr.mxu0 0.0
        %5446 = vmatpush1.xpose.msra.mxu0 0.0
        %5447 = vmatprep.subr.mxu0 0.0
        %5448 = vmatpush1.xpose.msra.mxu0 0.0
        %5449 = vmatprep.subr.mxu0 0.0
        %5450 = vmatpush1.xpose.msra.mxu0 %v5417
        %5451 = vmatprep.subr.mxu0 0.0
        %5452 = vmatpush2.xpose.msra.mxu0 0.0
        %5453 = vmatprep.subr.mxu0 0.0
        %5454 = vmatpush2.xpose.msra.mxu0 0.0
        %5455 = vmatprep.subr.mxu0 0.0
        %5456 = vmatpush2.xpose.msra.mxu0 0.0
        %5457 = vmatprep.subr.mxu0 0.0
        %5458 = vmatpush2.xpose.msra.mxu0 0.0
        %5459 = vmatprep.subr.mxu0 0.0
        %5460 = vmatpush2.xpose.msra.mxu0 0.0
        %5461 = vmatprep.subr.mxu0 0.0
        %5462 = vmatpush2.xpose.msra.mxu0 0.0
        %5463 = vmatprep.subr.mxu0 0.0
        %5464 = vmatpush2.xpose.msra.mxu0 0.0
        %5465 = vmatprep.subr.mxu0 0.0
        %5466 = vmatpush2.xpose.msra.mxu0 0.0
        %5467 = vmatprep.subr.mxu0 0.0
        %5468 = vmatpush2.xpose.msra.mxu0 0.0
        %5469 = vmatprep.subr.mxu0 0.0
        %5470 = vmatpush2.xpose.msra.mxu0 0.0
        %5471 = vmatprep.subr.mxu0 0.0
        %5472 = vmatpush2.xpose.msra.mxu0 0.0
        %5473 = vmatprep.subr.mxu0 0.0
        %5474 = vmatpush2.xpose.msra.mxu0 0.0
        %5475 = vmatprep.subr.mxu0 0.0
        %5476 = vmatpush2.xpose.msra.mxu0 0.0
        %5477 = vmatprep.subr.mxu0 0.0
        %5478 = vmatpush2.xpose.msra.mxu0 0.0
        %5479 = vmatprep.subr.mxu0 0.0
        %5480 = vmatpush2.xpose.msra.mxu0 0.0
        %5481 = vmatprep.subr.mxu0 0.0
        %5482 = vmatpush2.xpose.msra.mxu0 0.0
        %5483 = vmatprep.mubr.f32.mxu0 0.0
        %5484 = vmatmul.mubr.f32.gmra.mxu0 %v3445
        %v5485 = vpop.f32.mrf.mxu0
        %v5486 = vadd.f32 0.0, %v5485
        %v5487 = vpop.f32.mrf.mxu0
        %5488 = vmatprep.mubr.f32.mxu0 0.0
        %5489 = vmatmul.mubr.f32.gmra.mxu0 %v3448
        %v5490 = vpop.f32.mrf.mxu0
        %v5491 = vadd.f32 0.0, %v5490
        %v5492 = vpop.f32.mrf.mxu0
        %5493 = vdwg.mxu0
        %s5494 = scalar_lea.vmem %s3, 56
        %v5495 = vld [vmem:[%s5494] sm:$0xff]
        %v5497 = vsel %vm638, %v5495, 0
        %5499 = vmatprep.subr.mxu0 0.0
        %5500 = vmatpush1.xpose.msra.mxu0 0.0
        %5501 = vmatprep.subr.mxu0 0.0
        %5502 = vmatpush1.xpose.msra.mxu0 0.0
        %5503 = vmatprep.subr.mxu0 0.0
        %5504 = vmatpush1.xpose.msra.mxu0 0.0
        %5505 = vmatprep.subr.mxu0 0.0
        %5506 = vmatpush1.xpose.msra.mxu0 0.0
        %5507 = vmatprep.subr.mxu0 0.0
        %5508 = vmatpush1.xpose.msra.mxu0 0.0
        %5509 = vmatprep.subr.mxu0 0.0
        %5510 = vmatpush1.xpose.msra.mxu0 0.0
        %5511 = vmatprep.subr.mxu0 0.0
        %5512 = vmatpush1.xpose.msra.mxu0 0.0
        %5513 = vmatprep.subr.mxu0 0.0
        %5514 = vmatpush1.xpose.msra.mxu0 0.0
        %5515 = vmatprep.subr.mxu0 0.0
        %5516 = vmatpush1.xpose.msra.mxu0 0.0
        %5517 = vmatprep.subr.mxu0 0.0
        %5518 = vmatpush1.xpose.msra.mxu0 0.0
        %5519 = vmatprep.subr.mxu0 0.0
        %5520 = vmatpush1.xpose.msra.mxu0 0.0
        %5521 = vmatprep.subr.mxu0 0.0
        %5522 = vmatpush1.xpose.msra.mxu0 0.0
        %5523 = vmatprep.subr.mxu0 0.0
        %5524 = vmatpush1.xpose.msra.mxu0 0.0
        %5525 = vmatprep.subr.mxu0 0.0
        %5526 = vmatpush1.xpose.msra.mxu0 0.0
        %5527 = vmatprep.subr.mxu0 0.0
        %5528 = vmatpush1.xpose.msra.mxu0 0.0
        %5529 = vmatprep.subr.mxu0 0.0
        %5530 = vmatpush1.xpose.msra.mxu0 %v5497
        %5531 = vmatprep.subr.mxu0 0.0
        %5532 = vmatpush2.xpose.msra.mxu0 0.0
        %5533 = vmatprep.subr.mxu0 0.0
        %5534 = vmatpush2.xpose.msra.mxu0 0.0
        %5535 = vmatprep.subr.mxu0 0.0
        %5536 = vmatpush2.xpose.msra.mxu0 0.0
        %5537 = vmatprep.subr.mxu0 0.0
        %5538 = vmatpush2.xpose.msra.mxu0 0.0
        %5539 = vmatprep.subr.mxu0 0.0
        %5540 = vmatpush2.xpose.msra.mxu0 0.0
        %5541 = vmatprep.subr.mxu0 0.0
        %5542 = vmatpush2.xpose.msra.mxu0 0.0
        %5543 = vmatprep.subr.mxu0 0.0
        %5544 = vmatpush2.xpose.msra.mxu0 0.0
        %5545 = vmatprep.subr.mxu0 0.0
        %5546 = vmatpush2.xpose.msra.mxu0 0.0
        %5547 = vmatprep.subr.mxu0 0.0
        %5548 = vmatpush2.xpose.msra.mxu0 0.0
        %5549 = vmatprep.subr.mxu0 0.0
        %5550 = vmatpush2.xpose.msra.mxu0 0.0
        %5551 = vmatprep.subr.mxu0 0.0
        %5552 = vmatpush2.xpose.msra.mxu0 0.0
        %5553 = vmatprep.subr.mxu0 0.0
        %5554 = vmatpush2.xpose.msra.mxu0 0.0
        %5555 = vmatprep.subr.mxu0 0.0
        %5556 = vmatpush2.xpose.msra.mxu0 0.0
        %5557 = vmatprep.subr.mxu0 0.0
        %5558 = vmatpush2.xpose.msra.mxu0 0.0
        %5559 = vmatprep.subr.mxu0 0.0
        %5560 = vmatpush2.xpose.msra.mxu0 0.0
        %5561 = vmatprep.subr.mxu0 0.0
        %5562 = vmatpush2.xpose.msra.mxu0 0.0
        %5563 = vmatprep.mubr.f32.mxu0 0.0
        %5564 = vmatmul.mubr.f32.gmra.mxu0 %v3445
        %v5565 = vpop.f32.mrf.mxu0
        %v5566 = vadd.f32 0.0, %v5565
        %v5567 = vpop.f32.mrf.mxu0
        %5568 = vmatprep.mubr.f32.mxu0 0.0
        %5569 = vmatmul.mubr.f32.gmra.mxu0 %v3448
        %v5570 = vpop.f32.mrf.mxu0
        %v5571 = vadd.f32 0.0, %v5570
        %v5572 = vpop.f32.mrf.mxu0
        %5573 = vdwg.mxu0
        %v5575 = vsel %vm881, %v5406, 0
        %v5578 = vsel %vm881, %v5411, 0
        %v5581 = vsel %vm881, %v5486, 0
        %v5584 = vsel %vm881, %v5491, 0
        %5586 = vmatprep.subr.mxu0 0.0
        %5587 = vmatpush1.xpose.msra.mxu0 0.0
        %5588 = vmatprep.subr.mxu0 0.0
        %5589 = vmatpush1.xpose.msra.mxu0 0.0
        %5590 = vmatprep.subr.mxu0 0.0
        %5591 = vmatpush1.xpose.msra.mxu0 0.0
        %5592 = vmatprep.subr.mxu0 0.0
        %5593 = vmatpush1.xpose.msra.mxu0 0.0
        %5594 = vmatprep.subr.mxu0 0.0
        %5595 = vmatpush1.xpose.msra.mxu0 0.0
        %5596 = vmatprep.subr.mxu0 0.0
        %5597 = vmatpush1.xpose.msra.mxu0 0.0
        %5598 = vmatprep.subr.mxu0 0.0
        %5599 = vmatpush1.xpose.msra.mxu0 0.0
        %5600 = vmatprep.subr.mxu0 0.0
        %5601 = vmatpush1.xpose.msra.mxu0 0.0
        %5602 = vmatprep.subr.mxu0 0.0
        %5603 = vmatpush1.xpose.msra.mxu0 0.0
        %5604 = vmatprep.subr.mxu0 0.0
        %5605 = vmatpush1.xpose.msra.mxu0 0.0
        %5606 = vmatprep.subr.mxu0 0.0
        %5607 = vmatpush1.xpose.msra.mxu0 0.0
        %5608 = vmatprep.subr.mxu0 0.0
        %5609 = vmatpush1.xpose.msra.mxu0 0.0
        %5610 = vmatprep.subr.mxu0 0.0
        %5611 = vmatpush1.xpose.msra.mxu0 0.0
        %5612 = vmatprep.subr.mxu0 0.0
        %5613 = vmatpush1.xpose.msra.mxu0 0.0
        %5614 = vmatprep.subr.mxu0 0.0
        %5615 = vmatpush1.xpose.msra.mxu0 %v5584
        %5616 = vmatprep.subr.mxu0 0.0
        %5617 = vmatpush1.xpose.msra.mxu0 %v5581
        %5618 = vmatprep.subr.mxu0 0.0
        %5619 = vmatpush2.xpose.msra.mxu0 0.0
        %5620 = vmatprep.subr.mxu0 0.0
        %5621 = vmatpush2.xpose.msra.mxu0 0.0
        %5622 = vmatprep.subr.mxu0 0.0
        %5623 = vmatpush2.xpose.msra.mxu0 0.0
        %5624 = vmatprep.subr.mxu0 0.0
        %5625 = vmatpush2.xpose.msra.mxu0 0.0
        %5626 = vmatprep.subr.mxu0 0.0
        %5627 = vmatpush2.xpose.msra.mxu0 0.0
        %5628 = vmatprep.subr.mxu0 0.0
        %5629 = vmatpush2.xpose.msra.mxu0 0.0
        %5630 = vmatprep.subr.mxu0 0.0
        %5631 = vmatpush2.xpose.msra.mxu0 0.0
        %5632 = vmatprep.subr.mxu0 0.0
        %5633 = vmatpush2.xpose.msra.mxu0 0.0
        %5634 = vmatprep.subr.mxu0 0.0
        %5635 = vmatpush2.xpose.msra.mxu0 0.0
        %5636 = vmatprep.subr.mxu0 0.0
        %5637 = vmatpush2.xpose.msra.mxu0 0.0
        %5638 = vmatprep.subr.mxu0 0.0
        %5639 = vmatpush2.xpose.msra.mxu0 0.0
        %5640 = vmatprep.subr.mxu0 0.0
        %5641 = vmatpush2.xpose.msra.mxu0 0.0
        %5642 = vmatprep.subr.mxu0 0.0
        %5643 = vmatpush2.xpose.msra.mxu0 0.0
        %5644 = vmatprep.subr.mxu0 0.0
        %5645 = vmatpush2.xpose.msra.mxu0 0.0
        %5646 = vmatprep.subr.mxu0 0.0
        %5647 = vmatpush2.xpose.msra.mxu0 0.0
        %5648 = vmatprep.subr.mxu0 0.0
        %5649 = vmatpush2.xpose.msra.mxu0 0.0
        %5650 = vmatprep.mubr.f32.mxu0 0.0
        %5651 = vmatmul.mubr.f32.gmra.mxu0 %v5575
        %v5652 = vpop.f32.mrf.mxu0
        %v5653 = vadd.f32 0.0, %v5652
        %v5654 = vpop.f32.mrf.mxu0
        %5655 = vmatprep.mubr.f32.mxu0 0.0
        %5656 = vmatmul.mubr.f32.gmra.mxu0 %v5578
        %v5657 = vpop.f32.mrf.mxu0
        %v5658 = vadd.f32 0.0, %v5657
        %v5659 = vpop.f32.mrf.mxu0
        %5660 = vdwg.mxu0
        %v5661 = vmul.f32 %v5653, 0.35355338
        %v5662 = vmul.f32 %v5658, 0.35355338
        %v5663 = vsel %vm635, %v5661, -1e+30
        %v5664 = vsel %vm636, %v5662, -1e+30
        %v5665 = vsel %vm973, %v5663, -inf
        %5666 = vmax.xlane.f32.xlu0 %v5665
        %v5667 = vpop.xlane.xlu0 %5666
        %v5668 = vsel %vm973, %v5664, -inf
        %5669 = vmax.xlane.f32.xlu0 %v5668
        %v5670 = vpop.xlane.xlu0 %5669
        %v5671 = vsub.f32 %v5663, %v5667
        %v5672 = vsub.f32 %v5664, %v5670
        %v5673 = vmul.f32 %v5671, 1.442695
        %v5674 = vpow.pop %v5673
        %v5675 = vmul.f32 %v5672, 1.442695
        %v5676 = vpow.pop %v5675
        %v5677 = vsel %vm973, %v5674, 0.0
        %5678 = vadd.xlane.f32.xlu0 %v5677
        %v5679 = vpop.xlane.xlu0 %5678
        %v5680 = vsel %vm973, %v5676, 0.0
        %5681 = vadd.xlane.f32.xlu0 %v5680
        %v5682 = vpop.xlane.xlu0 %5681
        %v5683 = vadd.f32 %v5679, 1e-06
        %v5684 = vadd.f32 %v5682, 1e-06
        %v5685 = vrcp.pop %v5683
        %v5686 = vrcp.pop %v5684
        %v5687 = vmul.f32 %v5674, %v5685
        %v5688 = vmul.f32 %v5676, %v5686
        %v5690 = vsel %vm973, %v5687, 0
        %v5693 = vsel %vm973, %v5688, 0
        %5695 = vmatprep.subr.mxu0 0.0
        %5696 = vmatpush1.msra.mxu0 0.0
        %5697 = vmatprep.subr.mxu0 0.0
        %5698 = vmatpush1.msra.mxu0 0.0
        %5699 = vmatprep.subr.mxu0 0.0
        %5700 = vmatpush1.msra.mxu0 0.0
        %5701 = vmatprep.subr.mxu0 0.0
        %5702 = vmatpush1.msra.mxu0 0.0
        %5703 = vmatprep.subr.mxu0 0.0
        %5704 = vmatpush1.msra.mxu0 0.0
        %5705 = vmatprep.subr.mxu0 0.0
        %5706 = vmatpush1.msra.mxu0 0.0
        %5707 = vmatprep.subr.mxu0 0.0
        %5708 = vmatpush1.msra.mxu0 0.0
        %5709 = vmatprep.subr.mxu0 0.0
        %5710 = vmatpush1.msra.mxu0 0.0
        %5711 = vmatprep.subr.mxu0 0.0
        %5712 = vmatpush1.msra.mxu0 0.0
        %5713 = vmatprep.subr.mxu0 0.0
        %5714 = vmatpush1.msra.mxu0 0.0
        %5715 = vmatprep.subr.mxu0 0.0
        %5716 = vmatpush1.msra.mxu0 0.0
        %5717 = vmatprep.subr.mxu0 0.0
        %5718 = vmatpush1.msra.mxu0 0.0
        %5719 = vmatprep.subr.mxu0 0.0
        %5720 = vmatpush1.msra.mxu0 0.0
        %5721 = vmatprep.subr.mxu0 0.0
        %5722 = vmatpush1.msra.mxu0 0.0
        %5723 = vmatprep.subr.mxu0 0.0
        %5724 = vmatpush1.msra.mxu0 %v5571
        %5725 = vmatprep.subr.mxu0 0.0
        %5726 = vmatpush1.msra.mxu0 %v5566
        %5727 = vmatprep.subr.mxu0 0.0
        %5728 = vmatpush2.msra.mxu0 0.0
        %5729 = vmatprep.subr.mxu0 0.0
        %5730 = vmatpush2.msra.mxu0 0.0
        %5731 = vmatprep.subr.mxu0 0.0
        %5732 = vmatpush2.msra.mxu0 0.0
        %5733 = vmatprep.subr.mxu0 0.0
        %5734 = vmatpush2.msra.mxu0 0.0
        %5735 = vmatprep.subr.mxu0 0.0
        %5736 = vmatpush2.msra.mxu0 0.0
        %5737 = vmatprep.subr.mxu0 0.0
        %5738 = vmatpush2.msra.mxu0 0.0
        %5739 = vmatprep.subr.mxu0 0.0
        %5740 = vmatpush2.msra.mxu0 0.0
        %5741 = vmatprep.subr.mxu0 0.0
        %5742 = vmatpush2.msra.mxu0 0.0
        %5743 = vmatprep.subr.mxu0 0.0
        %5744 = vmatpush2.msra.mxu0 0.0
        %5745 = vmatprep.subr.mxu0 0.0
        %5746 = vmatpush2.msra.mxu0 0.0
        %5747 = vmatprep.subr.mxu0 0.0
        %5748 = vmatpush2.msra.mxu0 0.0
        %5749 = vmatprep.subr.mxu0 0.0
        %5750 = vmatpush2.msra.mxu0 0.0
        %5751 = vmatprep.subr.mxu0 0.0
        %5752 = vmatpush2.msra.mxu0 0.0
        %5753 = vmatprep.subr.mxu0 0.0
        %5754 = vmatpush2.msra.mxu0 0.0
        %5755 = vmatprep.subr.mxu0 0.0
        %5756 = vmatpush2.msra.mxu0 0.0
        %5757 = vmatprep.subr.mxu0 0.0
        %5758 = vmatpush2.msra.mxu0 0.0
        %5759 = vmatprep.mubr.f32.mxu0 0.0
        %5760 = vmatmul.mubr.f32.gmra.mxu0 %v5690
        %v5761 = vpop.f32.mrf.mxu0
        %v5762 = vadd.f32 0.0, %v5761
        %v5763 = vpop.f32.mrf.mxu0
        %5764 = vmatprep.mubr.f32.mxu0 0.0
        %5765 = vmatmul.mubr.f32.gmra.mxu0 %v5693
        %v5766 = vpop.f32.mrf.mxu0
        %v5767 = vadd.f32 0.0, %v5766
        %v5768 = vpop.f32.mrf.mxu0
        %5769 = vdwg.mxu0
        %s5770 = scalar_lea.vmem %s4, 56
        %v5771 = vld [vmem:[%s5770] sm:$0xff]
        %s5772 = scalar_lea.vmem %s5, 7
        %v5773 = vld [vmem:[%s5772] sm:$0x1]
        %v5775 = vlaneseq
        %v5776 = vshrl.u32 %v5775, 7
        %v5777 = vsub.s32 0, %v5776
        %v5778 = vrot.slane %v5773, %v5777
        %v5781 = vsel %vm881, %v5762, 0
        %v5784 = vsel %vm881, %v5767, 0
        %v5787 = vsel %vm881, %v5771, 0
        %5789 = vmatprep.subr.mxu0 0.0
        %5790 = vmatpush1.xpose.msra.mxu0 0.0
        %5791 = vmatprep.subr.mxu0 0.0
        %5792 = vmatpush1.xpose.msra.mxu0 0.0
        %5793 = vmatprep.subr.mxu0 0.0
        %5794 = vmatpush1.xpose.msra.mxu0 0.0
        %5795 = vmatprep.subr.mxu0 0.0
        %5796 = vmatpush1.xpose.msra.mxu0 0.0
        %5797 = vmatprep.subr.mxu0 0.0
        %5798 = vmatpush1.xpose.msra.mxu0 0.0
        %5799 = vmatprep.subr.mxu0 0.0
        %5800 = vmatpush1.xpose.msra.mxu0 0.0
        %5801 = vmatprep.subr.mxu0 0.0
        %5802 = vmatpush1.xpose.msra.mxu0 0.0
        %5803 = vmatprep.subr.mxu0 0.0
        %5804 = vmatpush1.xpose.msra.mxu0 0.0
        %5805 = vmatprep.subr.mxu0 0.0
        %5806 = vmatpush1.xpose.msra.mxu0 0.0
        %5807 = vmatprep.subr.mxu0 0.0
        %5808 = vmatpush1.xpose.msra.mxu0 0.0
        %5809 = vmatprep.subr.mxu0 0.0
        %5810 = vmatpush1.xpose.msra.mxu0 0.0
        %5811 = vmatprep.subr.mxu0 0.0
        %5812 = vmatpush1.xpose.msra.mxu0 0.0
        %5813 = vmatprep.subr.mxu0 0.0
        %5814 = vmatpush1.xpose.msra.mxu0 0.0
        %5815 = vmatprep.subr.mxu0 0.0
        %5816 = vmatpush1.xpose.msra.mxu0 0.0
        %5817 = vmatprep.subr.mxu0 0.0
        %5818 = vmatpush1.xpose.msra.mxu0 0.0
        %5819 = vmatprep.subr.mxu0 0.0
        %5820 = vmatpush1.xpose.msra.mxu0 %v5787
        %5821 = vmatprep.subr.mxu0 0.0
        %5822 = vmatpush2.xpose.msra.mxu0 0.0
        %5823 = vmatprep.subr.mxu0 0.0
        %5824 = vmatpush2.xpose.msra.mxu0 0.0
        %5825 = vmatprep.subr.mxu0 0.0
        %5826 = vmatpush2.xpose.msra.mxu0 0.0
        %5827 = vmatprep.subr.mxu0 0.0
        %5828 = vmatpush2.xpose.msra.mxu0 0.0
        %5829 = vmatprep.subr.mxu0 0.0
        %5830 = vmatpush2.xpose.msra.mxu0 0.0
        %5831 = vmatprep.subr.mxu0 0.0
        %5832 = vmatpush2.xpose.msra.mxu0 0.0
        %5833 = vmatprep.subr.mxu0 0.0
        %5834 = vmatpush2.xpose.msra.mxu0 0.0
        %5835 = vmatprep.subr.mxu0 0.0
        %5836 = vmatpush2.xpose.msra.mxu0 0.0
        %5837 = vmatprep.subr.mxu0 0.0
        %5838 = vmatpush2.xpose.msra.mxu0 0.0
        %5839 = vmatprep.subr.mxu0 0.0
        %5840 = vmatpush2.xpose.msra.mxu0 0.0
        %5841 = vmatprep.subr.mxu0 0.0
        %5842 = vmatpush2.xpose.msra.mxu0 0.0
        %5843 = vmatprep.subr.mxu0 0.0
        %5844 = vmatpush2.xpose.msra.mxu0 0.0
        %5845 = vmatprep.subr.mxu0 0.0
        %5846 = vmatpush2.xpose.msra.mxu0 0.0
        %5847 = vmatprep.subr.mxu0 0.0
        %5848 = vmatpush2.xpose.msra.mxu0 0.0
        %5849 = vmatprep.subr.mxu0 0.0
        %5850 = vmatpush2.xpose.msra.mxu0 0.0
        %5851 = vmatprep.subr.mxu0 0.0
        %5852 = vmatpush2.xpose.msra.mxu0 0.0
        %5853 = vmatprep.mubr.f32.mxu0 0.0
        %5854 = vmatmul.mubr.f32.gmra.mxu0 %v5781
        %v5855 = vpop.f32.mrf.mxu0
        %v5856 = vadd.f32 %v5778, %v5855
        %v5857 = vpop.f32.mrf.mxu0
        %5858 = vmatprep.mubr.f32.mxu0 0.0
        %5859 = vmatmul.mubr.f32.gmra.mxu0 %v5784
        %v5860 = vpop.f32.mrf.mxu0
        %v5861 = vadd.f32 %v5778, %v5860
        %v5862 = vpop.f32.mrf.mxu0
        %5863 = vdwg.mxu0
        %s5864 = scalar_lea.vmem %s6, 224
        %v5865 = vld [vmem:[%s5864] sm:$0xff]
        %v5866 = vld [vmem:[%s5864 + $0x8] sm:$0xff]
        %v5867 = vld [vmem:[%s5864 + $0x10] sm:$0xff]
        %v5868 = vld [vmem:[%s5864 + $0x18] sm:$0xff]
        %v5870 = vsel %vm881, %v5856, 0
        %v5873 = vsel %vm881, %v5861, 0
        %v5876 = vsel %vm881, %v5865, 0
        %v5879 = vsel %vm881, %v5866, 0
        %v5882 = vsel %vm881, %v5867, 0
        %v5885 = vsel %vm881, %v5868, 0
        %5887 = vmatprep.subr.mxu0 0.0
        %5888 = vmatpush1.xpose.msra.mxu0 0.0
        %5889 = vmatprep.subr.mxu0 0.0
        %5890 = vmatpush1.xpose.msra.mxu0 0.0
        %5891 = vmatprep.subr.mxu0 0.0
        %5892 = vmatpush1.xpose.msra.mxu0 0.0
        %5893 = vmatprep.subr.mxu0 0.0
        %5894 = vmatpush1.xpose.msra.mxu0 0.0
        %5895 = vmatprep.subr.mxu0 0.0
        %5896 = vmatpush1.xpose.msra.mxu0 0.0
        %5897 = vmatprep.subr.mxu0 0.0
        %5898 = vmatpush1.xpose.msra.mxu0 0.0
        %5899 = vmatprep.subr.mxu0 0.0
        %5900 = vmatpush1.xpose.msra.mxu0 0.0
        %5901 = vmatprep.subr.mxu0 0.0
        %5902 = vmatpush1.xpose.msra.mxu0 0.0
        %5903 = vmatprep.subr.mxu0 0.0
        %5904 = vmatpush1.xpose.msra.mxu0 0.0
        %5905 = vmatprep.subr.mxu0 0.0
        %5906 = vmatpush1.xpose.msra.mxu0 0.0
        %5907 = vmatprep.subr.mxu0 0.0
        %5908 = vmatpush1.xpose.msra.mxu0 0.0
        %5909 = vmatprep.subr.mxu0 0.0
        %5910 = vmatpush1.xpose.msra.mxu0 0.0
        %5911 = vmatprep.subr.mxu0 0.0
        %5912 = vmatpush1.xpose.msra.mxu0 %v5885
        %5913 = vmatprep.subr.mxu0 0.0
        %5914 = vmatpush1.xpose.msra.mxu0 %v5882
        %5915 = vmatprep.subr.mxu0 0.0
        %5916 = vmatpush1.xpose.msra.mxu0 %v5879
        %5917 = vmatprep.subr.mxu0 0.0
        %5918 = vmatpush1.xpose.msra.mxu0 %v5876
        %5919 = vmatprep.subr.mxu0 0.0
        %5920 = vmatpush2.xpose.msra.mxu0 0.0
        %5921 = vmatprep.subr.mxu0 0.0
        %5922 = vmatpush2.xpose.msra.mxu0 0.0
        %5923 = vmatprep.subr.mxu0 0.0
        %5924 = vmatpush2.xpose.msra.mxu0 0.0
        %5925 = vmatprep.subr.mxu0 0.0
        %5926 = vmatpush2.xpose.msra.mxu0 0.0
        %5927 = vmatprep.subr.mxu0 0.0
        %5928 = vmatpush2.xpose.msra.mxu0 0.0
        %5929 = vmatprep.subr.mxu0 0.0
        %5930 = vmatpush2.xpose.msra.mxu0 0.0
        %5931 = vmatprep.subr.mxu0 0.0
        %5932 = vmatpush2.xpose.msra.mxu0 0.0
        %5933 = vmatprep.subr.mxu0 0.0
        %5934 = vmatpush2.xpose.msra.mxu0 0.0
        %5935 = vmatprep.subr.mxu0 0.0
        %5936 = vmatpush2.xpose.msra.mxu0 0.0
        %5937 = vmatprep.subr.mxu0 0.0
        %5938 = vmatpush2.xpose.msra.mxu0 0.0
        %5939 = vmatprep.subr.mxu0 0.0
        %5940 = vmatpush2.xpose.msra.mxu0 0.0
        %5941 = vmatprep.subr.mxu0 0.0
        %5942 = vmatpush2.xpose.msra.mxu0 0.0
        %5943 = vmatprep.subr.mxu0 0.0
        %5944 = vmatpush2.xpose.msra.mxu0 0.0
        %5945 = vmatprep.subr.mxu0 0.0
        %5946 = vmatpush2.xpose.msra.mxu0 0.0
        %5947 = vmatprep.subr.mxu0 0.0
        %5948 = vmatpush2.xpose.msra.mxu0 0.0
        %5949 = vmatprep.subr.mxu0 0.0
        %5950 = vmatpush2.xpose.msra.mxu0 0.0
        %5951 = vmatprep.mubr.f32.mxu0 0.0
        %5952 = vmatmul.mubr.f32.gmra.mxu0 %v5870
        %v5953 = vpop.f32.mrf.mxu0
        %v5954 = vadd.f32 0.0, %v5953
        %v5955 = vpop.f32.mrf.mxu0
        %5956 = vmatprep.mubr.f32.mxu0 0.0
        %5957 = vmatmul.mubr.f32.gmra.mxu0 %v5873
        %v5958 = vpop.f32.mrf.mxu0
        %v5959 = vadd.f32 0.0, %v5958
        %v5960 = vpop.f32.mrf.mxu0
        %5961 = vdwg.mxu0
        %v5962 = vadd.f32 %v5332, %v5954
        %v5963 = vadd.f32 %v5333, %v5959
        %s5964 = scalar_lea.vmem %s7, 1
        %v5965 = vld [vmem:[%s5964] sm:$0x1]
        %v5967 = vlaneseq
        %v5968 = vshrl.u32 %v5967, 7
        %v5969 = vsub.s32 0, %v5968
        %v5970 = vrot.slane %v5965, %v5969
        %v5972 = vadd.f32 %v5962, %v5970
        %v5973 = vadd.f32 %v5963, %v5970
        %v5974 = vadd.f32 %v3440, %v5972
        %v5975 = vadd.f32 %v3441, %v5973
        %s5976 = scalar_lea.vmem %s8, 1
        %v5977 = vld [vmem:[%s5976] sm:$0x1]
        %s5978 = scalar_lea.vmem %s9, 1
        %v5979 = vld [vmem:[%s5978] sm:$0x1]
        %v5980 = vsel %vm638, %v5974, 0.0
        %5981 = vadd.xlane.f32.xlu0 %v5980
        %v5982 = vpop.xlane.xlu0 %5981
        %v5983 = vsel %vm638, %v5975, 0.0
        %5984 = vadd.xlane.f32.xlu0 %v5983
        %v5985 = vpop.xlane.xlu0 %5984
        %v5986 = vmul.f32 %v5982, %v3175
        %v5987 = vmul.f32 %v5985, %v3175
        %v5988 = vsub.f32 %v5974, %v5986
        %v5989 = vsub.f32 %v5975, %v5987
        %v5990 = vmul.f32 %v5988, %v5988
        %v5991 = vmul.f32 %v5989, %v5989
        %v5992 = vsel %vm638, %v5990, 0.0
        %5993 = vadd.xlane.f32.xlu0 %v5992
        %v5994 = vpop.xlane.xlu0 %5993
        %v5995 = vsel %vm638, %v5991, 0.0
        %5996 = vadd.xlane.f32.xlu0 %v5995
        %v5997 = vpop.xlane.xlu0 %5996
        %v5998 = vmul.f32 %v5994, %v3175
        %v5999 = vmul.f32 %v5997, %v3175
        %v6000 = vadd.f32 %v5998, 1e-05
        %v6001 = vadd.f32 %v5999, 1e-05
        %v6002 = vrsqrt.pop %v6000
        %v6003 = vrsqrt.pop %v6001
        %v6004 = vmul.f32 %v5988, %v6002
        %v6005 = vmul.f32 %v5989, %v6003
        %v6007 = vlaneseq
        %v6008 = vshrl.u32 %v6007, 7
        %v6009 = vsub.s32 0, %v6008
        %v6010 = vrot.slane %v5977, %v6009
        %v6012 = vmul.f32 %v6004, %v6010
        %v6013 = vmul.f32 %v6005, %v6010
        %v6015 = vlaneseq
        %v6016 = vshrl.u32 %v6015, 7
        %v6017 = vsub.s32 0, %v6016
        %v6018 = vrot.slane %v5979, %v6017
        %v6020 = vadd.f32 %v6012, %v6018
        %v6021 = vadd.f32 %v6013, %v6018
        %s6022 = scalar_lea.vmem %s10, 32
        %v6023 = vld [vmem:[%s6022] sm:$0xff]
        %v6024 = vld [vmem:[%s6022 + $0x8] sm:$0xff]
        %v6025 = vld [vmem:[%s6022 + $0x10] sm:$0xff]
        %v6026 = vld [vmem:[%s6022 + $0x18] sm:$0xff]
        %s6027 = scalar_lea.vmem %s11, 1
        %v6028 = vld [vmem:[%s6027] sm:$0x1]
        %v6030 = vlaneseq
        %v6031 = vshrl.u32 %v6030, 7
        %v6032 = vsub.s32 0, %v6031
        %v6033 = vrot.slane %v6028, %v6032
        %v6036 = vsel %vm638, %v6020, 0
        %v6039 = vsel %vm638, %v6021, 0
        %6041 = vmatprep.subr.mxu0 0.0
        %6042 = vmatpush1.msra.mxu0 0.0
        %6043 = vmatprep.subr.mxu0 0.0
        %6044 = vmatpush1.msra.mxu0 0.0
        %6045 = vmatprep.subr.mxu0 0.0
        %6046 = vmatpush1.msra.mxu0 0.0
        %6047 = vmatprep.subr.mxu0 0.0
        %6048 = vmatpush1.msra.mxu0 0.0
        %6049 = vmatprep.subr.mxu0 0.0
        %6050 = vmatpush1.msra.mxu0 0.0
        %6051 = vmatprep.subr.mxu0 0.0
        %6052 = vmatpush1.msra.mxu0 0.0
        %6053 = vmatprep.subr.mxu0 0.0
        %6054 = vmatpush1.msra.mxu0 0.0
        %6055 = vmatprep.subr.mxu0 0.0
        %6056 = vmatpush1.msra.mxu0 0.0
        %6057 = vmatprep.subr.mxu0 0.0
        %6058 = vmatpush1.msra.mxu0 0.0
        %6059 = vmatprep.subr.mxu0 0.0
        %6060 = vmatpush1.msra.mxu0 0.0
        %6061 = vmatprep.subr.mxu0 0.0
        %6062 = vmatpush1.msra.mxu0 0.0
        %6063 = vmatprep.subr.mxu0 0.0
        %6064 = vmatpush1.msra.mxu0 0.0
        %6065 = vmatprep.subr.mxu0 0.0
        %6066 = vmatpush1.msra.mxu0 %v6026
        %6067 = vmatprep.subr.mxu0 0.0
        %6068 = vmatpush1.msra.mxu0 %v6025
        %6069 = vmatprep.subr.mxu0 0.0
        %6070 = vmatpush1.msra.mxu0 %v6024
        %6071 = vmatprep.subr.mxu0 0.0
        %6072 = vmatpush1.msra.mxu0 %v6023
        %6073 = vmatprep.subr.mxu0 0.0
        %6074 = vmatpush2.msra.mxu0 0.0
        %6075 = vmatprep.subr.mxu0 0.0
        %6076 = vmatpush2.msra.mxu0 0.0
        %6077 = vmatprep.subr.mxu0 0.0
        %6078 = vmatpush2.msra.mxu0 0.0
        %6079 = vmatprep.subr.mxu0 0.0
        %6080 = vmatpush2.msra.mxu0 0.0
        %6081 = vmatprep.subr.mxu0 0.0
        %6082 = vmatpush2.msra.mxu0 0.0
        %6083 = vmatprep.subr.mxu0 0.0
        %6084 = vmatpush2.msra.mxu0 0.0
        %6085 = vmatprep.subr.mxu0 0.0
        %6086 = vmatpush2.msra.mxu0 0.0
        %6087 = vmatprep.subr.mxu0 0.0
        %6088 = vmatpush2.msra.mxu0 0.0
        %6089 = vmatprep.subr.mxu0 0.0
        %6090 = vmatpush2.msra.mxu0 0.0
        %6091 = vmatprep.subr.mxu0 0.0
        %6092 = vmatpush2.msra.mxu0 0.0
        %6093 = vmatprep.subr.mxu0 0.0
        %6094 = vmatpush2.msra.mxu0 0.0
        %6095 = vmatprep.subr.mxu0 0.0
        %6096 = vmatpush2.msra.mxu0 0.0
        %6097 = vmatprep.subr.mxu0 0.0
        %6098 = vmatpush2.msra.mxu0 0.0
        %6099 = vmatprep.subr.mxu0 0.0
        %6100 = vmatpush2.msra.mxu0 0.0
        %6101 = vmatprep.subr.mxu0 0.0
        %6102 = vmatpush2.msra.mxu0 0.0
        %6103 = vmatprep.subr.mxu0 0.0
        %6104 = vmatpush2.msra.mxu0 0.0
        %6105 = vmatprep.mubr.f32.mxu0 0.0
        %6106 = vmatmul.mubr.f32.gmra.mxu0 %v6036
        %v6107 = vpop.f32.mrf.mxu0
        %v6108 = vadd.f32 %v6033, %v6107
        %v6109 = vpop.f32.mrf.mxu0
        %6110 = vmatprep.mubr.f32.mxu0 0.0
        %6111 = vmatmul.mubr.f32.gmra.mxu0 %v6039
        %v6112 = vpop.f32.mrf.mxu0
        %v6113 = vadd.f32 %v6033, %v6112
        %v6114 = vpop.f32.mrf.mxu0
        %6115 = vdwg.mxu0
        %v6116 = vmax.f32 %v6108, 0.0
        %v6117 = vmax.f32 %v6113, 0.0
        %s6118 = scalar_lea.vmem %s12, 16
        %v6119 = vld [vmem:[%s6118] sm:$0xff]
        %v6120 = vld [vmem:[%s6118 + $0x8] sm:$0xff]
        %s6121 = scalar_lea.vmem %s13, 1
        %v6122 = vld [vmem:[%s6121] sm:$0x1]
        %v6124 = vlaneseq
        %v6125 = vshrl.u32 %v6124, 7
        %v6126 = vsub.s32 0, %v6125
        %v6127 = vrot.slane %v6122, %v6126
        %v6130 = vsel %vm973, %v6116, 0
        %v6133 = vsel %vm973, %v6117, 0
        %6135 = vmatprep.subr.mxu0 0.0
        %6136 = vmatpush1.msra.mxu0 0.0
        %6137 = vmatprep.subr.mxu0 0.0
        %6138 = vmatpush1.msra.mxu0 0.0
        %6139 = vmatprep.subr.mxu0 0.0
        %6140 = vmatpush1.msra.mxu0 0.0
        %6141 = vmatprep.subr.mxu0 0.0
        %6142 = vmatpush1.msra.mxu0 0.0
        %6143 = vmatprep.subr.mxu0 0.0
        %6144 = vmatpush1.msra.mxu0 0.0
        %6145 = vmatprep.subr.mxu0 0.0
        %6146 = vmatpush1.msra.mxu0 0.0
        %6147 = vmatprep.subr.mxu0 0.0
        %6148 = vmatpush1.msra.mxu0 0.0
        %6149 = vmatprep.subr.mxu0 0.0
        %6150 = vmatpush1.msra.mxu0 0.0
        %6151 = vmatprep.subr.mxu0 0.0
        %6152 = vmatpush1.msra.mxu0 0.0
        %6153 = vmatprep.subr.mxu0 0.0
        %6154 = vmatpush1.msra.mxu0 0.0
        %6155 = vmatprep.subr.mxu0 0.0
        %6156 = vmatpush1.msra.mxu0 0.0
        %6157 = vmatprep.subr.mxu0 0.0
        %6158 = vmatpush1.msra.mxu0 0.0
        %6159 = vmatprep.subr.mxu0 0.0
        %6160 = vmatpush1.msra.mxu0 0.0
        %6161 = vmatprep.subr.mxu0 0.0
        %6162 = vmatpush1.msra.mxu0 0.0
        %6163 = vmatprep.subr.mxu0 0.0
        %6164 = vmatpush1.msra.mxu0 %v6120
        %6165 = vmatprep.subr.mxu0 0.0
        %6166 = vmatpush1.msra.mxu0 %v6119
        %6167 = vmatprep.subr.mxu0 0.0
        %6168 = vmatpush2.msra.mxu0 0.0
        %6169 = vmatprep.subr.mxu0 0.0
        %6170 = vmatpush2.msra.mxu0 0.0
        %6171 = vmatprep.subr.mxu0 0.0
        %6172 = vmatpush2.msra.mxu0 0.0
        %6173 = vmatprep.subr.mxu0 0.0
        %6174 = vmatpush2.msra.mxu0 0.0
        %6175 = vmatprep.subr.mxu0 0.0
        %6176 = vmatpush2.msra.mxu0 0.0
        %6177 = vmatprep.subr.mxu0 0.0
        %6178 = vmatpush2.msra.mxu0 0.0
        %6179 = vmatprep.subr.mxu0 0.0
        %6180 = vmatpush2.msra.mxu0 0.0
        %6181 = vmatprep.subr.mxu0 0.0
        %6182 = vmatpush2.msra.mxu0 0.0
        %6183 = vmatprep.subr.mxu0 0.0
        %6184 = vmatpush2.msra.mxu0 0.0
        %6185 = vmatprep.subr.mxu0 0.0
        %6186 = vmatpush2.msra.mxu0 0.0
        %6187 = vmatprep.subr.mxu0 0.0
        %6188 = vmatpush2.msra.mxu0 0.0
        %6189 = vmatprep.subr.mxu0 0.0
        %6190 = vmatpush2.msra.mxu0 0.0
        %6191 = vmatprep.subr.mxu0 0.0
        %6192 = vmatpush2.msra.mxu0 0.0
        %6193 = vmatprep.subr.mxu0 0.0
        %6194 = vmatpush2.msra.mxu0 0.0
        %6195 = vmatprep.subr.mxu0 0.0
        %6196 = vmatpush2.msra.mxu0 0.0
        %6197 = vmatprep.subr.mxu0 0.0
        %6198 = vmatpush2.msra.mxu0 0.0
        %6199 = vmatprep.mubr.f32.mxu0 0.0
        %6200 = vmatmul.mubr.f32.gmra.mxu0 %v6130
        %v6201 = vpop.f32.mrf.mxu0
        %v6202 = vadd.f32 %v6127, %v6201
        %v6203 = vpop.f32.mrf.mxu0
        %6204 = vmatprep.mubr.f32.mxu0 0.0
        %6205 = vmatmul.mubr.f32.gmra.mxu0 %v6133
        %v6206 = vpop.f32.mrf.mxu0
        %v6207 = vadd.f32 %v6127, %v6206
        %v6208 = vpop.f32.mrf.mxu0
        %6209 = vdwg.mxu0
        %v6210 = vadd.f32 %v6020, %v6202
        %v6211 = vadd.f32 %v6021, %v6207
        %s6212 = scalar_lea.vmem %s14, 1
        %v6213 = vld [vmem:[%s6212] sm:$0x1]
        %s6214 = scalar_lea.vmem %s15, 1
        %v6215 = vld [vmem:[%s6214] sm:$0x1]
        %v6216 = vsel %vm638, %v6210, 0.0
        %6217 = vadd.xlane.f32.xlu0 %v6216
        %v6218 = vpop.xlane.xlu0 %6217
        %v6219 = vsel %vm638, %v6211, 0.0
        %6220 = vadd.xlane.f32.xlu0 %v6219
        %v6221 = vpop.xlane.xlu0 %6220
        %v6222 = vmul.f32 %v6218, %v3175
        %v6223 = vmul.f32 %v6221, %v3175
        %v6224 = vsub.f32 %v6210, %v6222
        %v6225 = vsub.f32 %v6211, %v6223
        %v6226 = vmul.f32 %v6224, %v6224
        %v6227 = vmul.f32 %v6225, %v6225
        %v6228 = vsel %vm638, %v6226, 0.0
        %6229 = vadd.xlane.f32.xlu0 %v6228
        %v6230 = vpop.xlane.xlu0 %6229
        %v6231 = vsel %vm638, %v6227, 0.0
        %6232 = vadd.xlane.f32.xlu0 %v6231
        %v6233 = vpop.xlane.xlu0 %6232
        %v6234 = vmul.f32 %v6230, %v3175
        %v6235 = vmul.f32 %v6233, %v3175
        %v6236 = vadd.f32 %v6234, 1e-05
        %v6237 = vadd.f32 %v6235, 1e-05
        %v6238 = vrsqrt.pop %v6236
        %v6239 = vrsqrt.pop %v6237
        %v6240 = vmul.f32 %v6224, %v6238
        %v6241 = vmul.f32 %v6225, %v6239
        %v6243 = vlaneseq
        %v6244 = vshrl.u32 %v6243, 7
        %v6245 = vsub.s32 0, %v6244
        %v6246 = vrot.slane %v6213, %v6245
        %v6248 = vmul.f32 %v6240, %v6246
        %v6249 = vmul.f32 %v6241, %v6246
        %v6251 = vlaneseq
        %v6252 = vshrl.u32 %v6251, 7
        %v6253 = vsub.s32 0, %v6252
        %v6254 = vrot.slane %v6215, %v6253
        %v6256 = vadd.f32 %v6248, %v6254
        %v6257 = vadd.f32 %v6249, %v6254
        %v6258 = vld [vmem:[%s16] sm:$0x1]
        %v6259 = vld [vmem:[%s17] sm:$0x1]
        %v6260 = vsel %vm638, %v6256, 0.0
        %6261 = vadd.xlane.f32.xlu0 %v6260
        %v6262 = vpop.xlane.xlu0 %6261
        %v6263 = vsel %vm638, %v6257, 0.0
        %6264 = vadd.xlane.f32.xlu0 %v6263
        %v6265 = vpop.xlane.xlu0 %6264
        %v6266 = vmul.f32 %v6262, %v3175
        %v6267 = vmul.f32 %v6265, %v3175
        %v6268 = vsub.f32 %v6256, %v6266
        %v6269 = vsub.f32 %v6257, %v6267
        %v6270 = vmul.f32 %v6268, %v6268
        %v6271 = vmul.f32 %v6269, %v6269
        %v6272 = vsel %vm638, %v6270, 0.0
        %6273 = vadd.xlane.f32.xlu0 %v6272
        %v6274 = vpop.xlane.xlu0 %6273
        %v6275 = vsel %vm638, %v6271, 0.0
        %6276 = vadd.xlane.f32.xlu0 %v6275
        %v6277 = vpop.xlane.xlu0 %6276
        %v6278 = vmul.f32 %v6274, %v3175
        %v6279 = vmul.f32 %v6277, %v3175
        %v6280 = vadd.f32 %v6278, 1e-05
        %v6281 = vadd.f32 %v6279, 1e-05
        %v6282 = vrsqrt.pop %v6280
        %v6283 = vrsqrt.pop %v6281
        %v6284 = vmul.f32 %v6268, %v6282
        %v6285 = vmul.f32 %v6269, %v6283
        %v6287 = vlaneseq
        %v6288 = vshrl.u32 %v6287, 7
        %v6289 = vsub.s32 0, %v6288
        %v6290 = vrot.slane %v6258, %v6289
        %v6292 = vmul.f32 %v6284, %v6290
        %v6293 = vmul.f32 %v6285, %v6290
        %v6295 = vlaneseq
        %v6296 = vshrl.u32 %v6295, 7
        %v6297 = vsub.s32 0, %v6296
        %v6298 = vrot.slane %v6259, %v6297
        %v6300 = vadd.f32 %v6292, %v6298
        %v6301 = vadd.f32 %v6293, %v6298
        %v6302 = vld [vmem:[%s18] sm:$0xff]
        %v6303 = vld [vmem:[%s18 + $0x8] sm:$0xff]
        %v6304 = vld [vmem:[%s18 + $0x10] sm:$0xff]
        %v6305 = vld [vmem:[%s18 + $0x18] sm:$0xff]
        %v6306 = vld [vmem:[%s19] sm:$0x1]
        %v6308 = vlaneseq
        %v6309 = vshrl.u32 %v6308, 7
        %v6310 = vsub.s32 0, %v6309
        %v6311 = vrot.slane %v6306, %v6310
        %v6314 = vsel %vm638, %v6300, 0
        %v6317 = vsel %vm638, %v6301, 0
        %6319 = vmatprep.subr.mxu0 0.0
        %6320 = vmatpush1.msra.mxu0 0.0
        %6321 = vmatprep.subr.mxu0 0.0
        %6322 = vmatpush1.msra.mxu0 0.0
        %6323 = vmatprep.subr.mxu0 0.0
        %6324 = vmatpush1.msra.mxu0 0.0
        %6325 = vmatprep.subr.mxu0 0.0
        %6326 = vmatpush1.msra.mxu0 0.0
        %6327 = vmatprep.subr.mxu0 0.0
        %6328 = vmatpush1.msra.mxu0 0.0
        %6329 = vmatprep.subr.mxu0 0.0
        %6330 = vmatpush1.msra.mxu0 0.0
        %6331 = vmatprep.subr.mxu0 0.0
        %6332 = vmatpush1.msra.mxu0 0.0
        %6333 = vmatprep.subr.mxu0 0.0
        %6334 = vmatpush1.msra.mxu0 0.0
        %6335 = vmatprep.subr.mxu0 0.0
        %6336 = vmatpush1.msra.mxu0 0.0
        %6337 = vmatprep.subr.mxu0 0.0
        %6338 = vmatpush1.msra.mxu0 0.0
        %6339 = vmatprep.subr.mxu0 0.0
        %6340 = vmatpush1.msra.mxu0 0.0
        %6341 = vmatprep.subr.mxu0 0.0
        %6342 = vmatpush1.msra.mxu0 0.0
        %6343 = vmatprep.subr.mxu0 0.0
        %6344 = vmatpush1.msra.mxu0 %v6305
        %6345 = vmatprep.subr.mxu0 0.0
        %6346 = vmatpush1.msra.mxu0 %v6304
        %6347 = vmatprep.subr.mxu0 0.0
        %6348 = vmatpush1.msra.mxu0 %v6303
        %6349 = vmatprep.subr.mxu0 0.0
        %6350 = vmatpush1.msra.mxu0 %v6302
        %6351 = vmatprep.subr.mxu0 0.0
        %6352 = vmatpush2.msra.mxu0 0.0
        %6353 = vmatprep.subr.mxu0 0.0
        %6354 = vmatpush2.msra.mxu0 0.0
        %6355 = vmatprep.subr.mxu0 0.0
        %6356 = vmatpush2.msra.mxu0 0.0
        %6357 = vmatprep.subr.mxu0 0.0
        %6358 = vmatpush2.msra.mxu0 0.0
        %6359 = vmatprep.subr.mxu0 0.0
        %6360 = vmatpush2.msra.mxu0 0.0
        %6361 = vmatprep.subr.mxu0 0.0
        %6362 = vmatpush2.msra.mxu0 0.0
        %6363 = vmatprep.subr.mxu0 0.0
        %6364 = vmatpush2.msra.mxu0 0.0
        %6365 = vmatprep.subr.mxu0 0.0
        %6366 = vmatpush2.msra.mxu0 0.0
        %6367 = vmatprep.subr.mxu0 0.0
        %6368 = vmatpush2.msra.mxu0 0.0
        %6369 = vmatprep.subr.mxu0 0.0
        %6370 = vmatpush2.msra.mxu0 0.0
        %6371 = vmatprep.subr.mxu0 0.0
        %6372 = vmatpush2.msra.mxu0 0.0
        %6373 = vmatprep.subr.mxu0 0.0
        %6374 = vmatpush2.msra.mxu0 0.0
        %6375 = vmatprep.subr.mxu0 0.0
        %6376 = vmatpush2.msra.mxu0 0.0
        %6377 = vmatprep.subr.mxu0 0.0
        %6378 = vmatpush2.msra.mxu0 0.0
        %6379 = vmatprep.subr.mxu0 0.0
        %6380 = vmatpush2.msra.mxu0 0.0
        %6381 = vmatprep.subr.mxu0 0.0
        %6382 = vmatpush2.msra.mxu0 0.0
        %6383 = vmatprep.mubr.f32.mxu0 0.0
        %6384 = vmatmul.mubr.f32.gmra.mxu0 %v6314
        %v6385 = vpop.f32.mrf.mxu0
        %v6386 = vadd.f32 %v6311, %v6385
        %v6387 = vpop.f32.mrf.mxu0
        %6388 = vmatprep.mubr.f32.mxu0 0.0
        %6389 = vmatmul.mubr.f32.gmra.mxu0 %v6317
        %v6390 = vpop.f32.mrf.mxu0
        %v6391 = vadd.f32 %v6311, %v6390
        %v6392 = vpop.f32.mrf.mxu0
        %6393 = vdwg.mxu0
        %vm6394 = vcmask 523264
        %6395 = vst.msk [vmem:[%s622] sm:$0xff] %vm6394, %v6386
        %6396 = vst.msk [vmem:[%s622 + $0x8] sm:$0xff] %vm6394, %v6391
        %s6397 = sand.u32 %s467, 1
        %s6398 = scalar_lea.sflag [#allocation3], %s6397
        %s6399 = sand.u32 %s467, 1
        %s6400 = smul.addr %s6399, 16
        %s6401 = scalar_lea.vmem [#allocation2], %s6400
        // Predicated region
        $region101: #{gpt_forward.1} parent=99 // pred_check
          %p6402 = pneg %p477
        $region102: #{gpt_forward.1} parent=99 // pred_check_branch
          %6404 = sbr.rel (%p6402) target = $region104
        $region103: #{gpt_forward.1} parent=99 // pred_region
          %s6406 = ssub.s32 256, 256
          %6407 = vsyncadd %s6398, %s6406
          %s6408 = smul.addr %s34, 2
          %s6409 = smul.addr %s6408, 128
          %s6410 = scalar_lea.hbm %s20, %s6409
          %s6411 = sshll.u32 %s6401, 4
          %s6412 = int_to_ptr.vmem [resolvable:$true] %s6411
          %6417 = dma.vmem_to_hbm [thread:$0]  %s6412, 256, %s6410, %s6398, 128, 128, 8
        $region104: #{gpt_forward.1} parent=99 // pred_fallthru
          _
      $region100: #{gpt_forward.1} parent=5 // pred_fallthru
        _
      %p6418 = scmp.le.s32.totalorder 2, %s29
      // Predicated region
      $region105: #{gpt_forward.1} parent=5 // pred_check
        %p6419 = pneg %p6418
      $region106: #{gpt_forward.1} parent=5 // pred_check_branch
        %6421 = sbr.rel (%p6419) target = $region108
      $region107: #{gpt_forward.1} parent=5 // pred_region
        %s6422 = ssub.s32 %s29, 2
        // Predicated region
        $region109: #{gpt_forward.1} parent=107 // pred_check
          %p6423 = pneg %p483
        $region110: #{gpt_forward.1} parent=107 // pred_check_branch
          %6425 = sbr.rel (%p6423) target = $region112
        $region111: #{gpt_forward.1} parent=107 // pred_region
          %s6426 = sand.u32 %s468, 1
          %s6427 = scalar_lea.sflag [#allocation3], %s6426
          %s6428 = sand.u32 %s468, 1
          %s6429 = smul.addr %s6428, 16
          %s6430 = scalar_lea.vmem [#allocation2], %s6429
          %6431 = dma.done %s6427, 256
        $region112: #{gpt_forward.1} parent=107 // pred_fallthru
          _
      $region108: #{gpt_forward.1} parent=5 // pred_fallthru
        _
    $region6: #{gpt_forward.1} parent=1 // loop_footer
      %s33 = sadd.s32 1, %s29
    $region7: #{gpt_forward.1} parent=1 // loop_footer_branch
      %28 = sbr.rel target = $region3
    $region8: #{gpt_forward.1} parent=1 // loop_exit
      _
    %6432 = vsyncpa [#allocation3], 1
    %s6433 = scalar_lea.sflag [#allocation3], 1
    %6434 = vsyncpa %s6433, 1

</llo_original>
